<compile_context>
chip_gen: v5e
topology: v5e:2x2
jax: 0.10.0
libtpu: 0.0.40
codegen_flags: <defaults>
</compile_context>

<pallas_src>
import jax
import jax.numpy as jnp
from jax.experimental import pallas as pl
from jax.experimental.pallas import tpu as pltpu

# (in_features, out_features) for every Linear layer, in forward order.
LAYER_DIMS = [
    (784, 256), (256, 128), (128, 32), (32, 16), (16, 10),              # encoder
    (10, 16), (16, 32), (32, 64), (64, 128), (128, 256), (256, 784),    # decoder
]
N_LAYERS = len(LAYER_DIMS)
D_IN = LAYER_DIMS[0][0]     # 784
D_OUT = LAYER_DIMS[-1][1]   # 784
LANE = 128

# Activation AFTER each Linear, matching the PyTorch module exactly.
ACTS = ("relu", "relu", "relu", "relu", "none",
        "relu", "relu", "relu", "relu", "relu", "sigmoid")


def _round_up(n, m):
    return ((n + m - 1) // m) * m


# Per-layer padded (in, out): middle dims lane-padded to 128; the true input
# width (784) and true output width (784) are NOT padded — their BlockSpecs
# use the full array dim, which is legal and avoids wrapper pad/unpad passes.
PAD_DIMS = []
for _l, (_i, _o) in enumerate(LAYER_DIMS):
    _pi = _i if _l == 0 else _round_up(_i, LANE)
    _po = _o if _l == N_LAYERS - 1 else _round_up(_o, LANE)
    PAD_DIMS.append((_pi, _po))


def _device_kind():
    try:
        return jax.devices()[0].device_kind.lower()
    except Exception:
        return ""


def _hw_config():
    """Per-generation tile cap and scoped-VMEM limit."""
    kind = _device_kind()
    if "7" in kind:                        # v7x: 64 MiB VMEM, 2 TCs/chip
        return {"tile_cap": 512, "vmem_limit": 48 * 1024 * 1024}
    if "v5" in kind or "v6" in kind:       # v5e/v5p/v6e: 128 MiB VMEM
        return {"tile_cap": 1024, "vmem_limit": 64 * 1024 * 1024}
    # Unknown generation: stay conservative (previously validated limits).
    return {"tile_cap": 512, "vmem_limit": 32 * 1024 * 1024}


def _choose_tile_m(B, tile_cap):
    """Aim for >= 2 grid steps (keeps both v7x TensorCores busy, gives the
    pipeline an overlap step) with MXU-height-friendly tiles, capped per gen."""
    if B <= 16:
        return _round_up(B, 8)
    half = pl.cdiv(B, 2)
    tile = _round_up(half, 128) if B >= 256 else _round_up(half, 8)
    return min(tile_cap, tile)


def _pack_params(params, cdtype):
    """Pad + cast + consolidate the 11 (w, b) pairs into 6 arrays."""
    assert len(params) == N_LAYERS
    ws = []
    for (w, b), (pi, po) in zip(params, PAD_DIMS):
        fi, fo = w.shape
        wp = jnp.zeros((pi, po), cdtype).at[:fi, :fo].set(w.astype(cdtype))
        ws.append(wp)
    w_first = ws[0]                         # (784, 256)
    w_1 = ws[1]                             # (256, 128)
    w_mid = jnp.stack(ws[2:9], axis=0)      # (7, 128, 128)  layers 2..8
    w_9 = ws[9]                             # (128, 256)
    w_last = ws[10]                         # (256, 784)
    # One bias table: row l holds layer l's bias, zero-padded to 784 lanes.
    b_all = jnp.zeros((N_LAYERS, D_OUT), jnp.float32)
    for l, (_, b) in enumerate(params):
        b_all = b_all.at[l, : b.shape[0]].set(b.astype(jnp.float32))
    return w_first, w_1, w_mid, w_9, w_last, b_all


def autoencoder_kernel(x_ref, w0_ref, w1_ref, wmid_ref, w9_ref, w10_ref,
                       b_ref, out_ref):
    """Fused 11-layer MLP forward for one batch tile.

    Weights are VMEM-resident (constant index maps), bf16 (or f32).
    Activations are carried between layers in the weight dtype; matmuls
    accumulate in f32 on the MXU; bias/ReLU/sigmoid run in f32.
    """
    cdtype = w0_ref.dtype

    def layer(h, w, l):
        z = jnp.dot(h, w, preferred_element_type=jnp.float32)
        z = z + b_ref[l:l + 1, : z.shape[1]]
        act = ACTS[l]
        if act == "relu":
            return jnp.maximum(z, 0.0).astype(cdtype)   # cast fused in epilogue
        if act == "none":
            return z.astype(cdtype)                     # bottleneck, no activation
        return jax.nn.sigmoid(z)                        # final layer, keep f32

    h = x_ref[...].astype(cdtype)                       # (tm, 784)
    h = layer(h, w0_ref[...], 0)                        # (tm, 256)
    h = layer(h, w1_ref[...], 1)                        # (tm, 128)
    for k in range(7):                                  # layers 2..8 (128x128)
        h = layer(h, wmid_ref[k], 2 + k)
    h = layer(h, w9_ref[...], 9)                        # (tm, 256)
    h = layer(h, w10_ref[...], 10)                      # (tm, 784) f32
    out_ref[...] = h.astype(out_ref.dtype)


def autoencoder_forward(x, params, *, tile_m=None, use_bf16=True):
    """x: (B, 784) float32.  params: list of (w, b) with w: (in, out), b: (out,)."""
    B, d_in = x.shape
    assert d_in == D_IN
    cdtype = jnp.bfloat16 if use_bf16 else jnp.float32

    hw = _hw_config()
    if tile_m is None:
        tile_m = _choose_tile_m(B, hw["tile_cap"])

    w0, w1, w_mid, w9, w10, b_all = _pack_params(params, cdtype)

    # Only the batch dim is padded (to a tile multiple); feature dims stay 784.
    B_pad = _round_up(B, tile_m)
    x_pad = x if B_pad == B else jnp.zeros((B_pad, D_IN), x.dtype).at[:B].set(x)

    in_specs = [
        pl.BlockSpec((tile_m, D_IN), lambda i: (i, 0)),   # x: streamed per tile
        pl.BlockSpec(w0.shape, lambda i: (0, 0)),         # params: constant
        pl.BlockSpec(w1.shape, lambda i: (0, 0)),         #   index maps ->
        pl.BlockSpec(w_mid.shape, lambda i: (0, 0, 0)),   #   fetched once,
        pl.BlockSpec(w9.shape, lambda i: (0, 0)),         #   VMEM-resident
        pl.BlockSpec(w10.shape, lambda i: (0, 0)),        #   for all grid steps
        pl.BlockSpec(b_all.shape, lambda i: (0, 0)),
    ]
    out_spec = pl.BlockSpec((tile_m, D_OUT), lambda i: (i, 0))

    flops = 2 * B_pad * sum(pi * po for pi, po in PAD_DIMS)
    param_bytes = sum(int(a.size) * a.dtype.itemsize
                      for a in (w0, w1, w_mid, w9, w10, b_all))
    cost = pl.CostEstimate(
        flops=flops,
        transcendentals=B_pad * D_OUT,                    # final sigmoid
        bytes_accessed=(B_pad * D_IN * x.dtype.itemsize
                        + B_pad * D_OUT * 4 + param_bytes),
    )

    out_pad = pl.pallas_call(
        autoencoder_kernel,
        out_shape=jax.ShapeDtypeStruct((B_pad, D_OUT), jnp.float32),
        grid_spec=pltpu.PrefetchScalarGridSpec(
            num_scalar_prefetch=0,
            grid=(B_pad // tile_m,),
            in_specs=in_specs,
            out_specs=out_spec,
        ),
        compiler_params=pltpu.CompilerParams(
            dimension_semantics=("parallel",),
            vmem_limit_bytes=hw["vmem_limit"],
        ),
        cost_estimate=cost,
    )(x_pad, w0, w1, w_mid, w9, w10, b_all)

    return out_pad if B_pad == B else out_pad[:B]


def init_params(key):
    """Deterministic PyTorch-style (Kaiming-uniform-ish) init for every Linear."""
    params = []
    for fan_in, fan_out in LAYER_DIMS:
        kw, kb, key = jax.random.split(key, 3)
        bound = 1.0 / jnp.sqrt(fan_in)
        # Stored as (in, out) == W.T relative to PyTorch's (out, in).
        w = jax.random.uniform(kw, (fan_in, fan_out), jnp.float32, -bound, bound)
        b = jax.random.uniform(kb, (fan_out,), jnp.float32, -bound, bound)
        params.append((w, b))
    return params


def reference_forward(x, params, *, use_bf16=True):
    """Plain-JAX reference with the same matmul precision as the kernel."""
    cdtype = jnp.bfloat16 if use_bf16 else jnp.float32
    h = x.astype(jnp.float32)
    for l, (w, b) in enumerate(params):
        z = jnp.dot(h.astype(cdtype), w.astype(cdtype),
                    preferred_element_type=jnp.float32) + b
        act = ACTS[l]
        if act == "relu":
            h = jnp.maximum(z, 0.0)
        elif act == "none":
            h = z
        else:
            h = jax.nn.sigmoid(z)
    return h


if __name__ == "__main__":
    key = jax.random.PRNGKey(0)
    kx, kp = jax.random.split(key)

    # B=500 exercises the batch-padding path (pads to 512) and yields a grid
    # of 2 so the parallel batch axis can shard across v7x's two TensorCores.
    B = 500
    x = jax.random.normal(kx, (B, 784), dtype=jnp.float32)
    params = init_params(kp)

    out = autoencoder_forward(x, params, use_bf16=True)
    out = jax.block_until_ready(out)

    ref = reference_forward(x, params, use_bf16=True)
    assert out.shape == (B, 784)
    err = float(jnp.max(jnp.abs(out - ref)))
    assert err < 5e-3, f"mismatch vs reference: max abs err {err}"

    print("KERNEL_OK")
</pallas_src>

<mosaic_0001>
module attributes {stable_mosaic.version = 11 : i64} {
  func.func @autoencoder_kernel(%arg0: i32, %arg1: memref<256x784xf32, #tpu.memory_space<vmem>>, %arg2: memref<784x256xbf16, #tpu.memory_space<vmem>>, %arg3: memref<256x128xbf16, #tpu.memory_space<vmem>>, %arg4: memref<7x128x128xbf16, #tpu.memory_space<vmem>>, %arg5: memref<128x256xbf16, #tpu.memory_space<vmem>>, %arg6: memref<256x784xbf16, #tpu.memory_space<vmem>>, %arg7: memref<11x784xf32, #tpu.memory_space<vmem>>, %arg8: memref<256x784xf32, #tpu.memory_space<vmem>>) attributes {dimension_semantics = [#tpu.dimension_semantics<parallel>], iteration_bounds = array<i64: 2>, scalar_prefetch = 0 : i64, scratch_operands = 0 : i64, tpu.core_type = #tpu.core_type<tc>, window_params = [{transform_indices = @transform_0, window_bounds = array<i64: 256, 784>}, {pipeline_mode = #tpu.pipeline_mode<synchronous>, transform_indices = @transform_1, window_bounds = array<i64: 784, 256>}, {pipeline_mode = #tpu.pipeline_mode<synchronous>, transform_indices = @transform_2, window_bounds = array<i64: 256, 128>}, {pipeline_mode = #tpu.pipeline_mode<synchronous>, transform_indices = @transform_3, window_bounds = array<i64: 7, 128, 128>}, {pipeline_mode = #tpu.pipeline_mode<synchronous>, transform_indices = @transform_4, window_bounds = array<i64: 128, 256>}, {pipeline_mode = #tpu.pipeline_mode<synchronous>, transform_indices = @transform_5, window_bounds = array<i64: 256, 784>}, {pipeline_mode = #tpu.pipeline_mode<synchronous>, transform_indices = @transform_6, window_bounds = array<i64: 11, 784>}, {transform_indices = @transform_7, window_bounds = array<i64: 256, 784>}]} {
    %c0 = arith.constant 0 : index
    %c0_0 = arith.constant 0 : index
    %0 = vector.load %arg1[%c0, %c0_0] : memref<256x784xf32, #tpu.memory_space<vmem>>, vector<256x784xf32>
    %1 = arith.truncf %0 : vector<256x784xf32> to vector<256x784xbf16>
    %c0_1 = arith.constant 0 : index
    %c0_2 = arith.constant 0 : index
    %2 = vector.load %arg2[%c0_1, %c0_2] : memref<784x256xbf16, #tpu.memory_space<vmem>>, vector<784x256xbf16>
    %cst = arith.constant dense<0.000000e+00> : vector<256x256xf32>
    %3 = tpu.matmul %1, %2, %cst {dimension_numbers = #tpu.dot_dimension_numbers<[1], [0], [0], [1], [0, 0, 1, 1], [], []>} : vector<256x784xbf16>, vector<784x256xbf16>, vector<256x256xf32> -> vector<256x256xf32>
    %c0_3 = arith.constant 0 : index
    %c0_4 = arith.constant 0 : index
    %4 = vector.load %arg7[%c0_3, %c0_4] : memref<11x784xf32, #tpu.memory_space<vmem>>, vector<1x256xf32>
    %5 = vector.broadcast %4 : vector<1x256xf32> to vector<256x256xf32>
    %6 = arith.addf %3, %5 : vector<256x256xf32>
    %cst_5 = arith.constant 0.000000e+00 : f32
    %7 = vector.broadcast %cst_5 : f32 to vector<256x256xf32>
    %8 = arith.maximumf %6, %7 : vector<256x256xf32>
    %9 = arith.truncf %8 : vector<256x256xf32> to vector<256x256xbf16>
    %c0_6 = arith.constant 0 : index
    %c0_7 = arith.constant 0 : index
    %10 = vector.load %arg3[%c0_6, %c0_7] : memref<256x128xbf16, #tpu.memory_space<vmem>>, vector<256x128xbf16>
    %cst_8 = arith.constant dense<0.000000e+00> : vector<256x128xf32>
    %11 = tpu.matmul %9, %10, %cst_8 {dimension_numbers = #tpu.dot_dimension_numbers<[1], [0], [0], [1], [0, 0, 1, 1], [], []>} : vector<256x256xbf16>, vector<256x128xbf16>, vector<256x128xf32> -> vector<256x128xf32>
    %c1 = arith.constant 1 : index
    %c0_9 = arith.constant 0 : index
    %12 = vector.load %arg7[%c1, %c0_9] : memref<11x784xf32, #tpu.memory_space<vmem>>, vector<1x128xf32>
    %13 = vector.broadcast %12 : vector<1x128xf32> to vector<256x128xf32>
    %14 = arith.addf %11, %13 : vector<256x128xf32>
    %cst_10 = arith.constant 0.000000e+00 : f32
    %15 = vector.broadcast %cst_10 : f32 to vector<256x128xf32>
    %16 = arith.maximumf %14, %15 : vector<256x128xf32>
    %17 = arith.truncf %16 : vector<256x128xf32> to vector<256x128xbf16>
    %c0_11 = arith.constant 0 : index
    %c0_12 = arith.constant 0 : index
    %c0_13 = arith.constant 0 : index
    %18 = vector.load %arg4[%c0_11, %c0_12, %c0_13] : memref<7x128x128xbf16, #tpu.memory_space<vmem>>, vector<1x128x128xbf16>
    %19 = vector.shape_cast %18 : vector<1x128x128xbf16> to vector<128x128xbf16>
    %cst_14 = arith.constant dense<0.000000e+00> : vector<256x128xf32>
    %20 = tpu.matmul %17, %19, %cst_14 {dimension_numbers = #tpu.dot_dimension_numbers<[1], [0], [0], [1], [0, 0, 1, 1], [], []>} : vector<256x128xbf16>, vector<128x128xbf16>, vector<256x128xf32> -> vector<256x128xf32>
    %c2 = arith.constant 2 : index
    %c0_15 = arith.constant 0 : index
    %21 = vector.load %arg7[%c2, %c0_15] : memref<11x784xf32, #tpu.memory_space<vmem>>, vector<1x128xf32>
    %22 = vector.broadcast %21 : vector<1x128xf32> to vector<256x128xf32>
    %23 = arith.addf %20, %22 : vector<256x128xf32>
    %cst_16 = arith.constant 0.000000e+00 : f32
    %24 = vector.broadcast %cst_16 : f32 to vector<256x128xf32>
    %25 = arith.maximumf %23, %24 : vector<256x128xf32>
    %26 = arith.truncf %25 : vector<256x128xf32> to vector<256x128xbf16>
    %c1_17 = arith.constant 1 : index
    %c0_18 = arith.constant 0 : index
    %c0_19 = arith.constant 0 : index
    %27 = vector.load %arg4[%c1_17, %c0_18, %c0_19] : memref<7x128x128xbf16, #tpu.memory_space<vmem>>, vector<1x128x128xbf16>
    %28 = vector.shape_cast %27 : vector<1x128x128xbf16> to vector<128x128xbf16>
    %cst_20 = arith.constant dense<0.000000e+00> : vector<256x128xf32>
    %29 = tpu.matmul %26, %28, %cst_20 {dimension_numbers = #tpu.dot_dimension_numbers<[1], [0], [0], [1], [0, 0, 1, 1], [], []>} : vector<256x128xbf16>, vector<128x128xbf16>, vector<256x128xf32> -> vector<256x128xf32>
    %c3 = arith.constant 3 : index
    %c0_21 = arith.constant 0 : index
    %30 = vector.load %arg7[%c3, %c0_21] : memref<11x784xf32, #tpu.memory_space<vmem>>, vector<1x128xf32>
    %31 = vector.broadcast %30 : vector<1x128xf32> to vector<256x128xf32>
    %32 = arith.addf %29, %31 : vector<256x128xf32>
    %cst_22 = arith.constant 0.000000e+00 : f32
    %33 = vector.broadcast %cst_22 : f32 to vector<256x128xf32>
    %34 = arith.maximumf %32, %33 : vector<256x128xf32>
    %35 = arith.truncf %34 : vector<256x128xf32> to vector<256x128xbf16>
    %c2_23 = arith.constant 2 : index
    %c0_24 = arith.constant 0 : index
    %c0_25 = arith.constant 0 : index
    %36 = vector.load %arg4[%c2_23, %c0_24, %c0_25] : memref<7x128x128xbf16, #tpu.memory_space<vmem>>, vector<1x128x128xbf16>
    %37 = vector.shape_cast %36 : vector<1x128x128xbf16> to vector<128x128xbf16>
    %cst_26 = arith.constant dense<0.000000e+00> : vector<256x128xf32>
    %38 = tpu.matmul %35, %37, %cst_26 {dimension_numbers = #tpu.dot_dimension_numbers<[1], [0], [0], [1], [0, 0, 1, 1], [], []>} : vector<256x128xbf16>, vector<128x128xbf16>, vector<256x128xf32> -> vector<256x128xf32>
    %c4 = arith.constant 4 : index
    %c0_27 = arith.constant 0 : index
    %39 = vector.load %arg7[%c4, %c0_27] : memref<11x784xf32, #tpu.memory_space<vmem>>, vector<1x128xf32>
    %40 = vector.broadcast %39 : vector<1x128xf32> to vector<256x128xf32>
    %41 = arith.addf %38, %40 : vector<256x128xf32>
    %42 = arith.truncf %41 : vector<256x128xf32> to vector<256x128xbf16>
    %c3_28 = arith.constant 3 : index
    %c0_29 = arith.constant 0 : index
    %c0_30 = arith.constant 0 : index
    %43 = vector.load %arg4[%c3_28, %c0_29, %c0_30] : memref<7x128x128xbf16, #tpu.memory_space<vmem>>, vector<1x128x128xbf16>
    %44 = vector.shape_cast %43 : vector<1x128x128xbf16> to vector<128x128xbf16>
    %cst_31 = arith.constant dense<0.000000e+00> : vector<256x128xf32>
    %45 = tpu.matmul %42, %44, %cst_31 {dimension_numbers = #tpu.dot_dimension_numbers<[1], [0], [0], [1], [0, 0, 1, 1], [], []>} : vector<256x128xbf16>, vector<128x128xbf16>, vector<256x128xf32> -> vector<256x128xf32>
    %c5 = arith.constant 5 : index
    %c0_32 = arith.constant 0 : index
    %46 = vector.load %arg7[%c5, %c0_32] : memref<11x784xf32, #tpu.memory_space<vmem>>, vector<1x128xf32>
    %47 = vector.broadcast %46 : vector<1x128xf32> to vector<256x128xf32>
    %48 = arith.addf %45, %47 : vector<256x128xf32>
    %cst_33 = arith.constant 0.000000e+00 : f32
    %49 = vector.broadcast %cst_33 : f32 to vector<256x128xf32>
    %50 = arith.maximumf %48, %49 : vector<256x128xf32>
    %51 = arith.truncf %50 : vector<256x128xf32> to vector<256x128xbf16>
    %c4_34 = arith.constant 4 : index
    %c0_35 = arith.constant 0 : index
    %c0_36 = arith.constant 0 : index
    %52 = vector.load %arg4[%c4_34, %c0_35, %c0_36] : memref<7x128x128xbf16, #tpu.memory_space<vmem>>, vector<1x128x128xbf16>
    %53 = vector.shape_cast %52 : vector<1x128x128xbf16> to vector<128x128xbf16>
    %cst_37 = arith.constant dense<0.000000e+00> : vector<256x128xf32>
    %54 = tpu.matmul %51, %53, %cst_37 {dimension_numbers = #tpu.dot_dimension_numbers<[1], [0], [0], [1], [0, 0, 1, 1], [], []>} : vector<256x128xbf16>, vector<128x128xbf16>, vector<256x128xf32> -> vector<256x128xf32>
    %c6 = arith.constant 6 : index
    %c0_38 = arith.constant 0 : index
    %55 = vector.load %arg7[%c6, %c0_38] : memref<11x784xf32, #tpu.memory_space<vmem>>, vector<1x128xf32>
    %56 = vector.broadcast %55 : vector<1x128xf32> to vector<256x128xf32>
    %57 = arith.addf %54, %56 : vector<256x128xf32>
    %cst_39 = arith.constant 0.000000e+00 : f32
    %58 = vector.broadcast %cst_39 : f32 to vector<256x128xf32>
    %59 = arith.maximumf %57, %58 : vector<256x128xf32>
    %60 = arith.truncf %59 : vector<256x128xf32> to vector<256x128xbf16>
    %c5_40 = arith.constant 5 : index
    %c0_41 = arith.constant 0 : index
    %c0_42 = arith.constant 0 : index
    %61 = vector.load %arg4[%c5_40, %c0_41, %c0_42] : memref<7x128x128xbf16, #tpu.memory_space<vmem>>, vector<1x128x128xbf16>
    %62 = vector.shape_cast %61 : vector<1x128x128xbf16> to vector<128x128xbf16>
    %cst_43 = arith.constant dense<0.000000e+00> : vector<256x128xf32>
    %63 = tpu.matmul %60, %62, %cst_43 {dimension_numbers = #tpu.dot_dimension_numbers<[1], [0], [0], [1], [0, 0, 1, 1], [], []>} : vector<256x128xbf16>, vector<128x128xbf16>, vector<256x128xf32> -> vector<256x128xf32>
    %c7 = arith.constant 7 : index
    %c0_44 = arith.constant 0 : index
    %64 = vector.load %arg7[%c7, %c0_44] : memref<11x784xf32, #tpu.memory_space<vmem>>, vector<1x128xf32>
    %65 = vector.broadcast %64 : vector<1x128xf32> to vector<256x128xf32>
    %66 = arith.addf %63, %65 : vector<256x128xf32>
    %cst_45 = arith.constant 0.000000e+00 : f32
    %67 = vector.broadcast %cst_45 : f32 to vector<256x128xf32>
    %68 = arith.maximumf %66, %67 : vector<256x128xf32>
    %69 = arith.truncf %68 : vector<256x128xf32> to vector<256x128xbf16>
    %c6_46 = arith.constant 6 : index
    %c0_47 = arith.constant 0 : index
    %c0_48 = arith.constant 0 : index
    %70 = vector.load %arg4[%c6_46, %c0_47, %c0_48] : memref<7x128x128xbf16, #tpu.memory_space<vmem>>, vector<1x128x128xbf16>
    %71 = vector.shape_cast %70 : vector<1x128x128xbf16> to vector<128x128xbf16>
    %cst_49 = arith.constant dense<0.000000e+00> : vector<256x128xf32>
    %72 = tpu.matmul %69, %71, %cst_49 {dimension_numbers = #tpu.dot_dimension_numbers<[1], [0], [0], [1], [0, 0, 1, 1], [], []>} : vector<256x128xbf16>, vector<128x128xbf16>, vector<256x128xf32> -> vector<256x128xf32>
    %c8 = arith.constant 8 : index
    %c0_50 = arith.constant 0 : index
    %73 = vector.load %arg7[%c8, %c0_50] : memref<11x784xf32, #tpu.memory_space<vmem>>, vector<1x128xf32>
    %74 = vector.broadcast %73 : vector<1x128xf32> to vector<256x128xf32>
    %75 = arith.addf %72, %74 : vector<256x128xf32>
    %cst_51 = arith.constant 0.000000e+00 : f32
    %76 = vector.broadcast %cst_51 : f32 to vector<256x128xf32>
    %77 = arith.maximumf %75, %76 : vector<256x128xf32>
    %78 = arith.truncf %77 : vector<256x128xf32> to vector<256x128xbf16>
    %c0_52 = arith.constant 0 : index
    %c0_53 = arith.constant 0 : index
    %79 = vector.load %arg5[%c0_52, %c0_53] : memref<128x256xbf16, #tpu.memory_space<vmem>>, vector<128x256xbf16>
    %cst_54 = arith.constant dense<0.000000e+00> : vector<256x256xf32>
    %80 = tpu.matmul %78, %79, %cst_54 {dimension_numbers = #tpu.dot_dimension_numbers<[1], [0], [0], [1], [0, 0, 1, 1], [], []>} : vector<256x128xbf16>, vector<128x256xbf16>, vector<256x256xf32> -> vector<256x256xf32>
    %c9 = arith.constant 9 : index
    %c0_55 = arith.constant 0 : index
    %81 = vector.load %arg7[%c9, %c0_55] : memref<11x784xf32, #tpu.memory_space<vmem>>, vector<1x256xf32>
    %82 = vector.broadcast %81 : vector<1x256xf32> to vector<256x256xf32>
    %83 = arith.addf %80, %82 : vector<256x256xf32>
    %cst_56 = arith.constant 0.000000e+00 : f32
    %84 = vector.broadcast %cst_56 : f32 to vector<256x256xf32>
    %85 = arith.maximumf %83, %84 : vector<256x256xf32>
    %86 = arith.truncf %85 : vector<256x256xf32> to vector<256x256xbf16>
    %c0_57 = arith.constant 0 : index
    %c0_58 = arith.constant 0 : index
    %87 = vector.load %arg6[%c0_57, %c0_58] : memref<256x784xbf16, #tpu.memory_space<vmem>>, vector<256x784xbf16>
    %cst_59 = arith.constant dense<0.000000e+00> : vector<256x784xf32>
    %88 = tpu.matmul %86, %87, %cst_59 {dimension_numbers = #tpu.dot_dimension_numbers<[1], [0], [0], [1], [0, 0, 1, 1], [], []>} : vector<256x256xbf16>, vector<256x784xbf16>, vector<256x784xf32> -> vector<256x784xf32>
    %c10 = arith.constant 10 : index
    %c0_60 = arith.constant 0 : index
    %89 = vector.load %arg7[%c10, %c0_60] : memref<11x784xf32, #tpu.memory_space<vmem>>, vector<1x784xf32>
    %90 = vector.broadcast %89 : vector<1x784xf32> to vector<256x784xf32>
    %91 = arith.addf %88, %90 : vector<256x784xf32>
    %92 = arith.negf %91 : vector<256x784xf32>
    %93 = math.exp %92 : vector<256x784xf32>
    %cst_61 = arith.constant 1.000000e+00 : f32
    %94 = vector.broadcast %cst_61 : f32 to vector<256x784xf32>
    %95 = arith.addf %94, %93 : vector<256x784xf32>
    %96 = arith.divf %94, %95 : vector<256x784xf32>
    %c0_62 = arith.constant 0 : index
    %c0_63 = arith.constant 0 : index
    %97 = vector.load %arg8[%c0_62, %c0_63] : memref<256x784xf32, #tpu.memory_space<vmem>>, vector<256x784xf32>
    tpu.vector_store %arg8[%c0_62, %c0_63], %96 {strides = array<i32>} : memref<256x784xf32, #tpu.memory_space<vmem>>, vector<256x784xf32>,
    return
  }
  func.func @transform_0(%arg0: i32) -> (i32, i32) {
    %c0_i32 = arith.constant 0 : i32
    %c0_i32_0 = arith.constant 0 : i32
    return %arg0, %c0_i32 : i32, i32
  }
  func.func @transform_1(%arg0: i32) -> (i32, i32) {
    %c0_i32 = arith.constant 0 : i32
    %c0_i32_0 = arith.constant 0 : i32
    %c0_i32_1 = arith.constant 0 : i32
    return %c0_i32, %c0_i32_0 : i32, i32
  }
  func.func @transform_2(%arg0: i32) -> (i32, i32) {
    %c0_i32 = arith.constant 0 : i32
    %c0_i32_0 = arith.constant 0 : i32
    %c0_i32_1 = arith.constant 0 : i32
    return %c0_i32, %c0_i32_0 : i32, i32
  }
  func.func @transform_3(%arg0: i32) -> (i32, i32, i32) {
    %c0_i32 = arith.constant 0 : i32
    %c0_i32_0 = arith.constant 0 : i32
    %c0_i32_1 = arith.constant 0 : i32
    %c0_i32_2 = arith.constant 0 : i32
    return %c0_i32, %c0_i32_0, %c0_i32_1 : i32, i32, i32
  }
  func.func @transform_4(%arg0: i32) -> (i32, i32) {
    %c0_i32 = arith.constant 0 : i32
    %c0_i32_0 = arith.constant 0 : i32
    %c0_i32_1 = arith.constant 0 : i32
    return %c0_i32, %c0_i32_0 : i32, i32
  }
  func.func @transform_5(%arg0: i32) -> (i32, i32) {
    %c0_i32 = arith.constant 0 : i32
    %c0_i32_0 = arith.constant 0 : i32
    %c0_i32_1 = arith.constant 0 : i32
    return %c0_i32, %c0_i32_0 : i32, i32
  }
  func.func @transform_6(%arg0: i32) -> (i32, i32) {
    %c0_i32 = arith.constant 0 : i32
    %c0_i32_0 = arith.constant 0 : i32
    %c0_i32_1 = arith.constant 0 : i32
    return %c0_i32, %c0_i32_0 : i32, i32
  }
  func.func @transform_7(%arg0: i32) -> (i32, i32) {
    %c0_i32 = arith.constant 0 : i32
    %c0_i32_0 = arith.constant 0 : i32
    return %arg0, %c0_i32 : i32, i32
  }
}

</mosaic_0001>

<llo_original>
// kernel: tpu_custom_call.1
$region0: #{tpu_custom_call.1}
  #allocation0 [shape = 'u32[]', space=smem, size = 0x4, offset = 0x4, fixed_abs, tag = 'smem constant byte address 0x4 - core index']
  #allocation1 [shape = 'u32[72,128]{1,0:T(1,128)}', space=vmem, size = 0x9000, scoped, tag = 'internal scratch']
  %s0 = inlined_call_operand.vmem [shape: f32[512,784], index: 0, kind: input, shape index: {}]
  %s1 = inlined_call_operand.vmem [shape: bf16[784,256], index: 1, kind: input, shape index: {}]
  %s2 = inlined_call_operand.vmem [shape: bf16[256,128], index: 2, kind: input, shape index: {}]
  %s3 = inlined_call_operand.vmem [shape: bf16[7,128,128], index: 3, kind: input, shape index: {}]
  %s4 = inlined_call_operand.vmem [shape: bf16[128,256], index: 4, kind: input, shape index: {}]
  %s5 = inlined_call_operand.vmem [shape: bf16[256,784], index: 5, kind: input, shape index: {}]
  %s6 = inlined_call_operand.vmem [shape: f32[11,784], index: 6, kind: input, shape index: {}]
  %s7 = inlined_call_operand.vmem [shape: f32[512,784], index: 7, kind: output, shape index: {}]
  %s8 = sld [smem:[#allocation0]]
  $region61: #{tpu_custom_call.1} parent=0
    _
  %s10 = ssub.s32 1, %s8
  %s11 = scalar_select 0, %s10, %s8
  loop: start=0, step=1, limit=4
  $region2: #{tpu_custom_call.1} parent=0 // loop_pre_header
    _
  $region3: #{tpu_custom_call.1} parent=0 // loop_header
    %s13 = sphi 0, %s17
    %p14 = scmp.ge.s32.totalorder %s13, 4
    %s23 = sphi 0, %s25
    %s26 = sphi 0, %s23
    %s27 = sphi 0, %s26
    %s43 = sphi 0, %s27
    %s47 = sphi 0, %s47
    %s49 = sphi 0, %s47
    %s50 = sphi 0, %s49
    %s64 = sphi 0, %s50
    %s68 = sphi 0, %s68
    %s70 = sphi 0, %s68
    %s71 = sphi 0, %s70
    %s85 = sphi 0, %s71
    %s89 = sphi 0, %s89
    %s91 = sphi 0, %s89
    %s92 = sphi 0, %s91
    %s106 = sphi 0, %s92
    %s110 = sphi 0, %s110
    %s112 = sphi 0, %s110
    %s113 = sphi 0, %s112
    %s127 = sphi 0, %s113
    %s131 = sphi 0, %s131
    %s133 = sphi 0, %s131
    %s134 = sphi 0, %s133
    %s148 = sphi 0, %s134
    %s152 = sphi 0, %s152
    %s154 = sphi 0, %s152
    %s155 = sphi 0, %s154
    %s169 = sphi 0, %s155
    %s175 = sphi 0, %s177
    %s178 = sphi 0, %s175
    %s179 = sphi 0, %s178
    %s195 = sphi 0, %s179
  $region4: #{tpu_custom_call.1} parent=0 // loop_header_branch
    %16 = sbr.rel (%p14) target = $region8
  $region5: #{tpu_custom_call.1} parent=0 // loop_body
    %s18 = ssub.s32 %s13, 1
    %s19 = ssub.s32 %s13, 2
    %s20 = sadd.s32 %s13, 1
    %s21 = ssub.s32 %s13, %s20
    %p22 = scmp.eq.s32.totalorder %s21, 0
    %s24 = sadd.s32 %s23, 1
    %s25 = scalar_select %p22, %s23, %s24
    %p28 = pneg %p22
    %p29 = scmp.eq.s32.totalorder %s13, 1
    %p30 = por %p28, %p29
    %p31 = scmp.ne.s32.totalorder %s23, %s26
    %p32 = scmp.eq.s32.totalorder %s13, 0
    %p33 = por %p31, %p32
    %p34 = scmp.ne.s32.totalorder %s23, %s26
    %p35 = scmp.eq.s32.totalorder %s18, 1
    %p36 = por %p34, %p35
    %p37 = scmp.ne.s32.totalorder %s26, %s27
    %p38 = scmp.eq.s32.totalorder %s18, 0
    %p39 = por %p37, %p38
    %p40 = scmp.ne.s32.totalorder %s26, %s27
    %p41 = scmp.eq.s32.totalorder %s19, 1
    %p42 = por %p40, %p41
    %p44 = scmp.ne.s32.totalorder %s27, %s43
    %p45 = scmp.eq.s32.totalorder %s19, 0
    %p46 = por %p44, %p45
    %s48 = sadd.s32 %s47, 1
    %p51 = scmp.eq.s32.totalorder %s13, 1
    %p52 = scmp.ne.s32.totalorder %s47, %s49
    %p53 = scmp.eq.s32.totalorder %s13, 0
    %p54 = por %p52, %p53
    %p55 = scmp.ne.s32.totalorder %s47, %s49
    %p56 = scmp.eq.s32.totalorder %s18, 1
    %p57 = por %p55, %p56
    %p58 = scmp.ne.s32.totalorder %s49, %s50
    %p59 = scmp.eq.s32.totalorder %s18, 0
    %p60 = por %p58, %p59
    %p61 = scmp.ne.s32.totalorder %s49, %s50
    %p62 = scmp.eq.s32.totalorder %s19, 1
    %p63 = por %p61, %p62
    %p65 = scmp.ne.s32.totalorder %s50, %s64
    %p66 = scmp.eq.s32.totalorder %s19, 0
    %p67 = por %p65, %p66
    %s69 = sadd.s32 %s68, 1
    %p72 = scmp.eq.s32.totalorder %s13, 1
    %p73 = scmp.ne.s32.totalorder %s68, %s70
    %p74 = scmp.eq.s32.totalorder %s13, 0
    %p75 = por %p73, %p74
    %p76 = scmp.ne.s32.totalorder %s68, %s70
    %p77 = scmp.eq.s32.totalorder %s18, 1
    %p78 = por %p76, %p77
    %p79 = scmp.ne.s32.totalorder %s70, %s71
    %p80 = scmp.eq.s32.totalorder %s18, 0
    %p81 = por %p79, %p80
    %p82 = scmp.ne.s32.totalorder %s70, %s71
    %p83 = scmp.eq.s32.totalorder %s19, 1
    %p84 = por %p82, %p83
    %p86 = scmp.ne.s32.totalorder %s71, %s85
    %p87 = scmp.eq.s32.totalorder %s19, 0
    %p88 = por %p86, %p87
    %s90 = sadd.s32 %s89, 1
    %p93 = scmp.eq.s32.totalorder %s13, 1
    %p94 = scmp.ne.s32.totalorder %s89, %s91
    %p95 = scmp.eq.s32.totalorder %s13, 0
    %p96 = por %p94, %p95
    %p97 = scmp.ne.s32.totalorder %s89, %s91
    %p98 = scmp.eq.s32.totalorder %s18, 1
    %p99 = por %p97, %p98
    %p100 = scmp.ne.s32.totalorder %s91, %s92
    %p101 = scmp.eq.s32.totalorder %s18, 0
    %p102 = por %p100, %p101
    %p103 = scmp.ne.s32.totalorder %s91, %s92
    %p104 = scmp.eq.s32.totalorder %s19, 1
    %p105 = por %p103, %p104
    %p107 = scmp.ne.s32.totalorder %s92, %s106
    %p108 = scmp.eq.s32.totalorder %s19, 0
    %p109 = por %p107, %p108
    %s111 = sadd.s32 %s110, 1
    %p114 = scmp.eq.s32.totalorder %s13, 1
    %p115 = scmp.ne.s32.totalorder %s110, %s112
    %p116 = scmp.eq.s32.totalorder %s13, 0
    %p117 = por %p115, %p116
    %p118 = scmp.ne.s32.totalorder %s110, %s112
    %p119 = scmp.eq.s32.totalorder %s18, 1
    %p120 = por %p118, %p119
    %p121 = scmp.ne.s32.totalorder %s112, %s113
    %p122 = scmp.eq.s32.totalorder %s18, 0
    %p123 = por %p121, %p122
    %p124 = scmp.ne.s32.totalorder %s112, %s113
    %p125 = scmp.eq.s32.totalorder %s19, 1
    %p126 = por %p124, %p125
    %p128 = scmp.ne.s32.totalorder %s113, %s127
    %p129 = scmp.eq.s32.totalorder %s19, 0
    %p130 = por %p128, %p129
    %s132 = sadd.s32 %s131, 1
    %p135 = scmp.eq.s32.totalorder %s13, 1
    %p136 = scmp.ne.s32.totalorder %s131, %s133
    %p137 = scmp.eq.s32.totalorder %s13, 0
    %p138 = por %p136, %p137
    %p139 = scmp.ne.s32.totalorder %s131, %s133
    %p140 = scmp.eq.s32.totalorder %s18, 1
    %p141 = por %p139, %p140
    %p142 = scmp.ne.s32.totalorder %s133, %s134
    %p143 = scmp.eq.s32.totalorder %s18, 0
    %p144 = por %p142, %p143
    %p145 = scmp.ne.s32.totalorder %s133, %s134
    %p146 = scmp.eq.s32.totalorder %s19, 1
    %p147 = por %p145, %p146
    %p149 = scmp.ne.s32.totalorder %s134, %s148
    %p150 = scmp.eq.s32.totalorder %s19, 0
    %p151 = por %p149, %p150
    %s153 = sadd.s32 %s152, 1
    %p156 = scmp.eq.s32.totalorder %s13, 1
    %p157 = scmp.ne.s32.totalorder %s152, %s154
    %p158 = scmp.eq.s32.totalorder %s13, 0
    %p159 = por %p157, %p158
    %p160 = scmp.ne.s32.totalorder %s152, %s154
    %p161 = scmp.eq.s32.totalorder %s18, 1
    %p162 = por %p160, %p161
    %p163 = scmp.ne.s32.totalorder %s154, %s155
    %p164 = scmp.eq.s32.totalorder %s18, 0
    %p165 = por %p163, %p164
    %p166 = scmp.ne.s32.totalorder %s154, %s155
    %p167 = scmp.eq.s32.totalorder %s19, 1
    %p168 = por %p166, %p167
    %p170 = scmp.ne.s32.totalorder %s155, %s169
    %p171 = scmp.eq.s32.totalorder %s19, 0
    %p172 = por %p170, %p171
    %s173 = ssub.s32 %s13, %s20
    %p174 = scmp.eq.s32.totalorder %s173, 0
    %s176 = sadd.s32 %s175, 1
    %s177 = scalar_select %p174, %s175, %s176
    %p180 = pneg %p174
    %p181 = scmp.eq.s32.totalorder %s13, 1
    %p182 = por %p180, %p181
    %p183 = scmp.ne.s32.totalorder %s175, %s178
    %p184 = scmp.eq.s32.totalorder %s13, 0
    %p185 = por %p183, %p184
    %p186 = scmp.ne.s32.totalorder %s175, %s178
    %p187 = scmp.eq.s32.totalorder %s18, 1
    %p188 = por %p186, %p187
    %p189 = scmp.ne.s32.totalorder %s178, %s179
    %p190 = scmp.eq.s32.totalorder %s18, 0
    %p191 = por %p189, %p190
    %p192 = scmp.ne.s32.totalorder %s178, %s179
    %p193 = scmp.eq.s32.totalorder %s19, 1
    %p194 = por %p192, %p193
    %p196 = scmp.ne.s32.totalorder %s179, %s195
    %p197 = scmp.eq.s32.totalorder %s19, 0
    %p198 = por %p196, %p197
    %p199 = scmp.le.s32.totalorder 1, %s13
    %p200 = scmp.lt.s32.totalorder %s13, 3
    %p201 = pnand %p199, %p200
    %p202 = pneg %p201
    // Predicated region
    $region9: #{tpu_custom_call.1} parent=5 // pred_check
      _
    $region10: #{tpu_custom_call.1} parent=5 // pred_check_branch
      %204 = sbr.rel (%p201) target = $region12
    $region11: #{tpu_custom_call.1} parent=5 // pred_region
      %s205 = ssub.s32 %s13, 1
      // Predicated region
      $region13: #{tpu_custom_call.1} parent=11 // pred_check
        %p206 = pneg %p60
      $region14: #{tpu_custom_call.1} parent=11 // pred_check_branch
        %208 = sbr.rel (%p206) target = $region16
      $region15: #{tpu_custom_call.1} parent=11 // pred_region
        _
      $region16: #{tpu_custom_call.1} parent=11 // pred_fallthru
        _
      // Predicated region
      $region17: #{tpu_custom_call.1} parent=11 // pred_check
        %p209 = pneg %p81
      $region18: #{tpu_custom_call.1} parent=11 // pred_check_branch
        %211 = sbr.rel (%p209) target = $region20
      $region19: #{tpu_custom_call.1} parent=11 // pred_region
        _
      $region20: #{tpu_custom_call.1} parent=11 // pred_fallthru
        _
      // Predicated region
      $region21: #{tpu_custom_call.1} parent=11 // pred_check
        %p212 = pneg %p102
      $region22: #{tpu_custom_call.1} parent=11 // pred_check_branch
        %214 = sbr.rel (%p212) target = $region24
      $region23: #{tpu_custom_call.1} parent=11 // pred_region
        _
      $region24: #{tpu_custom_call.1} parent=11 // pred_fallthru
        _
      // Predicated region
      $region25: #{tpu_custom_call.1} parent=11 // pred_check
        %p215 = pneg %p123
      $region26: #{tpu_custom_call.1} parent=11 // pred_check_branch
        %217 = sbr.rel (%p215) target = $region28
      $region27: #{tpu_custom_call.1} parent=11 // pred_region
        _
      $region28: #{tpu_custom_call.1} parent=11 // pred_fallthru
        _
      // Predicated region
      $region29: #{tpu_custom_call.1} parent=11 // pred_check
        %p218 = pneg %p144
      $region30: #{tpu_custom_call.1} parent=11 // pred_check_branch
        %220 = sbr.rel (%p218) target = $region32
      $region31: #{tpu_custom_call.1} parent=11 // pred_region
        _
      $region32: #{tpu_custom_call.1} parent=11 // pred_fallthru
        _
      // Predicated region
      $region33: #{tpu_custom_call.1} parent=11 // pred_check
        %p221 = pneg %p165
      $region34: #{tpu_custom_call.1} parent=11 // pred_check_branch
        %223 = sbr.rel (%p221) target = $region36
      $region35: #{tpu_custom_call.1} parent=11 // pred_region
        _
      $region36: #{tpu_custom_call.1} parent=11 // pred_fallthru
        _
    $region12: #{tpu_custom_call.1} parent=5 // pred_fallthru
      _
    %p224 = scmp.lt.s32.totalorder %s13, 2
    // Predicated region
    $region37: #{tpu_custom_call.1} parent=5 // pred_check
      %p225 = pneg %p224
    $region38: #{tpu_custom_call.1} parent=5 // pred_check_branch
      %227 = sbr.rel (%p225) target = $region40
    $region39: #{tpu_custom_call.1} parent=5 // pred_region
      // Predicated region
      $region41: #{tpu_custom_call.1} parent=39 // pred_check
        %p228 = pneg %p33
      $region42: #{tpu_custom_call.1} parent=39 // pred_check_branch
        %230 = sbr.rel (%p228) target = $region44
      $region43: #{tpu_custom_call.1} parent=39 // pred_region
        %s231 = smul.u32 32, %s13
        %p232 = scmp.lt.s32.totalorder %s231, 63
        %s233 = scalar_select %p232, %s231, 63
        %s234 = smul.addr %s233, 7
        %s235 = smul.addr %s234, 8
        %s236 = scalar_lea.vmem %s0, %s235
        %s237 = smul.u32 32, %s13
      $region44: #{tpu_custom_call.1} parent=39 // pred_fallthru
        _
    $region40: #{tpu_custom_call.1} parent=5 // pred_fallthru
      _
    %p238 = scmp.le.s32.totalorder 1, %s13
    %p239 = scmp.lt.s32.totalorder %s13, 3
    %p240 = pnand %p238, %p239
    %p241 = pneg %p240
    // Predicated region
    $region45: #{tpu_custom_call.1} parent=5 // pred_check
      _
    $region46: #{tpu_custom_call.1} parent=5 // pred_check_branch
      %243 = sbr.rel (%p240) target = $region48
    $region47: #{tpu_custom_call.1} parent=5 // pred_region
      %s244 = ssub.s32 %s13, 1
      %s245 = smul.u32 32, %s18
      %p246 = scmp.lt.s32.totalorder %s245, 63
      %s247 = scalar_select %p246, %s245, 63
      %s248 = smul.addr %s247, 7
      %s249 = smul.addr %s248, 8
      %s250 = scalar_lea.vmem %s0, %s249
      %p251 = pneg %p39
      %p252 = pneg %p36
      %p253 = pneg %p60
      %p254 = pneg %p57
      %p255 = pneg %p81
      %p256 = pneg %p78
      %p257 = pneg %p102
      %p258 = pneg %p99
      %p259 = pneg %p123
      %p260 = pneg %p120
      %p261 = pneg %p144
      %p262 = pneg %p141
      %p263 = pneg %p165
      %p264 = pneg %p162
      %p265 = pneg %p191
      %p266 = pneg %p188
      %s267 = smul.u32 32, %s18
      %p268 = scmp.lt.s32.totalorder %s267, 63
      %s269 = scalar_select %p268, %s267, 63
      %s270 = smul.addr %s269, 7
      %s271 = smul.addr %s270, 8
      %s272 = scalar_lea.vmem %s7, %s271
      %s273 = smul.u32 32, %s18
      %p274 = scmp.lt.s32.totalorder %s273, 63
      %s275 = scalar_select %p274, %s273, 63
      %s276 = smul.addr %s275, 7
      %s277 = smul.addr %s276, 8
      %s278 = scalar_lea.vmem %s0, %s277
      %s279 = smul.u32 32, %s18
      %s280 = smul.u32 32, %s18
      %p281 = scmp.lt.s32.totalorder %s280, 63
      %s282 = scalar_select %p281, %s280, 63
      %s283 = smul.addr %s282, 7
      %s284 = smul.addr %s283, 8
      %s285 = scalar_lea.vmem %s7, %s284
      %s286 = smul.u32 32, %s18
      %v288 = vld [vmem:[%s278] sm:$0xff]
      %v289 = vld [vmem:[%s278 + $0x8] sm:$0xff]
      %v290 = vld [vmem:[%s278 + $0x10] sm:$0xff]
      %v291 = vld [vmem:[%s278 + $0x18] sm:$0xff]
      %v292 = vld [vmem:[%s278 + $0x20] sm:$0xff]
      %v293 = vld [vmem:[%s278 + $0x28] sm:$0xff]
      %v294 = vld [vmem:[%s278 + $0x30] sm:$0xff]
      %v295 = vld [vmem:[%s278 + $0x38] sm:$0xff]
      %v296 = vld [vmem:[%s278 + $0x40] sm:$0xff]
      %v297 = vld [vmem:[%s278 + $0x48] sm:$0xff]
      %v298 = vld [vmem:[%s278 + $0x50] sm:$0xff]
      %v299 = vld [vmem:[%s278 + $0x58] sm:$0xff]
      %v300 = vld [vmem:[%s278 + $0x60] sm:$0xff]
      %v301 = vld [vmem:[%s278 + $0x68] sm:$0xff]
      %v302 = vld [vmem:[%s278 + $0x70] sm:$0xff]
      %v303 = vld [vmem:[%s278 + $0x78] sm:$0xff]
      %v304 = vld [vmem:[%s278 + $0x80] sm:$0xff]
      %v305 = vld [vmem:[%s278 + $0x88] sm:$0xff]
      %v306 = vld [vmem:[%s278 + $0x90] sm:$0xff]
      %v307 = vld [vmem:[%s278 + $0x98] sm:$0xff]
      %v308 = vld [vmem:[%s278 + $0xa0] sm:$0xff]
      %v309 = vld [vmem:[%s278 + $0xa8] sm:$0xff]
      %v310 = vld [vmem:[%s278 + $0xb0] sm:$0xff]
      %v311 = vld [vmem:[%s278 + $0xb8] sm:$0xff]
      %v312 = vld [vmem:[%s278 + $0xc0] sm:$0xff]
      %v313 = vld [vmem:[%s278 + $0xc8] sm:$0xff]
      %v314 = vld [vmem:[%s278 + $0xd0] sm:$0xff]
      %v315 = vld [vmem:[%s278 + $0xd8] sm:$0xff]
      %v316 = vld [vmem:[%s278 + $0xe0] sm:$0xff]
      %v317 = vld [vmem:[%s278 + $0xe8] sm:$0xff]
      %v318 = vld [vmem:[%s278 + $0xf0] sm:$0xff]
      %v319 = vld [vmem:[%s278 + $0xf8] sm:$0xff]
      %v320 = vld [vmem:[%s278 + $0x100] sm:$0xff]
      %v321 = vld [vmem:[%s278 + $0x108] sm:$0xff]
      %v322 = vld [vmem:[%s278 + $0x110] sm:$0xff]
      %v323 = vld [vmem:[%s278 + $0x118] sm:$0xff]
      %v324 = vld [vmem:[%s278 + $0x120] sm:$0xff]
      %v325 = vld [vmem:[%s278 + $0x128] sm:$0xff]
      %v326 = vld [vmem:[%s278 + $0x130] sm:$0xff]
      %v327 = vld [vmem:[%s278 + $0x138] sm:$0xff]
      %v328 = vld [vmem:[%s278 + $0x140] sm:$0xff]
      %v329 = vld [vmem:[%s278 + $0x148] sm:$0xff]
      %v330 = vld [vmem:[%s278 + $0x150] sm:$0xff]
      %v331 = vld [vmem:[%s278 + $0x158] sm:$0xff]
      %v332 = vld [vmem:[%s278 + $0x160] sm:$0xff]
      %v333 = vld [vmem:[%s278 + $0x168] sm:$0xff]
      %v334 = vld [vmem:[%s278 + $0x170] sm:$0xff]
      %v335 = vld [vmem:[%s278 + $0x178] sm:$0xff]
      %v336 = vld [vmem:[%s278 + $0x180] sm:$0xff]
      %v337 = vld [vmem:[%s278 + $0x188] sm:$0xff]
      %v338 = vld [vmem:[%s278 + $0x190] sm:$0xff]
      %v339 = vld [vmem:[%s278 + $0x198] sm:$0xff]
      %v340 = vld [vmem:[%s278 + $0x1a0] sm:$0xff]
      %v341 = vld [vmem:[%s278 + $0x1a8] sm:$0xff]
      %v342 = vld [vmem:[%s278 + $0x1b0] sm:$0xff]
      %v343 = vld [vmem:[%s278 + $0x1b8] sm:$0xff]
      %v344 = vld [vmem:[%s278 + $0x1c0] sm:$0xff]
      %v345 = vld [vmem:[%s278 + $0x1c8] sm:$0xff]
      %v346 = vld [vmem:[%s278 + $0x1d0] sm:$0xff]
      %v347 = vld [vmem:[%s278 + $0x1d8] sm:$0xff]
      %v348 = vld [vmem:[%s278 + $0x1e0] sm:$0xff]
      %v349 = vld [vmem:[%s278 + $0x1e8] sm:$0xff]
      %v350 = vld [vmem:[%s278 + $0x1f0] sm:$0xff]
      %v351 = vld [vmem:[%s278 + $0x1f8] sm:$0xff]
      %v352 = vld [vmem:[%s278 + $0x200] sm:$0xff]
      %v353 = vld [vmem:[%s278 + $0x208] sm:$0xff]
      %v354 = vld [vmem:[%s278 + $0x210] sm:$0xff]
      %v355 = vld [vmem:[%s278 + $0x218] sm:$0xff]
      %v356 = vld [vmem:[%s278 + $0x220] sm:$0xff]
      %v357 = vld [vmem:[%s278 + $0x228] sm:$0xff]
      %v358 = vld [vmem:[%s278 + $0x230] sm:$0xff]
      %v359 = vld [vmem:[%s278 + $0x238] sm:$0xff]
      %v360 = vld [vmem:[%s278 + $0x240] sm:$0xff]
      %v361 = vld [vmem:[%s278 + $0x248] sm:$0xff]
      %v362 = vld [vmem:[%s278 + $0x250] sm:$0xff]
      %v363 = vld [vmem:[%s278 + $0x258] sm:$0xff]
      %v364 = vld [vmem:[%s278 + $0x260] sm:$0xff]
      %v365 = vld [vmem:[%s278 + $0x268] sm:$0xff]
      %v366 = vld [vmem:[%s278 + $0x270] sm:$0xff]
      %v367 = vld [vmem:[%s278 + $0x278] sm:$0xff]
      %v368 = vld [vmem:[%s278 + $0x280] sm:$0xff]
      %v369 = vld [vmem:[%s278 + $0x288] sm:$0xff]
      %v370 = vld [vmem:[%s278 + $0x290] sm:$0xff]
      %v371 = vld [vmem:[%s278 + $0x298] sm:$0xff]
      %v372 = vld [vmem:[%s278 + $0x2a0] sm:$0xff]
      %v373 = vld [vmem:[%s278 + $0x2a8] sm:$0xff]
      %v374 = vld [vmem:[%s278 + $0x2b0] sm:$0xff]
      %v375 = vld [vmem:[%s278 + $0x2b8] sm:$0xff]
      %v376 = vld [vmem:[%s278 + $0x2c0] sm:$0xff]
      %v377 = vld [vmem:[%s278 + $0x2c8] sm:$0xff]
      %v378 = vld [vmem:[%s278 + $0x2d0] sm:$0xff]
      %v379 = vld [vmem:[%s278 + $0x2d8] sm:$0xff]
      %v380 = vld [vmem:[%s278 + $0x2e0] sm:$0xff]
      %v381 = vld [vmem:[%s278 + $0x2e8] sm:$0xff]
      %v382 = vld [vmem:[%s278 + $0x2f0] sm:$0xff]
      %v383 = vld [vmem:[%s278 + $0x2f8] sm:$0xff]
      %v384 = vld [vmem:[%s278 + $0x300] sm:$0xff]
      %v385 = vld [vmem:[%s278 + $0x308] sm:$0xff]
      %v386 = vld [vmem:[%s278 + $0x310] sm:$0xff]
      %v387 = vld [vmem:[%s278 + $0x318] sm:$0xff]
      %v388 = vld [vmem:[%s278 + $0x320] sm:$0xff]
      %v389 = vld [vmem:[%s278 + $0x328] sm:$0xff]
      %v390 = vld [vmem:[%s278 + $0x330] sm:$0xff]
      %v391 = vld [vmem:[%s278 + $0x338] sm:$0xff]
      %v392 = vld [vmem:[%s278 + $0x340] sm:$0xff]
      %v393 = vld [vmem:[%s278 + $0x348] sm:$0xff]
      %v394 = vld [vmem:[%s278 + $0x350] sm:$0xff]
      %v395 = vld [vmem:[%s278 + $0x358] sm:$0xff]
      %v396 = vld [vmem:[%s278 + $0x360] sm:$0xff]
      %v397 = vld [vmem:[%s278 + $0x368] sm:$0xff]
      %v398 = vld [vmem:[%s278 + $0x370] sm:$0xff]
      %v399 = vld [vmem:[%s278 + $0x378] sm:$0xff]
      %v400 = vld [vmem:[%s278 + $0x380] sm:$0xff]
      %v401 = vld [vmem:[%s278 + $0x388] sm:$0xff]
      %v402 = vld [vmem:[%s278 + $0x390] sm:$0xff]
      %v403 = vld [vmem:[%s278 + $0x398] sm:$0xff]
      %v404 = vld [vmem:[%s278 + $0x3a0] sm:$0xff]
      %v405 = vld [vmem:[%s278 + $0x3a8] sm:$0xff]
      %v406 = vld [vmem:[%s278 + $0x3b0] sm:$0xff]
      %v407 = vld [vmem:[%s278 + $0x3b8] sm:$0xff]
      %v408 = vld [vmem:[%s278 + $0x3c0] sm:$0xff]
      %v409 = vld [vmem:[%s278 + $0x3c8] sm:$0xff]
      %v410 = vld [vmem:[%s278 + $0x3d0] sm:$0xff]
      %v411 = vld [vmem:[%s278 + $0x3d8] sm:$0xff]
      %v412 = vld [vmem:[%s278 + $0x3e0] sm:$0xff]
      %v413 = vld [vmem:[%s278 + $0x3e8] sm:$0xff]
      %v414 = vld [vmem:[%s278 + $0x3f0] sm:$0xff]
      %v415 = vld [vmem:[%s278 + $0x3f8] sm:$0xff]
      %v416 = vld [vmem:[%s278 + $0x400] sm:$0xff]
      %v417 = vld [vmem:[%s278 + $0x408] sm:$0xff]
      %v418 = vld [vmem:[%s278 + $0x410] sm:$0xff]
      %v419 = vld [vmem:[%s278 + $0x418] sm:$0xff]
      %v420 = vld [vmem:[%s278 + $0x420] sm:$0xff]
      %v421 = vld [vmem:[%s278 + $0x428] sm:$0xff]
      %v422 = vld [vmem:[%s278 + $0x430] sm:$0xff]
      %v423 = vld [vmem:[%s278 + $0x438] sm:$0xff]
      %v424 = vld [vmem:[%s278 + $0x440] sm:$0xff]
      %v425 = vld [vmem:[%s278 + $0x448] sm:$0xff]
      %v426 = vld [vmem:[%s278 + $0x450] sm:$0xff]
      %v427 = vld [vmem:[%s278 + $0x458] sm:$0xff]
      %v428 = vld [vmem:[%s278 + $0x460] sm:$0xff]
      %v429 = vld [vmem:[%s278 + $0x468] sm:$0xff]
      %v430 = vld [vmem:[%s278 + $0x470] sm:$0xff]
      %v431 = vld [vmem:[%s278 + $0x478] sm:$0xff]
      %v432 = vld [vmem:[%s278 + $0x480] sm:$0xff]
      %v433 = vld [vmem:[%s278 + $0x488] sm:$0xff]
      %v434 = vld [vmem:[%s278 + $0x490] sm:$0xff]
      %v435 = vld [vmem:[%s278 + $0x498] sm:$0xff]
      %v436 = vld [vmem:[%s278 + $0x4a0] sm:$0xff]
      %v437 = vld [vmem:[%s278 + $0x4a8] sm:$0xff]
      %v438 = vld [vmem:[%s278 + $0x4b0] sm:$0xff]
      %v439 = vld [vmem:[%s278 + $0x4b8] sm:$0xff]
      %v440 = vld [vmem:[%s278 + $0x4c0] sm:$0xff]
      %v441 = vld [vmem:[%s278 + $0x4c8] sm:$0xff]
      %v442 = vld [vmem:[%s278 + $0x4d0] sm:$0xff]
      %v443 = vld [vmem:[%s278 + $0x4d8] sm:$0xff]
      %v444 = vld [vmem:[%s278 + $0x4e0] sm:$0xff]
      %v445 = vld [vmem:[%s278 + $0x4e8] sm:$0xff]
      %v446 = vld [vmem:[%s278 + $0x4f0] sm:$0xff]
      %v447 = vld [vmem:[%s278 + $0x4f8] sm:$0xff]
      %v448 = vld [vmem:[%s278 + $0x500] sm:$0xff]
      %v449 = vld [vmem:[%s278 + $0x508] sm:$0xff]
      %v450 = vld [vmem:[%s278 + $0x510] sm:$0xff]
      %v451 = vld [vmem:[%s278 + $0x518] sm:$0xff]
      %v452 = vld [vmem:[%s278 + $0x520] sm:$0xff]
      %v453 = vld [vmem:[%s278 + $0x528] sm:$0xff]
      %v454 = vld [vmem:[%s278 + $0x530] sm:$0xff]
      %v455 = vld [vmem:[%s278 + $0x538] sm:$0xff]
      %v456 = vld [vmem:[%s278 + $0x540] sm:$0xff]
      %v457 = vld [vmem:[%s278 + $0x548] sm:$0xff]
      %v458 = vld [vmem:[%s278 + $0x550] sm:$0xff]
      %v459 = vld [vmem:[%s278 + $0x558] sm:$0xff]
      %v460 = vld [vmem:[%s278 + $0x560] sm:$0xff]
      %v461 = vld [vmem:[%s278 + $0x568] sm:$0xff]
      %v462 = vld [vmem:[%s278 + $0x570] sm:$0xff]
      %v463 = vld [vmem:[%s278 + $0x578] sm:$0xff]
      %v464 = vld [vmem:[%s278 + $0x580] sm:$0xff]
      %v465 = vld [vmem:[%s278 + $0x588] sm:$0xff]
      %v466 = vld [vmem:[%s278 + $0x590] sm:$0xff]
      %v467 = vld [vmem:[%s278 + $0x598] sm:$0xff]
      %v468 = vld [vmem:[%s278 + $0x5a0] sm:$0xff]
      %v469 = vld [vmem:[%s278 + $0x5a8] sm:$0xff]
      %v470 = vld [vmem:[%s278 + $0x5b0] sm:$0xff]
      %v471 = vld [vmem:[%s278 + $0x5b8] sm:$0xff]
      %v472 = vld [vmem:[%s278 + $0x5c0] sm:$0xff]
      %v473 = vld [vmem:[%s278 + $0x5c8] sm:$0xff]
      %v474 = vld [vmem:[%s278 + $0x5d0] sm:$0xff]
      %v475 = vld [vmem:[%s278 + $0x5d8] sm:$0xff]
      %v476 = vld [vmem:[%s278 + $0x5e0] sm:$0xff]
      %v477 = vld [vmem:[%s278 + $0x5e8] sm:$0xff]
      %v478 = vld [vmem:[%s278 + $0x5f0] sm:$0xff]
      %v479 = vld [vmem:[%s278 + $0x5f8] sm:$0xff]
      %v480 = vld [vmem:[%s278 + $0x600] sm:$0xff]
      %v481 = vld [vmem:[%s278 + $0x608] sm:$0xff]
      %v482 = vld [vmem:[%s278 + $0x610] sm:$0xff]
      %v483 = vld [vmem:[%s278 + $0x618] sm:$0xff]
      %v484 = vld [vmem:[%s278 + $0x620] sm:$0xff]
      %v485 = vld [vmem:[%s278 + $0x628] sm:$0xff]
      %v486 = vld [vmem:[%s278 + $0x630] sm:$0xff]
      %v487 = vld [vmem:[%s278 + $0x638] sm:$0xff]
      %v488 = vld [vmem:[%s278 + $0x640] sm:$0xff]
      %v489 = vld [vmem:[%s278 + $0x648] sm:$0xff]
      %v490 = vld [vmem:[%s278 + $0x650] sm:$0xff]
      %v491 = vld [vmem:[%s278 + $0x658] sm:$0xff]
      %v492 = vld [vmem:[%s278 + $0x660] sm:$0xff]
      %v493 = vld [vmem:[%s278 + $0x668] sm:$0xff]
      %v494 = vld [vmem:[%s278 + $0x670] sm:$0xff]
      %v495 = vld [vmem:[%s278 + $0x678] sm:$0xff]
      %v496 = vld [vmem:[%s278 + $0x680] sm:$0xff]
      %v497 = vld [vmem:[%s278 + $0x688] sm:$0xff]
      %v498 = vld [vmem:[%s278 + $0x690] sm:$0xff]
      %v499 = vld [vmem:[%s278 + $0x698] sm:$0xff]
      %v500 = vld [vmem:[%s278 + $0x6a0] sm:$0xff]
      %v501 = vld [vmem:[%s278 + $0x6a8] sm:$0xff]
      %v502 = vld [vmem:[%s278 + $0x6b0] sm:$0xff]
      %v503 = vld [vmem:[%s278 + $0x6b8] sm:$0xff]
      %v504 = vld [vmem:[%s278 + $0x6c0] sm:$0xff]
      %v505 = vld [vmem:[%s278 + $0x6c8] sm:$0xff]
      %v506 = vld [vmem:[%s278 + $0x6d0] sm:$0xff]
      %v507 = vld [vmem:[%s278 + $0x6d8] sm:$0xff]
      %v508 = vld [vmem:[%s278 + $0x6e0] sm:$0xff]
      %v509 = vld [vmem:[%s278 + $0x6e8] sm:$0xff]
      %v510 = vld [vmem:[%s278 + $0x6f0] sm:$0xff]
      %v511 = vld [vmem:[%s278 + $0x6f8] sm:$0xff]
      %v512 = vpack.c.bf16 %v295, %v288
      %v513 = vpack.c.bf16 %v296, %v289
      %v514 = vpack.c.bf16 %v297, %v290
      %v515 = vpack.c.bf16 %v298, %v291
      %v516 = vpack.c.bf16 %v299, %v292
      %v517 = vpack.c.bf16 %v300, %v293
      %v518 = vpack.c.bf16 %v301, %v294
      %v519 = vpack.c.bf16 %v309, %v302
      %v520 = vpack.c.bf16 %v310, %v303
      %v521 = vpack.c.bf16 %v311, %v304
      %v522 = vpack.c.bf16 %v312, %v305
      %v523 = vpack.c.bf16 %v313, %v306
      %v524 = vpack.c.bf16 %v314, %v307
      %v525 = vpack.c.bf16 %v315, %v308
      %v526 = vpack.c.bf16 %v323, %v316
      %v527 = vpack.c.bf16 %v324, %v317
      %v528 = vpack.c.bf16 %v325, %v318
      %v529 = vpack.c.bf16 %v326, %v319
      %v530 = vpack.c.bf16 %v327, %v320
      %v531 = vpack.c.bf16 %v328, %v321
      %v532 = vpack.c.bf16 %v329, %v322
      %v533 = vpack.c.bf16 %v337, %v330
      %v534 = vpack.c.bf16 %v338, %v331
      %v535 = vpack.c.bf16 %v339, %v332
      %v536 = vpack.c.bf16 %v340, %v333
      %v537 = vpack.c.bf16 %v341, %v334
      %v538 = vpack.c.bf16 %v342, %v335
      %v539 = vpack.c.bf16 %v343, %v336
      %v540 = vpack.c.bf16 %v351, %v344
      %v541 = vpack.c.bf16 %v352, %v345
      %v542 = vpack.c.bf16 %v353, %v346
      %v543 = vpack.c.bf16 %v354, %v347
      %v544 = vpack.c.bf16 %v355, %v348
      %v545 = vpack.c.bf16 %v356, %v349
      %v546 = vpack.c.bf16 %v357, %v350
      %v547 = vpack.c.bf16 %v365, %v358
      %v548 = vpack.c.bf16 %v366, %v359
      %v549 = vpack.c.bf16 %v367, %v360
      %v550 = vpack.c.bf16 %v368, %v361
      %v551 = vpack.c.bf16 %v369, %v362
      %v552 = vpack.c.bf16 %v370, %v363
      %v553 = vpack.c.bf16 %v371, %v364
      %v554 = vpack.c.bf16 %v379, %v372
      %v555 = vpack.c.bf16 %v380, %v373
      %v556 = vpack.c.bf16 %v381, %v374
      %v557 = vpack.c.bf16 %v382, %v375
      %v558 = vpack.c.bf16 %v383, %v376
      %v559 = vpack.c.bf16 %v384, %v377
      %v560 = vpack.c.bf16 %v385, %v378
      %v561 = vpack.c.bf16 %v393, %v386
      %v562 = vpack.c.bf16 %v394, %v387
      %v563 = vpack.c.bf16 %v395, %v388
      %v564 = vpack.c.bf16 %v396, %v389
      %v565 = vpack.c.bf16 %v397, %v390
      %v566 = vpack.c.bf16 %v398, %v391
      %v567 = vpack.c.bf16 %v399, %v392
      %v568 = vpack.c.bf16 %v407, %v400
      %v569 = vpack.c.bf16 %v408, %v401
      %v570 = vpack.c.bf16 %v409, %v402
      %v571 = vpack.c.bf16 %v410, %v403
      %v572 = vpack.c.bf16 %v411, %v404
      %v573 = vpack.c.bf16 %v412, %v405
      %v574 = vpack.c.bf16 %v413, %v406
      %v575 = vpack.c.bf16 %v421, %v414
      %v576 = vpack.c.bf16 %v422, %v415
      %v577 = vpack.c.bf16 %v423, %v416
      %v578 = vpack.c.bf16 %v424, %v417
      %v579 = vpack.c.bf16 %v425, %v418
      %v580 = vpack.c.bf16 %v426, %v419
      %v581 = vpack.c.bf16 %v427, %v420
      %v582 = vpack.c.bf16 %v435, %v428
      %v583 = vpack.c.bf16 %v436, %v429
      %v584 = vpack.c.bf16 %v437, %v430
      %v585 = vpack.c.bf16 %v438, %v431
      %v586 = vpack.c.bf16 %v439, %v432
      %v587 = vpack.c.bf16 %v440, %v433
      %v588 = vpack.c.bf16 %v441, %v434
      %v589 = vpack.c.bf16 %v449, %v442
      %v590 = vpack.c.bf16 %v450, %v443
      %v591 = vpack.c.bf16 %v451, %v444
      %v592 = vpack.c.bf16 %v452, %v445
      %v593 = vpack.c.bf16 %v453, %v446
      %v594 = vpack.c.bf16 %v454, %v447
      %v595 = vpack.c.bf16 %v455, %v448
      %v596 = vpack.c.bf16 %v463, %v456
      %v597 = vpack.c.bf16 %v464, %v457
      %v598 = vpack.c.bf16 %v465, %v458
      %v599 = vpack.c.bf16 %v466, %v459
      %v600 = vpack.c.bf16 %v467, %v460
      %v601 = vpack.c.bf16 %v468, %v461
      %v602 = vpack.c.bf16 %v469, %v462
      %v603 = vpack.c.bf16 %v477, %v470
      %v604 = vpack.c.bf16 %v478, %v471
      %v605 = vpack.c.bf16 %v479, %v472
      %v606 = vpack.c.bf16 %v480, %v473
      %v607 = vpack.c.bf16 %v481, %v474
      %v608 = vpack.c.bf16 %v482, %v475
      %v609 = vpack.c.bf16 %v483, %v476
      %v610 = vpack.c.bf16 %v491, %v484
      %v611 = vpack.c.bf16 %v492, %v485
      %v612 = vpack.c.bf16 %v493, %v486
      %v613 = vpack.c.bf16 %v494, %v487
      %v614 = vpack.c.bf16 %v495, %v488
      %v615 = vpack.c.bf16 %v496, %v489
      %v616 = vpack.c.bf16 %v497, %v490
      %v617 = vpack.c.bf16 %v505, %v498
      %v618 = vpack.c.bf16 %v506, %v499
      %v619 = vpack.c.bf16 %v507, %v500
      %v620 = vpack.c.bf16 %v508, %v501
      %v621 = vpack.c.bf16 %v509, %v502
      %v622 = vpack.c.bf16 %v510, %v503
      %v623 = vpack.c.bf16 %v511, %v504
      %v624 = vld [vmem:[%s1] sm:$0xff]
      %v625 = vld [vmem:[%s1 + $0x8] sm:$0xff]
      %v626 = vld [vmem:[%s1 + $0x10] sm:$0xff]
      %v627 = vld [vmem:[%s1 + $0x18] sm:$0xff]
      %v628 = vld [vmem:[%s1 + $0x20] sm:$0xff]
      %v629 = vld [vmem:[%s1 + $0x28] sm:$0xff]
      %v630 = vld [vmem:[%s1 + $0x30] sm:$0xff]
      %v631 = vld [vmem:[%s1 + $0x38] sm:$0xff]
      %v632 = vld [vmem:[%s1 + $0x40] sm:$0xff]
      %v633 = vld [vmem:[%s1 + $0x48] sm:$0xff]
      %v634 = vld [vmem:[%s1 + $0x50] sm:$0xff]
      %v635 = vld [vmem:[%s1 + $0x58] sm:$0xff]
      %v636 = vld [vmem:[%s1 + $0x60] sm:$0xff]
      %v637 = vld [vmem:[%s1 + $0x68] sm:$0xff]
      %v638 = vld [vmem:[%s1 + $0x70] sm:$0xff]
      %v639 = vld [vmem:[%s1 + $0x78] sm:$0xff]
      %v640 = vld [vmem:[%s1 + $0x80] sm:$0xff]
      %v641 = vld [vmem:[%s1 + $0x88] sm:$0xff]
      %v642 = vld [vmem:[%s1 + $0x90] sm:$0xff]
      %v643 = vld [vmem:[%s1 + $0x98] sm:$0xff]
      %v644 = vld [vmem:[%s1 + $0xa0] sm:$0xff]
      %v645 = vld [vmem:[%s1 + $0xa8] sm:$0xff]
      %v646 = vld [vmem:[%s1 + $0xb0] sm:$0xff]
      %v647 = vld [vmem:[%s1 + $0xb8] sm:$0xff]
      %v648 = vld [vmem:[%s1 + $0xc0] sm:$0xff]
      %v649 = vld [vmem:[%s1 + $0xc8] sm:$0xff]
      %v650 = vld [vmem:[%s1 + $0xd0] sm:$0xff]
      %v651 = vld [vmem:[%s1 + $0xd8] sm:$0xff]
      %v652 = vld [vmem:[%s1 + $0xe0] sm:$0xff]
      %v653 = vld [vmem:[%s1 + $0xe8] sm:$0xff]
      %v654 = vld [vmem:[%s1 + $0xf0] sm:$0xff]
      %v655 = vld [vmem:[%s1 + $0xf8] sm:$0xff]
      %v656 = vld [vmem:[%s1 + $0x100] sm:$0xff]
      %v657 = vld [vmem:[%s1 + $0x108] sm:$0xff]
      %v658 = vld [vmem:[%s1 + $0x110] sm:$0xff]
      %v659 = vld [vmem:[%s1 + $0x118] sm:$0xff]
      %v660 = vld [vmem:[%s1 + $0x120] sm:$0xff]
      %v661 = vld [vmem:[%s1 + $0x128] sm:$0xff]
      %v662 = vld [vmem:[%s1 + $0x130] sm:$0xff]
      %v663 = vld [vmem:[%s1 + $0x138] sm:$0xff]
      %v664 = vld [vmem:[%s1 + $0x140] sm:$0xff]
      %v665 = vld [vmem:[%s1 + $0x148] sm:$0xff]
      %v666 = vld [vmem:[%s1 + $0x150] sm:$0xff]
      %v667 = vld [vmem:[%s1 + $0x158] sm:$0xff]
      %v668 = vld [vmem:[%s1 + $0x160] sm:$0xff]
      %v669 = vld [vmem:[%s1 + $0x168] sm:$0xff]
      %v670 = vld [vmem:[%s1 + $0x170] sm:$0xff]
      %v671 = vld [vmem:[%s1 + $0x178] sm:$0xff]
      %v672 = vld [vmem:[%s1 + $0x180] sm:$0xff]
      %v673 = vld [vmem:[%s1 + $0x188] sm:$0xff]
      %v674 = vld [vmem:[%s1 + $0x190] sm:$0xff]
      %v675 = vld [vmem:[%s1 + $0x198] sm:$0xff]
      %v676 = vld [vmem:[%s1 + $0x1a0] sm:$0xff]
      %v677 = vld [vmem:[%s1 + $0x1a8] sm:$0xff]
      %v678 = vld [vmem:[%s1 + $0x1b0] sm:$0xff]
      %v679 = vld [vmem:[%s1 + $0x1b8] sm:$0xff]
      %v680 = vld [vmem:[%s1 + $0x1c0] sm:$0xff]
      %v681 = vld [vmem:[%s1 + $0x1c8] sm:$0xff]
      %v682 = vld [vmem:[%s1 + $0x1d0] sm:$0xff]
      %v683 = vld [vmem:[%s1 + $0x1d8] sm:$0xff]
      %v684 = vld [vmem:[%s1 + $0x1e0] sm:$0xff]
      %v685 = vld [vmem:[%s1 + $0x1e8] sm:$0xff]
      %v686 = vld [vmem:[%s1 + $0x1f0] sm:$0xff]
      %v687 = vld [vmem:[%s1 + $0x1f8] sm:$0xff]
      %v688 = vld [vmem:[%s1 + $0x200] sm:$0xff]
      %v689 = vld [vmem:[%s1 + $0x208] sm:$0xff]
      %v690 = vld [vmem:[%s1 + $0x210] sm:$0xff]
      %v691 = vld [vmem:[%s1 + $0x218] sm:$0xff]
      %v692 = vld [vmem:[%s1 + $0x220] sm:$0xff]
      %v693 = vld [vmem:[%s1 + $0x228] sm:$0xff]
      %v694 = vld [vmem:[%s1 + $0x230] sm:$0xff]
      %v695 = vld [vmem:[%s1 + $0x238] sm:$0xff]
      %v696 = vld [vmem:[%s1 + $0x240] sm:$0xff]
      %v697 = vld [vmem:[%s1 + $0x248] sm:$0xff]
      %v698 = vld [vmem:[%s1 + $0x250] sm:$0xff]
      %v699 = vld [vmem:[%s1 + $0x258] sm:$0xff]
      %v700 = vld [vmem:[%s1 + $0x260] sm:$0xff]
      %v701 = vld [vmem:[%s1 + $0x268] sm:$0xff]
      %v702 = vld [vmem:[%s1 + $0x270] sm:$0xff]
      %v703 = vld [vmem:[%s1 + $0x278] sm:$0xff]
      %v704 = vld [vmem:[%s1 + $0x280] sm:$0xff]
      %v705 = vld [vmem:[%s1 + $0x288] sm:$0xff]
      %v706 = vld [vmem:[%s1 + $0x290] sm:$0xff]
      %v707 = vld [vmem:[%s1 + $0x298] sm:$0xff]
      %v708 = vld [vmem:[%s1 + $0x2a0] sm:$0xff]
      %v709 = vld [vmem:[%s1 + $0x2a8] sm:$0xff]
      %v710 = vld [vmem:[%s1 + $0x2b0] sm:$0xff]
      %v711 = vld [vmem:[%s1 + $0x2b8] sm:$0xff]
      %v712 = vld [vmem:[%s1 + $0x2c0] sm:$0xff]
      %v713 = vld [vmem:[%s1 + $0x2c8] sm:$0xff]
      %v714 = vld [vmem:[%s1 + $0x2d0] sm:$0xff]
      %v715 = vld [vmem:[%s1 + $0x2d8] sm:$0xff]
      %v716 = vld [vmem:[%s1 + $0x2e0] sm:$0xff]
      %v717 = vld [vmem:[%s1 + $0x2e8] sm:$0xff]
      %v718 = vld [vmem:[%s1 + $0x2f0] sm:$0xff]
      %v719 = vld [vmem:[%s1 + $0x2f8] sm:$0xff]
      %v720 = vld [vmem:[%s1 + $0x300] sm:$0xff]
      %v721 = vld [vmem:[%s1 + $0x308] sm:$0xff]
      %v722 = vld [vmem:[%s6] ss:$8 sm:$0x3]
      %v724 = vperm.slane %v722, 0
      %v725 = vperm.slane %v722, 1
      %v826 = vunpack.c.l.b16 %v624
      %v827 = vunpack.c.h.b16 %v624
      %v828 = vunpack.c.l.b16 %v625
      %v829 = vunpack.c.h.b16 %v625
      %v830 = vunpack.c.l.b16 %v626
      %v831 = vunpack.c.h.b16 %v626
      %v832 = vunpack.c.l.b16 %v627
      %v833 = vunpack.c.h.b16 %v627
      %v834 = vunpack.c.l.b16 %v628
      %v835 = vunpack.c.h.b16 %v628
      %v836 = vunpack.c.l.b16 %v629
      %v837 = vunpack.c.h.b16 %v629
      %v838 = vunpack.c.l.b16 %v630
      %v839 = vunpack.c.h.b16 %v630
      %v840 = vunpack.c.l.b16 %v631
      %v841 = vunpack.c.h.b16 %v631
      %v842 = vunpack.c.l.b16 %v632
      %v843 = vunpack.c.h.b16 %v632
      %v844 = vunpack.c.l.b16 %v633
      %v845 = vunpack.c.h.b16 %v633
      %v846 = vunpack.c.l.b16 %v634
      %v847 = vunpack.c.h.b16 %v634
      %v848 = vunpack.c.l.b16 %v635
      %v849 = vunpack.c.h.b16 %v635
      %v850 = vunpack.c.l.b16 %v636
      %v851 = vunpack.c.h.b16 %v636
      %v852 = vunpack.c.l.b16 %v637
      %v853 = vunpack.c.h.b16 %v637
      %v854 = vunpack.c.l.b16 %v638
      %v855 = vunpack.c.h.b16 %v638
      %v856 = vunpack.c.l.b16 %v639
      %v857 = vunpack.c.h.b16 %v639
      %v858 = vunpack.c.l.b16 %v640
      %v859 = vunpack.c.h.b16 %v640
      %v860 = vunpack.c.l.b16 %v641
      %v861 = vunpack.c.h.b16 %v641
      %v862 = vunpack.c.l.b16 %v642
      %v863 = vunpack.c.h.b16 %v642
      %v864 = vunpack.c.l.b16 %v643
      %v865 = vunpack.c.h.b16 %v643
      %v866 = vunpack.c.l.b16 %v644
      %v867 = vunpack.c.h.b16 %v644
      %v868 = vunpack.c.l.b16 %v645
      %v869 = vunpack.c.h.b16 %v645
      %v870 = vunpack.c.l.b16 %v646
      %v871 = vunpack.c.h.b16 %v646
      %v872 = vunpack.c.l.b16 %v647
      %v873 = vunpack.c.h.b16 %v647
      %v874 = vunpack.c.l.b16 %v648
      %v875 = vunpack.c.h.b16 %v648
      %v876 = vunpack.c.l.b16 %v649
      %v877 = vunpack.c.h.b16 %v649
      %v878 = vunpack.c.l.b16 %v650
      %v879 = vunpack.c.h.b16 %v650
      %v880 = vunpack.c.l.b16 %v651
      %v881 = vunpack.c.h.b16 %v651
      %v882 = vunpack.c.l.b16 %v652
      %v883 = vunpack.c.h.b16 %v652
      %v884 = vunpack.c.l.b16 %v653
      %v885 = vunpack.c.h.b16 %v653
      %v886 = vunpack.c.l.b16 %v654
      %v887 = vunpack.c.h.b16 %v654
      %v888 = vunpack.c.l.b16 %v655
      %v889 = vunpack.c.h.b16 %v655
      %v890 = vunpack.c.l.b16 %v656
      %v891 = vunpack.c.h.b16 %v656
      %v892 = vunpack.c.l.b16 %v657
      %v893 = vunpack.c.h.b16 %v657
      %v894 = vunpack.c.l.b16 %v658
      %v895 = vunpack.c.h.b16 %v658
      %v896 = vunpack.c.l.b16 %v659
      %v897 = vunpack.c.h.b16 %v659
      %v898 = vunpack.c.l.b16 %v660
      %v899 = vunpack.c.h.b16 %v660
      %v900 = vunpack.c.l.b16 %v661
      %v901 = vunpack.c.h.b16 %v661
      %v902 = vunpack.c.l.b16 %v662
      %v903 = vunpack.c.h.b16 %v662
      %v904 = vunpack.c.l.b16 %v663
      %v905 = vunpack.c.h.b16 %v663
      %v906 = vunpack.c.l.b16 %v664
      %v907 = vunpack.c.h.b16 %v664
      %v908 = vunpack.c.l.b16 %v665
      %v909 = vunpack.c.h.b16 %v665
      %v910 = vunpack.c.l.b16 %v666
      %v911 = vunpack.c.h.b16 %v666
      %v912 = vunpack.c.l.b16 %v667
      %v913 = vunpack.c.h.b16 %v667
      %v914 = vunpack.c.l.b16 %v668
      %v915 = vunpack.c.h.b16 %v668
      %v916 = vunpack.c.l.b16 %v669
      %v917 = vunpack.c.h.b16 %v669
      %v918 = vunpack.c.l.b16 %v670
      %v919 = vunpack.c.h.b16 %v670
      %v920 = vunpack.c.l.b16 %v671
      %v921 = vunpack.c.h.b16 %v671
      %v922 = vunpack.c.l.b16 %v672
      %v923 = vunpack.c.h.b16 %v672
      %v924 = vunpack.c.l.b16 %v673
      %v925 = vunpack.c.h.b16 %v673
      %v926 = vunpack.c.l.b16 %v674
      %v927 = vunpack.c.h.b16 %v674
      %v928 = vunpack.c.l.b16 %v675
      %v929 = vunpack.c.h.b16 %v675
      %v930 = vunpack.c.l.b16 %v676
      %v931 = vunpack.c.h.b16 %v676
      %v932 = vunpack.c.l.b16 %v677
      %v933 = vunpack.c.h.b16 %v677
      %v934 = vunpack.c.l.b16 %v678
      %v935 = vunpack.c.h.b16 %v678
      %v936 = vunpack.c.l.b16 %v679
      %v937 = vunpack.c.h.b16 %v679
      %v938 = vunpack.c.l.b16 %v680
      %v939 = vunpack.c.h.b16 %v680
      %v940 = vunpack.c.l.b16 %v681
      %v941 = vunpack.c.h.b16 %v681
      %v942 = vunpack.c.l.b16 %v682
      %v943 = vunpack.c.h.b16 %v682
      %v944 = vunpack.c.l.b16 %v683
      %v945 = vunpack.c.h.b16 %v683
      %v946 = vunpack.c.l.b16 %v684
      %v947 = vunpack.c.h.b16 %v684
      %v948 = vunpack.c.l.b16 %v685
      %v949 = vunpack.c.h.b16 %v685
      %v950 = vunpack.c.l.b16 %v686
      %v951 = vunpack.c.h.b16 %v686
      %v952 = vunpack.c.l.b16 %v687
      %v953 = vunpack.c.h.b16 %v687
      %v954 = vunpack.c.l.b16 %v688
      %v955 = vunpack.c.h.b16 %v688
      %v956 = vunpack.c.l.b16 %v689
      %v957 = vunpack.c.h.b16 %v689
      %v958 = vunpack.c.l.b16 %v690
      %v959 = vunpack.c.h.b16 %v690
      %v960 = vunpack.c.l.b16 %v691
      %v961 = vunpack.c.h.b16 %v691
      %v962 = vunpack.c.l.b16 %v692
      %v963 = vunpack.c.h.b16 %v692
      %v964 = vunpack.c.l.b16 %v693
      %v965 = vunpack.c.h.b16 %v693
      %v966 = vunpack.c.l.b16 %v694
      %v967 = vunpack.c.h.b16 %v694
      %v968 = vunpack.c.l.b16 %v695
      %v969 = vunpack.c.h.b16 %v695
      %v970 = vunpack.c.l.b16 %v696
      %v971 = vunpack.c.h.b16 %v696
      %v972 = vunpack.c.l.b16 %v697
      %v973 = vunpack.c.h.b16 %v697
      %v974 = vunpack.c.l.b16 %v698
      %v975 = vunpack.c.h.b16 %v698
      %v976 = vunpack.c.l.b16 %v699
      %v977 = vunpack.c.h.b16 %v699
      %v978 = vunpack.c.l.b16 %v700
      %v979 = vunpack.c.h.b16 %v700
      %v980 = vunpack.c.l.b16 %v701
      %v981 = vunpack.c.h.b16 %v701
      %v982 = vunpack.c.l.b16 %v702
      %v983 = vunpack.c.h.b16 %v702
      %v984 = vunpack.c.l.b16 %v703
      %v985 = vunpack.c.h.b16 %v703
      %v986 = vunpack.c.l.b16 %v704
      %v987 = vunpack.c.h.b16 %v704
      %v988 = vunpack.c.l.b16 %v705
      %v989 = vunpack.c.h.b16 %v705
      %v990 = vunpack.c.l.b16 %v706
      %v991 = vunpack.c.h.b16 %v706
      %v992 = vunpack.c.l.b16 %v707
      %v993 = vunpack.c.h.b16 %v707
      %v994 = vunpack.c.l.b16 %v708
      %v995 = vunpack.c.h.b16 %v708
      %v996 = vunpack.c.l.b16 %v709
      %v997 = vunpack.c.h.b16 %v709
      %v998 = vunpack.c.l.b16 %v710
      %v999 = vunpack.c.h.b16 %v710
      %v1000 = vunpack.c.l.b16 %v711
      %v1001 = vunpack.c.h.b16 %v711
      %v1002 = vunpack.c.l.b16 %v712
      %v1003 = vunpack.c.h.b16 %v712
      %v1004 = vunpack.c.l.b16 %v713
      %v1005 = vunpack.c.h.b16 %v713
      %v1006 = vunpack.c.l.b16 %v714
      %v1007 = vunpack.c.h.b16 %v714
      %v1008 = vunpack.c.l.b16 %v715
      %v1009 = vunpack.c.h.b16 %v715
      %v1010 = vunpack.c.l.b16 %v716
      %v1011 = vunpack.c.h.b16 %v716
      %v1012 = vunpack.c.l.b16 %v717
      %v1013 = vunpack.c.h.b16 %v717
      %v1014 = vunpack.c.l.b16 %v718
      %v1015 = vunpack.c.h.b16 %v718
      %v1016 = vunpack.c.l.b16 %v719
      %v1017 = vunpack.c.h.b16 %v719
      %v1018 = vunpack.c.l.b16 %v720
      %v1019 = vunpack.c.h.b16 %v720
      %v1020 = vunpack.c.l.b16 %v721
      %v1021 = vunpack.c.h.b16 %v721
      %v1022 = vpack.c.b16 %v828, %v826
      %v1023 = vpack.c.b16 %v829, %v827
      %v1024 = vpack.c.b16 %v832, %v830
      %v1025 = vpack.c.b16 %v833, %v831
      %v1026 = vpack.c.b16 %v836, %v834
      %v1027 = vpack.c.b16 %v837, %v835
      %v1028 = vpack.c.b16 %v840, %v838
      %v1029 = vpack.c.b16 %v841, %v839
      %v1030 = vpack.c.b16 %v844, %v842
      %v1031 = vpack.c.b16 %v845, %v843
      %v1032 = vpack.c.b16 %v848, %v846
      %v1033 = vpack.c.b16 %v849, %v847
      %v1034 = vpack.c.b16 %v852, %v850
      %v1035 = vpack.c.b16 %v853, %v851
      %v1036 = vpack.c.b16 %v856, %v854
      %v1037 = vpack.c.b16 %v857, %v855
      %v1038 = vpack.c.b16 %v860, %v858
      %v1039 = vpack.c.b16 %v861, %v859
      %v1040 = vpack.c.b16 %v864, %v862
      %v1041 = vpack.c.b16 %v865, %v863
      %v1042 = vpack.c.b16 %v868, %v866
      %v1043 = vpack.c.b16 %v869, %v867
      %v1044 = vpack.c.b16 %v872, %v870
      %v1045 = vpack.c.b16 %v873, %v871
      %v1046 = vpack.c.b16 %v876, %v874
      %v1047 = vpack.c.b16 %v877, %v875
      %v1048 = vpack.c.b16 %v880, %v878
      %v1049 = vpack.c.b16 %v881, %v879
      %v1050 = vpack.c.b16 %v884, %v882
      %v1051 = vpack.c.b16 %v885, %v883
      %v1052 = vpack.c.b16 %v888, %v886
      %v1053 = vpack.c.b16 %v889, %v887
      %v1054 = vpack.c.b16 %v892, %v890
      %v1055 = vpack.c.b16 %v893, %v891
      %v1056 = vpack.c.b16 %v896, %v894
      %v1057 = vpack.c.b16 %v897, %v895
      %v1058 = vpack.c.b16 %v900, %v898
      %v1059 = vpack.c.b16 %v901, %v899
      %v1060 = vpack.c.b16 %v904, %v902
      %v1061 = vpack.c.b16 %v905, %v903
      %v1062 = vpack.c.b16 %v908, %v906
      %v1063 = vpack.c.b16 %v909, %v907
      %v1064 = vpack.c.b16 %v912, %v910
      %v1065 = vpack.c.b16 %v913, %v911
      %v1066 = vpack.c.b16 %v916, %v914
      %v1067 = vpack.c.b16 %v917, %v915
      %v1068 = vpack.c.b16 %v920, %v918
      %v1069 = vpack.c.b16 %v921, %v919
      %v1070 = vpack.c.b16 %v924, %v922
      %v1071 = vpack.c.b16 %v925, %v923
      %v1072 = vpack.c.b16 %v928, %v926
      %v1073 = vpack.c.b16 %v929, %v927
      %v1074 = vpack.c.b16 %v932, %v930
      %v1075 = vpack.c.b16 %v933, %v931
      %v1076 = vpack.c.b16 %v936, %v934
      %v1077 = vpack.c.b16 %v937, %v935
      %v1078 = vpack.c.b16 %v940, %v938
      %v1079 = vpack.c.b16 %v941, %v939
      %v1080 = vpack.c.b16 %v944, %v942
      %v1081 = vpack.c.b16 %v945, %v943
      %v1082 = vpack.c.b16 %v948, %v946
      %v1083 = vpack.c.b16 %v949, %v947
      %v1084 = vpack.c.b16 %v952, %v950
      %v1085 = vpack.c.b16 %v953, %v951
      %v1086 = vpack.c.b16 %v956, %v954
      %v1087 = vpack.c.b16 %v957, %v955
      %v1088 = vpack.c.b16 %v960, %v958
      %v1089 = vpack.c.b16 %v961, %v959
      %v1090 = vpack.c.b16 %v964, %v962
      %v1091 = vpack.c.b16 %v965, %v963
      %v1092 = vpack.c.b16 %v968, %v966
      %v1093 = vpack.c.b16 %v969, %v967
      %v1094 = vpack.c.b16 %v972, %v970
      %v1095 = vpack.c.b16 %v973, %v971
      %v1096 = vpack.c.b16 %v976, %v974
      %v1097 = vpack.c.b16 %v977, %v975
      %v1098 = vpack.c.b16 %v980, %v978
      %v1099 = vpack.c.b16 %v981, %v979
      %v1100 = vpack.c.b16 %v984, %v982
      %v1101 = vpack.c.b16 %v985, %v983
      %v1102 = vpack.c.b16 %v988, %v986
      %v1103 = vpack.c.b16 %v989, %v987
      %v1104 = vpack.c.b16 %v992, %v990
      %v1105 = vpack.c.b16 %v993, %v991
      %v1106 = vpack.c.b16 %v996, %v994
      %v1107 = vpack.c.b16 %v997, %v995
      %v1108 = vpack.c.b16 %v1000, %v998
      %v1109 = vpack.c.b16 %v1001, %v999
      %v1110 = vpack.c.b16 %v1004, %v1002
      %v1111 = vpack.c.b16 %v1005, %v1003
      %v1112 = vpack.c.b16 %v1008, %v1006
      %v1113 = vpack.c.b16 %v1009, %v1007
      %v1114 = vpack.c.b16 %v1012, %v1010
      %v1115 = vpack.c.b16 %v1013, %v1011
      %v1116 = vpack.c.b16 %v1016, %v1014
      %v1117 = vpack.c.b16 %v1017, %v1015
      %v1118 = vpack.c.b16 %v1020, %v1018
      %v1119 = vpack.c.b16 %v1021, %v1019
      %vm1218 = vcmask 130048
      %v1220 = vsel %vm1218, %v518, 0
      %v1223 = vsel %vm1218, %v525, 0
      %v1226 = vsel %vm1218, %v532, 0
      %v1229 = vsel %vm1218, %v539, 0
      %v1232 = vsel %vm1218, %v546, 0
      %v1235 = vsel %vm1218, %v553, 0
      %v1238 = vsel %vm1218, %v560, 0
      %v1241 = vsel %vm1218, %v567, 0
      %v1244 = vsel %vm1218, %v574, 0
      %v1247 = vsel %vm1218, %v581, 0
      %v1250 = vsel %vm1218, %v588, 0
      %v1253 = vsel %vm1218, %v595, 0
      %v1256 = vsel %vm1218, %v602, 0
      %v1259 = vsel %vm1218, %v609, 0
      %v1262 = vsel %vm1218, %v616, 0
      %v1265 = vsel %vm1218, %v623, 0
      %1267 = vmatpush.bf16.msra.mxu0 %v1036
      %1268 = vmatpush.bf16.msra.mxu0 %v1034
      %1269 = vmatpush.bf16.msra.mxu0 %v1032
      %1270 = vmatpush.bf16.msra.mxu0 %v1030
      %1271 = vmatpush.bf16.msra.mxu0 %v1028
      %1272 = vmatpush.bf16.msra.mxu0 %v1026
      %1273 = vmatpush.bf16.msra.mxu0 %v1024
      %1274 = vmatpush.bf16.msra.mxu0 %v1022
      %1275 = vmatmul.bf16.gmra.mxu0 %v512
      %v1276 = vpop.f32.mrf.mxu0
      %v1277 = vadd.f32 %v724, %v1276
      %v1278 = vpop.f32.mrf.mxu0
      %v1279 = vadd.f32 %v724, %v1278
      %1280 = vmatmul.bf16.gmra.mxu0 %v519
      %v1281 = vpop.f32.mrf.mxu0
      %v1282 = vadd.f32 %v724, %v1281
      %v1283 = vpop.f32.mrf.mxu0
      %v1284 = vadd.f32 %v724, %v1283
      %1285 = vmatmul.bf16.gmra.mxu0 %v526
      %v1286 = vpop.f32.mrf.mxu0
      %v1287 = vadd.f32 %v724, %v1286
      %v1288 = vpop.f32.mrf.mxu0
      %v1289 = vadd.f32 %v724, %v1288
      %1290 = vmatmul.bf16.gmra.mxu0 %v533
      %v1291 = vpop.f32.mrf.mxu0
      %v1292 = vadd.f32 %v724, %v1291
      %v1293 = vpop.f32.mrf.mxu0
      %v1294 = vadd.f32 %v724, %v1293
      %1295 = vmatmul.bf16.gmra.mxu0 %v540
      %v1296 = vpop.f32.mrf.mxu0
      %v1297 = vadd.f32 %v724, %v1296
      %v1298 = vpop.f32.mrf.mxu0
      %v1299 = vadd.f32 %v724, %v1298
      %1300 = vmatmul.bf16.gmra.mxu0 %v547
      %v1301 = vpop.f32.mrf.mxu0
      %v1302 = vadd.f32 %v724, %v1301
      %v1303 = vpop.f32.mrf.mxu0
      %v1304 = vadd.f32 %v724, %v1303
      %1305 = vmatmul.bf16.gmra.mxu0 %v554
      %v1306 = vpop.f32.mrf.mxu0
      %v1307 = vadd.f32 %v724, %v1306
      %v1308 = vpop.f32.mrf.mxu0
      %v1309 = vadd.f32 %v724, %v1308
      %1310 = vmatmul.bf16.gmra.mxu0 %v561
      %v1311 = vpop.f32.mrf.mxu0
      %v1312 = vadd.f32 %v724, %v1311
      %v1313 = vpop.f32.mrf.mxu0
      %v1314 = vadd.f32 %v724, %v1313
      %1315 = vmatmul.bf16.gmra.mxu0 %v568
      %v1316 = vpop.f32.mrf.mxu0
      %v1317 = vadd.f32 %v724, %v1316
      %v1318 = vpop.f32.mrf.mxu0
      %v1319 = vadd.f32 %v724, %v1318
      %1320 = vmatmul.bf16.gmra.mxu0 %v575
      %v1321 = vpop.f32.mrf.mxu0
      %v1322 = vadd.f32 %v724, %v1321
      %v1323 = vpop.f32.mrf.mxu0
      %v1324 = vadd.f32 %v724, %v1323
      %1325 = vmatmul.bf16.gmra.mxu0 %v582
      %v1326 = vpop.f32.mrf.mxu0
      %v1327 = vadd.f32 %v724, %v1326
      %v1328 = vpop.f32.mrf.mxu0
      %v1329 = vadd.f32 %v724, %v1328
      %1330 = vmatmul.bf16.gmra.mxu0 %v589
      %v1331 = vpop.f32.mrf.mxu0
      %v1332 = vadd.f32 %v724, %v1331
      %v1333 = vpop.f32.mrf.mxu0
      %v1334 = vadd.f32 %v724, %v1333
      %1335 = vmatmul.bf16.gmra.mxu0 %v596
      %v1336 = vpop.f32.mrf.mxu0
      %v1337 = vadd.f32 %v724, %v1336
      %v1338 = vpop.f32.mrf.mxu0
      %v1339 = vadd.f32 %v724, %v1338
      %1340 = vmatmul.bf16.gmra.mxu0 %v603
      %v1341 = vpop.f32.mrf.mxu0
      %v1342 = vadd.f32 %v724, %v1341
      %v1343 = vpop.f32.mrf.mxu0
      %v1344 = vadd.f32 %v724, %v1343
      %1345 = vmatmul.bf16.gmra.mxu0 %v610
      %v1346 = vpop.f32.mrf.mxu0
      %v1347 = vadd.f32 %v724, %v1346
      %v1348 = vpop.f32.mrf.mxu0
      %v1349 = vadd.f32 %v724, %v1348
      %1350 = vmatmul.bf16.gmra.mxu0 %v617
      %v1351 = vpop.f32.mrf.mxu0
      %v1352 = vadd.f32 %v724, %v1351
      %v1353 = vpop.f32.mrf.mxu0
      %v1354 = vadd.f32 %v724, %v1353
      %1355 = vdwg.mxu0
      %1356 = vmatpush.bf16.msra.mxu0 %v1052
      %1357 = vmatpush.bf16.msra.mxu0 %v1050
      %1358 = vmatpush.bf16.msra.mxu0 %v1048
      %1359 = vmatpush.bf16.msra.mxu0 %v1046
      %1360 = vmatpush.bf16.msra.mxu0 %v1044
      %1361 = vmatpush.bf16.msra.mxu0 %v1042
      %1362 = vmatpush.bf16.msra.mxu0 %v1040
      %1363 = vmatpush.bf16.msra.mxu0 %v1038
      %1364 = vmatmul.bf16.gmra.mxu0 %v513
      %v1365 = vpop.f32.mrf.mxu0
      %v1366 = vadd.f32 %v1277, %v1365
      %v1367 = vpop.f32.mrf.mxu0
      %v1368 = vadd.f32 %v1279, %v1367
      %1369 = vmatmul.bf16.gmra.mxu0 %v520
      %v1370 = vpop.f32.mrf.mxu0
      %v1371 = vadd.f32 %v1282, %v1370
      %v1372 = vpop.f32.mrf.mxu0
      %v1373 = vadd.f32 %v1284, %v1372
      %1374 = vmatmul.bf16.gmra.mxu0 %v527
      %v1375 = vpop.f32.mrf.mxu0
      %v1376 = vadd.f32 %v1287, %v1375
      %v1377 = vpop.f32.mrf.mxu0
      %v1378 = vadd.f32 %v1289, %v1377
      %1379 = vmatmul.bf16.gmra.mxu0 %v534
      %v1380 = vpop.f32.mrf.mxu0
      %v1381 = vadd.f32 %v1292, %v1380
      %v1382 = vpop.f32.mrf.mxu0
      %v1383 = vadd.f32 %v1294, %v1382
      %1384 = vmatmul.bf16.gmra.mxu0 %v541
      %v1385 = vpop.f32.mrf.mxu0
      %v1386 = vadd.f32 %v1297, %v1385
      %v1387 = vpop.f32.mrf.mxu0
      %v1388 = vadd.f32 %v1299, %v1387
      %1389 = vmatmul.bf16.gmra.mxu0 %v548
      %v1390 = vpop.f32.mrf.mxu0
      %v1391 = vadd.f32 %v1302, %v1390
      %v1392 = vpop.f32.mrf.mxu0
      %v1393 = vadd.f32 %v1304, %v1392
      %1394 = vmatmul.bf16.gmra.mxu0 %v555
      %v1395 = vpop.f32.mrf.mxu0
      %v1396 = vadd.f32 %v1307, %v1395
      %v1397 = vpop.f32.mrf.mxu0
      %v1398 = vadd.f32 %v1309, %v1397
      %1399 = vmatmul.bf16.gmra.mxu0 %v562
      %v1400 = vpop.f32.mrf.mxu0
      %v1401 = vadd.f32 %v1312, %v1400
      %v1402 = vpop.f32.mrf.mxu0
      %v1403 = vadd.f32 %v1314, %v1402
      %1404 = vmatmul.bf16.gmra.mxu0 %v569
      %v1405 = vpop.f32.mrf.mxu0
      %v1406 = vadd.f32 %v1317, %v1405
      %v1407 = vpop.f32.mrf.mxu0
      %v1408 = vadd.f32 %v1319, %v1407
      %1409 = vmatmul.bf16.gmra.mxu0 %v576
      %v1410 = vpop.f32.mrf.mxu0
      %v1411 = vadd.f32 %v1322, %v1410
      %v1412 = vpop.f32.mrf.mxu0
      %v1413 = vadd.f32 %v1324, %v1412
      %1414 = vmatmul.bf16.gmra.mxu0 %v583
      %v1415 = vpop.f32.mrf.mxu0
      %v1416 = vadd.f32 %v1327, %v1415
      %v1417 = vpop.f32.mrf.mxu0
      %v1418 = vadd.f32 %v1329, %v1417
      %1419 = vmatmul.bf16.gmra.mxu0 %v590
      %v1420 = vpop.f32.mrf.mxu0
      %v1421 = vadd.f32 %v1332, %v1420
      %v1422 = vpop.f32.mrf.mxu0
      %v1423 = vadd.f32 %v1334, %v1422
      %1424 = vmatmul.bf16.gmra.mxu0 %v597
      %v1425 = vpop.f32.mrf.mxu0
      %v1426 = vadd.f32 %v1337, %v1425
      %v1427 = vpop.f32.mrf.mxu0
      %v1428 = vadd.f32 %v1339, %v1427
      %1429 = vmatmul.bf16.gmra.mxu0 %v604
      %v1430 = vpop.f32.mrf.mxu0
      %v1431 = vadd.f32 %v1342, %v1430
      %v1432 = vpop.f32.mrf.mxu0
      %v1433 = vadd.f32 %v1344, %v1432
      %1434 = vmatmul.bf16.gmra.mxu0 %v611
      %v1435 = vpop.f32.mrf.mxu0
      %v1436 = vadd.f32 %v1347, %v1435
      %v1437 = vpop.f32.mrf.mxu0
      %v1438 = vadd.f32 %v1349, %v1437
      %1439 = vmatmul.bf16.gmra.mxu0 %v618
      %v1440 = vpop.f32.mrf.mxu0
      %v1441 = vadd.f32 %v1352, %v1440
      %v1442 = vpop.f32.mrf.mxu0
      %v1443 = vadd.f32 %v1354, %v1442
      %1444 = vdwg.mxu0
      %1445 = vmatpush.bf16.msra.mxu0 %v1068
      %1446 = vmatpush.bf16.msra.mxu0 %v1066
      %1447 = vmatpush.bf16.msra.mxu0 %v1064
      %1448 = vmatpush.bf16.msra.mxu0 %v1062
      %1449 = vmatpush.bf16.msra.mxu0 %v1060
      %1450 = vmatpush.bf16.msra.mxu0 %v1058
      %1451 = vmatpush.bf16.msra.mxu0 %v1056
      %1452 = vmatpush.bf16.msra.mxu0 %v1054
      %1453 = vmatmul.bf16.gmra.mxu0 %v514
      %v1454 = vpop.f32.mrf.mxu0
      %v1455 = vadd.f32 %v1366, %v1454
      %v1456 = vpop.f32.mrf.mxu0
      %v1457 = vadd.f32 %v1368, %v1456
      %1458 = vmatmul.bf16.gmra.mxu0 %v521
      %v1459 = vpop.f32.mrf.mxu0
      %v1460 = vadd.f32 %v1371, %v1459
      %v1461 = vpop.f32.mrf.mxu0
      %v1462 = vadd.f32 %v1373, %v1461
      %1463 = vmatmul.bf16.gmra.mxu0 %v528
      %v1464 = vpop.f32.mrf.mxu0
      %v1465 = vadd.f32 %v1376, %v1464
      %v1466 = vpop.f32.mrf.mxu0
      %v1467 = vadd.f32 %v1378, %v1466
      %1468 = vmatmul.bf16.gmra.mxu0 %v535
      %v1469 = vpop.f32.mrf.mxu0
      %v1470 = vadd.f32 %v1381, %v1469
      %v1471 = vpop.f32.mrf.mxu0
      %v1472 = vadd.f32 %v1383, %v1471
      %1473 = vmatmul.bf16.gmra.mxu0 %v542
      %v1474 = vpop.f32.mrf.mxu0
      %v1475 = vadd.f32 %v1386, %v1474
      %v1476 = vpop.f32.mrf.mxu0
      %v1477 = vadd.f32 %v1388, %v1476
      %1478 = vmatmul.bf16.gmra.mxu0 %v549
      %v1479 = vpop.f32.mrf.mxu0
      %v1480 = vadd.f32 %v1391, %v1479
      %v1481 = vpop.f32.mrf.mxu0
      %v1482 = vadd.f32 %v1393, %v1481
      %1483 = vmatmul.bf16.gmra.mxu0 %v556
      %v1484 = vpop.f32.mrf.mxu0
      %v1485 = vadd.f32 %v1396, %v1484
      %v1486 = vpop.f32.mrf.mxu0
      %v1487 = vadd.f32 %v1398, %v1486
      %1488 = vmatmul.bf16.gmra.mxu0 %v563
      %v1489 = vpop.f32.mrf.mxu0
      %v1490 = vadd.f32 %v1401, %v1489
      %v1491 = vpop.f32.mrf.mxu0
      %v1492 = vadd.f32 %v1403, %v1491
      %1493 = vmatmul.bf16.gmra.mxu0 %v570
      %v1494 = vpop.f32.mrf.mxu0
      %v1495 = vadd.f32 %v1406, %v1494
      %v1496 = vpop.f32.mrf.mxu0
      %v1497 = vadd.f32 %v1408, %v1496
      %1498 = vmatmul.bf16.gmra.mxu0 %v577
      %v1499 = vpop.f32.mrf.mxu0
      %v1500 = vadd.f32 %v1411, %v1499
      %v1501 = vpop.f32.mrf.mxu0
      %v1502 = vadd.f32 %v1413, %v1501
      %1503 = vmatmul.bf16.gmra.mxu0 %v584
      %v1504 = vpop.f32.mrf.mxu0
      %v1505 = vadd.f32 %v1416, %v1504
      %v1506 = vpop.f32.mrf.mxu0
      %v1507 = vadd.f32 %v1418, %v1506
      %1508 = vmatmul.bf16.gmra.mxu0 %v591
      %v1509 = vpop.f32.mrf.mxu0
      %v1510 = vadd.f32 %v1421, %v1509
      %v1511 = vpop.f32.mrf.mxu0
      %v1512 = vadd.f32 %v1423, %v1511
      %1513 = vmatmul.bf16.gmra.mxu0 %v598
      %v1514 = vpop.f32.mrf.mxu0
      %v1515 = vadd.f32 %v1426, %v1514
      %v1516 = vpop.f32.mrf.mxu0
      %v1517 = vadd.f32 %v1428, %v1516
      %1518 = vmatmul.bf16.gmra.mxu0 %v605
      %v1519 = vpop.f32.mrf.mxu0
      %v1520 = vadd.f32 %v1431, %v1519
      %v1521 = vpop.f32.mrf.mxu0
      %v1522 = vadd.f32 %v1433, %v1521
      %1523 = vmatmul.bf16.gmra.mxu0 %v612
      %v1524 = vpop.f32.mrf.mxu0
      %v1525 = vadd.f32 %v1436, %v1524
      %v1526 = vpop.f32.mrf.mxu0
      %v1527 = vadd.f32 %v1438, %v1526
      %1528 = vmatmul.bf16.gmra.mxu0 %v619
      %v1529 = vpop.f32.mrf.mxu0
      %v1530 = vadd.f32 %v1441, %v1529
      %v1531 = vpop.f32.mrf.mxu0
      %v1532 = vadd.f32 %v1443, %v1531
      %1533 = vdwg.mxu0
      %1534 = vmatpush.bf16.msra.mxu0 %v1084
      %1535 = vmatpush.bf16.msra.mxu0 %v1082
      %1536 = vmatpush.bf16.msra.mxu0 %v1080
      %1537 = vmatpush.bf16.msra.mxu0 %v1078
      %1538 = vmatpush.bf16.msra.mxu0 %v1076
      %1539 = vmatpush.bf16.msra.mxu0 %v1074
      %1540 = vmatpush.bf16.msra.mxu0 %v1072
      %1541 = vmatpush.bf16.msra.mxu0 %v1070
      %1542 = vmatmul.bf16.gmra.mxu0 %v515
      %v1543 = vpop.f32.mrf.mxu0
      %v1544 = vadd.f32 %v1455, %v1543
      %v1545 = vpop.f32.mrf.mxu0
      %v1546 = vadd.f32 %v1457, %v1545
      %1547 = vmatmul.bf16.gmra.mxu0 %v522
      %v1548 = vpop.f32.mrf.mxu0
      %v1549 = vadd.f32 %v1460, %v1548
      %v1550 = vpop.f32.mrf.mxu0
      %v1551 = vadd.f32 %v1462, %v1550
      %1552 = vmatmul.bf16.gmra.mxu0 %v529
      %v1553 = vpop.f32.mrf.mxu0
      %v1554 = vadd.f32 %v1465, %v1553
      %v1555 = vpop.f32.mrf.mxu0
      %v1556 = vadd.f32 %v1467, %v1555
      %1557 = vmatmul.bf16.gmra.mxu0 %v536
      %v1558 = vpop.f32.mrf.mxu0
      %v1559 = vadd.f32 %v1470, %v1558
      %v1560 = vpop.f32.mrf.mxu0
      %v1561 = vadd.f32 %v1472, %v1560
      %1562 = vmatmul.bf16.gmra.mxu0 %v543
      %v1563 = vpop.f32.mrf.mxu0
      %v1564 = vadd.f32 %v1475, %v1563
      %v1565 = vpop.f32.mrf.mxu0
      %v1566 = vadd.f32 %v1477, %v1565
      %1567 = vmatmul.bf16.gmra.mxu0 %v550
      %v1568 = vpop.f32.mrf.mxu0
      %v1569 = vadd.f32 %v1480, %v1568
      %v1570 = vpop.f32.mrf.mxu0
      %v1571 = vadd.f32 %v1482, %v1570
      %1572 = vmatmul.bf16.gmra.mxu0 %v557
      %v1573 = vpop.f32.mrf.mxu0
      %v1574 = vadd.f32 %v1485, %v1573
      %v1575 = vpop.f32.mrf.mxu0
      %v1576 = vadd.f32 %v1487, %v1575
      %1577 = vmatmul.bf16.gmra.mxu0 %v564
      %v1578 = vpop.f32.mrf.mxu0
      %v1579 = vadd.f32 %v1490, %v1578
      %v1580 = vpop.f32.mrf.mxu0
      %v1581 = vadd.f32 %v1492, %v1580
      %1582 = vmatmul.bf16.gmra.mxu0 %v571
      %v1583 = vpop.f32.mrf.mxu0
      %v1584 = vadd.f32 %v1495, %v1583
      %v1585 = vpop.f32.mrf.mxu0
      %v1586 = vadd.f32 %v1497, %v1585
      %1587 = vmatmul.bf16.gmra.mxu0 %v578
      %v1588 = vpop.f32.mrf.mxu0
      %v1589 = vadd.f32 %v1500, %v1588
      %v1590 = vpop.f32.mrf.mxu0
      %v1591 = vadd.f32 %v1502, %v1590
      %1592 = vmatmul.bf16.gmra.mxu0 %v585
      %v1593 = vpop.f32.mrf.mxu0
      %v1594 = vadd.f32 %v1505, %v1593
      %v1595 = vpop.f32.mrf.mxu0
      %v1596 = vadd.f32 %v1507, %v1595
      %1597 = vmatmul.bf16.gmra.mxu0 %v592
      %v1598 = vpop.f32.mrf.mxu0
      %v1599 = vadd.f32 %v1510, %v1598
      %v1600 = vpop.f32.mrf.mxu0
      %v1601 = vadd.f32 %v1512, %v1600
      %1602 = vmatmul.bf16.gmra.mxu0 %v599
      %v1603 = vpop.f32.mrf.mxu0
      %v1604 = vadd.f32 %v1515, %v1603
      %v1605 = vpop.f32.mrf.mxu0
      %v1606 = vadd.f32 %v1517, %v1605
      %1607 = vmatmul.bf16.gmra.mxu0 %v606
      %v1608 = vpop.f32.mrf.mxu0
      %v1609 = vadd.f32 %v1520, %v1608
      %v1610 = vpop.f32.mrf.mxu0
      %v1611 = vadd.f32 %v1522, %v1610
      %1612 = vmatmul.bf16.gmra.mxu0 %v613
      %v1613 = vpop.f32.mrf.mxu0
      %v1614 = vadd.f32 %v1525, %v1613
      %v1615 = vpop.f32.mrf.mxu0
      %v1616 = vadd.f32 %v1527, %v1615
      %1617 = vmatmul.bf16.gmra.mxu0 %v620
      %v1618 = vpop.f32.mrf.mxu0
      %v1619 = vadd.f32 %v1530, %v1618
      %v1620 = vpop.f32.mrf.mxu0
      %v1621 = vadd.f32 %v1532, %v1620
      %1622 = vdwg.mxu0
      %1623 = vmatpush.bf16.msra.mxu0 %v1100
      %1624 = vmatpush.bf16.msra.mxu0 %v1098
      %1625 = vmatpush.bf16.msra.mxu0 %v1096
      %1626 = vmatpush.bf16.msra.mxu0 %v1094
      %1627 = vmatpush.bf16.msra.mxu0 %v1092
      %1628 = vmatpush.bf16.msra.mxu0 %v1090
      %1629 = vmatpush.bf16.msra.mxu0 %v1088
      %1630 = vmatpush.bf16.msra.mxu0 %v1086
      %1631 = vmatmul.bf16.gmra.mxu0 %v516
      %v1632 = vpop.f32.mrf.mxu0
      %v1633 = vadd.f32 %v1544, %v1632
      %v1634 = vpop.f32.mrf.mxu0
      %v1635 = vadd.f32 %v1546, %v1634
      %1636 = vmatmul.bf16.gmra.mxu0 %v523
      %v1637 = vpop.f32.mrf.mxu0
      %v1638 = vadd.f32 %v1549, %v1637
      %v1639 = vpop.f32.mrf.mxu0
      %v1640 = vadd.f32 %v1551, %v1639
      %1641 = vmatmul.bf16.gmra.mxu0 %v530
      %v1642 = vpop.f32.mrf.mxu0
      %v1643 = vadd.f32 %v1554, %v1642
      %v1644 = vpop.f32.mrf.mxu0
      %v1645 = vadd.f32 %v1556, %v1644
      %1646 = vmatmul.bf16.gmra.mxu0 %v537
      %v1647 = vpop.f32.mrf.mxu0
      %v1648 = vadd.f32 %v1559, %v1647
      %v1649 = vpop.f32.mrf.mxu0
      %v1650 = vadd.f32 %v1561, %v1649
      %1651 = vmatmul.bf16.gmra.mxu0 %v544
      %v1652 = vpop.f32.mrf.mxu0
      %v1653 = vadd.f32 %v1564, %v1652
      %v1654 = vpop.f32.mrf.mxu0
      %v1655 = vadd.f32 %v1566, %v1654
      %1656 = vmatmul.bf16.gmra.mxu0 %v551
      %v1657 = vpop.f32.mrf.mxu0
      %v1658 = vadd.f32 %v1569, %v1657
      %v1659 = vpop.f32.mrf.mxu0
      %v1660 = vadd.f32 %v1571, %v1659
      %1661 = vmatmul.bf16.gmra.mxu0 %v558
      %v1662 = vpop.f32.mrf.mxu0
      %v1663 = vadd.f32 %v1574, %v1662
      %v1664 = vpop.f32.mrf.mxu0
      %v1665 = vadd.f32 %v1576, %v1664
      %1666 = vmatmul.bf16.gmra.mxu0 %v565
      %v1667 = vpop.f32.mrf.mxu0
      %v1668 = vadd.f32 %v1579, %v1667
      %v1669 = vpop.f32.mrf.mxu0
      %v1670 = vadd.f32 %v1581, %v1669
      %1671 = vmatmul.bf16.gmra.mxu0 %v572
      %v1672 = vpop.f32.mrf.mxu0
      %v1673 = vadd.f32 %v1584, %v1672
      %v1674 = vpop.f32.mrf.mxu0
      %v1675 = vadd.f32 %v1586, %v1674
      %1676 = vmatmul.bf16.gmra.mxu0 %v579
      %v1677 = vpop.f32.mrf.mxu0
      %v1678 = vadd.f32 %v1589, %v1677
      %v1679 = vpop.f32.mrf.mxu0
      %v1680 = vadd.f32 %v1591, %v1679
      %1681 = vmatmul.bf16.gmra.mxu0 %v586
      %v1682 = vpop.f32.mrf.mxu0
      %v1683 = vadd.f32 %v1594, %v1682
      %v1684 = vpop.f32.mrf.mxu0
      %v1685 = vadd.f32 %v1596, %v1684
      %1686 = vmatmul.bf16.gmra.mxu0 %v593
      %v1687 = vpop.f32.mrf.mxu0
      %v1688 = vadd.f32 %v1599, %v1687
      %v1689 = vpop.f32.mrf.mxu0
      %v1690 = vadd.f32 %v1601, %v1689
      %1691 = vmatmul.bf16.gmra.mxu0 %v600
      %v1692 = vpop.f32.mrf.mxu0
      %v1693 = vadd.f32 %v1604, %v1692
      %v1694 = vpop.f32.mrf.mxu0
      %v1695 = vadd.f32 %v1606, %v1694
      %1696 = vmatmul.bf16.gmra.mxu0 %v607
      %v1697 = vpop.f32.mrf.mxu0
      %v1698 = vadd.f32 %v1609, %v1697
      %v1699 = vpop.f32.mrf.mxu0
      %v1700 = vadd.f32 %v1611, %v1699
      %1701 = vmatmul.bf16.gmra.mxu0 %v614
      %v1702 = vpop.f32.mrf.mxu0
      %v1703 = vadd.f32 %v1614, %v1702
      %v1704 = vpop.f32.mrf.mxu0
      %v1705 = vadd.f32 %v1616, %v1704
      %1706 = vmatmul.bf16.gmra.mxu0 %v621
      %v1707 = vpop.f32.mrf.mxu0
      %v1708 = vadd.f32 %v1619, %v1707
      %v1709 = vpop.f32.mrf.mxu0
      %v1710 = vadd.f32 %v1621, %v1709
      %1711 = vdwg.mxu0
      %1712 = vmatpush.bf16.msra.mxu0 %v1116
      %1713 = vmatpush.bf16.msra.mxu0 %v1114
      %1714 = vmatpush.bf16.msra.mxu0 %v1112
      %1715 = vmatpush.bf16.msra.mxu0 %v1110
      %1716 = vmatpush.bf16.msra.mxu0 %v1108
      %1717 = vmatpush.bf16.msra.mxu0 %v1106
      %1718 = vmatpush.bf16.msra.mxu0 %v1104
      %1719 = vmatpush.bf16.msra.mxu0 %v1102
      %1720 = vmatmul.bf16.gmra.mxu0 %v517
      %v1721 = vpop.f32.mrf.mxu0
      %v1722 = vadd.f32 %v1633, %v1721
      %v1723 = vpop.f32.mrf.mxu0
      %v1724 = vadd.f32 %v1635, %v1723
      %1725 = vmatmul.bf16.gmra.mxu0 %v524
      %v1726 = vpop.f32.mrf.mxu0
      %v1727 = vadd.f32 %v1638, %v1726
      %v1728 = vpop.f32.mrf.mxu0
      %v1729 = vadd.f32 %v1640, %v1728
      %1730 = vmatmul.bf16.gmra.mxu0 %v531
      %v1731 = vpop.f32.mrf.mxu0
      %v1732 = vadd.f32 %v1643, %v1731
      %v1733 = vpop.f32.mrf.mxu0
      %v1734 = vadd.f32 %v1645, %v1733
      %1735 = vmatmul.bf16.gmra.mxu0 %v538
      %v1736 = vpop.f32.mrf.mxu0
      %v1737 = vadd.f32 %v1648, %v1736
      %v1738 = vpop.f32.mrf.mxu0
      %v1739 = vadd.f32 %v1650, %v1738
      %1740 = vmatmul.bf16.gmra.mxu0 %v545
      %v1741 = vpop.f32.mrf.mxu0
      %v1742 = vadd.f32 %v1653, %v1741
      %v1743 = vpop.f32.mrf.mxu0
      %v1744 = vadd.f32 %v1655, %v1743
      %1745 = vmatmul.bf16.gmra.mxu0 %v552
      %v1746 = vpop.f32.mrf.mxu0
      %v1747 = vadd.f32 %v1658, %v1746
      %v1748 = vpop.f32.mrf.mxu0
      %v1749 = vadd.f32 %v1660, %v1748
      %1750 = vmatmul.bf16.gmra.mxu0 %v559
      %v1751 = vpop.f32.mrf.mxu0
      %v1752 = vadd.f32 %v1663, %v1751
      %v1753 = vpop.f32.mrf.mxu0
      %v1754 = vadd.f32 %v1665, %v1753
      %1755 = vmatmul.bf16.gmra.mxu0 %v566
      %v1756 = vpop.f32.mrf.mxu0
      %v1757 = vadd.f32 %v1668, %v1756
      %v1758 = vpop.f32.mrf.mxu0
      %v1759 = vadd.f32 %v1670, %v1758
      %1760 = vmatmul.bf16.gmra.mxu0 %v573
      %v1761 = vpop.f32.mrf.mxu0
      %v1762 = vadd.f32 %v1673, %v1761
      %v1763 = vpop.f32.mrf.mxu0
      %v1764 = vadd.f32 %v1675, %v1763
      %1765 = vmatmul.bf16.gmra.mxu0 %v580
      %v1766 = vpop.f32.mrf.mxu0
      %v1767 = vadd.f32 %v1678, %v1766
      %v1768 = vpop.f32.mrf.mxu0
      %v1769 = vadd.f32 %v1680, %v1768
      %1770 = vmatmul.bf16.gmra.mxu0 %v587
      %v1771 = vpop.f32.mrf.mxu0
      %v1772 = vadd.f32 %v1683, %v1771
      %v1773 = vpop.f32.mrf.mxu0
      %v1774 = vadd.f32 %v1685, %v1773
      %1775 = vmatmul.bf16.gmra.mxu0 %v594
      %v1776 = vpop.f32.mrf.mxu0
      %v1777 = vadd.f32 %v1688, %v1776
      %v1778 = vpop.f32.mrf.mxu0
      %v1779 = vadd.f32 %v1690, %v1778
      %1780 = vmatmul.bf16.gmra.mxu0 %v601
      %v1781 = vpop.f32.mrf.mxu0
      %v1782 = vadd.f32 %v1693, %v1781
      %v1783 = vpop.f32.mrf.mxu0
      %v1784 = vadd.f32 %v1695, %v1783
      %1785 = vmatmul.bf16.gmra.mxu0 %v608
      %v1786 = vpop.f32.mrf.mxu0
      %v1787 = vadd.f32 %v1698, %v1786
      %v1788 = vpop.f32.mrf.mxu0
      %v1789 = vadd.f32 %v1700, %v1788
      %1790 = vmatmul.bf16.gmra.mxu0 %v615
      %v1791 = vpop.f32.mrf.mxu0
      %v1792 = vadd.f32 %v1703, %v1791
      %v1793 = vpop.f32.mrf.mxu0
      %v1794 = vadd.f32 %v1705, %v1793
      %1795 = vmatmul.bf16.gmra.mxu0 %v622
      %v1796 = vpop.f32.mrf.mxu0
      %v1797 = vadd.f32 %v1708, %v1796
      %v1798 = vpop.f32.mrf.mxu0
      %v1799 = vadd.f32 %v1710, %v1798
      %1800 = vdwg.mxu0
      %1801 = vmatpush.bf16.msra.mxu0 0
      %1802 = vmatpush.bf16.msra.mxu0 0
      %1803 = vmatpush.bf16.msra.mxu0 0
      %1804 = vmatpush.bf16.msra.mxu0 0
      %1805 = vmatpush.bf16.msra.mxu0 0
      %1806 = vmatpush.bf16.msra.mxu0 0
      %1807 = vmatpush.bf16.msra.mxu0 0
      %1808 = vmatpush.bf16.msra.mxu0 %v1118
      %1809 = vmatmul.bf16.gmra.mxu0 %v1220
      %v1810 = vpop.f32.mrf.mxu0
      %v1811 = vadd.f32 %v1722, %v1810
      %v1812 = vpop.f32.mrf.mxu0
      %v1813 = vadd.f32 %v1724, %v1812
      %1814 = vmatmul.bf16.gmra.mxu0 %v1223
      %v1815 = vpop.f32.mrf.mxu0
      %v1816 = vadd.f32 %v1727, %v1815
      %v1817 = vpop.f32.mrf.mxu0
      %v1818 = vadd.f32 %v1729, %v1817
      %1819 = vmatmul.bf16.gmra.mxu0 %v1226
      %v1820 = vpop.f32.mrf.mxu0
      %v1821 = vadd.f32 %v1732, %v1820
      %v1822 = vpop.f32.mrf.mxu0
      %v1823 = vadd.f32 %v1734, %v1822
      %1824 = vmatmul.bf16.gmra.mxu0 %v1229
      %v1825 = vpop.f32.mrf.mxu0
      %v1826 = vadd.f32 %v1737, %v1825
      %v1827 = vpop.f32.mrf.mxu0
      %v1828 = vadd.f32 %v1739, %v1827
      %1829 = vmatmul.bf16.gmra.mxu0 %v1232
      %v1830 = vpop.f32.mrf.mxu0
      %v1831 = vadd.f32 %v1742, %v1830
      %v1832 = vpop.f32.mrf.mxu0
      %v1833 = vadd.f32 %v1744, %v1832
      %1834 = vmatmul.bf16.gmra.mxu0 %v1235
      %v1835 = vpop.f32.mrf.mxu0
      %v1836 = vadd.f32 %v1747, %v1835
      %v1837 = vpop.f32.mrf.mxu0
      %v1838 = vadd.f32 %v1749, %v1837
      %1839 = vmatmul.bf16.gmra.mxu0 %v1238
      %v1840 = vpop.f32.mrf.mxu0
      %v1841 = vadd.f32 %v1752, %v1840
      %v1842 = vpop.f32.mrf.mxu0
      %v1843 = vadd.f32 %v1754, %v1842
      %1844 = vmatmul.bf16.gmra.mxu0 %v1241
      %v1845 = vpop.f32.mrf.mxu0
      %v1846 = vadd.f32 %v1757, %v1845
      %v1847 = vpop.f32.mrf.mxu0
      %v1848 = vadd.f32 %v1759, %v1847
      %1849 = vmatmul.bf16.gmra.mxu0 %v1244
      %v1850 = vpop.f32.mrf.mxu0
      %v1851 = vadd.f32 %v1762, %v1850
      %v1852 = vpop.f32.mrf.mxu0
      %v1853 = vadd.f32 %v1764, %v1852
      %1854 = vmatmul.bf16.gmra.mxu0 %v1247
      %v1855 = vpop.f32.mrf.mxu0
      %v1856 = vadd.f32 %v1767, %v1855
      %v1857 = vpop.f32.mrf.mxu0
      %v1858 = vadd.f32 %v1769, %v1857
      %1859 = vmatmul.bf16.gmra.mxu0 %v1250
      %v1860 = vpop.f32.mrf.mxu0
      %v1861 = vadd.f32 %v1772, %v1860
      %v1862 = vpop.f32.mrf.mxu0
      %v1863 = vadd.f32 %v1774, %v1862
      %1864 = vmatmul.bf16.gmra.mxu0 %v1253
      %v1865 = vpop.f32.mrf.mxu0
      %v1866 = vadd.f32 %v1777, %v1865
      %v1867 = vpop.f32.mrf.mxu0
      %v1868 = vadd.f32 %v1779, %v1867
      %1869 = vmatmul.bf16.gmra.mxu0 %v1256
      %v1870 = vpop.f32.mrf.mxu0
      %v1871 = vadd.f32 %v1782, %v1870
      %v1872 = vpop.f32.mrf.mxu0
      %v1873 = vadd.f32 %v1784, %v1872
      %1874 = vmatmul.bf16.gmra.mxu0 %v1259
      %v1875 = vpop.f32.mrf.mxu0
      %v1876 = vadd.f32 %v1787, %v1875
      %v1877 = vpop.f32.mrf.mxu0
      %v1878 = vadd.f32 %v1789, %v1877
      %1879 = vmatmul.bf16.gmra.mxu0 %v1262
      %v1880 = vpop.f32.mrf.mxu0
      %v1881 = vadd.f32 %v1792, %v1880
      %v1882 = vpop.f32.mrf.mxu0
      %v1883 = vadd.f32 %v1794, %v1882
      %1884 = vmatmul.bf16.gmra.mxu0 %v1265
      %v1885 = vpop.f32.mrf.mxu0
      %v1886 = vadd.f32 %v1797, %v1885
      %v1887 = vpop.f32.mrf.mxu0
      %v1888 = vadd.f32 %v1799, %v1887
      %1889 = vdwg.mxu0
      %1890 = vmatpush.bf16.msra.mxu0 %v1037
      %1891 = vmatpush.bf16.msra.mxu0 %v1035
      %1892 = vmatpush.bf16.msra.mxu0 %v1033
      %1893 = vmatpush.bf16.msra.mxu0 %v1031
      %1894 = vmatpush.bf16.msra.mxu0 %v1029
      %1895 = vmatpush.bf16.msra.mxu0 %v1027
      %1896 = vmatpush.bf16.msra.mxu0 %v1025
      %1897 = vmatpush.bf16.msra.mxu0 %v1023
      %1898 = vmatmul.bf16.gmra.mxu0 %v512
      %v1899 = vpop.f32.mrf.mxu0
      %v1900 = vadd.f32 %v725, %v1899
      %v1901 = vpop.f32.mrf.mxu0
      %v1902 = vadd.f32 %v725, %v1901
      %1903 = vmatmul.bf16.gmra.mxu0 %v519
      %v1904 = vpop.f32.mrf.mxu0
      %v1905 = vadd.f32 %v725, %v1904
      %v1906 = vpop.f32.mrf.mxu0
      %v1907 = vadd.f32 %v725, %v1906
      %1908 = vmatmul.bf16.gmra.mxu0 %v526
      %v1909 = vpop.f32.mrf.mxu0
      %v1910 = vadd.f32 %v725, %v1909
      %v1911 = vpop.f32.mrf.mxu0
      %v1912 = vadd.f32 %v725, %v1911
      %1913 = vmatmul.bf16.gmra.mxu0 %v533
      %v1914 = vpop.f32.mrf.mxu0
      %v1915 = vadd.f32 %v725, %v1914
      %v1916 = vpop.f32.mrf.mxu0
      %v1917 = vadd.f32 %v725, %v1916
      %1918 = vmatmul.bf16.gmra.mxu0 %v540
      %v1919 = vpop.f32.mrf.mxu0
      %v1920 = vadd.f32 %v725, %v1919
      %v1921 = vpop.f32.mrf.mxu0
      %v1922 = vadd.f32 %v725, %v1921
      %1923 = vmatmul.bf16.gmra.mxu0 %v547
      %v1924 = vpop.f32.mrf.mxu0
      %v1925 = vadd.f32 %v725, %v1924
      %v1926 = vpop.f32.mrf.mxu0
      %v1927 = vadd.f32 %v725, %v1926
      %1928 = vmatmul.bf16.gmra.mxu0 %v554
      %v1929 = vpop.f32.mrf.mxu0
      %v1930 = vadd.f32 %v725, %v1929
      %v1931 = vpop.f32.mrf.mxu0
      %v1932 = vadd.f32 %v725, %v1931
      %1933 = vmatmul.bf16.gmra.mxu0 %v561
      %v1934 = vpop.f32.mrf.mxu0
      %v1935 = vadd.f32 %v725, %v1934
      %v1936 = vpop.f32.mrf.mxu0
      %v1937 = vadd.f32 %v725, %v1936
      %1938 = vmatmul.bf16.gmra.mxu0 %v568
      %v1939 = vpop.f32.mrf.mxu0
      %v1940 = vadd.f32 %v725, %v1939
      %v1941 = vpop.f32.mrf.mxu0
      %v1942 = vadd.f32 %v725, %v1941
      %1943 = vmatmul.bf16.gmra.mxu0 %v575
      %v1944 = vpop.f32.mrf.mxu0
      %v1945 = vadd.f32 %v725, %v1944
      %v1946 = vpop.f32.mrf.mxu0
      %v1947 = vadd.f32 %v725, %v1946
      %1948 = vmatmul.bf16.gmra.mxu0 %v582
      %v1949 = vpop.f32.mrf.mxu0
      %v1950 = vadd.f32 %v725, %v1949
      %v1951 = vpop.f32.mrf.mxu0
      %v1952 = vadd.f32 %v725, %v1951
      %1953 = vmatmul.bf16.gmra.mxu0 %v589
      %v1954 = vpop.f32.mrf.mxu0
      %v1955 = vadd.f32 %v725, %v1954
      %v1956 = vpop.f32.mrf.mxu0
      %v1957 = vadd.f32 %v725, %v1956
      %1958 = vmatmul.bf16.gmra.mxu0 %v596
      %v1959 = vpop.f32.mrf.mxu0
      %v1960 = vadd.f32 %v725, %v1959
      %v1961 = vpop.f32.mrf.mxu0
      %v1962 = vadd.f32 %v725, %v1961
      %1963 = vmatmul.bf16.gmra.mxu0 %v603
      %v1964 = vpop.f32.mrf.mxu0
      %v1965 = vadd.f32 %v725, %v1964
      %v1966 = vpop.f32.mrf.mxu0
      %v1967 = vadd.f32 %v725, %v1966
      %1968 = vmatmul.bf16.gmra.mxu0 %v610
      %v1969 = vpop.f32.mrf.mxu0
      %v1970 = vadd.f32 %v725, %v1969
      %v1971 = vpop.f32.mrf.mxu0
      %v1972 = vadd.f32 %v725, %v1971
      %1973 = vmatmul.bf16.gmra.mxu0 %v617
      %v1974 = vpop.f32.mrf.mxu0
      %v1975 = vadd.f32 %v725, %v1974
      %v1976 = vpop.f32.mrf.mxu0
      %v1977 = vadd.f32 %v725, %v1976
      %1978 = vdwg.mxu0
      %1979 = vmatpush.bf16.msra.mxu0 %v1053
      %1980 = vmatpush.bf16.msra.mxu0 %v1051
      %1981 = vmatpush.bf16.msra.mxu0 %v1049
      %1982 = vmatpush.bf16.msra.mxu0 %v1047
      %1983 = vmatpush.bf16.msra.mxu0 %v1045
      %1984 = vmatpush.bf16.msra.mxu0 %v1043
      %1985 = vmatpush.bf16.msra.mxu0 %v1041
      %1986 = vmatpush.bf16.msra.mxu0 %v1039
      %1987 = vmatmul.bf16.gmra.mxu0 %v513
      %v1988 = vpop.f32.mrf.mxu0
      %v1989 = vadd.f32 %v1900, %v1988
      %v1990 = vpop.f32.mrf.mxu0
      %v1991 = vadd.f32 %v1902, %v1990
      %1992 = vmatmul.bf16.gmra.mxu0 %v520
      %v1993 = vpop.f32.mrf.mxu0
      %v1994 = vadd.f32 %v1905, %v1993
      %v1995 = vpop.f32.mrf.mxu0
      %v1996 = vadd.f32 %v1907, %v1995
      %1997 = vmatmul.bf16.gmra.mxu0 %v527
      %v1998 = vpop.f32.mrf.mxu0
      %v1999 = vadd.f32 %v1910, %v1998
      %v2000 = vpop.f32.mrf.mxu0
      %v2001 = vadd.f32 %v1912, %v2000
      %2002 = vmatmul.bf16.gmra.mxu0 %v534
      %v2003 = vpop.f32.mrf.mxu0
      %v2004 = vadd.f32 %v1915, %v2003
      %v2005 = vpop.f32.mrf.mxu0
      %v2006 = vadd.f32 %v1917, %v2005
      %2007 = vmatmul.bf16.gmra.mxu0 %v541
      %v2008 = vpop.f32.mrf.mxu0
      %v2009 = vadd.f32 %v1920, %v2008
      %v2010 = vpop.f32.mrf.mxu0
      %v2011 = vadd.f32 %v1922, %v2010
      %2012 = vmatmul.bf16.gmra.mxu0 %v548
      %v2013 = vpop.f32.mrf.mxu0
      %v2014 = vadd.f32 %v1925, %v2013
      %v2015 = vpop.f32.mrf.mxu0
      %v2016 = vadd.f32 %v1927, %v2015
      %2017 = vmatmul.bf16.gmra.mxu0 %v555
      %v2018 = vpop.f32.mrf.mxu0
      %v2019 = vadd.f32 %v1930, %v2018
      %v2020 = vpop.f32.mrf.mxu0
      %v2021 = vadd.f32 %v1932, %v2020
      %2022 = vmatmul.bf16.gmra.mxu0 %v562
      %v2023 = vpop.f32.mrf.mxu0
      %v2024 = vadd.f32 %v1935, %v2023
      %v2025 = vpop.f32.mrf.mxu0
      %v2026 = vadd.f32 %v1937, %v2025
      %2027 = vmatmul.bf16.gmra.mxu0 %v569
      %v2028 = vpop.f32.mrf.mxu0
      %v2029 = vadd.f32 %v1940, %v2028
      %v2030 = vpop.f32.mrf.mxu0
      %v2031 = vadd.f32 %v1942, %v2030
      %2032 = vmatmul.bf16.gmra.mxu0 %v576
      %v2033 = vpop.f32.mrf.mxu0
      %v2034 = vadd.f32 %v1945, %v2033
      %v2035 = vpop.f32.mrf.mxu0
      %v2036 = vadd.f32 %v1947, %v2035
      %2037 = vmatmul.bf16.gmra.mxu0 %v583
      %v2038 = vpop.f32.mrf.mxu0
      %v2039 = vadd.f32 %v1950, %v2038
      %v2040 = vpop.f32.mrf.mxu0
      %v2041 = vadd.f32 %v1952, %v2040
      %2042 = vmatmul.bf16.gmra.mxu0 %v590
      %v2043 = vpop.f32.mrf.mxu0
      %v2044 = vadd.f32 %v1955, %v2043
      %v2045 = vpop.f32.mrf.mxu0
      %v2046 = vadd.f32 %v1957, %v2045
      %2047 = vmatmul.bf16.gmra.mxu0 %v597
      %v2048 = vpop.f32.mrf.mxu0
      %v2049 = vadd.f32 %v1960, %v2048
      %v2050 = vpop.f32.mrf.mxu0
      %v2051 = vadd.f32 %v1962, %v2050
      %2052 = vmatmul.bf16.gmra.mxu0 %v604
      %v2053 = vpop.f32.mrf.mxu0
      %v2054 = vadd.f32 %v1965, %v2053
      %v2055 = vpop.f32.mrf.mxu0
      %v2056 = vadd.f32 %v1967, %v2055
      %2057 = vmatmul.bf16.gmra.mxu0 %v611
      %v2058 = vpop.f32.mrf.mxu0
      %v2059 = vadd.f32 %v1970, %v2058
      %v2060 = vpop.f32.mrf.mxu0
      %v2061 = vadd.f32 %v1972, %v2060
      %2062 = vmatmul.bf16.gmra.mxu0 %v618
      %v2063 = vpop.f32.mrf.mxu0
      %v2064 = vadd.f32 %v1975, %v2063
      %v2065 = vpop.f32.mrf.mxu0
      %v2066 = vadd.f32 %v1977, %v2065
      %2067 = vdwg.mxu0
      %2068 = vmatpush.bf16.msra.mxu0 %v1069
      %2069 = vmatpush.bf16.msra.mxu0 %v1067
      %2070 = vmatpush.bf16.msra.mxu0 %v1065
      %2071 = vmatpush.bf16.msra.mxu0 %v1063
      %2072 = vmatpush.bf16.msra.mxu0 %v1061
      %2073 = vmatpush.bf16.msra.mxu0 %v1059
      %2074 = vmatpush.bf16.msra.mxu0 %v1057
      %2075 = vmatpush.bf16.msra.mxu0 %v1055
      %2076 = vmatmul.bf16.gmra.mxu0 %v514
      %v2077 = vpop.f32.mrf.mxu0
      %v2078 = vadd.f32 %v1989, %v2077
      %v2079 = vpop.f32.mrf.mxu0
      %v2080 = vadd.f32 %v1991, %v2079
      %2081 = vmatmul.bf16.gmra.mxu0 %v521
      %v2082 = vpop.f32.mrf.mxu0
      %v2083 = vadd.f32 %v1994, %v2082
      %v2084 = vpop.f32.mrf.mxu0
      %v2085 = vadd.f32 %v1996, %v2084
      %2086 = vmatmul.bf16.gmra.mxu0 %v528
      %v2087 = vpop.f32.mrf.mxu0
      %v2088 = vadd.f32 %v1999, %v2087
      %v2089 = vpop.f32.mrf.mxu0
      %v2090 = vadd.f32 %v2001, %v2089
      %2091 = vmatmul.bf16.gmra.mxu0 %v535
      %v2092 = vpop.f32.mrf.mxu0
      %v2093 = vadd.f32 %v2004, %v2092
      %v2094 = vpop.f32.mrf.mxu0
      %v2095 = vadd.f32 %v2006, %v2094
      %2096 = vmatmul.bf16.gmra.mxu0 %v542
      %v2097 = vpop.f32.mrf.mxu0
      %v2098 = vadd.f32 %v2009, %v2097
      %v2099 = vpop.f32.mrf.mxu0
      %v2100 = vadd.f32 %v2011, %v2099
      %2101 = vmatmul.bf16.gmra.mxu0 %v549
      %v2102 = vpop.f32.mrf.mxu0
      %v2103 = vadd.f32 %v2014, %v2102
      %v2104 = vpop.f32.mrf.mxu0
      %v2105 = vadd.f32 %v2016, %v2104
      %2106 = vmatmul.bf16.gmra.mxu0 %v556
      %v2107 = vpop.f32.mrf.mxu0
      %v2108 = vadd.f32 %v2019, %v2107
      %v2109 = vpop.f32.mrf.mxu0
      %v2110 = vadd.f32 %v2021, %v2109
      %2111 = vmatmul.bf16.gmra.mxu0 %v563
      %v2112 = vpop.f32.mrf.mxu0
      %v2113 = vadd.f32 %v2024, %v2112
      %v2114 = vpop.f32.mrf.mxu0
      %v2115 = vadd.f32 %v2026, %v2114
      %2116 = vmatmul.bf16.gmra.mxu0 %v570
      %v2117 = vpop.f32.mrf.mxu0
      %v2118 = vadd.f32 %v2029, %v2117
      %v2119 = vpop.f32.mrf.mxu0
      %v2120 = vadd.f32 %v2031, %v2119
      %2121 = vmatmul.bf16.gmra.mxu0 %v577
      %v2122 = vpop.f32.mrf.mxu0
      %v2123 = vadd.f32 %v2034, %v2122
      %v2124 = vpop.f32.mrf.mxu0
      %v2125 = vadd.f32 %v2036, %v2124
      %2126 = vmatmul.bf16.gmra.mxu0 %v584
      %v2127 = vpop.f32.mrf.mxu0
      %v2128 = vadd.f32 %v2039, %v2127
      %v2129 = vpop.f32.mrf.mxu0
      %v2130 = vadd.f32 %v2041, %v2129
      %2131 = vmatmul.bf16.gmra.mxu0 %v591
      %v2132 = vpop.f32.mrf.mxu0
      %v2133 = vadd.f32 %v2044, %v2132
      %v2134 = vpop.f32.mrf.mxu0
      %v2135 = vadd.f32 %v2046, %v2134
      %2136 = vmatmul.bf16.gmra.mxu0 %v598
      %v2137 = vpop.f32.mrf.mxu0
      %v2138 = vadd.f32 %v2049, %v2137
      %v2139 = vpop.f32.mrf.mxu0
      %v2140 = vadd.f32 %v2051, %v2139
      %2141 = vmatmul.bf16.gmra.mxu0 %v605
      %v2142 = vpop.f32.mrf.mxu0
      %v2143 = vadd.f32 %v2054, %v2142
      %v2144 = vpop.f32.mrf.mxu0
      %v2145 = vadd.f32 %v2056, %v2144
      %2146 = vmatmul.bf16.gmra.mxu0 %v612
      %v2147 = vpop.f32.mrf.mxu0
      %v2148 = vadd.f32 %v2059, %v2147
      %v2149 = vpop.f32.mrf.mxu0
      %v2150 = vadd.f32 %v2061, %v2149
      %2151 = vmatmul.bf16.gmra.mxu0 %v619
      %v2152 = vpop.f32.mrf.mxu0
      %v2153 = vadd.f32 %v2064, %v2152
      %v2154 = vpop.f32.mrf.mxu0
      %v2155 = vadd.f32 %v2066, %v2154
      %2156 = vdwg.mxu0
      %2157 = vmatpush.bf16.msra.mxu0 %v1085
      %2158 = vmatpush.bf16.msra.mxu0 %v1083
      %2159 = vmatpush.bf16.msra.mxu0 %v1081
      %2160 = vmatpush.bf16.msra.mxu0 %v1079
      %2161 = vmatpush.bf16.msra.mxu0 %v1077
      %2162 = vmatpush.bf16.msra.mxu0 %v1075
      %2163 = vmatpush.bf16.msra.mxu0 %v1073
      %2164 = vmatpush.bf16.msra.mxu0 %v1071
      %2165 = vmatmul.bf16.gmra.mxu0 %v515
      %v2166 = vpop.f32.mrf.mxu0
      %v2167 = vadd.f32 %v2078, %v2166
      %v2168 = vpop.f32.mrf.mxu0
      %v2169 = vadd.f32 %v2080, %v2168
      %2170 = vmatmul.bf16.gmra.mxu0 %v522
      %v2171 = vpop.f32.mrf.mxu0
      %v2172 = vadd.f32 %v2083, %v2171
      %v2173 = vpop.f32.mrf.mxu0
      %v2174 = vadd.f32 %v2085, %v2173
      %2175 = vmatmul.bf16.gmra.mxu0 %v529
      %v2176 = vpop.f32.mrf.mxu0
      %v2177 = vadd.f32 %v2088, %v2176
      %v2178 = vpop.f32.mrf.mxu0
      %v2179 = vadd.f32 %v2090, %v2178
      %2180 = vmatmul.bf16.gmra.mxu0 %v536
      %v2181 = vpop.f32.mrf.mxu0
      %v2182 = vadd.f32 %v2093, %v2181
      %v2183 = vpop.f32.mrf.mxu0
      %v2184 = vadd.f32 %v2095, %v2183
      %2185 = vmatmul.bf16.gmra.mxu0 %v543
      %v2186 = vpop.f32.mrf.mxu0
      %v2187 = vadd.f32 %v2098, %v2186
      %v2188 = vpop.f32.mrf.mxu0
      %v2189 = vadd.f32 %v2100, %v2188
      %2190 = vmatmul.bf16.gmra.mxu0 %v550
      %v2191 = vpop.f32.mrf.mxu0
      %v2192 = vadd.f32 %v2103, %v2191
      %v2193 = vpop.f32.mrf.mxu0
      %v2194 = vadd.f32 %v2105, %v2193
      %2195 = vmatmul.bf16.gmra.mxu0 %v557
      %v2196 = vpop.f32.mrf.mxu0
      %v2197 = vadd.f32 %v2108, %v2196
      %v2198 = vpop.f32.mrf.mxu0
      %v2199 = vadd.f32 %v2110, %v2198
      %2200 = vmatmul.bf16.gmra.mxu0 %v564
      %v2201 = vpop.f32.mrf.mxu0
      %v2202 = vadd.f32 %v2113, %v2201
      %v2203 = vpop.f32.mrf.mxu0
      %v2204 = vadd.f32 %v2115, %v2203
      %2205 = vmatmul.bf16.gmra.mxu0 %v571
      %v2206 = vpop.f32.mrf.mxu0
      %v2207 = vadd.f32 %v2118, %v2206
      %v2208 = vpop.f32.mrf.mxu0
      %v2209 = vadd.f32 %v2120, %v2208
      %2210 = vmatmul.bf16.gmra.mxu0 %v578
      %v2211 = vpop.f32.mrf.mxu0
      %v2212 = vadd.f32 %v2123, %v2211
      %v2213 = vpop.f32.mrf.mxu0
      %v2214 = vadd.f32 %v2125, %v2213
      %2215 = vmatmul.bf16.gmra.mxu0 %v585
      %v2216 = vpop.f32.mrf.mxu0
      %v2217 = vadd.f32 %v2128, %v2216
      %v2218 = vpop.f32.mrf.mxu0
      %v2219 = vadd.f32 %v2130, %v2218
      %2220 = vmatmul.bf16.gmra.mxu0 %v592
      %v2221 = vpop.f32.mrf.mxu0
      %v2222 = vadd.f32 %v2133, %v2221
      %v2223 = vpop.f32.mrf.mxu0
      %v2224 = vadd.f32 %v2135, %v2223
      %2225 = vmatmul.bf16.gmra.mxu0 %v599
      %v2226 = vpop.f32.mrf.mxu0
      %v2227 = vadd.f32 %v2138, %v2226
      %v2228 = vpop.f32.mrf.mxu0
      %v2229 = vadd.f32 %v2140, %v2228
      %2230 = vmatmul.bf16.gmra.mxu0 %v606
      %v2231 = vpop.f32.mrf.mxu0
      %v2232 = vadd.f32 %v2143, %v2231
      %v2233 = vpop.f32.mrf.mxu0
      %v2234 = vadd.f32 %v2145, %v2233
      %2235 = vmatmul.bf16.gmra.mxu0 %v613
      %v2236 = vpop.f32.mrf.mxu0
      %v2237 = vadd.f32 %v2148, %v2236
      %v2238 = vpop.f32.mrf.mxu0
      %v2239 = vadd.f32 %v2150, %v2238
      %2240 = vmatmul.bf16.gmra.mxu0 %v620
      %v2241 = vpop.f32.mrf.mxu0
      %v2242 = vadd.f32 %v2153, %v2241
      %v2243 = vpop.f32.mrf.mxu0
      %v2244 = vadd.f32 %v2155, %v2243
      %2245 = vdwg.mxu0
      %2246 = vmatpush.bf16.msra.mxu0 %v1101
      %2247 = vmatpush.bf16.msra.mxu0 %v1099
      %2248 = vmatpush.bf16.msra.mxu0 %v1097
      %2249 = vmatpush.bf16.msra.mxu0 %v1095
      %2250 = vmatpush.bf16.msra.mxu0 %v1093
      %2251 = vmatpush.bf16.msra.mxu0 %v1091
      %2252 = vmatpush.bf16.msra.mxu0 %v1089
      %2253 = vmatpush.bf16.msra.mxu0 %v1087
      %2254 = vmatmul.bf16.gmra.mxu0 %v516
      %v2255 = vpop.f32.mrf.mxu0
      %v2256 = vadd.f32 %v2167, %v2255
      %v2257 = vpop.f32.mrf.mxu0
      %v2258 = vadd.f32 %v2169, %v2257
      %2259 = vmatmul.bf16.gmra.mxu0 %v523
      %v2260 = vpop.f32.mrf.mxu0
      %v2261 = vadd.f32 %v2172, %v2260
      %v2262 = vpop.f32.mrf.mxu0
      %v2263 = vadd.f32 %v2174, %v2262
      %2264 = vmatmul.bf16.gmra.mxu0 %v530
      %v2265 = vpop.f32.mrf.mxu0
      %v2266 = vadd.f32 %v2177, %v2265
      %v2267 = vpop.f32.mrf.mxu0
      %v2268 = vadd.f32 %v2179, %v2267
      %2269 = vmatmul.bf16.gmra.mxu0 %v537
      %v2270 = vpop.f32.mrf.mxu0
      %v2271 = vadd.f32 %v2182, %v2270
      %v2272 = vpop.f32.mrf.mxu0
      %v2273 = vadd.f32 %v2184, %v2272
      %2274 = vmatmul.bf16.gmra.mxu0 %v544
      %v2275 = vpop.f32.mrf.mxu0
      %v2276 = vadd.f32 %v2187, %v2275
      %v2277 = vpop.f32.mrf.mxu0
      %v2278 = vadd.f32 %v2189, %v2277
      %2279 = vmatmul.bf16.gmra.mxu0 %v551
      %v2280 = vpop.f32.mrf.mxu0
      %v2281 = vadd.f32 %v2192, %v2280
      %v2282 = vpop.f32.mrf.mxu0
      %v2283 = vadd.f32 %v2194, %v2282
      %2284 = vmatmul.bf16.gmra.mxu0 %v558
      %v2285 = vpop.f32.mrf.mxu0
      %v2286 = vadd.f32 %v2197, %v2285
      %v2287 = vpop.f32.mrf.mxu0
      %v2288 = vadd.f32 %v2199, %v2287
      %2289 = vmatmul.bf16.gmra.mxu0 %v565
      %v2290 = vpop.f32.mrf.mxu0
      %v2291 = vadd.f32 %v2202, %v2290
      %v2292 = vpop.f32.mrf.mxu0
      %v2293 = vadd.f32 %v2204, %v2292
      %2294 = vmatmul.bf16.gmra.mxu0 %v572
      %v2295 = vpop.f32.mrf.mxu0
      %v2296 = vadd.f32 %v2207, %v2295
      %v2297 = vpop.f32.mrf.mxu0
      %v2298 = vadd.f32 %v2209, %v2297
      %2299 = vmatmul.bf16.gmra.mxu0 %v579
      %v2300 = vpop.f32.mrf.mxu0
      %v2301 = vadd.f32 %v2212, %v2300
      %v2302 = vpop.f32.mrf.mxu0
      %v2303 = vadd.f32 %v2214, %v2302
      %2304 = vmatmul.bf16.gmra.mxu0 %v586
      %v2305 = vpop.f32.mrf.mxu0
      %v2306 = vadd.f32 %v2217, %v2305
      %v2307 = vpop.f32.mrf.mxu0
      %v2308 = vadd.f32 %v2219, %v2307
      %2309 = vmatmul.bf16.gmra.mxu0 %v593
      %v2310 = vpop.f32.mrf.mxu0
      %v2311 = vadd.f32 %v2222, %v2310
      %v2312 = vpop.f32.mrf.mxu0
      %v2313 = vadd.f32 %v2224, %v2312
      %2314 = vmatmul.bf16.gmra.mxu0 %v600
      %v2315 = vpop.f32.mrf.mxu0
      %v2316 = vadd.f32 %v2227, %v2315
      %v2317 = vpop.f32.mrf.mxu0
      %v2318 = vadd.f32 %v2229, %v2317
      %2319 = vmatmul.bf16.gmra.mxu0 %v607
      %v2320 = vpop.f32.mrf.mxu0
      %v2321 = vadd.f32 %v2232, %v2320
      %v2322 = vpop.f32.mrf.mxu0
      %v2323 = vadd.f32 %v2234, %v2322
      %2324 = vmatmul.bf16.gmra.mxu0 %v614
      %v2325 = vpop.f32.mrf.mxu0
      %v2326 = vadd.f32 %v2237, %v2325
      %v2327 = vpop.f32.mrf.mxu0
      %v2328 = vadd.f32 %v2239, %v2327
      %2329 = vmatmul.bf16.gmra.mxu0 %v621
      %v2330 = vpop.f32.mrf.mxu0
      %v2331 = vadd.f32 %v2242, %v2330
      %v2332 = vpop.f32.mrf.mxu0
      %v2333 = vadd.f32 %v2244, %v2332
      %2334 = vdwg.mxu0
      %2335 = vmatpush.bf16.msra.mxu0 %v1117
      %2336 = vmatpush.bf16.msra.mxu0 %v1115
      %2337 = vmatpush.bf16.msra.mxu0 %v1113
      %2338 = vmatpush.bf16.msra.mxu0 %v1111
      %2339 = vmatpush.bf16.msra.mxu0 %v1109
      %2340 = vmatpush.bf16.msra.mxu0 %v1107
      %2341 = vmatpush.bf16.msra.mxu0 %v1105
      %2342 = vmatpush.bf16.msra.mxu0 %v1103
      %2343 = vmatmul.bf16.gmra.mxu0 %v517
      %v2344 = vpop.f32.mrf.mxu0
      %v2345 = vadd.f32 %v2256, %v2344
      %v2346 = vpop.f32.mrf.mxu0
      %v2347 = vadd.f32 %v2258, %v2346
      %2348 = vmatmul.bf16.gmra.mxu0 %v524
      %v2349 = vpop.f32.mrf.mxu0
      %v2350 = vadd.f32 %v2261, %v2349
      %v2351 = vpop.f32.mrf.mxu0
      %v2352 = vadd.f32 %v2263, %v2351
      %2353 = vmatmul.bf16.gmra.mxu0 %v531
      %v2354 = vpop.f32.mrf.mxu0
      %v2355 = vadd.f32 %v2266, %v2354
      %v2356 = vpop.f32.mrf.mxu0
      %v2357 = vadd.f32 %v2268, %v2356
      %2358 = vmatmul.bf16.gmra.mxu0 %v538
      %v2359 = vpop.f32.mrf.mxu0
      %v2360 = vadd.f32 %v2271, %v2359
      %v2361 = vpop.f32.mrf.mxu0
      %v2362 = vadd.f32 %v2273, %v2361
      %2363 = vmatmul.bf16.gmra.mxu0 %v545
      %v2364 = vpop.f32.mrf.mxu0
      %v2365 = vadd.f32 %v2276, %v2364
      %v2366 = vpop.f32.mrf.mxu0
      %v2367 = vadd.f32 %v2278, %v2366
      %2368 = vmatmul.bf16.gmra.mxu0 %v552
      %v2369 = vpop.f32.mrf.mxu0
      %v2370 = vadd.f32 %v2281, %v2369
      %v2371 = vpop.f32.mrf.mxu0
      %v2372 = vadd.f32 %v2283, %v2371
      %2373 = vmatmul.bf16.gmra.mxu0 %v559
      %v2374 = vpop.f32.mrf.mxu0
      %v2375 = vadd.f32 %v2286, %v2374
      %v2376 = vpop.f32.mrf.mxu0
      %v2377 = vadd.f32 %v2288, %v2376
      %2378 = vmatmul.bf16.gmra.mxu0 %v566
      %v2379 = vpop.f32.mrf.mxu0
      %v2380 = vadd.f32 %v2291, %v2379
      %v2381 = vpop.f32.mrf.mxu0
      %v2382 = vadd.f32 %v2293, %v2381
      %2383 = vmatmul.bf16.gmra.mxu0 %v573
      %v2384 = vpop.f32.mrf.mxu0
      %v2385 = vadd.f32 %v2296, %v2384
      %v2386 = vpop.f32.mrf.mxu0
      %v2387 = vadd.f32 %v2298, %v2386
      %2388 = vmatmul.bf16.gmra.mxu0 %v580
      %v2389 = vpop.f32.mrf.mxu0
      %v2390 = vadd.f32 %v2301, %v2389
      %v2391 = vpop.f32.mrf.mxu0
      %v2392 = vadd.f32 %v2303, %v2391
      %2393 = vmatmul.bf16.gmra.mxu0 %v587
      %v2394 = vpop.f32.mrf.mxu0
      %v2395 = vadd.f32 %v2306, %v2394
      %v2396 = vpop.f32.mrf.mxu0
      %v2397 = vadd.f32 %v2308, %v2396
      %2398 = vmatmul.bf16.gmra.mxu0 %v594
      %v2399 = vpop.f32.mrf.mxu0
      %v2400 = vadd.f32 %v2311, %v2399
      %v2401 = vpop.f32.mrf.mxu0
      %v2402 = vadd.f32 %v2313, %v2401
      %2403 = vmatmul.bf16.gmra.mxu0 %v601
      %v2404 = vpop.f32.mrf.mxu0
      %v2405 = vadd.f32 %v2316, %v2404
      %v2406 = vpop.f32.mrf.mxu0
      %v2407 = vadd.f32 %v2318, %v2406
      %2408 = vmatmul.bf16.gmra.mxu0 %v608
      %v2409 = vpop.f32.mrf.mxu0
      %v2410 = vadd.f32 %v2321, %v2409
      %v2411 = vpop.f32.mrf.mxu0
      %v2412 = vadd.f32 %v2323, %v2411
      %2413 = vmatmul.bf16.gmra.mxu0 %v615
      %v2414 = vpop.f32.mrf.mxu0
      %v2415 = vadd.f32 %v2326, %v2414
      %v2416 = vpop.f32.mrf.mxu0
      %v2417 = vadd.f32 %v2328, %v2416
      %2418 = vmatmul.bf16.gmra.mxu0 %v622
      %v2419 = vpop.f32.mrf.mxu0
      %v2420 = vadd.f32 %v2331, %v2419
      %v2421 = vpop.f32.mrf.mxu0
      %v2422 = vadd.f32 %v2333, %v2421
      %2423 = vdwg.mxu0
      %2424 = vmatpush.bf16.msra.mxu0 0
      %2425 = vmatpush.bf16.msra.mxu0 0
      %2426 = vmatpush.bf16.msra.mxu0 0
      %2427 = vmatpush.bf16.msra.mxu0 0
      %2428 = vmatpush.bf16.msra.mxu0 0
      %2429 = vmatpush.bf16.msra.mxu0 0
      %2430 = vmatpush.bf16.msra.mxu0 0
      %2431 = vmatpush.bf16.msra.mxu0 %v1119
      %2432 = vmatmul.bf16.gmra.mxu0 %v1220
      %v2433 = vpop.f32.mrf.mxu0
      %v2434 = vadd.f32 %v2345, %v2433
      %v2435 = vpop.f32.mrf.mxu0
      %v2436 = vadd.f32 %v2347, %v2435
      %2437 = vmatmul.bf16.gmra.mxu0 %v1223
      %v2438 = vpop.f32.mrf.mxu0
      %v2439 = vadd.f32 %v2350, %v2438
      %v2440 = vpop.f32.mrf.mxu0
      %v2441 = vadd.f32 %v2352, %v2440
      %2442 = vmatmul.bf16.gmra.mxu0 %v1226
      %v2443 = vpop.f32.mrf.mxu0
      %v2444 = vadd.f32 %v2355, %v2443
      %v2445 = vpop.f32.mrf.mxu0
      %v2446 = vadd.f32 %v2357, %v2445
      %2447 = vmatmul.bf16.gmra.mxu0 %v1229
      %v2448 = vpop.f32.mrf.mxu0
      %v2449 = vadd.f32 %v2360, %v2448
      %v2450 = vpop.f32.mrf.mxu0
      %v2451 = vadd.f32 %v2362, %v2450
      %2452 = vmatmul.bf16.gmra.mxu0 %v1232
      %v2453 = vpop.f32.mrf.mxu0
      %v2454 = vadd.f32 %v2365, %v2453
      %v2455 = vpop.f32.mrf.mxu0
      %v2456 = vadd.f32 %v2367, %v2455
      %2457 = vmatmul.bf16.gmra.mxu0 %v1235
      %v2458 = vpop.f32.mrf.mxu0
      %v2459 = vadd.f32 %v2370, %v2458
      %v2460 = vpop.f32.mrf.mxu0
      %v2461 = vadd.f32 %v2372, %v2460
      %2462 = vmatmul.bf16.gmra.mxu0 %v1238
      %v2463 = vpop.f32.mrf.mxu0
      %v2464 = vadd.f32 %v2375, %v2463
      %v2465 = vpop.f32.mrf.mxu0
      %v2466 = vadd.f32 %v2377, %v2465
      %2467 = vmatmul.bf16.gmra.mxu0 %v1241
      %v2468 = vpop.f32.mrf.mxu0
      %v2469 = vadd.f32 %v2380, %v2468
      %v2470 = vpop.f32.mrf.mxu0
      %v2471 = vadd.f32 %v2382, %v2470
      %2472 = vmatmul.bf16.gmra.mxu0 %v1244
      %v2473 = vpop.f32.mrf.mxu0
      %v2474 = vadd.f32 %v2385, %v2473
      %v2475 = vpop.f32.mrf.mxu0
      %v2476 = vadd.f32 %v2387, %v2475
      %2477 = vmatmul.bf16.gmra.mxu0 %v1247
      %v2478 = vpop.f32.mrf.mxu0
      %v2479 = vadd.f32 %v2390, %v2478
      %v2480 = vpop.f32.mrf.mxu0
      %v2481 = vadd.f32 %v2392, %v2480
      %2482 = vmatmul.bf16.gmra.mxu0 %v1250
      %v2483 = vpop.f32.mrf.mxu0
      %v2484 = vadd.f32 %v2395, %v2483
      %v2485 = vpop.f32.mrf.mxu0
      %v2486 = vadd.f32 %v2397, %v2485
      %2487 = vmatmul.bf16.gmra.mxu0 %v1253
      %v2488 = vpop.f32.mrf.mxu0
      %v2489 = vadd.f32 %v2400, %v2488
      %v2490 = vpop.f32.mrf.mxu0
      %v2491 = vadd.f32 %v2402, %v2490
      %2492 = vmatmul.bf16.gmra.mxu0 %v1256
      %v2493 = vpop.f32.mrf.mxu0
      %v2494 = vadd.f32 %v2405, %v2493
      %v2495 = vpop.f32.mrf.mxu0
      %v2496 = vadd.f32 %v2407, %v2495
      %2497 = vmatmul.bf16.gmra.mxu0 %v1259
      %v2498 = vpop.f32.mrf.mxu0
      %v2499 = vadd.f32 %v2410, %v2498
      %v2500 = vpop.f32.mrf.mxu0
      %v2501 = vadd.f32 %v2412, %v2500
      %2502 = vmatmul.bf16.gmra.mxu0 %v1262
      %v2503 = vpop.f32.mrf.mxu0
      %v2504 = vadd.f32 %v2415, %v2503
      %v2505 = vpop.f32.mrf.mxu0
      %v2506 = vadd.f32 %v2417, %v2505
      %2507 = vmatmul.bf16.gmra.mxu0 %v1265
      %v2508 = vpop.f32.mrf.mxu0
      %v2509 = vadd.f32 %v2420, %v2508
      %v2510 = vpop.f32.mrf.mxu0
      %v2511 = vadd.f32 %v2422, %v2510
      %2512 = vdwg.mxu0
      %v2513 = vmax.f32 %v1811, 0.0
      %v2514 = vmax.f32 %v2434, 0.0
      %v2515 = vmax.f32 %v1813, 0.0
      %v2516 = vmax.f32 %v2436, 0.0
      %v2517 = vmax.f32 %v1816, 0.0
      %v2518 = vmax.f32 %v2439, 0.0
      %v2519 = vmax.f32 %v1818, 0.0
      %v2520 = vmax.f32 %v2441, 0.0
      %v2521 = vmax.f32 %v1821, 0.0
      %v2522 = vmax.f32 %v2444, 0.0
      %v2523 = vmax.f32 %v1823, 0.0
      %v2524 = vmax.f32 %v2446, 0.0
      %v2525 = vmax.f32 %v1826, 0.0
      %v2526 = vmax.f32 %v2449, 0.0
      %v2527 = vmax.f32 %v1828, 0.0
      %v2528 = vmax.f32 %v2451, 0.0
      %v2529 = vmax.f32 %v1831, 0.0
      %v2530 = vmax.f32 %v2454, 0.0
      %v2531 = vmax.f32 %v1833, 0.0
      %v2532 = vmax.f32 %v2456, 0.0
      %v2533 = vmax.f32 %v1836, 0.0
      %v2534 = vmax.f32 %v2459, 0.0
      %v2535 = vmax.f32 %v1838, 0.0
      %v2536 = vmax.f32 %v2461, 0.0
      %v2537 = vmax.f32 %v1841, 0.0
      %v2538 = vmax.f32 %v2464, 0.0
      %v2539 = vmax.f32 %v1843, 0.0
      %v2540 = vmax.f32 %v2466, 0.0
      %v2541 = vmax.f32 %v1846, 0.0
      %v2542 = vmax.f32 %v2469, 0.0
      %v2543 = vmax.f32 %v1848, 0.0
      %v2544 = vmax.f32 %v2471, 0.0
      %v2545 = vmax.f32 %v1851, 0.0
      %v2546 = vmax.f32 %v2474, 0.0
      %v2547 = vmax.f32 %v1853, 0.0
      %v2548 = vmax.f32 %v2476, 0.0
      %v2549 = vmax.f32 %v1856, 0.0
      %v2550 = vmax.f32 %v2479, 0.0
      %v2551 = vmax.f32 %v1858, 0.0
      %v2552 = vmax.f32 %v2481, 0.0
      %v2553 = vmax.f32 %v1861, 0.0
      %v2554 = vmax.f32 %v2484, 0.0
      %v2555 = vmax.f32 %v1863, 0.0
      %v2556 = vmax.f32 %v2486, 0.0
      %v2557 = vmax.f32 %v1866, 0.0
      %v2558 = vmax.f32 %v2489, 0.0
      %v2559 = vmax.f32 %v1868, 0.0
      %v2560 = vmax.f32 %v2491, 0.0
      %v2561 = vmax.f32 %v1871, 0.0
      %v2562 = vmax.f32 %v2494, 0.0
      %v2563 = vmax.f32 %v1873, 0.0
      %v2564 = vmax.f32 %v2496, 0.0
      %v2565 = vmax.f32 %v1876, 0.0
      %v2566 = vmax.f32 %v2499, 0.0
      %v2567 = vmax.f32 %v1878, 0.0
      %v2568 = vmax.f32 %v2501, 0.0
      %v2569 = vmax.f32 %v1881, 0.0
      %v2570 = vmax.f32 %v2504, 0.0
      %v2571 = vmax.f32 %v1883, 0.0
      %v2572 = vmax.f32 %v2506, 0.0
      %v2573 = vmax.f32 %v1886, 0.0
      %v2574 = vmax.f32 %v2509, 0.0
      %v2575 = vmax.f32 %v1888, 0.0
      %v2576 = vmax.f32 %v2511, 0.0
      %v2577 = vpack.c.bf16 %v2515, %v2513
      %v2578 = vpack.c.bf16 %v2516, %v2514
      %v2579 = vpack.c.bf16 %v2519, %v2517
      %v2580 = vpack.c.bf16 %v2520, %v2518
      %v2581 = vpack.c.bf16 %v2523, %v2521
      %v2582 = vpack.c.bf16 %v2524, %v2522
      %v2583 = vpack.c.bf16 %v2527, %v2525
      %v2584 = vpack.c.bf16 %v2528, %v2526
      %v2585 = vpack.c.bf16 %v2531, %v2529
      %v2586 = vpack.c.bf16 %v2532, %v2530
      %v2587 = vpack.c.bf16 %v2535, %v2533
      %v2588 = vpack.c.bf16 %v2536, %v2534
      %v2589 = vpack.c.bf16 %v2539, %v2537
      %v2590 = vpack.c.bf16 %v2540, %v2538
      %v2591 = vpack.c.bf16 %v2543, %v2541
      %v2592 = vpack.c.bf16 %v2544, %v2542
      %v2593 = vpack.c.bf16 %v2547, %v2545
      %v2594 = vpack.c.bf16 %v2548, %v2546
      %v2595 = vpack.c.bf16 %v2551, %v2549
      %v2596 = vpack.c.bf16 %v2552, %v2550
      %v2597 = vpack.c.bf16 %v2555, %v2553
      %v2598 = vpack.c.bf16 %v2556, %v2554
      %v2599 = vpack.c.bf16 %v2559, %v2557
      %v2600 = vpack.c.bf16 %v2560, %v2558
      %v2601 = vpack.c.bf16 %v2563, %v2561
      %v2602 = vpack.c.bf16 %v2564, %v2562
      %v2603 = vpack.c.bf16 %v2567, %v2565
      %v2604 = vpack.c.bf16 %v2568, %v2566
      %v2605 = vpack.c.bf16 %v2571, %v2569
      %v2606 = vpack.c.bf16 %v2572, %v2570
      %v2607 = vpack.c.bf16 %v2575, %v2573
      %v2608 = vpack.c.bf16 %v2576, %v2574
      %v2609 = vld [vmem:[%s2] sm:$0xf]
      %v2610 = vld [vmem:[%s2 + $0x4] sm:$0xf]
      %v2611 = vld [vmem:[%s2 + $0x8] sm:$0xf]
      %v2612 = vld [vmem:[%s2 + $0xc] sm:$0xf]
      %v2613 = vld [vmem:[%s2 + $0x10] sm:$0xf]
      %v2614 = vld [vmem:[%s2 + $0x14] sm:$0xf]
      %v2615 = vld [vmem:[%s2 + $0x18] sm:$0xf]
      %v2616 = vld [vmem:[%s2 + $0x1c] sm:$0xf]
      %v2617 = vld [vmem:[%s2 + $0x20] sm:$0xf]
      %v2618 = vld [vmem:[%s2 + $0x24] sm:$0xf]
      %v2619 = vld [vmem:[%s2 + $0x28] sm:$0xf]
      %v2620 = vld [vmem:[%s2 + $0x2c] sm:$0xf]
      %v2621 = vld [vmem:[%s2 + $0x30] sm:$0xf]
      %v2622 = vld [vmem:[%s2 + $0x34] sm:$0xf]
      %v2623 = vld [vmem:[%s2 + $0x38] sm:$0xf]
      %v2624 = vld [vmem:[%s2 + $0x3c] sm:$0xf]
      %v2625 = vld [vmem:[%s2 + $0x40] sm:$0xf]
      %v2626 = vld [vmem:[%s2 + $0x44] sm:$0xf]
      %v2627 = vld [vmem:[%s2 + $0x48] sm:$0xf]
      %v2628 = vld [vmem:[%s2 + $0x4c] sm:$0xf]
      %v2629 = vld [vmem:[%s2 + $0x50] sm:$0xf]
      %v2630 = vld [vmem:[%s2 + $0x54] sm:$0xf]
      %v2631 = vld [vmem:[%s2 + $0x58] sm:$0xf]
      %v2632 = vld [vmem:[%s2 + $0x5c] sm:$0xf]
      %v2633 = vld [vmem:[%s2 + $0x60] sm:$0xf]
      %v2634 = vld [vmem:[%s2 + $0x64] sm:$0xf]
      %v2635 = vld [vmem:[%s2 + $0x68] sm:$0xf]
      %v2636 = vld [vmem:[%s2 + $0x6c] sm:$0xf]
      %v2637 = vld [vmem:[%s2 + $0x70] sm:$0xf]
      %v2638 = vld [vmem:[%s2 + $0x74] sm:$0xf]
      %v2639 = vld [vmem:[%s2 + $0x78] sm:$0xf]
      %v2640 = vld [vmem:[%s2 + $0x7c] sm:$0xf]
      %v2641 = vld [vmem:[%s6 + $0x1] ss:$0 sm:$0xff]
      %v2674 = vunpack.c.l.b16 %v2609
      %v2675 = vunpack.c.l.b16 %v2610
      %v2676 = vunpack.c.l.b16 %v2611
      %v2677 = vunpack.c.l.b16 %v2612
      %v2678 = vunpack.c.l.b16 %v2613
      %v2679 = vunpack.c.l.b16 %v2614
      %v2680 = vunpack.c.l.b16 %v2615
      %v2681 = vunpack.c.l.b16 %v2616
      %v2682 = vunpack.c.l.b16 %v2617
      %v2683 = vunpack.c.l.b16 %v2618
      %v2684 = vunpack.c.l.b16 %v2619
      %v2685 = vunpack.c.l.b16 %v2620
      %v2686 = vunpack.c.l.b16 %v2621
      %v2687 = vunpack.c.l.b16 %v2622
      %v2688 = vunpack.c.l.b16 %v2623
      %v2689 = vunpack.c.l.b16 %v2624
      %v2690 = vunpack.c.l.b16 %v2625
      %v2691 = vunpack.c.l.b16 %v2626
      %v2692 = vunpack.c.l.b16 %v2627
      %v2693 = vunpack.c.l.b16 %v2628
      %v2694 = vunpack.c.l.b16 %v2629
      %v2695 = vunpack.c.l.b16 %v2630
      %v2696 = vunpack.c.l.b16 %v2631
      %v2697 = vunpack.c.l.b16 %v2632
      %v2698 = vunpack.c.l.b16 %v2633
      %v2699 = vunpack.c.l.b16 %v2634
      %v2700 = vunpack.c.l.b16 %v2635
      %v2701 = vunpack.c.l.b16 %v2636
      %v2702 = vunpack.c.l.b16 %v2637
      %v2703 = vunpack.c.l.b16 %v2638
      %v2704 = vunpack.c.l.b16 %v2639
      %v2705 = vunpack.c.l.b16 %v2640
      %v2706 = vpack.c.b16 %v2675, %v2674
      %v2707 = vpack.c.b16 %v2677, %v2676
      %v2708 = vpack.c.b16 %v2679, %v2678
      %v2709 = vpack.c.b16 %v2681, %v2680
      %v2710 = vpack.c.b16 %v2683, %v2682
      %v2711 = vpack.c.b16 %v2685, %v2684
      %v2712 = vpack.c.b16 %v2687, %v2686
      %v2713 = vpack.c.b16 %v2689, %v2688
      %v2714 = vpack.c.b16 %v2691, %v2690
      %v2715 = vpack.c.b16 %v2693, %v2692
      %v2716 = vpack.c.b16 %v2695, %v2694
      %v2717 = vpack.c.b16 %v2697, %v2696
      %v2718 = vpack.c.b16 %v2699, %v2698
      %v2719 = vpack.c.b16 %v2701, %v2700
      %v2720 = vpack.c.b16 %v2703, %v2702
      %v2721 = vpack.c.b16 %v2705, %v2704
      %2738 = vmatpush.bf16.msra.mxu0 %v2713
      %2739 = vmatpush.bf16.msra.mxu0 %v2712
      %2740 = vmatpush.bf16.msra.mxu0 %v2711
      %2741 = vmatpush.bf16.msra.mxu0 %v2710
      %2742 = vmatpush.bf16.msra.mxu0 %v2709
      %2743 = vmatpush.bf16.msra.mxu0 %v2708
      %2744 = vmatpush.bf16.msra.mxu0 %v2707
      %2745 = vmatpush.bf16.msra.mxu0 %v2706
      %2746 = vmatmul.bf16.gmra.mxu0 %v2577
      %v2747 = vpop.f32.mrf.mxu0
      %v2748 = vadd.f32 %v2641, %v2747
      %v2749 = vpop.f32.mrf.mxu0
      %v2750 = vadd.f32 %v2641, %v2749
      %2751 = vmatmul.bf16.gmra.mxu0 %v2579
      %v2752 = vpop.f32.mrf.mxu0
      %v2753 = vadd.f32 %v2641, %v2752
      %v2754 = vpop.f32.mrf.mxu0
      %v2755 = vadd.f32 %v2641, %v2754
      %2756 = vmatmul.bf16.gmra.mxu0 %v2581
      %v2757 = vpop.f32.mrf.mxu0
      %v2758 = vadd.f32 %v2641, %v2757
      %v2759 = vpop.f32.mrf.mxu0
      %v2760 = vadd.f32 %v2641, %v2759
      %2761 = vmatmul.bf16.gmra.mxu0 %v2583
      %v2762 = vpop.f32.mrf.mxu0
      %v2763 = vadd.f32 %v2641, %v2762
      %v2764 = vpop.f32.mrf.mxu0
      %v2765 = vadd.f32 %v2641, %v2764
      %2766 = vmatmul.bf16.gmra.mxu0 %v2585
      %v2767 = vpop.f32.mrf.mxu0
      %v2768 = vadd.f32 %v2641, %v2767
      %v2769 = vpop.f32.mrf.mxu0
      %v2770 = vadd.f32 %v2641, %v2769
      %2771 = vmatmul.bf16.gmra.mxu0 %v2587
      %v2772 = vpop.f32.mrf.mxu0
      %v2773 = vadd.f32 %v2641, %v2772
      %v2774 = vpop.f32.mrf.mxu0
      %v2775 = vadd.f32 %v2641, %v2774
      %2776 = vmatmul.bf16.gmra.mxu0 %v2589
      %v2777 = vpop.f32.mrf.mxu0
      %v2778 = vadd.f32 %v2641, %v2777
      %v2779 = vpop.f32.mrf.mxu0
      %v2780 = vadd.f32 %v2641, %v2779
      %2781 = vmatmul.bf16.gmra.mxu0 %v2591
      %v2782 = vpop.f32.mrf.mxu0
      %v2783 = vadd.f32 %v2641, %v2782
      %v2784 = vpop.f32.mrf.mxu0
      %v2785 = vadd.f32 %v2641, %v2784
      %2786 = vmatmul.bf16.gmra.mxu0 %v2593
      %v2787 = vpop.f32.mrf.mxu0
      %v2788 = vadd.f32 %v2641, %v2787
      %v2789 = vpop.f32.mrf.mxu0
      %v2790 = vadd.f32 %v2641, %v2789
      %2791 = vmatmul.bf16.gmra.mxu0 %v2595
      %v2792 = vpop.f32.mrf.mxu0
      %v2793 = vadd.f32 %v2641, %v2792
      %v2794 = vpop.f32.mrf.mxu0
      %v2795 = vadd.f32 %v2641, %v2794
      %2796 = vmatmul.bf16.gmra.mxu0 %v2597
      %v2797 = vpop.f32.mrf.mxu0
      %v2798 = vadd.f32 %v2641, %v2797
      %v2799 = vpop.f32.mrf.mxu0
      %v2800 = vadd.f32 %v2641, %v2799
      %2801 = vmatmul.bf16.gmra.mxu0 %v2599
      %v2802 = vpop.f32.mrf.mxu0
      %v2803 = vadd.f32 %v2641, %v2802
      %v2804 = vpop.f32.mrf.mxu0
      %v2805 = vadd.f32 %v2641, %v2804
      %2806 = vmatmul.bf16.gmra.mxu0 %v2601
      %v2807 = vpop.f32.mrf.mxu0
      %v2808 = vadd.f32 %v2641, %v2807
      %v2809 = vpop.f32.mrf.mxu0
      %v2810 = vadd.f32 %v2641, %v2809
      %2811 = vmatmul.bf16.gmra.mxu0 %v2603
      %v2812 = vpop.f32.mrf.mxu0
      %v2813 = vadd.f32 %v2641, %v2812
      %v2814 = vpop.f32.mrf.mxu0
      %v2815 = vadd.f32 %v2641, %v2814
      %2816 = vmatmul.bf16.gmra.mxu0 %v2605
      %v2817 = vpop.f32.mrf.mxu0
      %v2818 = vadd.f32 %v2641, %v2817
      %v2819 = vpop.f32.mrf.mxu0
      %v2820 = vadd.f32 %v2641, %v2819
      %2821 = vmatmul.bf16.gmra.mxu0 %v2607
      %v2822 = vpop.f32.mrf.mxu0
      %v2823 = vadd.f32 %v2641, %v2822
      %v2824 = vpop.f32.mrf.mxu0
      %v2825 = vadd.f32 %v2641, %v2824
      %2826 = vdwg.mxu0
      %2827 = vmatpush.bf16.msra.mxu0 %v2721
      %2828 = vmatpush.bf16.msra.mxu0 %v2720
      %2829 = vmatpush.bf16.msra.mxu0 %v2719
      %2830 = vmatpush.bf16.msra.mxu0 %v2718
      %2831 = vmatpush.bf16.msra.mxu0 %v2717
      %2832 = vmatpush.bf16.msra.mxu0 %v2716
      %2833 = vmatpush.bf16.msra.mxu0 %v2715
      %2834 = vmatpush.bf16.msra.mxu0 %v2714
      %2835 = vmatmul.bf16.gmra.mxu0 %v2578
      %v2836 = vpop.f32.mrf.mxu0
      %v2837 = vadd.f32 %v2748, %v2836
      %v2838 = vpop.f32.mrf.mxu0
      %v2839 = vadd.f32 %v2750, %v2838
      %2840 = vmatmul.bf16.gmra.mxu0 %v2580
      %v2841 = vpop.f32.mrf.mxu0
      %v2842 = vadd.f32 %v2753, %v2841
      %v2843 = vpop.f32.mrf.mxu0
      %v2844 = vadd.f32 %v2755, %v2843
      %2845 = vmatmul.bf16.gmra.mxu0 %v2582
      %v2846 = vpop.f32.mrf.mxu0
      %v2847 = vadd.f32 %v2758, %v2846
      %v2848 = vpop.f32.mrf.mxu0
      %v2849 = vadd.f32 %v2760, %v2848
      %2850 = vmatmul.bf16.gmra.mxu0 %v2584
      %v2851 = vpop.f32.mrf.mxu0
      %v2852 = vadd.f32 %v2763, %v2851
      %v2853 = vpop.f32.mrf.mxu0
      %v2854 = vadd.f32 %v2765, %v2853
      %2855 = vmatmul.bf16.gmra.mxu0 %v2586
      %v2856 = vpop.f32.mrf.mxu0
      %v2857 = vadd.f32 %v2768, %v2856
      %v2858 = vpop.f32.mrf.mxu0
      %v2859 = vadd.f32 %v2770, %v2858
      %2860 = vmatmul.bf16.gmra.mxu0 %v2588
      %v2861 = vpop.f32.mrf.mxu0
      %v2862 = vadd.f32 %v2773, %v2861
      %v2863 = vpop.f32.mrf.mxu0
      %v2864 = vadd.f32 %v2775, %v2863
      %2865 = vmatmul.bf16.gmra.mxu0 %v2590
      %v2866 = vpop.f32.mrf.mxu0
      %v2867 = vadd.f32 %v2778, %v2866
      %v2868 = vpop.f32.mrf.mxu0
      %v2869 = vadd.f32 %v2780, %v2868
      %2870 = vmatmul.bf16.gmra.mxu0 %v2592
      %v2871 = vpop.f32.mrf.mxu0
      %v2872 = vadd.f32 %v2783, %v2871
      %v2873 = vpop.f32.mrf.mxu0
      %v2874 = vadd.f32 %v2785, %v2873
      %2875 = vmatmul.bf16.gmra.mxu0 %v2594
      %v2876 = vpop.f32.mrf.mxu0
      %v2877 = vadd.f32 %v2788, %v2876
      %v2878 = vpop.f32.mrf.mxu0
      %v2879 = vadd.f32 %v2790, %v2878
      %2880 = vmatmul.bf16.gmra.mxu0 %v2596
      %v2881 = vpop.f32.mrf.mxu0
      %v2882 = vadd.f32 %v2793, %v2881
      %v2883 = vpop.f32.mrf.mxu0
      %v2884 = vadd.f32 %v2795, %v2883
      %2885 = vmatmul.bf16.gmra.mxu0 %v2598
      %v2886 = vpop.f32.mrf.mxu0
      %v2887 = vadd.f32 %v2798, %v2886
      %v2888 = vpop.f32.mrf.mxu0
      %v2889 = vadd.f32 %v2800, %v2888
      %2890 = vmatmul.bf16.gmra.mxu0 %v2600
      %v2891 = vpop.f32.mrf.mxu0
      %v2892 = vadd.f32 %v2803, %v2891
      %v2893 = vpop.f32.mrf.mxu0
      %v2894 = vadd.f32 %v2805, %v2893
      %2895 = vmatmul.bf16.gmra.mxu0 %v2602
      %v2896 = vpop.f32.mrf.mxu0
      %v2897 = vadd.f32 %v2808, %v2896
      %v2898 = vpop.f32.mrf.mxu0
      %v2899 = vadd.f32 %v2810, %v2898
      %2900 = vmatmul.bf16.gmra.mxu0 %v2604
      %v2901 = vpop.f32.mrf.mxu0
      %v2902 = vadd.f32 %v2813, %v2901
      %v2903 = vpop.f32.mrf.mxu0
      %v2904 = vadd.f32 %v2815, %v2903
      %2905 = vmatmul.bf16.gmra.mxu0 %v2606
      %v2906 = vpop.f32.mrf.mxu0
      %v2907 = vadd.f32 %v2818, %v2906
      %v2908 = vpop.f32.mrf.mxu0
      %v2909 = vadd.f32 %v2820, %v2908
      %2910 = vmatmul.bf16.gmra.mxu0 %v2608
      %v2911 = vpop.f32.mrf.mxu0
      %v2912 = vadd.f32 %v2823, %v2911
      %v2913 = vpop.f32.mrf.mxu0
      %v2914 = vadd.f32 %v2825, %v2913
      %2915 = vdwg.mxu0
      %v2916 = vmax.f32 %v2837, 0.0
      %v2917 = vmax.f32 %v2839, 0.0
      %v2918 = vmax.f32 %v2842, 0.0
      %v2919 = vmax.f32 %v2844, 0.0
      %v2920 = vmax.f32 %v2847, 0.0
      %v2921 = vmax.f32 %v2849, 0.0
      %v2922 = vmax.f32 %v2852, 0.0
      %v2923 = vmax.f32 %v2854, 0.0
      %v2924 = vmax.f32 %v2857, 0.0
      %v2925 = vmax.f32 %v2859, 0.0
      %v2926 = vmax.f32 %v2862, 0.0
      %v2927 = vmax.f32 %v2864, 0.0
      %v2928 = vmax.f32 %v2867, 0.0
      %v2929 = vmax.f32 %v2869, 0.0
      %v2930 = vmax.f32 %v2872, 0.0
      %v2931 = vmax.f32 %v2874, 0.0
      %v2932 = vmax.f32 %v2877, 0.0
      %v2933 = vmax.f32 %v2879, 0.0
      %v2934 = vmax.f32 %v2882, 0.0
      %v2935 = vmax.f32 %v2884, 0.0
      %v2936 = vmax.f32 %v2887, 0.0
      %v2937 = vmax.f32 %v2889, 0.0
      %v2938 = vmax.f32 %v2892, 0.0
      %v2939 = vmax.f32 %v2894, 0.0
      %v2940 = vmax.f32 %v2897, 0.0
      %v2941 = vmax.f32 %v2899, 0.0
      %v2942 = vmax.f32 %v2902, 0.0
      %v2943 = vmax.f32 %v2904, 0.0
      %v2944 = vmax.f32 %v2907, 0.0
      %v2945 = vmax.f32 %v2909, 0.0
      %v2946 = vmax.f32 %v2912, 0.0
      %v2947 = vmax.f32 %v2914, 0.0
      %v2948 = vpack.c.bf16 %v2917, %v2916
      %v2949 = vpack.c.bf16 %v2919, %v2918
      %v2950 = vpack.c.bf16 %v2921, %v2920
      %v2951 = vpack.c.bf16 %v2923, %v2922
      %v2952 = vpack.c.bf16 %v2925, %v2924
      %v2953 = vpack.c.bf16 %v2927, %v2926
      %v2954 = vpack.c.bf16 %v2929, %v2928
      %v2955 = vpack.c.bf16 %v2931, %v2930
      %v2956 = vpack.c.bf16 %v2933, %v2932
      %v2957 = vpack.c.bf16 %v2935, %v2934
      %v2958 = vpack.c.bf16 %v2937, %v2936
      %v2959 = vpack.c.bf16 %v2939, %v2938
      %v2960 = vpack.c.bf16 %v2941, %v2940
      %v2961 = vpack.c.bf16 %v2943, %v2942
      %v2962 = vpack.c.bf16 %v2945, %v2944
      %v2963 = vpack.c.bf16 %v2947, %v2946
      %v2964 = vld [vmem:[%s3] sm:$0xf]
      %v2965 = vld [vmem:[%s3 + $0x4] sm:$0xf]
      %v2966 = vld [vmem:[%s3 + $0x8] sm:$0xf]
      %v2967 = vld [vmem:[%s3 + $0xc] sm:$0xf]
      %v2968 = vld [vmem:[%s3 + $0x10] sm:$0xf]
      %v2969 = vld [vmem:[%s3 + $0x14] sm:$0xf]
      %v2970 = vld [vmem:[%s3 + $0x18] sm:$0xf]
      %v2971 = vld [vmem:[%s3 + $0x1c] sm:$0xf]
      %v2972 = vld [vmem:[%s3 + $0x20] sm:$0xf]
      %v2973 = vld [vmem:[%s3 + $0x24] sm:$0xf]
      %v2974 = vld [vmem:[%s3 + $0x28] sm:$0xf]
      %v2975 = vld [vmem:[%s3 + $0x2c] sm:$0xf]
      %v2976 = vld [vmem:[%s3 + $0x30] sm:$0xf]
      %v2977 = vld [vmem:[%s3 + $0x34] sm:$0xf]
      %v2978 = vld [vmem:[%s3 + $0x38] sm:$0xf]
      %v2979 = vld [vmem:[%s3 + $0x3c] sm:$0xf]
      %v2980 = vld [vmem:[%s6 + $0x2] ss:$0 sm:$0xff]
      %v2997 = vunpack.c.l.b16 %v2964
      %v2998 = vunpack.c.l.b16 %v2965
      %v2999 = vunpack.c.l.b16 %v2966
      %v3000 = vunpack.c.l.b16 %v2967
      %v3001 = vunpack.c.l.b16 %v2968
      %v3002 = vunpack.c.l.b16 %v2969
      %v3003 = vunpack.c.l.b16 %v2970
      %v3004 = vunpack.c.l.b16 %v2971
      %v3005 = vunpack.c.l.b16 %v2972
      %v3006 = vunpack.c.l.b16 %v2973
      %v3007 = vunpack.c.l.b16 %v2974
      %v3008 = vunpack.c.l.b16 %v2975
      %v3009 = vunpack.c.l.b16 %v2976
      %v3010 = vunpack.c.l.b16 %v2977
      %v3011 = vunpack.c.l.b16 %v2978
      %v3012 = vunpack.c.l.b16 %v2979
      %v3013 = vpack.c.b16 %v2998, %v2997
      %v3014 = vpack.c.b16 %v3000, %v2999
      %v3015 = vpack.c.b16 %v3002, %v3001
      %v3016 = vpack.c.b16 %v3004, %v3003
      %v3017 = vpack.c.b16 %v3006, %v3005
      %v3018 = vpack.c.b16 %v3008, %v3007
      %v3019 = vpack.c.b16 %v3010, %v3009
      %v3020 = vpack.c.b16 %v3012, %v3011
      %3029 = vmatpush.bf16.msra.mxu0 %v3020
      %3030 = vmatpush.bf16.msra.mxu0 %v3019
      %3031 = vmatpush.bf16.msra.mxu0 %v3018
      %3032 = vmatpush.bf16.msra.mxu0 %v3017
      %3033 = vmatpush.bf16.msra.mxu0 %v3016
      %3034 = vmatpush.bf16.msra.mxu0 %v3015
      %3035 = vmatpush.bf16.msra.mxu0 %v3014
      %3036 = vmatpush.bf16.msra.mxu0 %v3013
      %3037 = vmatmul.bf16.gmra.mxu0 %v2948
      %v3038 = vpop.f32.mrf.mxu0
      %v3039 = vadd.f32 %v2980, %v3038
      %v3040 = vpop.f32.mrf.mxu0
      %v3041 = vadd.f32 %v2980, %v3040
      %3042 = vmatmul.bf16.gmra.mxu0 %v2949
      %v3043 = vpop.f32.mrf.mxu0
      %v3044 = vadd.f32 %v2980, %v3043
      %v3045 = vpop.f32.mrf.mxu0
      %v3046 = vadd.f32 %v2980, %v3045
      %3047 = vmatmul.bf16.gmra.mxu0 %v2950
      %v3048 = vpop.f32.mrf.mxu0
      %v3049 = vadd.f32 %v2980, %v3048
      %v3050 = vpop.f32.mrf.mxu0
      %v3051 = vadd.f32 %v2980, %v3050
      %3052 = vmatmul.bf16.gmra.mxu0 %v2951
      %v3053 = vpop.f32.mrf.mxu0
      %v3054 = vadd.f32 %v2980, %v3053
      %v3055 = vpop.f32.mrf.mxu0
      %v3056 = vadd.f32 %v2980, %v3055
      %3057 = vmatmul.bf16.gmra.mxu0 %v2952
      %v3058 = vpop.f32.mrf.mxu0
      %v3059 = vadd.f32 %v2980, %v3058
      %v3060 = vpop.f32.mrf.mxu0
      %v3061 = vadd.f32 %v2980, %v3060
      %3062 = vmatmul.bf16.gmra.mxu0 %v2953
      %v3063 = vpop.f32.mrf.mxu0
      %v3064 = vadd.f32 %v2980, %v3063
      %v3065 = vpop.f32.mrf.mxu0
      %v3066 = vadd.f32 %v2980, %v3065
      %3067 = vmatmul.bf16.gmra.mxu0 %v2954
      %v3068 = vpop.f32.mrf.mxu0
      %v3069 = vadd.f32 %v2980, %v3068
      %v3070 = vpop.f32.mrf.mxu0
      %v3071 = vadd.f32 %v2980, %v3070
      %3072 = vmatmul.bf16.gmra.mxu0 %v2955
      %v3073 = vpop.f32.mrf.mxu0
      %v3074 = vadd.f32 %v2980, %v3073
      %v3075 = vpop.f32.mrf.mxu0
      %v3076 = vadd.f32 %v2980, %v3075
      %3077 = vmatmul.bf16.gmra.mxu0 %v2956
      %v3078 = vpop.f32.mrf.mxu0
      %v3079 = vadd.f32 %v2980, %v3078
      %v3080 = vpop.f32.mrf.mxu0
      %v3081 = vadd.f32 %v2980, %v3080
      %3082 = vmatmul.bf16.gmra.mxu0 %v2957
      %v3083 = vpop.f32.mrf.mxu0
      %v3084 = vadd.f32 %v2980, %v3083
      %v3085 = vpop.f32.mrf.mxu0
      %v3086 = vadd.f32 %v2980, %v3085
      %3087 = vmatmul.bf16.gmra.mxu0 %v2958
      %v3088 = vpop.f32.mrf.mxu0
      %v3089 = vadd.f32 %v2980, %v3088
      %v3090 = vpop.f32.mrf.mxu0
      %v3091 = vadd.f32 %v2980, %v3090
      %3092 = vmatmul.bf16.gmra.mxu0 %v2959
      %v3093 = vpop.f32.mrf.mxu0
      %v3094 = vadd.f32 %v2980, %v3093
      %v3095 = vpop.f32.mrf.mxu0
      %v3096 = vadd.f32 %v2980, %v3095
      %3097 = vmatmul.bf16.gmra.mxu0 %v2960
      %v3098 = vpop.f32.mrf.mxu0
      %v3099 = vadd.f32 %v2980, %v3098
      %v3100 = vpop.f32.mrf.mxu0
      %v3101 = vadd.f32 %v2980, %v3100
      %3102 = vmatmul.bf16.gmra.mxu0 %v2961
      %v3103 = vpop.f32.mrf.mxu0
      %v3104 = vadd.f32 %v2980, %v3103
      %v3105 = vpop.f32.mrf.mxu0
      %v3106 = vadd.f32 %v2980, %v3105
      %3107 = vmatmul.bf16.gmra.mxu0 %v2962
      %v3108 = vpop.f32.mrf.mxu0
      %v3109 = vadd.f32 %v2980, %v3108
      %v3110 = vpop.f32.mrf.mxu0
      %v3111 = vadd.f32 %v2980, %v3110
      %3112 = vmatmul.bf16.gmra.mxu0 %v2963
      %v3113 = vpop.f32.mrf.mxu0
      %v3114 = vadd.f32 %v2980, %v3113
      %v3115 = vpop.f32.mrf.mxu0
      %v3116 = vadd.f32 %v2980, %v3115
      %3117 = vdwg.mxu0
      %v3118 = vmax.f32 %v3039, 0.0
      %v3119 = vmax.f32 %v3041, 0.0
      %v3120 = vmax.f32 %v3044, 0.0
      %v3121 = vmax.f32 %v3046, 0.0
      %v3122 = vmax.f32 %v3049, 0.0
      %v3123 = vmax.f32 %v3051, 0.0
      %v3124 = vmax.f32 %v3054, 0.0
      %v3125 = vmax.f32 %v3056, 0.0
      %v3126 = vmax.f32 %v3059, 0.0
      %v3127 = vmax.f32 %v3061, 0.0
      %v3128 = vmax.f32 %v3064, 0.0
      %v3129 = vmax.f32 %v3066, 0.0
      %v3130 = vmax.f32 %v3069, 0.0
      %v3131 = vmax.f32 %v3071, 0.0
      %v3132 = vmax.f32 %v3074, 0.0
      %v3133 = vmax.f32 %v3076, 0.0
      %v3134 = vmax.f32 %v3079, 0.0
      %v3135 = vmax.f32 %v3081, 0.0
      %v3136 = vmax.f32 %v3084, 0.0
      %v3137 = vmax.f32 %v3086, 0.0
      %v3138 = vmax.f32 %v3089, 0.0
      %v3139 = vmax.f32 %v3091, 0.0
      %v3140 = vmax.f32 %v3094, 0.0
      %v3141 = vmax.f32 %v3096, 0.0
      %v3142 = vmax.f32 %v3099, 0.0
      %v3143 = vmax.f32 %v3101, 0.0
      %v3144 = vmax.f32 %v3104, 0.0
      %v3145 = vmax.f32 %v3106, 0.0
      %v3146 = vmax.f32 %v3109, 0.0
      %v3147 = vmax.f32 %v3111, 0.0
      %v3148 = vmax.f32 %v3114, 0.0
      %v3149 = vmax.f32 %v3116, 0.0
      %v3150 = vpack.c.bf16 %v3119, %v3118
      %v3151 = vpack.c.bf16 %v3121, %v3120
      %v3152 = vpack.c.bf16 %v3123, %v3122
      %v3153 = vpack.c.bf16 %v3125, %v3124
      %v3154 = vpack.c.bf16 %v3127, %v3126
      %v3155 = vpack.c.bf16 %v3129, %v3128
      %v3156 = vpack.c.bf16 %v3131, %v3130
      %v3157 = vpack.c.bf16 %v3133, %v3132
      %v3158 = vpack.c.bf16 %v3135, %v3134
      %v3159 = vpack.c.bf16 %v3137, %v3136
      %v3160 = vpack.c.bf16 %v3139, %v3138
      %v3161 = vpack.c.bf16 %v3141, %v3140
      %v3162 = vpack.c.bf16 %v3143, %v3142
      %v3163 = vpack.c.bf16 %v3145, %v3144
      %v3164 = vpack.c.bf16 %v3147, %v3146
      %v3165 = vpack.c.bf16 %v3149, %v3148
      %s3166 = scalar_lea.vmem %s3, 64
      %v3167 = vld [vmem:[%s3166] sm:$0xf]
      %v3168 = vld [vmem:[%s3166 + $0x4] sm:$0xf]
      %v3169 = vld [vmem:[%s3166 + $0x8] sm:$0xf]
      %v3170 = vld [vmem:[%s3166 + $0xc] sm:$0xf]
      %v3171 = vld [vmem:[%s3166 + $0x10] sm:$0xf]
      %v3172 = vld [vmem:[%s3166 + $0x14] sm:$0xf]
      %v3173 = vld [vmem:[%s3166 + $0x18] sm:$0xf]
      %v3174 = vld [vmem:[%s3166 + $0x1c] sm:$0xf]
      %v3175 = vld [vmem:[%s3166 + $0x20] sm:$0xf]
      %v3176 = vld [vmem:[%s3166 + $0x24] sm:$0xf]
      %v3177 = vld [vmem:[%s3166 + $0x28] sm:$0xf]
      %v3178 = vld [vmem:[%s3166 + $0x2c] sm:$0xf]
      %v3179 = vld [vmem:[%s3166 + $0x30] sm:$0xf]
      %v3180 = vld [vmem:[%s3166 + $0x34] sm:$0xf]
      %v3181 = vld [vmem:[%s3166 + $0x38] sm:$0xf]
      %v3182 = vld [vmem:[%s3166 + $0x3c] sm:$0xf]
      %v3183 = vld [vmem:[%s6 + $0x3] ss:$0 sm:$0xff]
      %v3200 = vunpack.c.l.b16 %v3167
      %v3201 = vunpack.c.l.b16 %v3168
      %v3202 = vunpack.c.l.b16 %v3169
      %v3203 = vunpack.c.l.b16 %v3170
      %v3204 = vunpack.c.l.b16 %v3171
      %v3205 = vunpack.c.l.b16 %v3172
      %v3206 = vunpack.c.l.b16 %v3173
      %v3207 = vunpack.c.l.b16 %v3174
      %v3208 = vunpack.c.l.b16 %v3175
      %v3209 = vunpack.c.l.b16 %v3176
      %v3210 = vunpack.c.l.b16 %v3177
      %v3211 = vunpack.c.l.b16 %v3178
      %v3212 = vunpack.c.l.b16 %v3179
      %v3213 = vunpack.c.l.b16 %v3180
      %v3214 = vunpack.c.l.b16 %v3181
      %v3215 = vunpack.c.l.b16 %v3182
      %v3216 = vpack.c.b16 %v3201, %v3200
      %v3217 = vpack.c.b16 %v3203, %v3202
      %v3218 = vpack.c.b16 %v3205, %v3204
      %v3219 = vpack.c.b16 %v3207, %v3206
      %v3220 = vpack.c.b16 %v3209, %v3208
      %v3221 = vpack.c.b16 %v3211, %v3210
      %v3222 = vpack.c.b16 %v3213, %v3212
      %v3223 = vpack.c.b16 %v3215, %v3214
      %3232 = vmatpush.bf16.msra.mxu0 %v3223
      %3233 = vmatpush.bf16.msra.mxu0 %v3222
      %3234 = vmatpush.bf16.msra.mxu0 %v3221
      %3235 = vmatpush.bf16.msra.mxu0 %v3220
      %3236 = vmatpush.bf16.msra.mxu0 %v3219
      %3237 = vmatpush.bf16.msra.mxu0 %v3218
      %3238 = vmatpush.bf16.msra.mxu0 %v3217
      %3239 = vmatpush.bf16.msra.mxu0 %v3216
      %3240 = vmatmul.bf16.gmra.mxu0 %v3150
      %v3241 = vpop.f32.mrf.mxu0
      %v3242 = vadd.f32 %v3183, %v3241
      %v3243 = vpop.f32.mrf.mxu0
      %v3244 = vadd.f32 %v3183, %v3243
      %3245 = vmatmul.bf16.gmra.mxu0 %v3151
      %v3246 = vpop.f32.mrf.mxu0
      %v3247 = vadd.f32 %v3183, %v3246
      %v3248 = vpop.f32.mrf.mxu0
      %v3249 = vadd.f32 %v3183, %v3248
      %3250 = vmatmul.bf16.gmra.mxu0 %v3152
      %v3251 = vpop.f32.mrf.mxu0
      %v3252 = vadd.f32 %v3183, %v3251
      %v3253 = vpop.f32.mrf.mxu0
      %v3254 = vadd.f32 %v3183, %v3253
      %3255 = vmatmul.bf16.gmra.mxu0 %v3153
      %v3256 = vpop.f32.mrf.mxu0
      %v3257 = vadd.f32 %v3183, %v3256
      %v3258 = vpop.f32.mrf.mxu0
      %v3259 = vadd.f32 %v3183, %v3258
      %3260 = vmatmul.bf16.gmra.mxu0 %v3154
      %v3261 = vpop.f32.mrf.mxu0
      %v3262 = vadd.f32 %v3183, %v3261
      %v3263 = vpop.f32.mrf.mxu0
      %v3264 = vadd.f32 %v3183, %v3263
      %3265 = vmatmul.bf16.gmra.mxu0 %v3155
      %v3266 = vpop.f32.mrf.mxu0
      %v3267 = vadd.f32 %v3183, %v3266
      %v3268 = vpop.f32.mrf.mxu0
      %v3269 = vadd.f32 %v3183, %v3268
      %3270 = vmatmul.bf16.gmra.mxu0 %v3156
      %v3271 = vpop.f32.mrf.mxu0
      %v3272 = vadd.f32 %v3183, %v3271
      %v3273 = vpop.f32.mrf.mxu0
      %v3274 = vadd.f32 %v3183, %v3273
      %3275 = vmatmul.bf16.gmra.mxu0 %v3157
      %v3276 = vpop.f32.mrf.mxu0
      %v3277 = vadd.f32 %v3183, %v3276
      %v3278 = vpop.f32.mrf.mxu0
      %v3279 = vadd.f32 %v3183, %v3278
      %3280 = vmatmul.bf16.gmra.mxu0 %v3158
      %v3281 = vpop.f32.mrf.mxu0
      %v3282 = vadd.f32 %v3183, %v3281
      %v3283 = vpop.f32.mrf.mxu0
      %v3284 = vadd.f32 %v3183, %v3283
      %3285 = vmatmul.bf16.gmra.mxu0 %v3159
      %v3286 = vpop.f32.mrf.mxu0
      %v3287 = vadd.f32 %v3183, %v3286
      %v3288 = vpop.f32.mrf.mxu0
      %v3289 = vadd.f32 %v3183, %v3288
      %3290 = vmatmul.bf16.gmra.mxu0 %v3160
      %v3291 = vpop.f32.mrf.mxu0
      %v3292 = vadd.f32 %v3183, %v3291
      %v3293 = vpop.f32.mrf.mxu0
      %v3294 = vadd.f32 %v3183, %v3293
      %3295 = vmatmul.bf16.gmra.mxu0 %v3161
      %v3296 = vpop.f32.mrf.mxu0
      %v3297 = vadd.f32 %v3183, %v3296
      %v3298 = vpop.f32.mrf.mxu0
      %v3299 = vadd.f32 %v3183, %v3298
      %3300 = vmatmul.bf16.gmra.mxu0 %v3162
      %v3301 = vpop.f32.mrf.mxu0
      %v3302 = vadd.f32 %v3183, %v3301
      %v3303 = vpop.f32.mrf.mxu0
      %v3304 = vadd.f32 %v3183, %v3303
      %3305 = vmatmul.bf16.gmra.mxu0 %v3163
      %v3306 = vpop.f32.mrf.mxu0
      %v3307 = vadd.f32 %v3183, %v3306
      %v3308 = vpop.f32.mrf.mxu0
      %v3309 = vadd.f32 %v3183, %v3308
      %3310 = vmatmul.bf16.gmra.mxu0 %v3164
      %v3311 = vpop.f32.mrf.mxu0
      %v3312 = vadd.f32 %v3183, %v3311
      %v3313 = vpop.f32.mrf.mxu0
      %v3314 = vadd.f32 %v3183, %v3313
      %3315 = vmatmul.bf16.gmra.mxu0 %v3165
      %v3316 = vpop.f32.mrf.mxu0
      %v3317 = vadd.f32 %v3183, %v3316
      %v3318 = vpop.f32.mrf.mxu0
      %v3319 = vadd.f32 %v3183, %v3318
      %3320 = vdwg.mxu0
      %v3321 = vmax.f32 %v3242, 0.0
      %v3322 = vmax.f32 %v3244, 0.0
      %v3323 = vmax.f32 %v3247, 0.0
      %v3324 = vmax.f32 %v3249, 0.0
      %v3325 = vmax.f32 %v3252, 0.0
      %v3326 = vmax.f32 %v3254, 0.0
      %v3327 = vmax.f32 %v3257, 0.0
      %v3328 = vmax.f32 %v3259, 0.0
      %v3329 = vmax.f32 %v3262, 0.0
      %v3330 = vmax.f32 %v3264, 0.0
      %v3331 = vmax.f32 %v3267, 0.0
      %v3332 = vmax.f32 %v3269, 0.0
      %v3333 = vmax.f32 %v3272, 0.0
      %v3334 = vmax.f32 %v3274, 0.0
      %v3335 = vmax.f32 %v3277, 0.0
      %v3336 = vmax.f32 %v3279, 0.0
      %v3337 = vmax.f32 %v3282, 0.0
      %v3338 = vmax.f32 %v3284, 0.0
      %v3339 = vmax.f32 %v3287, 0.0
      %v3340 = vmax.f32 %v3289, 0.0
      %v3341 = vmax.f32 %v3292, 0.0
      %v3342 = vmax.f32 %v3294, 0.0
      %v3343 = vmax.f32 %v3297, 0.0
      %v3344 = vmax.f32 %v3299, 0.0
      %v3345 = vmax.f32 %v3302, 0.0
      %v3346 = vmax.f32 %v3304, 0.0
      %v3347 = vmax.f32 %v3307, 0.0
      %v3348 = vmax.f32 %v3309, 0.0
      %v3349 = vmax.f32 %v3312, 0.0
      %v3350 = vmax.f32 %v3314, 0.0
      %v3351 = vmax.f32 %v3317, 0.0
      %v3352 = vmax.f32 %v3319, 0.0
      %v3353 = vpack.c.bf16 %v3322, %v3321
      %v3354 = vpack.c.bf16 %v3324, %v3323
      %v3355 = vpack.c.bf16 %v3326, %v3325
      %v3356 = vpack.c.bf16 %v3328, %v3327
      %v3357 = vpack.c.bf16 %v3330, %v3329
      %v3358 = vpack.c.bf16 %v3332, %v3331
      %v3359 = vpack.c.bf16 %v3334, %v3333
      %v3360 = vpack.c.bf16 %v3336, %v3335
      %v3361 = vpack.c.bf16 %v3338, %v3337
      %v3362 = vpack.c.bf16 %v3340, %v3339
      %v3363 = vpack.c.bf16 %v3342, %v3341
      %v3364 = vpack.c.bf16 %v3344, %v3343
      %v3365 = vpack.c.bf16 %v3346, %v3345
      %v3366 = vpack.c.bf16 %v3348, %v3347
      %v3367 = vpack.c.bf16 %v3350, %v3349
      %v3368 = vpack.c.bf16 %v3352, %v3351
      %s3369 = scalar_lea.vmem %s3, 128
      %v3370 = vld [vmem:[%s3369] sm:$0xf]
      %v3371 = vld [vmem:[%s3369 + $0x4] sm:$0xf]
      %v3372 = vld [vmem:[%s3369 + $0x8] sm:$0xf]
      %v3373 = vld [vmem:[%s3369 + $0xc] sm:$0xf]
      %v3374 = vld [vmem:[%s3369 + $0x10] sm:$0xf]
      %v3375 = vld [vmem:[%s3369 + $0x14] sm:$0xf]
      %v3376 = vld [vmem:[%s3369 + $0x18] sm:$0xf]
      %v3377 = vld [vmem:[%s3369 + $0x1c] sm:$0xf]
      %v3378 = vld [vmem:[%s3369 + $0x20] sm:$0xf]
      %v3379 = vld [vmem:[%s3369 + $0x24] sm:$0xf]
      %v3380 = vld [vmem:[%s3369 + $0x28] sm:$0xf]
      %v3381 = vld [vmem:[%s3369 + $0x2c] sm:$0xf]
      %v3382 = vld [vmem:[%s3369 + $0x30] sm:$0xf]
      %v3383 = vld [vmem:[%s3369 + $0x34] sm:$0xf]
      %v3384 = vld [vmem:[%s3369 + $0x38] sm:$0xf]
      %v3385 = vld [vmem:[%s3369 + $0x3c] sm:$0xf]
      %v3386 = vld [vmem:[%s6 + $0x4] ss:$0 sm:$0xff]
      %v3403 = vunpack.c.l.b16 %v3370
      %v3404 = vunpack.c.l.b16 %v3371
      %v3405 = vunpack.c.l.b16 %v3372
      %v3406 = vunpack.c.l.b16 %v3373
      %v3407 = vunpack.c.l.b16 %v3374
      %v3408 = vunpack.c.l.b16 %v3375
      %v3409 = vunpack.c.l.b16 %v3376
      %v3410 = vunpack.c.l.b16 %v3377
      %v3411 = vunpack.c.l.b16 %v3378
      %v3412 = vunpack.c.l.b16 %v3379
      %v3413 = vunpack.c.l.b16 %v3380
      %v3414 = vunpack.c.l.b16 %v3381
      %v3415 = vunpack.c.l.b16 %v3382
      %v3416 = vunpack.c.l.b16 %v3383
      %v3417 = vunpack.c.l.b16 %v3384
      %v3418 = vunpack.c.l.b16 %v3385
      %v3419 = vpack.c.b16 %v3404, %v3403
      %v3420 = vpack.c.b16 %v3406, %v3405
      %v3421 = vpack.c.b16 %v3408, %v3407
      %v3422 = vpack.c.b16 %v3410, %v3409
      %v3423 = vpack.c.b16 %v3412, %v3411
      %v3424 = vpack.c.b16 %v3414, %v3413
      %v3425 = vpack.c.b16 %v3416, %v3415
      %v3426 = vpack.c.b16 %v3418, %v3417
      %3435 = vmatpush.bf16.msra.mxu0 %v3426
      %3436 = vmatpush.bf16.msra.mxu0 %v3425
      %3437 = vmatpush.bf16.msra.mxu0 %v3424
      %3438 = vmatpush.bf16.msra.mxu0 %v3423
      %3439 = vmatpush.bf16.msra.mxu0 %v3422
      %3440 = vmatpush.bf16.msra.mxu0 %v3421
      %3441 = vmatpush.bf16.msra.mxu0 %v3420
      %3442 = vmatpush.bf16.msra.mxu0 %v3419
      %3443 = vmatmul.bf16.gmra.mxu0 %v3353
      %v3444 = vpop.f32.mrf.mxu0
      %v3445 = vadd.f32 %v3386, %v3444
      %v3446 = vpop.f32.mrf.mxu0
      %v3447 = vadd.f32 %v3386, %v3446
      %3448 = vmatmul.bf16.gmra.mxu0 %v3354
      %v3449 = vpop.f32.mrf.mxu0
      %v3450 = vadd.f32 %v3386, %v3449
      %v3451 = vpop.f32.mrf.mxu0
      %v3452 = vadd.f32 %v3386, %v3451
      %3453 = vmatmul.bf16.gmra.mxu0 %v3355
      %v3454 = vpop.f32.mrf.mxu0
      %v3455 = vadd.f32 %v3386, %v3454
      %v3456 = vpop.f32.mrf.mxu0
      %v3457 = vadd.f32 %v3386, %v3456
      %3458 = vmatmul.bf16.gmra.mxu0 %v3356
      %v3459 = vpop.f32.mrf.mxu0
      %v3460 = vadd.f32 %v3386, %v3459
      %v3461 = vpop.f32.mrf.mxu0
      %v3462 = vadd.f32 %v3386, %v3461
      %3463 = vmatmul.bf16.gmra.mxu0 %v3357
      %v3464 = vpop.f32.mrf.mxu0
      %v3465 = vadd.f32 %v3386, %v3464
      %v3466 = vpop.f32.mrf.mxu0
      %v3467 = vadd.f32 %v3386, %v3466
      %3468 = vmatmul.bf16.gmra.mxu0 %v3358
      %v3469 = vpop.f32.mrf.mxu0
      %v3470 = vadd.f32 %v3386, %v3469
      %v3471 = vpop.f32.mrf.mxu0
      %v3472 = vadd.f32 %v3386, %v3471
      %3473 = vmatmul.bf16.gmra.mxu0 %v3359
      %v3474 = vpop.f32.mrf.mxu0
      %v3475 = vadd.f32 %v3386, %v3474
      %v3476 = vpop.f32.mrf.mxu0
      %v3477 = vadd.f32 %v3386, %v3476
      %3478 = vmatmul.bf16.gmra.mxu0 %v3360
      %v3479 = vpop.f32.mrf.mxu0
      %v3480 = vadd.f32 %v3386, %v3479
      %v3481 = vpop.f32.mrf.mxu0
      %v3482 = vadd.f32 %v3386, %v3481
      %3483 = vmatmul.bf16.gmra.mxu0 %v3361
      %v3484 = vpop.f32.mrf.mxu0
      %v3485 = vadd.f32 %v3386, %v3484
      %v3486 = vpop.f32.mrf.mxu0
      %v3487 = vadd.f32 %v3386, %v3486
      %3488 = vmatmul.bf16.gmra.mxu0 %v3362
      %v3489 = vpop.f32.mrf.mxu0
      %v3490 = vadd.f32 %v3386, %v3489
      %v3491 = vpop.f32.mrf.mxu0
      %v3492 = vadd.f32 %v3386, %v3491
      %3493 = vmatmul.bf16.gmra.mxu0 %v3363
      %v3494 = vpop.f32.mrf.mxu0
      %v3495 = vadd.f32 %v3386, %v3494
      %v3496 = vpop.f32.mrf.mxu0
      %v3497 = vadd.f32 %v3386, %v3496
      %3498 = vmatmul.bf16.gmra.mxu0 %v3364
      %v3499 = vpop.f32.mrf.mxu0
      %v3500 = vadd.f32 %v3386, %v3499
      %v3501 = vpop.f32.mrf.mxu0
      %v3502 = vadd.f32 %v3386, %v3501
      %3503 = vmatmul.bf16.gmra.mxu0 %v3365
      %v3504 = vpop.f32.mrf.mxu0
      %v3505 = vadd.f32 %v3386, %v3504
      %v3506 = vpop.f32.mrf.mxu0
      %v3507 = vadd.f32 %v3386, %v3506
      %3508 = vmatmul.bf16.gmra.mxu0 %v3366
      %v3509 = vpop.f32.mrf.mxu0
      %v3510 = vadd.f32 %v3386, %v3509
      %v3511 = vpop.f32.mrf.mxu0
      %v3512 = vadd.f32 %v3386, %v3511
      %3513 = vmatmul.bf16.gmra.mxu0 %v3367
      %v3514 = vpop.f32.mrf.mxu0
      %v3515 = vadd.f32 %v3386, %v3514
      %v3516 = vpop.f32.mrf.mxu0
      %v3517 = vadd.f32 %v3386, %v3516
      %3518 = vmatmul.bf16.gmra.mxu0 %v3368
      %v3519 = vpop.f32.mrf.mxu0
      %v3520 = vadd.f32 %v3386, %v3519
      %v3521 = vpop.f32.mrf.mxu0
      %v3522 = vadd.f32 %v3386, %v3521
      %3523 = vdwg.mxu0
      %v3524 = vpack.c.bf16 %v3447, %v3445
      %v3525 = vpack.c.bf16 %v3452, %v3450
      %v3526 = vpack.c.bf16 %v3457, %v3455
      %v3527 = vpack.c.bf16 %v3462, %v3460
      %v3528 = vpack.c.bf16 %v3467, %v3465
      %v3529 = vpack.c.bf16 %v3472, %v3470
      %v3530 = vpack.c.bf16 %v3477, %v3475
      %v3531 = vpack.c.bf16 %v3482, %v3480
      %v3532 = vpack.c.bf16 %v3487, %v3485
      %v3533 = vpack.c.bf16 %v3492, %v3490
      %v3534 = vpack.c.bf16 %v3497, %v3495
      %v3535 = vpack.c.bf16 %v3502, %v3500
      %v3536 = vpack.c.bf16 %v3507, %v3505
      %v3537 = vpack.c.bf16 %v3512, %v3510
      %v3538 = vpack.c.bf16 %v3517, %v3515
      %v3539 = vpack.c.bf16 %v3522, %v3520
      %s3540 = scalar_lea.vmem %s3, 192
      %v3541 = vld [vmem:[%s3540] sm:$0xf]
      %v3542 = vld [vmem:[%s3540 + $0x4] sm:$0xf]
      %v3543 = vld [vmem:[%s3540 + $0x8] sm:$0xf]
      %v3544 = vld [vmem:[%s3540 + $0xc] sm:$0xf]
      %v3545 = vld [vmem:[%s3540 + $0x10] sm:$0xf]
      %v3546 = vld [vmem:[%s3540 + $0x14] sm:$0xf]
      %v3547 = vld [vmem:[%s3540 + $0x18] sm:$0xf]
      %v3548 = vld [vmem:[%s3540 + $0x1c] sm:$0xf]
      %v3549 = vld [vmem:[%s3540 + $0x20] sm:$0xf]
      %v3550 = vld [vmem:[%s3540 + $0x24] sm:$0xf]
      %v3551 = vld [vmem:[%s3540 + $0x28] sm:$0xf]
      %v3552 = vld [vmem:[%s3540 + $0x2c] sm:$0xf]
      %v3553 = vld [vmem:[%s3540 + $0x30] sm:$0xf]
      %v3554 = vld [vmem:[%s3540 + $0x34] sm:$0xf]
      %v3555 = vld [vmem:[%s3540 + $0x38] sm:$0xf]
      %v3556 = vld [vmem:[%s3540 + $0x3c] sm:$0xf]
      %v3557 = vld [vmem:[%s6 + $0x5] ss:$0 sm:$0xff]
      %v3574 = vunpack.c.l.b16 %v3541
      %v3575 = vunpack.c.l.b16 %v3542
      %v3576 = vunpack.c.l.b16 %v3543
      %v3577 = vunpack.c.l.b16 %v3544
      %v3578 = vunpack.c.l.b16 %v3545
      %v3579 = vunpack.c.l.b16 %v3546
      %v3580 = vunpack.c.l.b16 %v3547
      %v3581 = vunpack.c.l.b16 %v3548
      %v3582 = vunpack.c.l.b16 %v3549
      %v3583 = vunpack.c.l.b16 %v3550
      %v3584 = vunpack.c.l.b16 %v3551
      %v3585 = vunpack.c.l.b16 %v3552
      %v3586 = vunpack.c.l.b16 %v3553
      %v3587 = vunpack.c.l.b16 %v3554
      %v3588 = vunpack.c.l.b16 %v3555
      %v3589 = vunpack.c.l.b16 %v3556
      %v3590 = vpack.c.b16 %v3575, %v3574
      %v3591 = vpack.c.b16 %v3577, %v3576
      %v3592 = vpack.c.b16 %v3579, %v3578
      %v3593 = vpack.c.b16 %v3581, %v3580
      %v3594 = vpack.c.b16 %v3583, %v3582
      %v3595 = vpack.c.b16 %v3585, %v3584
      %v3596 = vpack.c.b16 %v3587, %v3586
      %v3597 = vpack.c.b16 %v3589, %v3588
      %3606 = vmatpush.bf16.msra.mxu0 %v3597
      %3607 = vmatpush.bf16.msra.mxu0 %v3596
      %3608 = vmatpush.bf16.msra.mxu0 %v3595
      %3609 = vmatpush.bf16.msra.mxu0 %v3594
      %3610 = vmatpush.bf16.msra.mxu0 %v3593
      %3611 = vmatpush.bf16.msra.mxu0 %v3592
      %3612 = vmatpush.bf16.msra.mxu0 %v3591
      %3613 = vmatpush.bf16.msra.mxu0 %v3590
      %3614 = vmatmul.bf16.gmra.mxu0 %v3524
      %v3615 = vpop.f32.mrf.mxu0
      %v3616 = vadd.f32 %v3557, %v3615
      %v3617 = vpop.f32.mrf.mxu0
      %v3618 = vadd.f32 %v3557, %v3617
      %3619 = vmatmul.bf16.gmra.mxu0 %v3525
      %v3620 = vpop.f32.mrf.mxu0
      %v3621 = vadd.f32 %v3557, %v3620
      %v3622 = vpop.f32.mrf.mxu0
      %v3623 = vadd.f32 %v3557, %v3622
      %3624 = vmatmul.bf16.gmra.mxu0 %v3526
      %v3625 = vpop.f32.mrf.mxu0
      %v3626 = vadd.f32 %v3557, %v3625
      %v3627 = vpop.f32.mrf.mxu0
      %v3628 = vadd.f32 %v3557, %v3627
      %3629 = vmatmul.bf16.gmra.mxu0 %v3527
      %v3630 = vpop.f32.mrf.mxu0
      %v3631 = vadd.f32 %v3557, %v3630
      %v3632 = vpop.f32.mrf.mxu0
      %v3633 = vadd.f32 %v3557, %v3632
      %3634 = vmatmul.bf16.gmra.mxu0 %v3528
      %v3635 = vpop.f32.mrf.mxu0
      %v3636 = vadd.f32 %v3557, %v3635
      %v3637 = vpop.f32.mrf.mxu0
      %v3638 = vadd.f32 %v3557, %v3637
      %3639 = vmatmul.bf16.gmra.mxu0 %v3529
      %v3640 = vpop.f32.mrf.mxu0
      %v3641 = vadd.f32 %v3557, %v3640
      %v3642 = vpop.f32.mrf.mxu0
      %v3643 = vadd.f32 %v3557, %v3642
      %3644 = vmatmul.bf16.gmra.mxu0 %v3530
      %v3645 = vpop.f32.mrf.mxu0
      %v3646 = vadd.f32 %v3557, %v3645
      %v3647 = vpop.f32.mrf.mxu0
      %v3648 = vadd.f32 %v3557, %v3647
      %3649 = vmatmul.bf16.gmra.mxu0 %v3531
      %v3650 = vpop.f32.mrf.mxu0
      %v3651 = vadd.f32 %v3557, %v3650
      %v3652 = vpop.f32.mrf.mxu0
      %v3653 = vadd.f32 %v3557, %v3652
      %3654 = vmatmul.bf16.gmra.mxu0 %v3532
      %v3655 = vpop.f32.mrf.mxu0
      %v3656 = vadd.f32 %v3557, %v3655
      %v3657 = vpop.f32.mrf.mxu0
      %v3658 = vadd.f32 %v3557, %v3657
      %3659 = vmatmul.bf16.gmra.mxu0 %v3533
      %v3660 = vpop.f32.mrf.mxu0
      %v3661 = vadd.f32 %v3557, %v3660
      %v3662 = vpop.f32.mrf.mxu0
      %v3663 = vadd.f32 %v3557, %v3662
      %3664 = vmatmul.bf16.gmra.mxu0 %v3534
      %v3665 = vpop.f32.mrf.mxu0
      %v3666 = vadd.f32 %v3557, %v3665
      %v3667 = vpop.f32.mrf.mxu0
      %v3668 = vadd.f32 %v3557, %v3667
      %3669 = vmatmul.bf16.gmra.mxu0 %v3535
      %v3670 = vpop.f32.mrf.mxu0
      %v3671 = vadd.f32 %v3557, %v3670
      %v3672 = vpop.f32.mrf.mxu0
      %v3673 = vadd.f32 %v3557, %v3672
      %3674 = vmatmul.bf16.gmra.mxu0 %v3536
      %v3675 = vpop.f32.mrf.mxu0
      %v3676 = vadd.f32 %v3557, %v3675
      %v3677 = vpop.f32.mrf.mxu0
      %v3678 = vadd.f32 %v3557, %v3677
      %3679 = vmatmul.bf16.gmra.mxu0 %v3537
      %v3680 = vpop.f32.mrf.mxu0
      %v3681 = vadd.f32 %v3557, %v3680
      %v3682 = vpop.f32.mrf.mxu0
      %v3683 = vadd.f32 %v3557, %v3682
      %3684 = vmatmul.bf16.gmra.mxu0 %v3538
      %v3685 = vpop.f32.mrf.mxu0
      %v3686 = vadd.f32 %v3557, %v3685
      %v3687 = vpop.f32.mrf.mxu0
      %v3688 = vadd.f32 %v3557, %v3687
      %3689 = vmatmul.bf16.gmra.mxu0 %v3539
      %v3690 = vpop.f32.mrf.mxu0
      %v3691 = vadd.f32 %v3557, %v3690
      %v3692 = vpop.f32.mrf.mxu0
      %v3693 = vadd.f32 %v3557, %v3692
      %3694 = vdwg.mxu0
      %v3695 = vmax.f32 %v3616, 0.0
      %v3696 = vmax.f32 %v3618, 0.0
      %v3697 = vmax.f32 %v3621, 0.0
      %v3698 = vmax.f32 %v3623, 0.0
      %v3699 = vmax.f32 %v3626, 0.0
      %v3700 = vmax.f32 %v3628, 0.0
      %v3701 = vmax.f32 %v3631, 0.0
      %v3702 = vmax.f32 %v3633, 0.0
      %v3703 = vmax.f32 %v3636, 0.0
      %v3704 = vmax.f32 %v3638, 0.0
      %v3705 = vmax.f32 %v3641, 0.0
      %v3706 = vmax.f32 %v3643, 0.0
      %v3707 = vmax.f32 %v3646, 0.0
      %v3708 = vmax.f32 %v3648, 0.0
      %v3709 = vmax.f32 %v3651, 0.0
      %v3710 = vmax.f32 %v3653, 0.0
      %v3711 = vmax.f32 %v3656, 0.0
      %v3712 = vmax.f32 %v3658, 0.0
      %v3713 = vmax.f32 %v3661, 0.0
      %v3714 = vmax.f32 %v3663, 0.0
      %v3715 = vmax.f32 %v3666, 0.0
      %v3716 = vmax.f32 %v3668, 0.0
      %v3717 = vmax.f32 %v3671, 0.0
      %v3718 = vmax.f32 %v3673, 0.0
      %v3719 = vmax.f32 %v3676, 0.0
      %v3720 = vmax.f32 %v3678, 0.0
      %v3721 = vmax.f32 %v3681, 0.0
      %v3722 = vmax.f32 %v3683, 0.0
      %v3723 = vmax.f32 %v3686, 0.0
      %v3724 = vmax.f32 %v3688, 0.0
      %v3725 = vmax.f32 %v3691, 0.0
      %v3726 = vmax.f32 %v3693, 0.0
      %v3727 = vpack.c.bf16 %v3696, %v3695
      %v3728 = vpack.c.bf16 %v3698, %v3697
      %v3729 = vpack.c.bf16 %v3700, %v3699
      %v3730 = vpack.c.bf16 %v3702, %v3701
      %v3731 = vpack.c.bf16 %v3704, %v3703
      %v3732 = vpack.c.bf16 %v3706, %v3705
      %v3733 = vpack.c.bf16 %v3708, %v3707
      %v3734 = vpack.c.bf16 %v3710, %v3709
      %v3735 = vpack.c.bf16 %v3712, %v3711
      %v3736 = vpack.c.bf16 %v3714, %v3713
      %v3737 = vpack.c.bf16 %v3716, %v3715
      %v3738 = vpack.c.bf16 %v3718, %v3717
      %v3739 = vpack.c.bf16 %v3720, %v3719
      %v3740 = vpack.c.bf16 %v3722, %v3721
      %v3741 = vpack.c.bf16 %v3724, %v3723
      %v3742 = vpack.c.bf16 %v3726, %v3725
      %s3743 = scalar_lea.vmem %s3, 256
      %v3744 = vld [vmem:[%s3743] sm:$0xf]
      %v3745 = vld [vmem:[%s3743 + $0x4] sm:$0xf]
      %v3746 = vld [vmem:[%s3743 + $0x8] sm:$0xf]
      %v3747 = vld [vmem:[%s3743 + $0xc] sm:$0xf]
      %v3748 = vld [vmem:[%s3743 + $0x10] sm:$0xf]
      %v3749 = vld [vmem:[%s3743 + $0x14] sm:$0xf]
      %v3750 = vld [vmem:[%s3743 + $0x18] sm:$0xf]
      %v3751 = vld [vmem:[%s3743 + $0x1c] sm:$0xf]
      %v3752 = vld [vmem:[%s3743 + $0x20] sm:$0xf]
      %v3753 = vld [vmem:[%s3743 + $0x24] sm:$0xf]
      %v3754 = vld [vmem:[%s3743 + $0x28] sm:$0xf]
      %v3755 = vld [vmem:[%s3743 + $0x2c] sm:$0xf]
      %v3756 = vld [vmem:[%s3743 + $0x30] sm:$0xf]
      %v3757 = vld [vmem:[%s3743 + $0x34] sm:$0xf]
      %v3758 = vld [vmem:[%s3743 + $0x38] sm:$0xf]
      %v3759 = vld [vmem:[%s3743 + $0x3c] sm:$0xf]
      %v3760 = vld [vmem:[%s6 + $0x6] ss:$0 sm:$0xff]
      %v3777 = vunpack.c.l.b16 %v3744
      %v3778 = vunpack.c.l.b16 %v3745
      %v3779 = vunpack.c.l.b16 %v3746
      %v3780 = vunpack.c.l.b16 %v3747
      %v3781 = vunpack.c.l.b16 %v3748
      %v3782 = vunpack.c.l.b16 %v3749
      %v3783 = vunpack.c.l.b16 %v3750
      %v3784 = vunpack.c.l.b16 %v3751
      %v3785 = vunpack.c.l.b16 %v3752
      %v3786 = vunpack.c.l.b16 %v3753
      %v3787 = vunpack.c.l.b16 %v3754
      %v3788 = vunpack.c.l.b16 %v3755
      %v3789 = vunpack.c.l.b16 %v3756
      %v3790 = vunpack.c.l.b16 %v3757
      %v3791 = vunpack.c.l.b16 %v3758
      %v3792 = vunpack.c.l.b16 %v3759
      %v3793 = vpack.c.b16 %v3778, %v3777
      %v3794 = vpack.c.b16 %v3780, %v3779
      %v3795 = vpack.c.b16 %v3782, %v3781
      %v3796 = vpack.c.b16 %v3784, %v3783
      %v3797 = vpack.c.b16 %v3786, %v3785
      %v3798 = vpack.c.b16 %v3788, %v3787
      %v3799 = vpack.c.b16 %v3790, %v3789
      %v3800 = vpack.c.b16 %v3792, %v3791
      %3809 = vmatpush.bf16.msra.mxu0 %v3800
      %3810 = vmatpush.bf16.msra.mxu0 %v3799
      %3811 = vmatpush.bf16.msra.mxu0 %v3798
      %3812 = vmatpush.bf16.msra.mxu0 %v3797
      %3813 = vmatpush.bf16.msra.mxu0 %v3796
      %3814 = vmatpush.bf16.msra.mxu0 %v3795
      %3815 = vmatpush.bf16.msra.mxu0 %v3794
      %3816 = vmatpush.bf16.msra.mxu0 %v3793
      %3817 = vmatmul.bf16.gmra.mxu0 %v3727
      %v3818 = vpop.f32.mrf.mxu0
      %v3819 = vadd.f32 %v3760, %v3818
      %v3820 = vpop.f32.mrf.mxu0
      %v3821 = vadd.f32 %v3760, %v3820
      %3822 = vmatmul.bf16.gmra.mxu0 %v3728
      %v3823 = vpop.f32.mrf.mxu0
      %v3824 = vadd.f32 %v3760, %v3823
      %v3825 = vpop.f32.mrf.mxu0
      %v3826 = vadd.f32 %v3760, %v3825
      %3827 = vmatmul.bf16.gmra.mxu0 %v3729
      %v3828 = vpop.f32.mrf.mxu0
      %v3829 = vadd.f32 %v3760, %v3828
      %v3830 = vpop.f32.mrf.mxu0
      %v3831 = vadd.f32 %v3760, %v3830
      %3832 = vmatmul.bf16.gmra.mxu0 %v3730
      %v3833 = vpop.f32.mrf.mxu0
      %v3834 = vadd.f32 %v3760, %v3833
      %v3835 = vpop.f32.mrf.mxu0
      %v3836 = vadd.f32 %v3760, %v3835
      %3837 = vmatmul.bf16.gmra.mxu0 %v3731
      %v3838 = vpop.f32.mrf.mxu0
      %v3839 = vadd.f32 %v3760, %v3838
      %v3840 = vpop.f32.mrf.mxu0
      %v3841 = vadd.f32 %v3760, %v3840
      %3842 = vmatmul.bf16.gmra.mxu0 %v3732
      %v3843 = vpop.f32.mrf.mxu0
      %v3844 = vadd.f32 %v3760, %v3843
      %v3845 = vpop.f32.mrf.mxu0
      %v3846 = vadd.f32 %v3760, %v3845
      %3847 = vmatmul.bf16.gmra.mxu0 %v3733
      %v3848 = vpop.f32.mrf.mxu0
      %v3849 = vadd.f32 %v3760, %v3848
      %v3850 = vpop.f32.mrf.mxu0
      %v3851 = vadd.f32 %v3760, %v3850
      %3852 = vmatmul.bf16.gmra.mxu0 %v3734
      %v3853 = vpop.f32.mrf.mxu0
      %v3854 = vadd.f32 %v3760, %v3853
      %v3855 = vpop.f32.mrf.mxu0
      %v3856 = vadd.f32 %v3760, %v3855
      %3857 = vmatmul.bf16.gmra.mxu0 %v3735
      %v3858 = vpop.f32.mrf.mxu0
      %v3859 = vadd.f32 %v3760, %v3858
      %v3860 = vpop.f32.mrf.mxu0
      %v3861 = vadd.f32 %v3760, %v3860
      %3862 = vmatmul.bf16.gmra.mxu0 %v3736
      %v3863 = vpop.f32.mrf.mxu0
      %v3864 = vadd.f32 %v3760, %v3863
      %v3865 = vpop.f32.mrf.mxu0
      %v3866 = vadd.f32 %v3760, %v3865
      %3867 = vmatmul.bf16.gmra.mxu0 %v3737
      %v3868 = vpop.f32.mrf.mxu0
      %v3869 = vadd.f32 %v3760, %v3868
      %v3870 = vpop.f32.mrf.mxu0
      %v3871 = vadd.f32 %v3760, %v3870
      %3872 = vmatmul.bf16.gmra.mxu0 %v3738
      %v3873 = vpop.f32.mrf.mxu0
      %v3874 = vadd.f32 %v3760, %v3873
      %v3875 = vpop.f32.mrf.mxu0
      %v3876 = vadd.f32 %v3760, %v3875
      %3877 = vmatmul.bf16.gmra.mxu0 %v3739
      %v3878 = vpop.f32.mrf.mxu0
      %v3879 = vadd.f32 %v3760, %v3878
      %v3880 = vpop.f32.mrf.mxu0
      %v3881 = vadd.f32 %v3760, %v3880
      %3882 = vmatmul.bf16.gmra.mxu0 %v3740
      %v3883 = vpop.f32.mrf.mxu0
      %v3884 = vadd.f32 %v3760, %v3883
      %v3885 = vpop.f32.mrf.mxu0
      %v3886 = vadd.f32 %v3760, %v3885
      %3887 = vmatmul.bf16.gmra.mxu0 %v3741
      %v3888 = vpop.f32.mrf.mxu0
      %v3889 = vadd.f32 %v3760, %v3888
      %v3890 = vpop.f32.mrf.mxu0
      %v3891 = vadd.f32 %v3760, %v3890
      %3892 = vmatmul.bf16.gmra.mxu0 %v3742
      %v3893 = vpop.f32.mrf.mxu0
      %v3894 = vadd.f32 %v3760, %v3893
      %v3895 = vpop.f32.mrf.mxu0
      %v3896 = vadd.f32 %v3760, %v3895
      %3897 = vdwg.mxu0
      %v3898 = vmax.f32 %v3819, 0.0
      %v3899 = vmax.f32 %v3821, 0.0
      %v3900 = vmax.f32 %v3824, 0.0
      %v3901 = vmax.f32 %v3826, 0.0
      %v3902 = vmax.f32 %v3829, 0.0
      %v3903 = vmax.f32 %v3831, 0.0
      %v3904 = vmax.f32 %v3834, 0.0
      %v3905 = vmax.f32 %v3836, 0.0
      %v3906 = vmax.f32 %v3839, 0.0
      %v3907 = vmax.f32 %v3841, 0.0
      %v3908 = vmax.f32 %v3844, 0.0
      %v3909 = vmax.f32 %v3846, 0.0
      %v3910 = vmax.f32 %v3849, 0.0
      %v3911 = vmax.f32 %v3851, 0.0
      %v3912 = vmax.f32 %v3854, 0.0
      %v3913 = vmax.f32 %v3856, 0.0
      %v3914 = vmax.f32 %v3859, 0.0
      %v3915 = vmax.f32 %v3861, 0.0
      %v3916 = vmax.f32 %v3864, 0.0
      %v3917 = vmax.f32 %v3866, 0.0
      %v3918 = vmax.f32 %v3869, 0.0
      %v3919 = vmax.f32 %v3871, 0.0
      %v3920 = vmax.f32 %v3874, 0.0
      %v3921 = vmax.f32 %v3876, 0.0
      %v3922 = vmax.f32 %v3879, 0.0
      %v3923 = vmax.f32 %v3881, 0.0
      %v3924 = vmax.f32 %v3884, 0.0
      %v3925 = vmax.f32 %v3886, 0.0
      %v3926 = vmax.f32 %v3889, 0.0
      %v3927 = vmax.f32 %v3891, 0.0
      %v3928 = vmax.f32 %v3894, 0.0
      %v3929 = vmax.f32 %v3896, 0.0
      %v3930 = vpack.c.bf16 %v3899, %v3898
      %v3931 = vpack.c.bf16 %v3901, %v3900
      %v3932 = vpack.c.bf16 %v3903, %v3902
      %v3933 = vpack.c.bf16 %v3905, %v3904
      %v3934 = vpack.c.bf16 %v3907, %v3906
      %v3935 = vpack.c.bf16 %v3909, %v3908
      %v3936 = vpack.c.bf16 %v3911, %v3910
      %v3937 = vpack.c.bf16 %v3913, %v3912
      %v3938 = vpack.c.bf16 %v3915, %v3914
      %v3939 = vpack.c.bf16 %v3917, %v3916
      %v3940 = vpack.c.bf16 %v3919, %v3918
      %v3941 = vpack.c.bf16 %v3921, %v3920
      %v3942 = vpack.c.bf16 %v3923, %v3922
      %v3943 = vpack.c.bf16 %v3925, %v3924
      %v3944 = vpack.c.bf16 %v3927, %v3926
      %v3945 = vpack.c.bf16 %v3929, %v3928
      %s3946 = scalar_lea.vmem %s3, 320
      %v3947 = vld [vmem:[%s3946] sm:$0xf]
      %v3948 = vld [vmem:[%s3946 + $0x4] sm:$0xf]
      %v3949 = vld [vmem:[%s3946 + $0x8] sm:$0xf]
      %v3950 = vld [vmem:[%s3946 + $0xc] sm:$0xf]
      %v3951 = vld [vmem:[%s3946 + $0x10] sm:$0xf]
      %v3952 = vld [vmem:[%s3946 + $0x14] sm:$0xf]
      %v3953 = vld [vmem:[%s3946 + $0x18] sm:$0xf]
      %v3954 = vld [vmem:[%s3946 + $0x1c] sm:$0xf]
      %v3955 = vld [vmem:[%s3946 + $0x20] sm:$0xf]
      %v3956 = vld [vmem:[%s3946 + $0x24] sm:$0xf]
      %v3957 = vld [vmem:[%s3946 + $0x28] sm:$0xf]
      %v3958 = vld [vmem:[%s3946 + $0x2c] sm:$0xf]
      %v3959 = vld [vmem:[%s3946 + $0x30] sm:$0xf]
      %v3960 = vld [vmem:[%s3946 + $0x34] sm:$0xf]
      %v3961 = vld [vmem:[%s3946 + $0x38] sm:$0xf]
      %v3962 = vld [vmem:[%s3946 + $0x3c] sm:$0xf]
      %v3963 = vld [vmem:[%s6 + $0x7] ss:$0 sm:$0xff]
      %v3980 = vunpack.c.l.b16 %v3947
      %v3981 = vunpack.c.l.b16 %v3948
      %v3982 = vunpack.c.l.b16 %v3949
      %v3983 = vunpack.c.l.b16 %v3950
      %v3984 = vunpack.c.l.b16 %v3951
      %v3985 = vunpack.c.l.b16 %v3952
      %v3986 = vunpack.c.l.b16 %v3953
      %v3987 = vunpack.c.l.b16 %v3954
      %v3988 = vunpack.c.l.b16 %v3955
      %v3989 = vunpack.c.l.b16 %v3956
      %v3990 = vunpack.c.l.b16 %v3957
      %v3991 = vunpack.c.l.b16 %v3958
      %v3992 = vunpack.c.l.b16 %v3959
      %v3993 = vunpack.c.l.b16 %v3960
      %v3994 = vunpack.c.l.b16 %v3961
      %v3995 = vunpack.c.l.b16 %v3962
      %v3996 = vpack.c.b16 %v3981, %v3980
      %v3997 = vpack.c.b16 %v3983, %v3982
      %v3998 = vpack.c.b16 %v3985, %v3984
      %v3999 = vpack.c.b16 %v3987, %v3986
      %v4000 = vpack.c.b16 %v3989, %v3988
      %v4001 = vpack.c.b16 %v3991, %v3990
      %v4002 = vpack.c.b16 %v3993, %v3992
      %v4003 = vpack.c.b16 %v3995, %v3994
      %4012 = vmatpush.bf16.msra.mxu0 %v4003
      %4013 = vmatpush.bf16.msra.mxu0 %v4002
      %4014 = vmatpush.bf16.msra.mxu0 %v4001
      %4015 = vmatpush.bf16.msra.mxu0 %v4000
      %4016 = vmatpush.bf16.msra.mxu0 %v3999
      %4017 = vmatpush.bf16.msra.mxu0 %v3998
      %4018 = vmatpush.bf16.msra.mxu0 %v3997
      %4019 = vmatpush.bf16.msra.mxu0 %v3996
      %4020 = vmatmul.bf16.gmra.mxu0 %v3930
      %v4021 = vpop.f32.mrf.mxu0
      %v4022 = vadd.f32 %v3963, %v4021
      %v4023 = vpop.f32.mrf.mxu0
      %v4024 = vadd.f32 %v3963, %v4023
      %4025 = vmatmul.bf16.gmra.mxu0 %v3931
      %v4026 = vpop.f32.mrf.mxu0
      %v4027 = vadd.f32 %v3963, %v4026
      %v4028 = vpop.f32.mrf.mxu0
      %v4029 = vadd.f32 %v3963, %v4028
      %4030 = vmatmul.bf16.gmra.mxu0 %v3932
      %v4031 = vpop.f32.mrf.mxu0
      %v4032 = vadd.f32 %v3963, %v4031
      %v4033 = vpop.f32.mrf.mxu0
      %v4034 = vadd.f32 %v3963, %v4033
      %4035 = vmatmul.bf16.gmra.mxu0 %v3933
      %v4036 = vpop.f32.mrf.mxu0
      %v4037 = vadd.f32 %v3963, %v4036
      %v4038 = vpop.f32.mrf.mxu0
      %v4039 = vadd.f32 %v3963, %v4038
      %4040 = vmatmul.bf16.gmra.mxu0 %v3934
      %v4041 = vpop.f32.mrf.mxu0
      %v4042 = vadd.f32 %v3963, %v4041
      %v4043 = vpop.f32.mrf.mxu0
      %v4044 = vadd.f32 %v3963, %v4043
      %4045 = vmatmul.bf16.gmra.mxu0 %v3935
      %v4046 = vpop.f32.mrf.mxu0
      %v4047 = vadd.f32 %v3963, %v4046
      %v4048 = vpop.f32.mrf.mxu0
      %v4049 = vadd.f32 %v3963, %v4048
      %4050 = vmatmul.bf16.gmra.mxu0 %v3936
      %v4051 = vpop.f32.mrf.mxu0
      %v4052 = vadd.f32 %v3963, %v4051
      %v4053 = vpop.f32.mrf.mxu0
      %v4054 = vadd.f32 %v3963, %v4053
      %4055 = vmatmul.bf16.gmra.mxu0 %v3937
      %v4056 = vpop.f32.mrf.mxu0
      %v4057 = vadd.f32 %v3963, %v4056
      %v4058 = vpop.f32.mrf.mxu0
      %v4059 = vadd.f32 %v3963, %v4058
      %4060 = vmatmul.bf16.gmra.mxu0 %v3938
      %v4061 = vpop.f32.mrf.mxu0
      %v4062 = vadd.f32 %v3963, %v4061
      %v4063 = vpop.f32.mrf.mxu0
      %v4064 = vadd.f32 %v3963, %v4063
      %4065 = vmatmul.bf16.gmra.mxu0 %v3939
      %v4066 = vpop.f32.mrf.mxu0
      %v4067 = vadd.f32 %v3963, %v4066
      %v4068 = vpop.f32.mrf.mxu0
      %v4069 = vadd.f32 %v3963, %v4068
      %4070 = vmatmul.bf16.gmra.mxu0 %v3940
      %v4071 = vpop.f32.mrf.mxu0
      %v4072 = vadd.f32 %v3963, %v4071
      %v4073 = vpop.f32.mrf.mxu0
      %v4074 = vadd.f32 %v3963, %v4073
      %4075 = vmatmul.bf16.gmra.mxu0 %v3941
      %v4076 = vpop.f32.mrf.mxu0
      %v4077 = vadd.f32 %v3963, %v4076
      %v4078 = vpop.f32.mrf.mxu0
      %v4079 = vadd.f32 %v3963, %v4078
      %4080 = vmatmul.bf16.gmra.mxu0 %v3942
      %v4081 = vpop.f32.mrf.mxu0
      %v4082 = vadd.f32 %v3963, %v4081
      %v4083 = vpop.f32.mrf.mxu0
      %v4084 = vadd.f32 %v3963, %v4083
      %4085 = vmatmul.bf16.gmra.mxu0 %v3943
      %v4086 = vpop.f32.mrf.mxu0
      %v4087 = vadd.f32 %v3963, %v4086
      %v4088 = vpop.f32.mrf.mxu0
      %v4089 = vadd.f32 %v3963, %v4088
      %4090 = vmatmul.bf16.gmra.mxu0 %v3944
      %v4091 = vpop.f32.mrf.mxu0
      %v4092 = vadd.f32 %v3963, %v4091
      %v4093 = vpop.f32.mrf.mxu0
      %v4094 = vadd.f32 %v3963, %v4093
      %4095 = vmatmul.bf16.gmra.mxu0 %v3945
      %v4096 = vpop.f32.mrf.mxu0
      %v4097 = vadd.f32 %v3963, %v4096
      %v4098 = vpop.f32.mrf.mxu0
      %v4099 = vadd.f32 %v3963, %v4098
      %4100 = vdwg.mxu0
      %v4101 = vmax.f32 %v4022, 0.0
      %v4102 = vmax.f32 %v4024, 0.0
      %v4103 = vmax.f32 %v4027, 0.0
      %v4104 = vmax.f32 %v4029, 0.0
      %v4105 = vmax.f32 %v4032, 0.0
      %v4106 = vmax.f32 %v4034, 0.0
      %v4107 = vmax.f32 %v4037, 0.0
      %v4108 = vmax.f32 %v4039, 0.0
      %v4109 = vmax.f32 %v4042, 0.0
      %v4110 = vmax.f32 %v4044, 0.0
      %v4111 = vmax.f32 %v4047, 0.0
      %v4112 = vmax.f32 %v4049, 0.0
      %v4113 = vmax.f32 %v4052, 0.0
      %v4114 = vmax.f32 %v4054, 0.0
      %v4115 = vmax.f32 %v4057, 0.0
      %v4116 = vmax.f32 %v4059, 0.0
      %v4117 = vmax.f32 %v4062, 0.0
      %v4118 = vmax.f32 %v4064, 0.0
      %v4119 = vmax.f32 %v4067, 0.0
      %v4120 = vmax.f32 %v4069, 0.0
      %v4121 = vmax.f32 %v4072, 0.0
      %v4122 = vmax.f32 %v4074, 0.0
      %v4123 = vmax.f32 %v4077, 0.0
      %v4124 = vmax.f32 %v4079, 0.0
      %v4125 = vmax.f32 %v4082, 0.0
      %v4126 = vmax.f32 %v4084, 0.0
      %v4127 = vmax.f32 %v4087, 0.0
      %v4128 = vmax.f32 %v4089, 0.0
      %v4129 = vmax.f32 %v4092, 0.0
      %v4130 = vmax.f32 %v4094, 0.0
      %v4131 = vmax.f32 %v4097, 0.0
      %v4132 = vmax.f32 %v4099, 0.0
      %v4133 = vpack.c.bf16 %v4102, %v4101
      %v4134 = vpack.c.bf16 %v4104, %v4103
      %v4135 = vpack.c.bf16 %v4106, %v4105
      %v4136 = vpack.c.bf16 %v4108, %v4107
      %v4137 = vpack.c.bf16 %v4110, %v4109
      %v4138 = vpack.c.bf16 %v4112, %v4111
      %v4139 = vpack.c.bf16 %v4114, %v4113
      %v4140 = vpack.c.bf16 %v4116, %v4115
      %v4141 = vpack.c.bf16 %v4118, %v4117
      %v4142 = vpack.c.bf16 %v4120, %v4119
      %v4143 = vpack.c.bf16 %v4122, %v4121
      %v4144 = vpack.c.bf16 %v4124, %v4123
      %v4145 = vpack.c.bf16 %v4126, %v4125
      %v4146 = vpack.c.bf16 %v4128, %v4127
      %v4147 = vpack.c.bf16 %v4130, %v4129
      %v4148 = vpack.c.bf16 %v4132, %v4131
      %s4149 = scalar_lea.vmem %s3, 384
      %v4150 = vld [vmem:[%s4149] sm:$0xf]
      %v4151 = vld [vmem:[%s4149 + $0x4] sm:$0xf]
      %v4152 = vld [vmem:[%s4149 + $0x8] sm:$0xf]
      %v4153 = vld [vmem:[%s4149 + $0xc] sm:$0xf]
      %v4154 = vld [vmem:[%s4149 + $0x10] sm:$0xf]
      %v4155 = vld [vmem:[%s4149 + $0x14] sm:$0xf]
      %v4156 = vld [vmem:[%s4149 + $0x18] sm:$0xf]
      %v4157 = vld [vmem:[%s4149 + $0x1c] sm:$0xf]
      %v4158 = vld [vmem:[%s4149 + $0x20] sm:$0xf]
      %v4159 = vld [vmem:[%s4149 + $0x24] sm:$0xf]
      %v4160 = vld [vmem:[%s4149 + $0x28] sm:$0xf]
      %v4161 = vld [vmem:[%s4149 + $0x2c] sm:$0xf]
      %v4162 = vld [vmem:[%s4149 + $0x30] sm:$0xf]
      %v4163 = vld [vmem:[%s4149 + $0x34] sm:$0xf]
      %v4164 = vld [vmem:[%s4149 + $0x38] sm:$0xf]
      %v4165 = vld [vmem:[%s4149 + $0x3c] sm:$0xf]
      %v4166 = vld [vmem:[%s6 + $0x38] ss:$0 sm:$0xff]
      %v4183 = vunpack.c.l.b16 %v4150
      %v4184 = vunpack.c.l.b16 %v4151
      %v4185 = vunpack.c.l.b16 %v4152
      %v4186 = vunpack.c.l.b16 %v4153
      %v4187 = vunpack.c.l.b16 %v4154
      %v4188 = vunpack.c.l.b16 %v4155
      %v4189 = vunpack.c.l.b16 %v4156
      %v4190 = vunpack.c.l.b16 %v4157
      %v4191 = vunpack.c.l.b16 %v4158
      %v4192 = vunpack.c.l.b16 %v4159
      %v4193 = vunpack.c.l.b16 %v4160
      %v4194 = vunpack.c.l.b16 %v4161
      %v4195 = vunpack.c.l.b16 %v4162
      %v4196 = vunpack.c.l.b16 %v4163
      %v4197 = vunpack.c.l.b16 %v4164
      %v4198 = vunpack.c.l.b16 %v4165
      %v4199 = vpack.c.b16 %v4184, %v4183
      %v4200 = vpack.c.b16 %v4186, %v4185
      %v4201 = vpack.c.b16 %v4188, %v4187
      %v4202 = vpack.c.b16 %v4190, %v4189
      %v4203 = vpack.c.b16 %v4192, %v4191
      %v4204 = vpack.c.b16 %v4194, %v4193
      %v4205 = vpack.c.b16 %v4196, %v4195
      %v4206 = vpack.c.b16 %v4198, %v4197
      %4215 = vmatpush.bf16.msra.mxu0 %v4206
      %4216 = vmatpush.bf16.msra.mxu0 %v4205
      %4217 = vmatpush.bf16.msra.mxu0 %v4204
      %4218 = vmatpush.bf16.msra.mxu0 %v4203
      %4219 = vmatpush.bf16.msra.mxu0 %v4202
      %4220 = vmatpush.bf16.msra.mxu0 %v4201
      %4221 = vmatpush.bf16.msra.mxu0 %v4200
      %4222 = vmatpush.bf16.msra.mxu0 %v4199
      %4223 = vmatmul.bf16.gmra.mxu0 %v4133
      %v4224 = vpop.f32.mrf.mxu0
      %v4225 = vadd.f32 %v4166, %v4224
      %v4226 = vpop.f32.mrf.mxu0
      %v4227 = vadd.f32 %v4166, %v4226
      %4228 = vmatmul.bf16.gmra.mxu0 %v4134
      %v4229 = vpop.f32.mrf.mxu0
      %v4230 = vadd.f32 %v4166, %v4229
      %v4231 = vpop.f32.mrf.mxu0
      %v4232 = vadd.f32 %v4166, %v4231
      %4233 = vmatmul.bf16.gmra.mxu0 %v4135
      %v4234 = vpop.f32.mrf.mxu0
      %v4235 = vadd.f32 %v4166, %v4234
      %v4236 = vpop.f32.mrf.mxu0
      %v4237 = vadd.f32 %v4166, %v4236
      %4238 = vmatmul.bf16.gmra.mxu0 %v4136
      %v4239 = vpop.f32.mrf.mxu0
      %v4240 = vadd.f32 %v4166, %v4239
      %v4241 = vpop.f32.mrf.mxu0
      %v4242 = vadd.f32 %v4166, %v4241
      %4243 = vmatmul.bf16.gmra.mxu0 %v4137
      %v4244 = vpop.f32.mrf.mxu0
      %v4245 = vadd.f32 %v4166, %v4244
      %v4246 = vpop.f32.mrf.mxu0
      %v4247 = vadd.f32 %v4166, %v4246
      %4248 = vmatmul.bf16.gmra.mxu0 %v4138
      %v4249 = vpop.f32.mrf.mxu0
      %v4250 = vadd.f32 %v4166, %v4249
      %v4251 = vpop.f32.mrf.mxu0
      %v4252 = vadd.f32 %v4166, %v4251
      %4253 = vmatmul.bf16.gmra.mxu0 %v4139
      %v4254 = vpop.f32.mrf.mxu0
      %v4255 = vadd.f32 %v4166, %v4254
      %v4256 = vpop.f32.mrf.mxu0
      %v4257 = vadd.f32 %v4166, %v4256
      %4258 = vmatmul.bf16.gmra.mxu0 %v4140
      %v4259 = vpop.f32.mrf.mxu0
      %v4260 = vadd.f32 %v4166, %v4259
      %v4261 = vpop.f32.mrf.mxu0
      %v4262 = vadd.f32 %v4166, %v4261
      %4263 = vmatmul.bf16.gmra.mxu0 %v4141
      %v4264 = vpop.f32.mrf.mxu0
      %v4265 = vadd.f32 %v4166, %v4264
      %v4266 = vpop.f32.mrf.mxu0
      %v4267 = vadd.f32 %v4166, %v4266
      %4268 = vmatmul.bf16.gmra.mxu0 %v4142
      %v4269 = vpop.f32.mrf.mxu0
      %v4270 = vadd.f32 %v4166, %v4269
      %v4271 = vpop.f32.mrf.mxu0
      %v4272 = vadd.f32 %v4166, %v4271
      %4273 = vmatmul.bf16.gmra.mxu0 %v4143
      %v4274 = vpop.f32.mrf.mxu0
      %v4275 = vadd.f32 %v4166, %v4274
      %v4276 = vpop.f32.mrf.mxu0
      %v4277 = vadd.f32 %v4166, %v4276
      %4278 = vmatmul.bf16.gmra.mxu0 %v4144
      %v4279 = vpop.f32.mrf.mxu0
      %v4280 = vadd.f32 %v4166, %v4279
      %v4281 = vpop.f32.mrf.mxu0
      %v4282 = vadd.f32 %v4166, %v4281
      %4283 = vmatmul.bf16.gmra.mxu0 %v4145
      %v4284 = vpop.f32.mrf.mxu0
      %v4285 = vadd.f32 %v4166, %v4284
      %v4286 = vpop.f32.mrf.mxu0
      %v4287 = vadd.f32 %v4166, %v4286
      %4288 = vmatmul.bf16.gmra.mxu0 %v4146
      %v4289 = vpop.f32.mrf.mxu0
      %v4290 = vadd.f32 %v4166, %v4289
      %v4291 = vpop.f32.mrf.mxu0
      %v4292 = vadd.f32 %v4166, %v4291
      %4293 = vmatmul.bf16.gmra.mxu0 %v4147
      %v4294 = vpop.f32.mrf.mxu0
      %v4295 = vadd.f32 %v4166, %v4294
      %v4296 = vpop.f32.mrf.mxu0
      %v4297 = vadd.f32 %v4166, %v4296
      %4298 = vmatmul.bf16.gmra.mxu0 %v4148
      %v4299 = vpop.f32.mrf.mxu0
      %v4300 = vadd.f32 %v4166, %v4299
      %v4301 = vpop.f32.mrf.mxu0
      %v4302 = vadd.f32 %v4166, %v4301
      %4303 = vdwg.mxu0
      %v4304 = vmax.f32 %v4225, 0.0
      %v4305 = vmax.f32 %v4227, 0.0
      %v4306 = vmax.f32 %v4230, 0.0
      %v4307 = vmax.f32 %v4232, 0.0
      %v4308 = vmax.f32 %v4235, 0.0
      %v4309 = vmax.f32 %v4237, 0.0
      %v4310 = vmax.f32 %v4240, 0.0
      %v4311 = vmax.f32 %v4242, 0.0
      %v4312 = vmax.f32 %v4245, 0.0
      %v4313 = vmax.f32 %v4247, 0.0
      %v4314 = vmax.f32 %v4250, 0.0
      %v4315 = vmax.f32 %v4252, 0.0
      %v4316 = vmax.f32 %v4255, 0.0
      %v4317 = vmax.f32 %v4257, 0.0
      %v4318 = vmax.f32 %v4260, 0.0
      %v4319 = vmax.f32 %v4262, 0.0
      %v4320 = vmax.f32 %v4265, 0.0
      %v4321 = vmax.f32 %v4267, 0.0
      %v4322 = vmax.f32 %v4270, 0.0
      %v4323 = vmax.f32 %v4272, 0.0
      %v4324 = vmax.f32 %v4275, 0.0
      %v4325 = vmax.f32 %v4277, 0.0
      %v4326 = vmax.f32 %v4280, 0.0
      %v4327 = vmax.f32 %v4282, 0.0
      %v4328 = vmax.f32 %v4285, 0.0
      %v4329 = vmax.f32 %v4287, 0.0
      %v4330 = vmax.f32 %v4290, 0.0
      %v4331 = vmax.f32 %v4292, 0.0
      %v4332 = vmax.f32 %v4295, 0.0
      %v4333 = vmax.f32 %v4297, 0.0
      %v4334 = vmax.f32 %v4300, 0.0
      %v4335 = vmax.f32 %v4302, 0.0
      %v4336 = vpack.c.bf16 %v4305, %v4304
      %v4337 = vpack.c.bf16 %v4307, %v4306
      %v4338 = vpack.c.bf16 %v4309, %v4308
      %v4339 = vpack.c.bf16 %v4311, %v4310
      %v4340 = vpack.c.bf16 %v4313, %v4312
      %v4341 = vpack.c.bf16 %v4315, %v4314
      %v4342 = vpack.c.bf16 %v4317, %v4316
      %v4343 = vpack.c.bf16 %v4319, %v4318
      %v4344 = vpack.c.bf16 %v4321, %v4320
      %v4345 = vpack.c.bf16 %v4323, %v4322
      %v4346 = vpack.c.bf16 %v4325, %v4324
      %v4347 = vpack.c.bf16 %v4327, %v4326
      %v4348 = vpack.c.bf16 %v4329, %v4328
      %v4349 = vpack.c.bf16 %v4331, %v4330
      %v4350 = vpack.c.bf16 %v4333, %v4332
      %v4351 = vpack.c.bf16 %v4335, %v4334
      %v4352 = vld [vmem:[%s4] sm:$0xff]
      %v4353 = vld [vmem:[%s4 + $0x8] sm:$0xff]
      %v4354 = vld [vmem:[%s4 + $0x10] sm:$0xff]
      %v4355 = vld [vmem:[%s4 + $0x18] sm:$0xff]
      %v4356 = vld [vmem:[%s4 + $0x20] sm:$0xff]
      %v4357 = vld [vmem:[%s4 + $0x28] sm:$0xff]
      %v4358 = vld [vmem:[%s4 + $0x30] sm:$0xff]
      %v4359 = vld [vmem:[%s4 + $0x38] sm:$0xff]
      %v4360 = vld [vmem:[%s4 + $0x40] sm:$0xff]
      %v4361 = vld [vmem:[%s4 + $0x48] sm:$0xff]
      %v4362 = vld [vmem:[%s4 + $0x50] sm:$0xff]
      %v4363 = vld [vmem:[%s4 + $0x58] sm:$0xff]
      %v4364 = vld [vmem:[%s4 + $0x60] sm:$0xff]
      %v4365 = vld [vmem:[%s4 + $0x68] sm:$0xff]
      %v4366 = vld [vmem:[%s4 + $0x70] sm:$0xff]
      %v4367 = vld [vmem:[%s4 + $0x78] sm:$0xff]
      %s4368 = scalar_lea.vmem %s6, 57
      %v4369 = vld [vmem:[%s4368] ss:$8 sm:$0x3]
      %v4371 = vperm.slane %v4369, 0
      %v4372 = vperm.slane %v4369, 1
      %v4391 = vunpack.c.l.b16 %v4352
      %v4392 = vunpack.c.h.b16 %v4352
      %v4393 = vunpack.c.l.b16 %v4353
      %v4394 = vunpack.c.h.b16 %v4353
      %v4395 = vunpack.c.l.b16 %v4354
      %v4396 = vunpack.c.h.b16 %v4354
      %v4397 = vunpack.c.l.b16 %v4355
      %v4398 = vunpack.c.h.b16 %v4355
      %v4399 = vunpack.c.l.b16 %v4356
      %v4400 = vunpack.c.h.b16 %v4356
      %v4401 = vunpack.c.l.b16 %v4357
      %v4402 = vunpack.c.h.b16 %v4357
      %v4403 = vunpack.c.l.b16 %v4358
      %v4404 = vunpack.c.h.b16 %v4358
      %v4405 = vunpack.c.l.b16 %v4359
      %v4406 = vunpack.c.h.b16 %v4359
      %v4407 = vunpack.c.l.b16 %v4360
      %v4408 = vunpack.c.h.b16 %v4360
      %v4409 = vunpack.c.l.b16 %v4361
      %v4410 = vunpack.c.h.b16 %v4361
      %v4411 = vunpack.c.l.b16 %v4362
      %v4412 = vunpack.c.h.b16 %v4362
      %v4413 = vunpack.c.l.b16 %v4363
      %v4414 = vunpack.c.h.b16 %v4363
      %v4415 = vunpack.c.l.b16 %v4364
      %v4416 = vunpack.c.h.b16 %v4364
      %v4417 = vunpack.c.l.b16 %v4365
      %v4418 = vunpack.c.h.b16 %v4365
      %v4419 = vunpack.c.l.b16 %v4366
      %v4420 = vunpack.c.h.b16 %v4366
      %v4421 = vunpack.c.l.b16 %v4367
      %v4422 = vunpack.c.h.b16 %v4367
      %v4423 = vpack.c.b16 %v4393, %v4391
      %v4424 = vpack.c.b16 %v4394, %v4392
      %v4425 = vpack.c.b16 %v4397, %v4395
      %v4426 = vpack.c.b16 %v4398, %v4396
      %v4427 = vpack.c.b16 %v4401, %v4399
      %v4428 = vpack.c.b16 %v4402, %v4400
      %v4429 = vpack.c.b16 %v4405, %v4403
      %v4430 = vpack.c.b16 %v4406, %v4404
      %v4431 = vpack.c.b16 %v4409, %v4407
      %v4432 = vpack.c.b16 %v4410, %v4408
      %v4433 = vpack.c.b16 %v4413, %v4411
      %v4434 = vpack.c.b16 %v4414, %v4412
      %v4435 = vpack.c.b16 %v4417, %v4415
      %v4436 = vpack.c.b16 %v4418, %v4416
      %v4437 = vpack.c.b16 %v4421, %v4419
      %v4438 = vpack.c.b16 %v4422, %v4420
      %4455 = vmatpush.bf16.msra.mxu0 %v4437
      %4456 = vmatpush.bf16.msra.mxu0 %v4435
      %4457 = vmatpush.bf16.msra.mxu0 %v4433
      %4458 = vmatpush.bf16.msra.mxu0 %v4431
      %4459 = vmatpush.bf16.msra.mxu0 %v4429
      %4460 = vmatpush.bf16.msra.mxu0 %v4427
      %4461 = vmatpush.bf16.msra.mxu0 %v4425
      %4462 = vmatpush.bf16.msra.mxu0 %v4423
      %4463 = vmatmul.bf16.gmra.mxu0 %v4336
      %v4464 = vpop.f32.mrf.mxu0
      %v4465 = vadd.f32 %v4371, %v4464
      %v4466 = vpop.f32.mrf.mxu0
      %v4467 = vadd.f32 %v4371, %v4466
      %4468 = vmatmul.bf16.gmra.mxu0 %v4337
      %v4469 = vpop.f32.mrf.mxu0
      %v4470 = vadd.f32 %v4371, %v4469
      %v4471 = vpop.f32.mrf.mxu0
      %v4472 = vadd.f32 %v4371, %v4471
      %4473 = vmatmul.bf16.gmra.mxu0 %v4338
      %v4474 = vpop.f32.mrf.mxu0
      %v4475 = vadd.f32 %v4371, %v4474
      %v4476 = vpop.f32.mrf.mxu0
      %v4477 = vadd.f32 %v4371, %v4476
      %4478 = vmatmul.bf16.gmra.mxu0 %v4339
      %v4479 = vpop.f32.mrf.mxu0
      %v4480 = vadd.f32 %v4371, %v4479
      %v4481 = vpop.f32.mrf.mxu0
      %v4482 = vadd.f32 %v4371, %v4481
      %4483 = vmatmul.bf16.gmra.mxu0 %v4340
      %v4484 = vpop.f32.mrf.mxu0
      %v4485 = vadd.f32 %v4371, %v4484
      %v4486 = vpop.f32.mrf.mxu0
      %v4487 = vadd.f32 %v4371, %v4486
      %4488 = vmatmul.bf16.gmra.mxu0 %v4341
      %v4489 = vpop.f32.mrf.mxu0
      %v4490 = vadd.f32 %v4371, %v4489
      %v4491 = vpop.f32.mrf.mxu0
      %v4492 = vadd.f32 %v4371, %v4491
      %4493 = vmatmul.bf16.gmra.mxu0 %v4342
      %v4494 = vpop.f32.mrf.mxu0
      %v4495 = vadd.f32 %v4371, %v4494
      %v4496 = vpop.f32.mrf.mxu0
      %v4497 = vadd.f32 %v4371, %v4496
      %4498 = vmatmul.bf16.gmra.mxu0 %v4343
      %v4499 = vpop.f32.mrf.mxu0
      %v4500 = vadd.f32 %v4371, %v4499
      %v4501 = vpop.f32.mrf.mxu0
      %v4502 = vadd.f32 %v4371, %v4501
      %4503 = vmatmul.bf16.gmra.mxu0 %v4344
      %v4504 = vpop.f32.mrf.mxu0
      %v4505 = vadd.f32 %v4371, %v4504
      %v4506 = vpop.f32.mrf.mxu0
      %v4507 = vadd.f32 %v4371, %v4506
      %4508 = vmatmul.bf16.gmra.mxu0 %v4345
      %v4509 = vpop.f32.mrf.mxu0
      %v4510 = vadd.f32 %v4371, %v4509
      %v4511 = vpop.f32.mrf.mxu0
      %v4512 = vadd.f32 %v4371, %v4511
      %4513 = vmatmul.bf16.gmra.mxu0 %v4346
      %v4514 = vpop.f32.mrf.mxu0
      %v4515 = vadd.f32 %v4371, %v4514
      %v4516 = vpop.f32.mrf.mxu0
      %v4517 = vadd.f32 %v4371, %v4516
      %4518 = vmatmul.bf16.gmra.mxu0 %v4347
      %v4519 = vpop.f32.mrf.mxu0
      %v4520 = vadd.f32 %v4371, %v4519
      %v4521 = vpop.f32.mrf.mxu0
      %v4522 = vadd.f32 %v4371, %v4521
      %4523 = vmatmul.bf16.gmra.mxu0 %v4348
      %v4524 = vpop.f32.mrf.mxu0
      %v4525 = vadd.f32 %v4371, %v4524
      %v4526 = vpop.f32.mrf.mxu0
      %v4527 = vadd.f32 %v4371, %v4526
      %4528 = vmatmul.bf16.gmra.mxu0 %v4349
      %v4529 = vpop.f32.mrf.mxu0
      %v4530 = vadd.f32 %v4371, %v4529
      %v4531 = vpop.f32.mrf.mxu0
      %v4532 = vadd.f32 %v4371, %v4531
      %4533 = vmatmul.bf16.gmra.mxu0 %v4350
      %v4534 = vpop.f32.mrf.mxu0
      %v4535 = vadd.f32 %v4371, %v4534
      %v4536 = vpop.f32.mrf.mxu0
      %v4537 = vadd.f32 %v4371, %v4536
      %4538 = vmatmul.bf16.gmra.mxu0 %v4351
      %v4539 = vpop.f32.mrf.mxu0
      %v4540 = vadd.f32 %v4371, %v4539
      %v4541 = vpop.f32.mrf.mxu0
      %v4542 = vadd.f32 %v4371, %v4541
      %4543 = vdwg.mxu0
      %4544 = vmatpush.bf16.msra.mxu0 %v4438
      %4545 = vmatpush.bf16.msra.mxu0 %v4436
      %4546 = vmatpush.bf16.msra.mxu0 %v4434
      %4547 = vmatpush.bf16.msra.mxu0 %v4432
      %4548 = vmatpush.bf16.msra.mxu0 %v4430
      %4549 = vmatpush.bf16.msra.mxu0 %v4428
      %4550 = vmatpush.bf16.msra.mxu0 %v4426
      %4551 = vmatpush.bf16.msra.mxu0 %v4424
      %4552 = vmatmul.bf16.gmra.mxu0 %v4336
      %v4553 = vpop.f32.mrf.mxu0
      %v4554 = vadd.f32 %v4372, %v4553
      %v4555 = vpop.f32.mrf.mxu0
      %v4556 = vadd.f32 %v4372, %v4555
      %4557 = vmatmul.bf16.gmra.mxu0 %v4337
      %v4558 = vpop.f32.mrf.mxu0
      %v4559 = vadd.f32 %v4372, %v4558
      %v4560 = vpop.f32.mrf.mxu0
      %v4561 = vadd.f32 %v4372, %v4560
      %4562 = vmatmul.bf16.gmra.mxu0 %v4338
      %v4563 = vpop.f32.mrf.mxu0
      %v4564 = vadd.f32 %v4372, %v4563
      %v4565 = vpop.f32.mrf.mxu0
      %v4566 = vadd.f32 %v4372, %v4565
      %4567 = vmatmul.bf16.gmra.mxu0 %v4339
      %v4568 = vpop.f32.mrf.mxu0
      %v4569 = vadd.f32 %v4372, %v4568
      %v4570 = vpop.f32.mrf.mxu0
      %v4571 = vadd.f32 %v4372, %v4570
      %4572 = vmatmul.bf16.gmra.mxu0 %v4340
      %v4573 = vpop.f32.mrf.mxu0
      %v4574 = vadd.f32 %v4372, %v4573
      %v4575 = vpop.f32.mrf.mxu0
      %v4576 = vadd.f32 %v4372, %v4575
      %4577 = vmatmul.bf16.gmra.mxu0 %v4341
      %v4578 = vpop.f32.mrf.mxu0
      %v4579 = vadd.f32 %v4372, %v4578
      %v4580 = vpop.f32.mrf.mxu0
      %v4581 = vadd.f32 %v4372, %v4580
      %4582 = vmatmul.bf16.gmra.mxu0 %v4342
      %v4583 = vpop.f32.mrf.mxu0
      %v4584 = vadd.f32 %v4372, %v4583
      %v4585 = vpop.f32.mrf.mxu0
      %v4586 = vadd.f32 %v4372, %v4585
      %4587 = vmatmul.bf16.gmra.mxu0 %v4343
      %v4588 = vpop.f32.mrf.mxu0
      %v4589 = vadd.f32 %v4372, %v4588
      %v4590 = vpop.f32.mrf.mxu0
      %v4591 = vadd.f32 %v4372, %v4590
      %4592 = vmatmul.bf16.gmra.mxu0 %v4344
      %v4593 = vpop.f32.mrf.mxu0
      %v4594 = vadd.f32 %v4372, %v4593
      %v4595 = vpop.f32.mrf.mxu0
      %v4596 = vadd.f32 %v4372, %v4595
      %4597 = vmatmul.bf16.gmra.mxu0 %v4345
      %v4598 = vpop.f32.mrf.mxu0
      %v4599 = vadd.f32 %v4372, %v4598
      %v4600 = vpop.f32.mrf.mxu0
      %v4601 = vadd.f32 %v4372, %v4600
      %4602 = vmatmul.bf16.gmra.mxu0 %v4346
      %v4603 = vpop.f32.mrf.mxu0
      %v4604 = vadd.f32 %v4372, %v4603
      %v4605 = vpop.f32.mrf.mxu0
      %v4606 = vadd.f32 %v4372, %v4605
      %4607 = vmatmul.bf16.gmra.mxu0 %v4347
      %v4608 = vpop.f32.mrf.mxu0
      %v4609 = vadd.f32 %v4372, %v4608
      %v4610 = vpop.f32.mrf.mxu0
      %v4611 = vadd.f32 %v4372, %v4610
      %4612 = vmatmul.bf16.gmra.mxu0 %v4348
      %v4613 = vpop.f32.mrf.mxu0
      %v4614 = vadd.f32 %v4372, %v4613
      %v4615 = vpop.f32.mrf.mxu0
      %v4616 = vadd.f32 %v4372, %v4615
      %4617 = vmatmul.bf16.gmra.mxu0 %v4349
      %v4618 = vpop.f32.mrf.mxu0
      %v4619 = vadd.f32 %v4372, %v4618
      %v4620 = vpop.f32.mrf.mxu0
      %v4621 = vadd.f32 %v4372, %v4620
      %4622 = vmatmul.bf16.gmra.mxu0 %v4350
      %v4623 = vpop.f32.mrf.mxu0
      %v4624 = vadd.f32 %v4372, %v4623
      %v4625 = vpop.f32.mrf.mxu0
      %v4626 = vadd.f32 %v4372, %v4625
      %4627 = vmatmul.bf16.gmra.mxu0 %v4351
      %v4628 = vpop.f32.mrf.mxu0
      %v4629 = vadd.f32 %v4372, %v4628
      %v4630 = vpop.f32.mrf.mxu0
      %v4631 = vadd.f32 %v4372, %v4630
      %4632 = vdwg.mxu0
      %v4633 = vmax.f32 %v4465, 0.0
      %v4634 = vmax.f32 %v4554, 0.0
      %v4635 = vmax.f32 %v4467, 0.0
      %v4636 = vmax.f32 %v4556, 0.0
      %v4637 = vmax.f32 %v4470, 0.0
      %v4638 = vmax.f32 %v4559, 0.0
      %v4639 = vmax.f32 %v4472, 0.0
      %v4640 = vmax.f32 %v4561, 0.0
      %v4641 = vmax.f32 %v4475, 0.0
      %v4642 = vmax.f32 %v4564, 0.0
      %v4643 = vmax.f32 %v4477, 0.0
      %v4644 = vmax.f32 %v4566, 0.0
      %v4645 = vmax.f32 %v4480, 0.0
      %v4646 = vmax.f32 %v4569, 0.0
      %v4647 = vmax.f32 %v4482, 0.0
      %v4648 = vmax.f32 %v4571, 0.0
      %v4649 = vmax.f32 %v4485, 0.0
      %v4650 = vmax.f32 %v4574, 0.0
      %v4651 = vmax.f32 %v4487, 0.0
      %v4652 = vmax.f32 %v4576, 0.0
      %v4653 = vmax.f32 %v4490, 0.0
      %v4654 = vmax.f32 %v4579, 0.0
      %v4655 = vmax.f32 %v4492, 0.0
      %v4656 = vmax.f32 %v4581, 0.0
      %v4657 = vmax.f32 %v4495, 0.0
      %v4658 = vmax.f32 %v4584, 0.0
      %v4659 = vmax.f32 %v4497, 0.0
      %v4660 = vmax.f32 %v4586, 0.0
      %v4661 = vmax.f32 %v4500, 0.0
      %v4662 = vmax.f32 %v4589, 0.0
      %v4663 = vmax.f32 %v4502, 0.0
      %v4664 = vmax.f32 %v4591, 0.0
      %v4665 = vmax.f32 %v4505, 0.0
      %v4666 = vmax.f32 %v4594, 0.0
      %v4667 = vmax.f32 %v4507, 0.0
      %v4668 = vmax.f32 %v4596, 0.0
      %v4669 = vmax.f32 %v4510, 0.0
      %v4670 = vmax.f32 %v4599, 0.0
      %v4671 = vmax.f32 %v4512, 0.0
      %v4672 = vmax.f32 %v4601, 0.0
      %v4673 = vmax.f32 %v4515, 0.0
      %v4674 = vmax.f32 %v4604, 0.0
      %v4675 = vmax.f32 %v4517, 0.0
      %v4676 = vmax.f32 %v4606, 0.0
      %v4677 = vmax.f32 %v4520, 0.0
      %v4678 = vmax.f32 %v4609, 0.0
      %v4679 = vmax.f32 %v4522, 0.0
      %v4680 = vmax.f32 %v4611, 0.0
      %v4681 = vmax.f32 %v4525, 0.0
      %v4682 = vmax.f32 %v4614, 0.0
      %v4683 = vmax.f32 %v4527, 0.0
      %v4684 = vmax.f32 %v4616, 0.0
      %v4685 = vmax.f32 %v4530, 0.0
      %v4686 = vmax.f32 %v4619, 0.0
      %v4687 = vmax.f32 %v4532, 0.0
      %v4688 = vmax.f32 %v4621, 0.0
      %v4689 = vmax.f32 %v4535, 0.0
      %v4690 = vmax.f32 %v4624, 0.0
      %v4691 = vmax.f32 %v4537, 0.0
      %v4692 = vmax.f32 %v4626, 0.0
      %v4693 = vmax.f32 %v4540, 0.0
      %v4694 = vmax.f32 %v4629, 0.0
      %v4695 = vmax.f32 %v4542, 0.0
      %v4696 = vmax.f32 %v4631, 0.0
      %v4697 = vpack.c.bf16 %v4635, %v4633
      %v4698 = vpack.c.bf16 %v4636, %v4634
      %v4699 = vpack.c.bf16 %v4639, %v4637
      %v4700 = vpack.c.bf16 %v4640, %v4638
      %v4701 = vpack.c.bf16 %v4643, %v4641
      %v4702 = vpack.c.bf16 %v4644, %v4642
      %v4703 = vpack.c.bf16 %v4647, %v4645
      %v4704 = vpack.c.bf16 %v4648, %v4646
      %v4705 = vpack.c.bf16 %v4651, %v4649
      %v4706 = vpack.c.bf16 %v4652, %v4650
      %v4707 = vpack.c.bf16 %v4655, %v4653
      %v4708 = vpack.c.bf16 %v4656, %v4654
      %v4709 = vpack.c.bf16 %v4659, %v4657
      %v4710 = vpack.c.bf16 %v4660, %v4658
      %v4711 = vpack.c.bf16 %v4663, %v4661
      %v4712 = vpack.c.bf16 %v4664, %v4662
      %v4713 = vpack.c.bf16 %v4667, %v4665
      %v4714 = vpack.c.bf16 %v4668, %v4666
      %v4715 = vpack.c.bf16 %v4671, %v4669
      %v4716 = vpack.c.bf16 %v4672, %v4670
      %v4717 = vpack.c.bf16 %v4675, %v4673
      %v4718 = vpack.c.bf16 %v4676, %v4674
      %v4719 = vpack.c.bf16 %v4679, %v4677
      %v4720 = vpack.c.bf16 %v4680, %v4678
      %v4721 = vpack.c.bf16 %v4683, %v4681
      %v4722 = vpack.c.bf16 %v4684, %v4682
      %v4723 = vpack.c.bf16 %v4687, %v4685
      %v4724 = vpack.c.bf16 %v4688, %v4686
      %v4725 = vpack.c.bf16 %v4691, %v4689
      %v4726 = vpack.c.bf16 %v4692, %v4690
      %v4727 = vpack.c.bf16 %v4695, %v4693
      %v4728 = vpack.c.bf16 %v4696, %v4694
      %v4729 = vld [vmem:[%s5] sm:$0xff]
      %v4730 = vld [vmem:[%s5 + $0x8] sm:$0xff]
      %v4731 = vld [vmem:[%s5 + $0x10] sm:$0xff]
      %v4732 = vld [vmem:[%s5 + $0x18] sm:$0xf]
      %v4733 = vld [vmem:[%s5 + $0x1c] sm:$0xff]
      %v4734 = vld [vmem:[%s5 + $0x24] sm:$0xff]
      %v4735 = vld [vmem:[%s5 + $0x2c] sm:$0xff]
      %v4736 = vld [vmem:[%s5 + $0x34] sm:$0xf]
      %v4737 = vld [vmem:[%s5 + $0x38] sm:$0xff]
      %v4738 = vld [vmem:[%s5 + $0x40] sm:$0xff]
      %v4739 = vld [vmem:[%s5 + $0x48] sm:$0xff]
      %v4740 = vld [vmem:[%s5 + $0x50] sm:$0xf]
      %v4741 = vld [vmem:[%s5 + $0x54] sm:$0xff]
      %v4742 = vld [vmem:[%s5 + $0x5c] sm:$0xff]
      %v4743 = vld [vmem:[%s5 + $0x64] sm:$0xff]
      %v4744 = vld [vmem:[%s5 + $0x6c] sm:$0xf]
      %v4745 = vld [vmem:[%s5 + $0x70] sm:$0xff]
      %v4746 = vld [vmem:[%s5 + $0x78] sm:$0xff]
      %v4747 = vld [vmem:[%s5 + $0x80] sm:$0xff]
      %v4748 = vld [vmem:[%s5 + $0x88] sm:$0xf]
      %v4749 = vld [vmem:[%s5 + $0x8c] sm:$0xff]
      %v4750 = vld [vmem:[%s5 + $0x94] sm:$0xff]
      %v4751 = vld [vmem:[%s5 + $0x9c] sm:$0xff]
      %v4752 = vld [vmem:[%s5 + $0xa4] sm:$0xf]
      %v4753 = vld [vmem:[%s5 + $0xa8] sm:$0xff]
      %v4754 = vld [vmem:[%s5 + $0xb0] sm:$0xff]
      %v4755 = vld [vmem:[%s5 + $0xb8] sm:$0xff]
      %v4756 = vld [vmem:[%s5 + $0xc0] sm:$0xf]
      %v4757 = vld [vmem:[%s5 + $0xc4] sm:$0xff]
      %v4758 = vld [vmem:[%s5 + $0xcc] sm:$0xff]
      %v4759 = vld [vmem:[%s5 + $0xd4] sm:$0xff]
      %v4760 = vld [vmem:[%s5 + $0xdc] sm:$0xf]
      %v4761 = vld [vmem:[%s5 + $0xe0] sm:$0xff]
      %v4762 = vld [vmem:[%s5 + $0xe8] sm:$0xff]
      %v4763 = vld [vmem:[%s5 + $0xf0] sm:$0xff]
      %v4764 = vld [vmem:[%s5 + $0xf8] sm:$0xf]
      %v4765 = vld [vmem:[%s5 + $0xfc] sm:$0xff]
      %v4766 = vld [vmem:[%s5 + $0x104] sm:$0xff]
      %v4767 = vld [vmem:[%s5 + $0x10c] sm:$0xff]
      %v4768 = vld [vmem:[%s5 + $0x114] sm:$0xf]
      %v4769 = vld [vmem:[%s5 + $0x118] sm:$0xff]
      %v4770 = vld [vmem:[%s5 + $0x120] sm:$0xff]
      %v4771 = vld [vmem:[%s5 + $0x128] sm:$0xff]
      %v4772 = vld [vmem:[%s5 + $0x130] sm:$0xf]
      %v4773 = vld [vmem:[%s5 + $0x134] sm:$0xff]
      %v4774 = vld [vmem:[%s5 + $0x13c] sm:$0xff]
      %v4775 = vld [vmem:[%s5 + $0x144] sm:$0xff]
      %v4776 = vld [vmem:[%s5 + $0x14c] sm:$0xf]
      %v4777 = vld [vmem:[%s5 + $0x150] sm:$0xff]
      %v4778 = vld [vmem:[%s5 + $0x158] sm:$0xff]
      %v4779 = vld [vmem:[%s5 + $0x160] sm:$0xff]
      %v4780 = vld [vmem:[%s5 + $0x168] sm:$0xf]
      %v4781 = vld [vmem:[%s5 + $0x16c] sm:$0xff]
      %v4782 = vld [vmem:[%s5 + $0x174] sm:$0xff]
      %v4783 = vld [vmem:[%s5 + $0x17c] sm:$0xff]
      %v4784 = vld [vmem:[%s5 + $0x184] sm:$0xf]
      %v4785 = vld [vmem:[%s5 + $0x188] sm:$0xff]
      %v4786 = vld [vmem:[%s5 + $0x190] sm:$0xff]
      %v4787 = vld [vmem:[%s5 + $0x198] sm:$0xff]
      %v4788 = vld [vmem:[%s5 + $0x1a0] sm:$0xf]
      %v4789 = vld [vmem:[%s5 + $0x1a4] sm:$0xff]
      %v4790 = vld [vmem:[%s5 + $0x1ac] sm:$0xff]
      %v4791 = vld [vmem:[%s5 + $0x1b4] sm:$0xff]
      %v4792 = vld [vmem:[%s5 + $0x1bc] sm:$0xf]
      %v4793 = vld [vmem:[%s5 + $0x1c0] sm:$0xff]
      %v4794 = vld [vmem:[%s5 + $0x1c8] sm:$0xff]
      %v4795 = vld [vmem:[%s5 + $0x1d0] sm:$0xff]
      %v4796 = vld [vmem:[%s5 + $0x1d8] sm:$0xf]
      %v4797 = vld [vmem:[%s5 + $0x1dc] sm:$0xff]
      %v4798 = vld [vmem:[%s5 + $0x1e4] sm:$0xff]
      %v4799 = vld [vmem:[%s5 + $0x1ec] sm:$0xff]
      %v4800 = vld [vmem:[%s5 + $0x1f4] sm:$0xf]
      %v4801 = vld [vmem:[%s5 + $0x1f8] sm:$0xff]
      %v4802 = vld [vmem:[%s5 + $0x200] sm:$0xff]
      %v4803 = vld [vmem:[%s5 + $0x208] sm:$0xff]
      %v4804 = vld [vmem:[%s5 + $0x210] sm:$0xf]
      %v4805 = vld [vmem:[%s5 + $0x214] sm:$0xff]
      %v4806 = vld [vmem:[%s5 + $0x21c] sm:$0xff]
      %v4807 = vld [vmem:[%s5 + $0x224] sm:$0xff]
      %v4808 = vld [vmem:[%s5 + $0x22c] sm:$0xf]
      %v4809 = vld [vmem:[%s5 + $0x230] sm:$0xff]
      %v4810 = vld [vmem:[%s5 + $0x238] sm:$0xff]
      %v4811 = vld [vmem:[%s5 + $0x240] sm:$0xff]
      %v4812 = vld [vmem:[%s5 + $0x248] sm:$0xf]
      %v4813 = vld [vmem:[%s5 + $0x24c] sm:$0xff]
      %v4814 = vld [vmem:[%s5 + $0x254] sm:$0xff]
      %v4815 = vld [vmem:[%s5 + $0x25c] sm:$0xff]
      %v4816 = vld [vmem:[%s5 + $0x264] sm:$0xf]
      %v4817 = vld [vmem:[%s5 + $0x268] sm:$0xff]
      %v4818 = vld [vmem:[%s5 + $0x270] sm:$0xff]
      %v4819 = vld [vmem:[%s5 + $0x278] sm:$0xff]
      %v4820 = vld [vmem:[%s5 + $0x280] sm:$0xf]
      %v4821 = vld [vmem:[%s5 + $0x284] sm:$0xff]
      %v4822 = vld [vmem:[%s5 + $0x28c] sm:$0xff]
      %v4823 = vld [vmem:[%s5 + $0x294] sm:$0xff]
      %v4824 = vld [vmem:[%s5 + $0x29c] sm:$0xf]
      %v4825 = vld [vmem:[%s5 + $0x2a0] sm:$0xff]
      %v4826 = vld [vmem:[%s5 + $0x2a8] sm:$0xff]
      %v4827 = vld [vmem:[%s5 + $0x2b0] sm:$0xff]
      %v4828 = vld [vmem:[%s5 + $0x2b8] sm:$0xf]
      %v4829 = vld [vmem:[%s5 + $0x2bc] sm:$0xff]
      %v4830 = vld [vmem:[%s5 + $0x2c4] sm:$0xff]
      %v4831 = vld [vmem:[%s5 + $0x2cc] sm:$0xff]
      %v4832 = vld [vmem:[%s5 + $0x2d4] sm:$0xf]
      %v4833 = vld [vmem:[%s5 + $0x2d8] sm:$0xff]
      %v4834 = vld [vmem:[%s5 + $0x2e0] sm:$0xff]
      %v4835 = vld [vmem:[%s5 + $0x2e8] sm:$0xff]
      %v4836 = vld [vmem:[%s5 + $0x2f0] sm:$0xf]
      %v4837 = vld [vmem:[%s5 + $0x2f4] sm:$0xff]
      %v4838 = vld [vmem:[%s5 + $0x2fc] sm:$0xff]
      %v4839 = vld [vmem:[%s5 + $0x304] sm:$0xff]
      %v4840 = vld [vmem:[%s5 + $0x30c] sm:$0xf]
      %v4841 = vld [vmem:[%s5 + $0x310] sm:$0xff]
      %v4842 = vld [vmem:[%s5 + $0x318] sm:$0xff]
      %v4843 = vld [vmem:[%s5 + $0x320] sm:$0xff]
      %v4844 = vld [vmem:[%s5 + $0x328] sm:$0xf]
      %v4845 = vld [vmem:[%s5 + $0x32c] sm:$0xff]
      %v4846 = vld [vmem:[%s5 + $0x334] sm:$0xff]
      %v4847 = vld [vmem:[%s5 + $0x33c] sm:$0xff]
      %v4848 = vld [vmem:[%s5 + $0x344] sm:$0xf]
      %v4849 = vld [vmem:[%s5 + $0x348] sm:$0xff]
      %v4850 = vld [vmem:[%s5 + $0x350] sm:$0xff]
      %v4851 = vld [vmem:[%s5 + $0x358] sm:$0xff]
      %v4852 = vld [vmem:[%s5 + $0x360] sm:$0xf]
      %v4853 = vld [vmem:[%s5 + $0x364] sm:$0xff]
      %v4854 = vld [vmem:[%s5 + $0x36c] sm:$0xff]
      %v4855 = vld [vmem:[%s5 + $0x374] sm:$0xff]
      %v4856 = vld [vmem:[%s5 + $0x37c] sm:$0xf]
      %s4857 = scalar_lea.vmem %s6, 58
      %v4858 = vld [vmem:[%s4857] ss:$8 sm:$0xf]
      %v4859 = vld [vmem:[%s4857] ss:$8 sm:$0x70]
      %v4860 = vor.u32 %v4858, %v4859
      %v4862 = vperm.slane %v4860, 0
      %v4863 = vperm.slane %v4860, 1
      %v4864 = vperm.slane %v4860, 2
      %v4865 = vperm.slane %v4860, 3
      %v4866 = vperm.slane %v4860, 4
      %v4867 = vperm.slane %v4860, 5
      %v4868 = vperm.slane %v4860, 6
      %v5004 = vunpack.c.l.b16 %v4729
      %v5005 = vunpack.c.h.b16 %v4729
      %v5006 = vunpack.c.l.b16 %v4730
      %v5007 = vunpack.c.h.b16 %v4730
      %v5008 = vunpack.c.l.b16 %v4731
      %v5009 = vunpack.c.h.b16 %v4731
      %v5010 = vunpack.c.l.b16 %v4732
      %v5011 = vunpack.c.l.b16 %v4733
      %v5012 = vunpack.c.h.b16 %v4733
      %v5013 = vunpack.c.l.b16 %v4734
      %v5014 = vunpack.c.h.b16 %v4734
      %v5015 = vunpack.c.l.b16 %v4735
      %v5016 = vunpack.c.h.b16 %v4735
      %v5017 = vunpack.c.l.b16 %v4736
      %v5018 = vunpack.c.l.b16 %v4737
      %v5019 = vunpack.c.h.b16 %v4737
      %v5020 = vunpack.c.l.b16 %v4738
      %v5021 = vunpack.c.h.b16 %v4738
      %v5022 = vunpack.c.l.b16 %v4739
      %v5023 = vunpack.c.h.b16 %v4739
      %v5024 = vunpack.c.l.b16 %v4740
      %v5025 = vunpack.c.l.b16 %v4741
      %v5026 = vunpack.c.h.b16 %v4741
      %v5027 = vunpack.c.l.b16 %v4742
      %v5028 = vunpack.c.h.b16 %v4742
      %v5029 = vunpack.c.l.b16 %v4743
      %v5030 = vunpack.c.h.b16 %v4743
      %v5031 = vunpack.c.l.b16 %v4744
      %v5032 = vunpack.c.l.b16 %v4745
      %v5033 = vunpack.c.h.b16 %v4745
      %v5034 = vunpack.c.l.b16 %v4746
      %v5035 = vunpack.c.h.b16 %v4746
      %v5036 = vunpack.c.l.b16 %v4747
      %v5037 = vunpack.c.h.b16 %v4747
      %v5038 = vunpack.c.l.b16 %v4748
      %v5039 = vunpack.c.l.b16 %v4749
      %v5040 = vunpack.c.h.b16 %v4749
      %v5041 = vunpack.c.l.b16 %v4750
      %v5042 = vunpack.c.h.b16 %v4750
      %v5043 = vunpack.c.l.b16 %v4751
      %v5044 = vunpack.c.h.b16 %v4751
      %v5045 = vunpack.c.l.b16 %v4752
      %v5046 = vunpack.c.l.b16 %v4753
      %v5047 = vunpack.c.h.b16 %v4753
      %v5048 = vunpack.c.l.b16 %v4754
      %v5049 = vunpack.c.h.b16 %v4754
      %v5050 = vunpack.c.l.b16 %v4755
      %v5051 = vunpack.c.h.b16 %v4755
      %v5052 = vunpack.c.l.b16 %v4756
      %v5053 = vunpack.c.l.b16 %v4757
      %v5054 = vunpack.c.h.b16 %v4757
      %v5055 = vunpack.c.l.b16 %v4758
      %v5056 = vunpack.c.h.b16 %v4758
      %v5057 = vunpack.c.l.b16 %v4759
      %v5058 = vunpack.c.h.b16 %v4759
      %v5059 = vunpack.c.l.b16 %v4760
      %v5060 = vunpack.c.l.b16 %v4761
      %v5061 = vunpack.c.h.b16 %v4761
      %v5062 = vunpack.c.l.b16 %v4762
      %v5063 = vunpack.c.h.b16 %v4762
      %v5064 = vunpack.c.l.b16 %v4763
      %v5065 = vunpack.c.h.b16 %v4763
      %v5066 = vunpack.c.l.b16 %v4764
      %v5067 = vunpack.c.l.b16 %v4765
      %v5068 = vunpack.c.h.b16 %v4765
      %v5069 = vunpack.c.l.b16 %v4766
      %v5070 = vunpack.c.h.b16 %v4766
      %v5071 = vunpack.c.l.b16 %v4767
      %v5072 = vunpack.c.h.b16 %v4767
      %v5073 = vunpack.c.l.b16 %v4768
      %v5074 = vunpack.c.l.b16 %v4769
      %v5075 = vunpack.c.h.b16 %v4769
      %v5076 = vunpack.c.l.b16 %v4770
      %v5077 = vunpack.c.h.b16 %v4770
      %v5078 = vunpack.c.l.b16 %v4771
      %v5079 = vunpack.c.h.b16 %v4771
      %v5080 = vunpack.c.l.b16 %v4772
      %v5081 = vunpack.c.l.b16 %v4773
      %v5082 = vunpack.c.h.b16 %v4773
      %v5083 = vunpack.c.l.b16 %v4774
      %v5084 = vunpack.c.h.b16 %v4774
      %v5085 = vunpack.c.l.b16 %v4775
      %v5086 = vunpack.c.h.b16 %v4775
      %v5087 = vunpack.c.l.b16 %v4776
      %v5088 = vunpack.c.l.b16 %v4777
      %v5089 = vunpack.c.h.b16 %v4777
      %v5090 = vunpack.c.l.b16 %v4778
      %v5091 = vunpack.c.h.b16 %v4778
      %v5092 = vunpack.c.l.b16 %v4779
      %v5093 = vunpack.c.h.b16 %v4779
      %v5094 = vunpack.c.l.b16 %v4780
      %v5095 = vunpack.c.l.b16 %v4781
      %v5096 = vunpack.c.h.b16 %v4781
      %v5097 = vunpack.c.l.b16 %v4782
      %v5098 = vunpack.c.h.b16 %v4782
      %v5099 = vunpack.c.l.b16 %v4783
      %v5100 = vunpack.c.h.b16 %v4783
      %v5101 = vunpack.c.l.b16 %v4784
      %v5102 = vunpack.c.l.b16 %v4785
      %v5103 = vunpack.c.h.b16 %v4785
      %v5104 = vunpack.c.l.b16 %v4786
      %v5105 = vunpack.c.h.b16 %v4786
      %v5106 = vunpack.c.l.b16 %v4787
      %v5107 = vunpack.c.h.b16 %v4787
      %v5108 = vunpack.c.l.b16 %v4788
      %v5109 = vunpack.c.l.b16 %v4789
      %v5110 = vunpack.c.h.b16 %v4789
      %v5111 = vunpack.c.l.b16 %v4790
      %v5112 = vunpack.c.h.b16 %v4790
      %v5113 = vunpack.c.l.b16 %v4791
      %v5114 = vunpack.c.h.b16 %v4791
      %v5115 = vunpack.c.l.b16 %v4792
      %v5116 = vunpack.c.l.b16 %v4793
      %v5117 = vunpack.c.h.b16 %v4793
      %v5118 = vunpack.c.l.b16 %v4794
      %v5119 = vunpack.c.h.b16 %v4794
      %v5120 = vunpack.c.l.b16 %v4795
      %v5121 = vunpack.c.h.b16 %v4795
      %v5122 = vunpack.c.l.b16 %v4796
      %v5123 = vunpack.c.l.b16 %v4797
      %v5124 = vunpack.c.h.b16 %v4797
      %v5125 = vunpack.c.l.b16 %v4798
      %v5126 = vunpack.c.h.b16 %v4798
      %v5127 = vunpack.c.l.b16 %v4799
      %v5128 = vunpack.c.h.b16 %v4799
      %v5129 = vunpack.c.l.b16 %v4800
      %v5130 = vunpack.c.l.b16 %v4801
      %v5131 = vunpack.c.h.b16 %v4801
      %v5132 = vunpack.c.l.b16 %v4802
      %v5133 = vunpack.c.h.b16 %v4802
      %v5134 = vunpack.c.l.b16 %v4803
      %v5135 = vunpack.c.h.b16 %v4803
      %v5136 = vunpack.c.l.b16 %v4804
      %v5137 = vunpack.c.l.b16 %v4805
      %v5138 = vunpack.c.h.b16 %v4805
      %v5139 = vunpack.c.l.b16 %v4806
      %v5140 = vunpack.c.h.b16 %v4806
      %v5141 = vunpack.c.l.b16 %v4807
      %v5142 = vunpack.c.h.b16 %v4807
      %v5143 = vunpack.c.l.b16 %v4808
      %v5144 = vunpack.c.l.b16 %v4809
      %v5145 = vunpack.c.h.b16 %v4809
      %v5146 = vunpack.c.l.b16 %v4810
      %v5147 = vunpack.c.h.b16 %v4810
      %v5148 = vunpack.c.l.b16 %v4811
      %v5149 = vunpack.c.h.b16 %v4811
      %v5150 = vunpack.c.l.b16 %v4812
      %v5151 = vunpack.c.l.b16 %v4813
      %v5152 = vunpack.c.h.b16 %v4813
      %v5153 = vunpack.c.l.b16 %v4814
      %v5154 = vunpack.c.h.b16 %v4814
      %v5155 = vunpack.c.l.b16 %v4815
      %v5156 = vunpack.c.h.b16 %v4815
      %v5157 = vunpack.c.l.b16 %v4816
      %v5158 = vunpack.c.l.b16 %v4817
      %v5159 = vunpack.c.h.b16 %v4817
      %v5160 = vunpack.c.l.b16 %v4818
      %v5161 = vunpack.c.h.b16 %v4818
      %v5162 = vunpack.c.l.b16 %v4819
      %v5163 = vunpack.c.h.b16 %v4819
      %v5164 = vunpack.c.l.b16 %v4820
      %v5165 = vunpack.c.l.b16 %v4821
      %v5166 = vunpack.c.h.b16 %v4821
      %v5167 = vunpack.c.l.b16 %v4822
      %v5168 = vunpack.c.h.b16 %v4822
      %v5169 = vunpack.c.l.b16 %v4823
      %v5170 = vunpack.c.h.b16 %v4823
      %v5171 = vunpack.c.l.b16 %v4824
      %v5172 = vunpack.c.l.b16 %v4825
      %v5173 = vunpack.c.h.b16 %v4825
      %v5174 = vunpack.c.l.b16 %v4826
      %v5175 = vunpack.c.h.b16 %v4826
      %v5176 = vunpack.c.l.b16 %v4827
      %v5177 = vunpack.c.h.b16 %v4827
      %v5178 = vunpack.c.l.b16 %v4828
      %v5179 = vunpack.c.l.b16 %v4829
      %v5180 = vunpack.c.h.b16 %v4829
      %v5181 = vunpack.c.l.b16 %v4830
      %v5182 = vunpack.c.h.b16 %v4830
      %v5183 = vunpack.c.l.b16 %v4831
      %v5184 = vunpack.c.h.b16 %v4831
      %v5185 = vunpack.c.l.b16 %v4832
      %v5186 = vunpack.c.l.b16 %v4833
      %v5187 = vunpack.c.h.b16 %v4833
      %v5188 = vunpack.c.l.b16 %v4834
      %v5189 = vunpack.c.h.b16 %v4834
      %v5190 = vunpack.c.l.b16 %v4835
      %v5191 = vunpack.c.h.b16 %v4835
      %v5192 = vunpack.c.l.b16 %v4836
      %v5193 = vunpack.c.l.b16 %v4837
      %v5194 = vunpack.c.h.b16 %v4837
      %v5195 = vunpack.c.l.b16 %v4838
      %v5196 = vunpack.c.h.b16 %v4838
      %v5197 = vunpack.c.l.b16 %v4839
      %v5198 = vunpack.c.h.b16 %v4839
      %v5199 = vunpack.c.l.b16 %v4840
      %v5200 = vunpack.c.l.b16 %v4841
      %v5201 = vunpack.c.h.b16 %v4841
      %v5202 = vunpack.c.l.b16 %v4842
      %v5203 = vunpack.c.h.b16 %v4842
      %v5204 = vunpack.c.l.b16 %v4843
      %v5205 = vunpack.c.h.b16 %v4843
      %v5206 = vunpack.c.l.b16 %v4844
      %v5207 = vunpack.c.l.b16 %v4845
      %v5208 = vunpack.c.h.b16 %v4845
      %v5209 = vunpack.c.l.b16 %v4846
      %v5210 = vunpack.c.h.b16 %v4846
      %v5211 = vunpack.c.l.b16 %v4847
      %v5212 = vunpack.c.h.b16 %v4847
      %v5213 = vunpack.c.l.b16 %v4848
      %v5214 = vunpack.c.l.b16 %v4849
      %v5215 = vunpack.c.h.b16 %v4849
      %v5216 = vunpack.c.l.b16 %v4850
      %v5217 = vunpack.c.h.b16 %v4850
      %v5218 = vunpack.c.l.b16 %v4851
      %v5219 = vunpack.c.h.b16 %v4851
      %v5220 = vunpack.c.l.b16 %v4852
      %v5221 = vunpack.c.l.b16 %v4853
      %v5222 = vunpack.c.h.b16 %v4853
      %v5223 = vunpack.c.l.b16 %v4854
      %v5224 = vunpack.c.h.b16 %v4854
      %v5225 = vunpack.c.l.b16 %v4855
      %v5226 = vunpack.c.h.b16 %v4855
      %v5227 = vunpack.c.l.b16 %v4856
      %v5228 = vpack.c.b16 %v5011, %v5004
      %v5229 = vpack.c.b16 %v5012, %v5005
      %v5230 = vpack.c.b16 %v5013, %v5006
      %v5231 = vpack.c.b16 %v5014, %v5007
      %v5232 = vpack.c.b16 %v5015, %v5008
      %v5233 = vpack.c.b16 %v5016, %v5009
      %v5234 = vpack.c.b16 %v5017, %v5010
      %v5235 = vpack.c.b16 %v5025, %v5018
      %v5236 = vpack.c.b16 %v5026, %v5019
      %v5237 = vpack.c.b16 %v5027, %v5020
      %v5238 = vpack.c.b16 %v5028, %v5021
      %v5239 = vpack.c.b16 %v5029, %v5022
      %v5240 = vpack.c.b16 %v5030, %v5023
      %v5241 = vpack.c.b16 %v5031, %v5024
      %v5242 = vpack.c.b16 %v5039, %v5032
      %v5243 = vpack.c.b16 %v5040, %v5033
      %v5244 = vpack.c.b16 %v5041, %v5034
      %v5245 = vpack.c.b16 %v5042, %v5035
      %v5246 = vpack.c.b16 %v5043, %v5036
      %v5247 = vpack.c.b16 %v5044, %v5037
      %v5248 = vpack.c.b16 %v5045, %v5038
      %v5249 = vpack.c.b16 %v5053, %v5046
      %v5250 = vpack.c.b16 %v5054, %v5047
      %v5251 = vpack.c.b16 %v5055, %v5048
      %v5252 = vpack.c.b16 %v5056, %v5049
      %v5253 = vpack.c.b16 %v5057, %v5050
      %v5254 = vpack.c.b16 %v5058, %v5051
      %v5255 = vpack.c.b16 %v5059, %v5052
      %v5256 = vpack.c.b16 %v5067, %v5060
      %v5257 = vpack.c.b16 %v5068, %v5061
      %v5258 = vpack.c.b16 %v5069, %v5062
      %v5259 = vpack.c.b16 %v5070, %v5063
      %v5260 = vpack.c.b16 %v5071, %v5064
      %v5261 = vpack.c.b16 %v5072, %v5065
      %v5262 = vpack.c.b16 %v5073, %v5066
      %v5263 = vpack.c.b16 %v5081, %v5074
      %v5264 = vpack.c.b16 %v5082, %v5075
      %v5265 = vpack.c.b16 %v5083, %v5076
      %v5266 = vpack.c.b16 %v5084, %v5077
      %v5267 = vpack.c.b16 %v5085, %v5078
      %v5268 = vpack.c.b16 %v5086, %v5079
      %v5269 = vpack.c.b16 %v5087, %v5080
      %v5270 = vpack.c.b16 %v5095, %v5088
      %v5271 = vpack.c.b16 %v5096, %v5089
      %v5272 = vpack.c.b16 %v5097, %v5090
      %v5273 = vpack.c.b16 %v5098, %v5091
      %v5274 = vpack.c.b16 %v5099, %v5092
      %v5275 = vpack.c.b16 %v5100, %v5093
      %v5276 = vpack.c.b16 %v5101, %v5094
      %v5277 = vpack.c.b16 %v5109, %v5102
      %v5278 = vpack.c.b16 %v5110, %v5103
      %v5279 = vpack.c.b16 %v5111, %v5104
      %v5280 = vpack.c.b16 %v5112, %v5105
      %v5281 = vpack.c.b16 %v5113, %v5106
      %v5282 = vpack.c.b16 %v5114, %v5107
      %v5283 = vpack.c.b16 %v5115, %v5108
      %v5284 = vpack.c.b16 %v5123, %v5116
      %v5285 = vpack.c.b16 %v5124, %v5117
      %v5286 = vpack.c.b16 %v5125, %v5118
      %v5287 = vpack.c.b16 %v5126, %v5119
      %v5288 = vpack.c.b16 %v5127, %v5120
      %v5289 = vpack.c.b16 %v5128, %v5121
      %v5290 = vpack.c.b16 %v5129, %v5122
      %v5291 = vpack.c.b16 %v5137, %v5130
      %v5292 = vpack.c.b16 %v5138, %v5131
      %v5293 = vpack.c.b16 %v5139, %v5132
      %v5294 = vpack.c.b16 %v5140, %v5133
      %v5295 = vpack.c.b16 %v5141, %v5134
      %v5296 = vpack.c.b16 %v5142, %v5135
      %v5297 = vpack.c.b16 %v5143, %v5136
      %v5298 = vpack.c.b16 %v5151, %v5144
      %v5299 = vpack.c.b16 %v5152, %v5145
      %v5300 = vpack.c.b16 %v5153, %v5146
      %v5301 = vpack.c.b16 %v5154, %v5147
      %v5302 = vpack.c.b16 %v5155, %v5148
      %v5303 = vpack.c.b16 %v5156, %v5149
      %v5304 = vpack.c.b16 %v5157, %v5150
      %v5305 = vpack.c.b16 %v5165, %v5158
      %v5306 = vpack.c.b16 %v5166, %v5159
      %v5307 = vpack.c.b16 %v5167, %v5160
      %v5308 = vpack.c.b16 %v5168, %v5161
      %v5309 = vpack.c.b16 %v5169, %v5162
      %v5310 = vpack.c.b16 %v5170, %v5163
      %v5311 = vpack.c.b16 %v5171, %v5164
      %v5312 = vpack.c.b16 %v5179, %v5172
      %v5313 = vpack.c.b16 %v5180, %v5173
      %v5314 = vpack.c.b16 %v5181, %v5174
      %v5315 = vpack.c.b16 %v5182, %v5175
      %v5316 = vpack.c.b16 %v5183, %v5176
      %v5317 = vpack.c.b16 %v5184, %v5177
      %v5318 = vpack.c.b16 %v5185, %v5178
      %v5319 = vpack.c.b16 %v5193, %v5186
      %v5320 = vpack.c.b16 %v5194, %v5187
      %v5321 = vpack.c.b16 %v5195, %v5188
      %v5322 = vpack.c.b16 %v5196, %v5189
      %v5323 = vpack.c.b16 %v5197, %v5190
      %v5324 = vpack.c.b16 %v5198, %v5191
      %v5325 = vpack.c.b16 %v5199, %v5192
      %v5326 = vpack.c.b16 %v5207, %v5200
      %v5327 = vpack.c.b16 %v5208, %v5201
      %v5328 = vpack.c.b16 %v5209, %v5202
      %v5329 = vpack.c.b16 %v5210, %v5203
      %v5330 = vpack.c.b16 %v5211, %v5204
      %v5331 = vpack.c.b16 %v5212, %v5205
      %v5332 = vpack.c.b16 %v5213, %v5206
      %v5333 = vpack.c.b16 %v5221, %v5214
      %v5334 = vpack.c.b16 %v5222, %v5215
      %v5335 = vpack.c.b16 %v5223, %v5216
      %v5336 = vpack.c.b16 %v5224, %v5217
      %v5337 = vpack.c.b16 %v5225, %v5218
      %v5338 = vpack.c.b16 %v5226, %v5219
      %v5339 = vpack.c.b16 %v5227, %v5220
      %5452 = vmatpush.bf16.msra.mxu0 %v5277
      %5453 = vmatpush.bf16.msra.mxu0 %v5270
      %5454 = vmatpush.bf16.msra.mxu0 %v5263
      %5455 = vmatpush.bf16.msra.mxu0 %v5256
      %5456 = vmatpush.bf16.msra.mxu0 %v5249
      %5457 = vmatpush.bf16.msra.mxu0 %v5242
      %5458 = vmatpush.bf16.msra.mxu0 %v5235
      %5459 = vmatpush.bf16.msra.mxu0 %v5228
      %5460 = vmatmul.bf16.gmra.mxu0 %v4697
      %v5461 = vpop.f32.mrf.mxu0
      %v5462 = vadd.f32 %v4862, %v5461
      %v5463 = vpop.f32.mrf.mxu0
      %v5464 = vadd.f32 %v4862, %v5463
      %5465 = vmatmul.bf16.gmra.mxu0 %v4699
      %v5466 = vpop.f32.mrf.mxu0
      %v5467 = vadd.f32 %v4862, %v5466
      %v5468 = vpop.f32.mrf.mxu0
      %v5469 = vadd.f32 %v4862, %v5468
      %5470 = vmatmul.bf16.gmra.mxu0 %v4701
      %v5471 = vpop.f32.mrf.mxu0
      %v5472 = vadd.f32 %v4862, %v5471
      %v5473 = vpop.f32.mrf.mxu0
      %v5474 = vadd.f32 %v4862, %v5473
      %5475 = vmatmul.bf16.gmra.mxu0 %v4703
      %v5476 = vpop.f32.mrf.mxu0
      %v5477 = vadd.f32 %v4862, %v5476
      %v5478 = vpop.f32.mrf.mxu0
      %v5479 = vadd.f32 %v4862, %v5478
      %5480 = vmatmul.bf16.gmra.mxu0 %v4705
      %v5481 = vpop.f32.mrf.mxu0
      %v5482 = vadd.f32 %v4862, %v5481
      %v5483 = vpop.f32.mrf.mxu0
      %v5484 = vadd.f32 %v4862, %v5483
      %5485 = vmatmul.bf16.gmra.mxu0 %v4707
      %v5486 = vpop.f32.mrf.mxu0
      %v5487 = vadd.f32 %v4862, %v5486
      %v5488 = vpop.f32.mrf.mxu0
      %v5489 = vadd.f32 %v4862, %v5488
      %5490 = vmatmul.bf16.gmra.mxu0 %v4709
      %v5491 = vpop.f32.mrf.mxu0
      %v5492 = vadd.f32 %v4862, %v5491
      %v5493 = vpop.f32.mrf.mxu0
      %v5494 = vadd.f32 %v4862, %v5493
      %5495 = vmatmul.bf16.gmra.mxu0 %v4711
      %v5496 = vpop.f32.mrf.mxu0
      %v5497 = vadd.f32 %v4862, %v5496
      %v5498 = vpop.f32.mrf.mxu0
      %v5499 = vadd.f32 %v4862, %v5498
      %5500 = vmatmul.bf16.gmra.mxu0 %v4713
      %v5501 = vpop.f32.mrf.mxu0
      %v5502 = vadd.f32 %v4862, %v5501
      %v5503 = vpop.f32.mrf.mxu0
      %v5504 = vadd.f32 %v4862, %v5503
      %5505 = vmatmul.bf16.gmra.mxu0 %v4715
      %v5506 = vpop.f32.mrf.mxu0
      %v5507 = vadd.f32 %v4862, %v5506
      %v5508 = vpop.f32.mrf.mxu0
      %v5509 = vadd.f32 %v4862, %v5508
      %5510 = vmatmul.bf16.gmra.mxu0 %v4717
      %v5511 = vpop.f32.mrf.mxu0
      %v5512 = vadd.f32 %v4862, %v5511
      %v5513 = vpop.f32.mrf.mxu0
      %v5514 = vadd.f32 %v4862, %v5513
      %5515 = vmatmul.bf16.gmra.mxu0 %v4719
      %v5516 = vpop.f32.mrf.mxu0
      %v5517 = vadd.f32 %v4862, %v5516
      %v5518 = vpop.f32.mrf.mxu0
      %v5519 = vadd.f32 %v4862, %v5518
      %5520 = vmatmul.bf16.gmra.mxu0 %v4721
      %v5521 = vpop.f32.mrf.mxu0
      %v5522 = vadd.f32 %v4862, %v5521
      %v5523 = vpop.f32.mrf.mxu0
      %v5524 = vadd.f32 %v4862, %v5523
      %5525 = vmatmul.bf16.gmra.mxu0 %v4723
      %v5526 = vpop.f32.mrf.mxu0
      %v5527 = vadd.f32 %v4862, %v5526
      %v5528 = vpop.f32.mrf.mxu0
      %v5529 = vadd.f32 %v4862, %v5528
      %5530 = vmatmul.bf16.gmra.mxu0 %v4725
      %v5531 = vpop.f32.mrf.mxu0
      %v5532 = vadd.f32 %v4862, %v5531
      %v5533 = vpop.f32.mrf.mxu0
      %v5534 = vadd.f32 %v4862, %v5533
      %5535 = vmatmul.bf16.gmra.mxu0 %v4727
      %v5536 = vpop.f32.mrf.mxu0
      %v5537 = vadd.f32 %v4862, %v5536
      %v5538 = vpop.f32.mrf.mxu0
      %v5539 = vadd.f32 %v4862, %v5538
      %5540 = vdwg.mxu0
      %5541 = vmatpush.bf16.msra.mxu0 %v5333
      %5542 = vmatpush.bf16.msra.mxu0 %v5326
      %5543 = vmatpush.bf16.msra.mxu0 %v5319
      %5544 = vmatpush.bf16.msra.mxu0 %v5312
      %5545 = vmatpush.bf16.msra.mxu0 %v5305
      %5546 = vmatpush.bf16.msra.mxu0 %v5298
      %5547 = vmatpush.bf16.msra.mxu0 %v5291
      %5548 = vmatpush.bf16.msra.mxu0 %v5284
      %5549 = vmatmul.bf16.gmra.mxu0 %v4698
      %v5550 = vpop.f32.mrf.mxu0
      %v5551 = vadd.f32 %v5462, %v5550
      %v5552 = vpop.f32.mrf.mxu0
      %v5553 = vadd.f32 %v5464, %v5552
      %5554 = vmatmul.bf16.gmra.mxu0 %v4700
      %v5555 = vpop.f32.mrf.mxu0
      %v5556 = vadd.f32 %v5467, %v5555
      %v5557 = vpop.f32.mrf.mxu0
      %v5558 = vadd.f32 %v5469, %v5557
      %5559 = vmatmul.bf16.gmra.mxu0 %v4702
      %v5560 = vpop.f32.mrf.mxu0
      %v5561 = vadd.f32 %v5472, %v5560
      %v5562 = vpop.f32.mrf.mxu0
      %v5563 = vadd.f32 %v5474, %v5562
      %5564 = vmatmul.bf16.gmra.mxu0 %v4704
      %v5565 = vpop.f32.mrf.mxu0
      %v5566 = vadd.f32 %v5477, %v5565
      %v5567 = vpop.f32.mrf.mxu0
      %v5568 = vadd.f32 %v5479, %v5567
      %5569 = vmatmul.bf16.gmra.mxu0 %v4706
      %v5570 = vpop.f32.mrf.mxu0
      %v5571 = vadd.f32 %v5482, %v5570
      %v5572 = vpop.f32.mrf.mxu0
      %v5573 = vadd.f32 %v5484, %v5572
      %5574 = vmatmul.bf16.gmra.mxu0 %v4708
      %v5575 = vpop.f32.mrf.mxu0
      %v5576 = vadd.f32 %v5487, %v5575
      %v5577 = vpop.f32.mrf.mxu0
      %v5578 = vadd.f32 %v5489, %v5577
      %5579 = vmatmul.bf16.gmra.mxu0 %v4710
      %v5580 = vpop.f32.mrf.mxu0
      %v5581 = vadd.f32 %v5492, %v5580
      %v5582 = vpop.f32.mrf.mxu0
      %v5583 = vadd.f32 %v5494, %v5582
      %5584 = vmatmul.bf16.gmra.mxu0 %v4712
      %v5585 = vpop.f32.mrf.mxu0
      %v5586 = vadd.f32 %v5497, %v5585
      %v5587 = vpop.f32.mrf.mxu0
      %v5588 = vadd.f32 %v5499, %v5587
      %5589 = vmatmul.bf16.gmra.mxu0 %v4714
      %v5590 = vpop.f32.mrf.mxu0
      %v5591 = vadd.f32 %v5502, %v5590
      %v5592 = vpop.f32.mrf.mxu0
      %v5593 = vadd.f32 %v5504, %v5592
      %5594 = vmatmul.bf16.gmra.mxu0 %v4716
      %v5595 = vpop.f32.mrf.mxu0
      %v5596 = vadd.f32 %v5507, %v5595
      %v5597 = vpop.f32.mrf.mxu0
      %v5598 = vadd.f32 %v5509, %v5597
      %5599 = vmatmul.bf16.gmra.mxu0 %v4718
      %v5600 = vpop.f32.mrf.mxu0
      %v5601 = vadd.f32 %v5512, %v5600
      %v5602 = vpop.f32.mrf.mxu0
      %v5603 = vadd.f32 %v5514, %v5602
      %5604 = vmatmul.bf16.gmra.mxu0 %v4720
      %v5605 = vpop.f32.mrf.mxu0
      %v5606 = vadd.f32 %v5517, %v5605
      %v5607 = vpop.f32.mrf.mxu0
      %v5608 = vadd.f32 %v5519, %v5607
      %5609 = vmatmul.bf16.gmra.mxu0 %v4722
      %v5610 = vpop.f32.mrf.mxu0
      %v5611 = vadd.f32 %v5522, %v5610
      %v5612 = vpop.f32.mrf.mxu0
      %v5613 = vadd.f32 %v5524, %v5612
      %5614 = vmatmul.bf16.gmra.mxu0 %v4724
      %v5615 = vpop.f32.mrf.mxu0
      %v5616 = vadd.f32 %v5527, %v5615
      %v5617 = vpop.f32.mrf.mxu0
      %v5618 = vadd.f32 %v5529, %v5617
      %5619 = vmatmul.bf16.gmra.mxu0 %v4726
      %v5620 = vpop.f32.mrf.mxu0
      %v5621 = vadd.f32 %v5532, %v5620
      %v5622 = vpop.f32.mrf.mxu0
      %v5623 = vadd.f32 %v5534, %v5622
      %5624 = vmatmul.bf16.gmra.mxu0 %v4728
      %v5625 = vpop.f32.mrf.mxu0
      %v5626 = vadd.f32 %v5537, %v5625
      %v5627 = vpop.f32.mrf.mxu0
      %v5628 = vadd.f32 %v5539, %v5627
      %5629 = vdwg.mxu0
      %5630 = vmatpush.bf16.msra.mxu0 %v5278
      %5631 = vmatpush.bf16.msra.mxu0 %v5271
      %5632 = vmatpush.bf16.msra.mxu0 %v5264
      %5633 = vmatpush.bf16.msra.mxu0 %v5257
      %5634 = vmatpush.bf16.msra.mxu0 %v5250
      %5635 = vmatpush.bf16.msra.mxu0 %v5243
      %5636 = vmatpush.bf16.msra.mxu0 %v5236
      %5637 = vmatpush.bf16.msra.mxu0 %v5229
      %5638 = vmatmul.bf16.gmra.mxu0 %v4697
      %v5639 = vpop.f32.mrf.mxu0
      %v5640 = vadd.f32 %v4863, %v5639
      %v5641 = vpop.f32.mrf.mxu0
      %v5642 = vadd.f32 %v4863, %v5641
      %5643 = vmatmul.bf16.gmra.mxu0 %v4699
      %v5644 = vpop.f32.mrf.mxu0
      %v5645 = vadd.f32 %v4863, %v5644
      %v5646 = vpop.f32.mrf.mxu0
      %v5647 = vadd.f32 %v4863, %v5646
      %5648 = vmatmul.bf16.gmra.mxu0 %v4701
      %v5649 = vpop.f32.mrf.mxu0
      %v5650 = vadd.f32 %v4863, %v5649
      %v5651 = vpop.f32.mrf.mxu0
      %v5652 = vadd.f32 %v4863, %v5651
      %5653 = vmatmul.bf16.gmra.mxu0 %v4703
      %v5654 = vpop.f32.mrf.mxu0
      %v5655 = vadd.f32 %v4863, %v5654
      %v5656 = vpop.f32.mrf.mxu0
      %v5657 = vadd.f32 %v4863, %v5656
      %5658 = vmatmul.bf16.gmra.mxu0 %v4705
      %v5659 = vpop.f32.mrf.mxu0
      %v5660 = vadd.f32 %v4863, %v5659
      %v5661 = vpop.f32.mrf.mxu0
      %v5662 = vadd.f32 %v4863, %v5661
      %5663 = vmatmul.bf16.gmra.mxu0 %v4707
      %v5664 = vpop.f32.mrf.mxu0
      %v5665 = vadd.f32 %v4863, %v5664
      %v5666 = vpop.f32.mrf.mxu0
      %v5667 = vadd.f32 %v4863, %v5666
      %5668 = vmatmul.bf16.gmra.mxu0 %v4709
      %v5669 = vpop.f32.mrf.mxu0
      %v5670 = vadd.f32 %v4863, %v5669
      %v5671 = vpop.f32.mrf.mxu0
      %v5672 = vadd.f32 %v4863, %v5671
      %5673 = vmatmul.bf16.gmra.mxu0 %v4711
      %v5674 = vpop.f32.mrf.mxu0
      %v5675 = vadd.f32 %v4863, %v5674
      %v5676 = vpop.f32.mrf.mxu0
      %v5677 = vadd.f32 %v4863, %v5676
      %5678 = vmatmul.bf16.gmra.mxu0 %v4713
      %v5679 = vpop.f32.mrf.mxu0
      %v5680 = vadd.f32 %v4863, %v5679
      %v5681 = vpop.f32.mrf.mxu0
      %v5682 = vadd.f32 %v4863, %v5681
      %5683 = vmatmul.bf16.gmra.mxu0 %v4715
      %v5684 = vpop.f32.mrf.mxu0
      %v5685 = vadd.f32 %v4863, %v5684
      %v5686 = vpop.f32.mrf.mxu0
      %v5687 = vadd.f32 %v4863, %v5686
      %5688 = vmatmul.bf16.gmra.mxu0 %v4717
      %v5689 = vpop.f32.mrf.mxu0
      %v5690 = vadd.f32 %v4863, %v5689
      %v5691 = vpop.f32.mrf.mxu0
      %v5692 = vadd.f32 %v4863, %v5691
      %5693 = vmatmul.bf16.gmra.mxu0 %v4719
      %v5694 = vpop.f32.mrf.mxu0
      %v5695 = vadd.f32 %v4863, %v5694
      %v5696 = vpop.f32.mrf.mxu0
      %v5697 = vadd.f32 %v4863, %v5696
      %5698 = vmatmul.bf16.gmra.mxu0 %v4721
      %v5699 = vpop.f32.mrf.mxu0
      %v5700 = vadd.f32 %v4863, %v5699
      %v5701 = vpop.f32.mrf.mxu0
      %v5702 = vadd.f32 %v4863, %v5701
      %5703 = vmatmul.bf16.gmra.mxu0 %v4723
      %v5704 = vpop.f32.mrf.mxu0
      %v5705 = vadd.f32 %v4863, %v5704
      %v5706 = vpop.f32.mrf.mxu0
      %v5707 = vadd.f32 %v4863, %v5706
      %5708 = vmatmul.bf16.gmra.mxu0 %v4725
      %v5709 = vpop.f32.mrf.mxu0
      %v5710 = vadd.f32 %v4863, %v5709
      %v5711 = vpop.f32.mrf.mxu0
      %v5712 = vadd.f32 %v4863, %v5711
      %5713 = vmatmul.bf16.gmra.mxu0 %v4727
      %v5714 = vpop.f32.mrf.mxu0
      %v5715 = vadd.f32 %v4863, %v5714
      %v5716 = vpop.f32.mrf.mxu0
      %v5717 = vadd.f32 %v4863, %v5716
      %5718 = vdwg.mxu0
      %5719 = vmatpush.bf16.msra.mxu0 %v5334
      %5720 = vmatpush.bf16.msra.mxu0 %v5327
      %5721 = vmatpush.bf16.msra.mxu0 %v5320
      %5722 = vmatpush.bf16.msra.mxu0 %v5313
      %5723 = vmatpush.bf16.msra.mxu0 %v5306
      %5724 = vmatpush.bf16.msra.mxu0 %v5299
      %5725 = vmatpush.bf16.msra.mxu0 %v5292
      %5726 = vmatpush.bf16.msra.mxu0 %v5285
      %5727 = vmatmul.bf16.gmra.mxu0 %v4698
      %v5728 = vpop.f32.mrf.mxu0
      %v5729 = vadd.f32 %v5640, %v5728
      %v5730 = vpop.f32.mrf.mxu0
      %v5731 = vadd.f32 %v5642, %v5730
      %5732 = vmatmul.bf16.gmra.mxu0 %v4700
      %v5733 = vpop.f32.mrf.mxu0
      %v5734 = vadd.f32 %v5645, %v5733
      %v5735 = vpop.f32.mrf.mxu0
      %v5736 = vadd.f32 %v5647, %v5735
      %5737 = vmatmul.bf16.gmra.mxu0 %v4702
      %v5738 = vpop.f32.mrf.mxu0
      %v5739 = vadd.f32 %v5650, %v5738
      %v5740 = vpop.f32.mrf.mxu0
      %v5741 = vadd.f32 %v5652, %v5740
      %5742 = vmatmul.bf16.gmra.mxu0 %v4704
      %v5743 = vpop.f32.mrf.mxu0
      %v5744 = vadd.f32 %v5655, %v5743
      %v5745 = vpop.f32.mrf.mxu0
      %v5746 = vadd.f32 %v5657, %v5745
      %5747 = vmatmul.bf16.gmra.mxu0 %v4706
      %v5748 = vpop.f32.mrf.mxu0
      %v5749 = vadd.f32 %v5660, %v5748
      %v5750 = vpop.f32.mrf.mxu0
      %v5751 = vadd.f32 %v5662, %v5750
      %5752 = vmatmul.bf16.gmra.mxu0 %v4708
      %v5753 = vpop.f32.mrf.mxu0
      %v5754 = vadd.f32 %v5665, %v5753
      %v5755 = vpop.f32.mrf.mxu0
      %v5756 = vadd.f32 %v5667, %v5755
      %5757 = vmatmul.bf16.gmra.mxu0 %v4710
      %v5758 = vpop.f32.mrf.mxu0
      %v5759 = vadd.f32 %v5670, %v5758
      %v5760 = vpop.f32.mrf.mxu0
      %v5761 = vadd.f32 %v5672, %v5760
      %5762 = vmatmul.bf16.gmra.mxu0 %v4712
      %v5763 = vpop.f32.mrf.mxu0
      %v5764 = vadd.f32 %v5675, %v5763
      %v5765 = vpop.f32.mrf.mxu0
      %v5766 = vadd.f32 %v5677, %v5765
      %5767 = vmatmul.bf16.gmra.mxu0 %v4714
      %v5768 = vpop.f32.mrf.mxu0
      %v5769 = vadd.f32 %v5680, %v5768
      %v5770 = vpop.f32.mrf.mxu0
      %v5771 = vadd.f32 %v5682, %v5770
      %5772 = vmatmul.bf16.gmra.mxu0 %v4716
      %v5773 = vpop.f32.mrf.mxu0
      %v5774 = vadd.f32 %v5685, %v5773
      %v5775 = vpop.f32.mrf.mxu0
      %v5776 = vadd.f32 %v5687, %v5775
      %5777 = vmatmul.bf16.gmra.mxu0 %v4718
      %v5778 = vpop.f32.mrf.mxu0
      %v5779 = vadd.f32 %v5690, %v5778
      %v5780 = vpop.f32.mrf.mxu0
      %v5781 = vadd.f32 %v5692, %v5780
      %5782 = vmatmul.bf16.gmra.mxu0 %v4720
      %v5783 = vpop.f32.mrf.mxu0
      %v5784 = vadd.f32 %v5695, %v5783
      %v5785 = vpop.f32.mrf.mxu0
      %v5786 = vadd.f32 %v5697, %v5785
      %5787 = vmatmul.bf16.gmra.mxu0 %v4722
      %v5788 = vpop.f32.mrf.mxu0
      %v5789 = vadd.f32 %v5700, %v5788
      %v5790 = vpop.f32.mrf.mxu0
      %v5791 = vadd.f32 %v5702, %v5790
      %5792 = vmatmul.bf16.gmra.mxu0 %v4724
      %v5793 = vpop.f32.mrf.mxu0
      %v5794 = vadd.f32 %v5705, %v5793
      %v5795 = vpop.f32.mrf.mxu0
      %v5796 = vadd.f32 %v5707, %v5795
      %5797 = vmatmul.bf16.gmra.mxu0 %v4726
      %v5798 = vpop.f32.mrf.mxu0
      %v5799 = vadd.f32 %v5710, %v5798
      %v5800 = vpop.f32.mrf.mxu0
      %v5801 = vadd.f32 %v5712, %v5800
      %5802 = vmatmul.bf16.gmra.mxu0 %v4728
      %v5803 = vpop.f32.mrf.mxu0
      %v5804 = vadd.f32 %v5715, %v5803
      %v5805 = vpop.f32.mrf.mxu0
      %v5806 = vadd.f32 %v5717, %v5805
      %5807 = vdwg.mxu0
      %5808 = vmatpush.bf16.msra.mxu0 %v5279
      %5809 = vmatpush.bf16.msra.mxu0 %v5272
      %5810 = vmatpush.bf16.msra.mxu0 %v5265
      %5811 = vmatpush.bf16.msra.mxu0 %v5258
      %5812 = vmatpush.bf16.msra.mxu0 %v5251
      %5813 = vmatpush.bf16.msra.mxu0 %v5244
      %5814 = vmatpush.bf16.msra.mxu0 %v5237
      %5815 = vmatpush.bf16.msra.mxu0 %v5230
      %5816 = vmatmul.bf16.gmra.mxu0 %v4697
      %v5817 = vpop.f32.mrf.mxu0
      %v5818 = vadd.f32 %v4864, %v5817
      %v5819 = vpop.f32.mrf.mxu0
      %v5820 = vadd.f32 %v4864, %v5819
      %5821 = vmatmul.bf16.gmra.mxu0 %v4699
      %v5822 = vpop.f32.mrf.mxu0
      %v5823 = vadd.f32 %v4864, %v5822
      %v5824 = vpop.f32.mrf.mxu0
      %v5825 = vadd.f32 %v4864, %v5824
      %5826 = vmatmul.bf16.gmra.mxu0 %v4701
      %v5827 = vpop.f32.mrf.mxu0
      %v5828 = vadd.f32 %v4864, %v5827
      %v5829 = vpop.f32.mrf.mxu0
      %v5830 = vadd.f32 %v4864, %v5829
      %5831 = vmatmul.bf16.gmra.mxu0 %v4703
      %v5832 = vpop.f32.mrf.mxu0
      %v5833 = vadd.f32 %v4864, %v5832
      %v5834 = vpop.f32.mrf.mxu0
      %v5835 = vadd.f32 %v4864, %v5834
      %5836 = vmatmul.bf16.gmra.mxu0 %v4705
      %v5837 = vpop.f32.mrf.mxu0
      %v5838 = vadd.f32 %v4864, %v5837
      %v5839 = vpop.f32.mrf.mxu0
      %v5840 = vadd.f32 %v4864, %v5839
      %5841 = vmatmul.bf16.gmra.mxu0 %v4707
      %v5842 = vpop.f32.mrf.mxu0
      %v5843 = vadd.f32 %v4864, %v5842
      %v5844 = vpop.f32.mrf.mxu0
      %v5845 = vadd.f32 %v4864, %v5844
      %5846 = vmatmul.bf16.gmra.mxu0 %v4709
      %v5847 = vpop.f32.mrf.mxu0
      %v5848 = vadd.f32 %v4864, %v5847
      %v5849 = vpop.f32.mrf.mxu0
      %v5850 = vadd.f32 %v4864, %v5849
      %5851 = vmatmul.bf16.gmra.mxu0 %v4711
      %v5852 = vpop.f32.mrf.mxu0
      %v5853 = vadd.f32 %v4864, %v5852
      %v5854 = vpop.f32.mrf.mxu0
      %v5855 = vadd.f32 %v4864, %v5854
      %5856 = vmatmul.bf16.gmra.mxu0 %v4713
      %v5857 = vpop.f32.mrf.mxu0
      %v5858 = vadd.f32 %v4864, %v5857
      %v5859 = vpop.f32.mrf.mxu0
      %v5860 = vadd.f32 %v4864, %v5859
      %5861 = vmatmul.bf16.gmra.mxu0 %v4715
      %v5862 = vpop.f32.mrf.mxu0
      %v5863 = vadd.f32 %v4864, %v5862
      %v5864 = vpop.f32.mrf.mxu0
      %v5865 = vadd.f32 %v4864, %v5864
      %5866 = vmatmul.bf16.gmra.mxu0 %v4717
      %v5867 = vpop.f32.mrf.mxu0
      %v5868 = vadd.f32 %v4864, %v5867
      %v5869 = vpop.f32.mrf.mxu0
      %v5870 = vadd.f32 %v4864, %v5869
      %5871 = vmatmul.bf16.gmra.mxu0 %v4719
      %v5872 = vpop.f32.mrf.mxu0
      %v5873 = vadd.f32 %v4864, %v5872
      %v5874 = vpop.f32.mrf.mxu0
      %v5875 = vadd.f32 %v4864, %v5874
      %5876 = vmatmul.bf16.gmra.mxu0 %v4721
      %v5877 = vpop.f32.mrf.mxu0
      %v5878 = vadd.f32 %v4864, %v5877
      %v5879 = vpop.f32.mrf.mxu0
      %v5880 = vadd.f32 %v4864, %v5879
      %5881 = vmatmul.bf16.gmra.mxu0 %v4723
      %v5882 = vpop.f32.mrf.mxu0
      %v5883 = vadd.f32 %v4864, %v5882
      %v5884 = vpop.f32.mrf.mxu0
      %v5885 = vadd.f32 %v4864, %v5884
      %5886 = vmatmul.bf16.gmra.mxu0 %v4725
      %v5887 = vpop.f32.mrf.mxu0
      %v5888 = vadd.f32 %v4864, %v5887
      %v5889 = vpop.f32.mrf.mxu0
      %v5890 = vadd.f32 %v4864, %v5889
      %5891 = vmatmul.bf16.gmra.mxu0 %v4727
      %v5892 = vpop.f32.mrf.mxu0
      %v5893 = vadd.f32 %v4864, %v5892
      %v5894 = vpop.f32.mrf.mxu0
      %v5895 = vadd.f32 %v4864, %v5894
      %5896 = vdwg.mxu0
      %5897 = vmatpush.bf16.msra.mxu0 %v5335
      %5898 = vmatpush.bf16.msra.mxu0 %v5328
      %5899 = vmatpush.bf16.msra.mxu0 %v5321
      %5900 = vmatpush.bf16.msra.mxu0 %v5314
      %5901 = vmatpush.bf16.msra.mxu0 %v5307
      %5902 = vmatpush.bf16.msra.mxu0 %v5300
      %5903 = vmatpush.bf16.msra.mxu0 %v5293
      %5904 = vmatpush.bf16.msra.mxu0 %v5286
      %5905 = vmatmul.bf16.gmra.mxu0 %v4698
      %v5906 = vpop.f32.mrf.mxu0
      %v5907 = vadd.f32 %v5818, %v5906
      %v5908 = vpop.f32.mrf.mxu0
      %v5909 = vadd.f32 %v5820, %v5908
      %5910 = vmatmul.bf16.gmra.mxu0 %v4700
      %v5911 = vpop.f32.mrf.mxu0
      %v5912 = vadd.f32 %v5823, %v5911
      %v5913 = vpop.f32.mrf.mxu0
      %v5914 = vadd.f32 %v5825, %v5913
      %5915 = vmatmul.bf16.gmra.mxu0 %v4702
      %v5916 = vpop.f32.mrf.mxu0
      %v5917 = vadd.f32 %v5828, %v5916
      %v5918 = vpop.f32.mrf.mxu0
      %v5919 = vadd.f32 %v5830, %v5918
      %5920 = vmatmul.bf16.gmra.mxu0 %v4704
      %v5921 = vpop.f32.mrf.mxu0
      %v5922 = vadd.f32 %v5833, %v5921
      %v5923 = vpop.f32.mrf.mxu0
      %v5924 = vadd.f32 %v5835, %v5923
      %5925 = vmatmul.bf16.gmra.mxu0 %v4706
      %v5926 = vpop.f32.mrf.mxu0
      %v5927 = vadd.f32 %v5838, %v5926
      %v5928 = vpop.f32.mrf.mxu0
      %v5929 = vadd.f32 %v5840, %v5928
      %5930 = vmatmul.bf16.gmra.mxu0 %v4708
      %v5931 = vpop.f32.mrf.mxu0
      %v5932 = vadd.f32 %v5843, %v5931
      %v5933 = vpop.f32.mrf.mxu0
      %v5934 = vadd.f32 %v5845, %v5933
      %5935 = vmatmul.bf16.gmra.mxu0 %v4710
      %v5936 = vpop.f32.mrf.mxu0
      %v5937 = vadd.f32 %v5848, %v5936
      %v5938 = vpop.f32.mrf.mxu0
      %v5939 = vadd.f32 %v5850, %v5938
      %5940 = vmatmul.bf16.gmra.mxu0 %v4712
      %v5941 = vpop.f32.mrf.mxu0
      %v5942 = vadd.f32 %v5853, %v5941
      %v5943 = vpop.f32.mrf.mxu0
      %v5944 = vadd.f32 %v5855, %v5943
      %5945 = vmatmul.bf16.gmra.mxu0 %v4714
      %v5946 = vpop.f32.mrf.mxu0
      %v5947 = vadd.f32 %v5858, %v5946
      %v5948 = vpop.f32.mrf.mxu0
      %v5949 = vadd.f32 %v5860, %v5948
      %5950 = vmatmul.bf16.gmra.mxu0 %v4716
      %v5951 = vpop.f32.mrf.mxu0
      %v5952 = vadd.f32 %v5863, %v5951
      %v5953 = vpop.f32.mrf.mxu0
      %v5954 = vadd.f32 %v5865, %v5953
      %5955 = vmatmul.bf16.gmra.mxu0 %v4718
      %v5956 = vpop.f32.mrf.mxu0
      %v5957 = vadd.f32 %v5868, %v5956
      %v5958 = vpop.f32.mrf.mxu0
      %v5959 = vadd.f32 %v5870, %v5958
      %5960 = vmatmul.bf16.gmra.mxu0 %v4720
      %v5961 = vpop.f32.mrf.mxu0
      %v5962 = vadd.f32 %v5873, %v5961
      %v5963 = vpop.f32.mrf.mxu0
      %v5964 = vadd.f32 %v5875, %v5963
      %5965 = vmatmul.bf16.gmra.mxu0 %v4722
      %v5966 = vpop.f32.mrf.mxu0
      %v5967 = vadd.f32 %v5878, %v5966
      %v5968 = vpop.f32.mrf.mxu0
      %v5969 = vadd.f32 %v5880, %v5968
      %5970 = vmatmul.bf16.gmra.mxu0 %v4724
      %v5971 = vpop.f32.mrf.mxu0
      %v5972 = vadd.f32 %v5883, %v5971
      %v5973 = vpop.f32.mrf.mxu0
      %v5974 = vadd.f32 %v5885, %v5973
      %5975 = vmatmul.bf16.gmra.mxu0 %v4726
      %v5976 = vpop.f32.mrf.mxu0
      %v5977 = vadd.f32 %v5888, %v5976
      %v5978 = vpop.f32.mrf.mxu0
      %v5979 = vadd.f32 %v5890, %v5978
      %5980 = vmatmul.bf16.gmra.mxu0 %v4728
      %v5981 = vpop.f32.mrf.mxu0
      %v5982 = vadd.f32 %v5893, %v5981
      %v5983 = vpop.f32.mrf.mxu0
      %v5984 = vadd.f32 %v5895, %v5983
      %5985 = vdwg.mxu0
      %5986 = vmatpush.bf16.msra.mxu0 %v5280
      %5987 = vmatpush.bf16.msra.mxu0 %v5273
      %5988 = vmatpush.bf16.msra.mxu0 %v5266
      %5989 = vmatpush.bf16.msra.mxu0 %v5259
      %5990 = vmatpush.bf16.msra.mxu0 %v5252
      %5991 = vmatpush.bf16.msra.mxu0 %v5245
      %5992 = vmatpush.bf16.msra.mxu0 %v5238
      %5993 = vmatpush.bf16.msra.mxu0 %v5231
      %5994 = vmatmul.bf16.gmra.mxu0 %v4697
      %v5995 = vpop.f32.mrf.mxu0
      %v5996 = vadd.f32 %v4865, %v5995
      %v5997 = vpop.f32.mrf.mxu0
      %v5998 = vadd.f32 %v4865, %v5997
      %5999 = vmatmul.bf16.gmra.mxu0 %v4699
      %v6000 = vpop.f32.mrf.mxu0
      %v6001 = vadd.f32 %v4865, %v6000
      %v6002 = vpop.f32.mrf.mxu0
      %v6003 = vadd.f32 %v4865, %v6002
      %6004 = vmatmul.bf16.gmra.mxu0 %v4701
      %v6005 = vpop.f32.mrf.mxu0
      %v6006 = vadd.f32 %v4865, %v6005
      %v6007 = vpop.f32.mrf.mxu0
      %v6008 = vadd.f32 %v4865, %v6007
      %6009 = vmatmul.bf16.gmra.mxu0 %v4703
      %v6010 = vpop.f32.mrf.mxu0
      %v6011 = vadd.f32 %v4865, %v6010
      %v6012 = vpop.f32.mrf.mxu0
      %v6013 = vadd.f32 %v4865, %v6012
      %6014 = vmatmul.bf16.gmra.mxu0 %v4705
      %v6015 = vpop.f32.mrf.mxu0
      %v6016 = vadd.f32 %v4865, %v6015
      %v6017 = vpop.f32.mrf.mxu0
      %v6018 = vadd.f32 %v4865, %v6017
      %6019 = vmatmul.bf16.gmra.mxu0 %v4707
      %v6020 = vpop.f32.mrf.mxu0
      %v6021 = vadd.f32 %v4865, %v6020
      %v6022 = vpop.f32.mrf.mxu0
      %v6023 = vadd.f32 %v4865, %v6022
      %6024 = vmatmul.bf16.gmra.mxu0 %v4709
      %v6025 = vpop.f32.mrf.mxu0
      %v6026 = vadd.f32 %v4865, %v6025
      %v6027 = vpop.f32.mrf.mxu0
      %v6028 = vadd.f32 %v4865, %v6027
      %6029 = vmatmul.bf16.gmra.mxu0 %v4711
      %v6030 = vpop.f32.mrf.mxu0
      %v6031 = vadd.f32 %v4865, %v6030
      %v6032 = vpop.f32.mrf.mxu0
      %v6033 = vadd.f32 %v4865, %v6032
      %6034 = vmatmul.bf16.gmra.mxu0 %v4713
      %v6035 = vpop.f32.mrf.mxu0
      %v6036 = vadd.f32 %v4865, %v6035
      %v6037 = vpop.f32.mrf.mxu0
      %v6038 = vadd.f32 %v4865, %v6037
      %6039 = vmatmul.bf16.gmra.mxu0 %v4715
      %v6040 = vpop.f32.mrf.mxu0
      %v6041 = vadd.f32 %v4865, %v6040
      %v6042 = vpop.f32.mrf.mxu0
      %v6043 = vadd.f32 %v4865, %v6042
      %6044 = vmatmul.bf16.gmra.mxu0 %v4717
      %v6045 = vpop.f32.mrf.mxu0
      %v6046 = vadd.f32 %v4865, %v6045
      %v6047 = vpop.f32.mrf.mxu0
      %v6048 = vadd.f32 %v4865, %v6047
      %6049 = vmatmul.bf16.gmra.mxu0 %v4719
      %v6050 = vpop.f32.mrf.mxu0
      %v6051 = vadd.f32 %v4865, %v6050
      %v6052 = vpop.f32.mrf.mxu0
      %v6053 = vadd.f32 %v4865, %v6052
      %6054 = vmatmul.bf16.gmra.mxu0 %v4721
      %v6055 = vpop.f32.mrf.mxu0
      %v6056 = vadd.f32 %v4865, %v6055
      %v6057 = vpop.f32.mrf.mxu0
      %v6058 = vadd.f32 %v4865, %v6057
      %6059 = vmatmul.bf16.gmra.mxu0 %v4723
      %v6060 = vpop.f32.mrf.mxu0
      %v6061 = vadd.f32 %v4865, %v6060
      %v6062 = vpop.f32.mrf.mxu0
      %v6063 = vadd.f32 %v4865, %v6062
      %6064 = vmatmul.bf16.gmra.mxu0 %v4725
      %v6065 = vpop.f32.mrf.mxu0
      %v6066 = vadd.f32 %v4865, %v6065
      %v6067 = vpop.f32.mrf.mxu0
      %v6068 = vadd.f32 %v4865, %v6067
      %6069 = vmatmul.bf16.gmra.mxu0 %v4727
      %v6070 = vpop.f32.mrf.mxu0
      %v6071 = vadd.f32 %v4865, %v6070
      %v6072 = vpop.f32.mrf.mxu0
      %v6073 = vadd.f32 %v4865, %v6072
      %6074 = vdwg.mxu0
      %6075 = vmatpush.bf16.msra.mxu0 %v5336
      %6076 = vmatpush.bf16.msra.mxu0 %v5329
      %6077 = vmatpush.bf16.msra.mxu0 %v5322
      %6078 = vmatpush.bf16.msra.mxu0 %v5315
      %6079 = vmatpush.bf16.msra.mxu0 %v5308
      %6080 = vmatpush.bf16.msra.mxu0 %v5301
      %6081 = vmatpush.bf16.msra.mxu0 %v5294
      %6082 = vmatpush.bf16.msra.mxu0 %v5287
      %6083 = vmatmul.bf16.gmra.mxu0 %v4698
      %v6084 = vpop.f32.mrf.mxu0
      %v6085 = vadd.f32 %v5996, %v6084
      %v6086 = vpop.f32.mrf.mxu0
      %v6087 = vadd.f32 %v5998, %v6086
      %6088 = vmatmul.bf16.gmra.mxu0 %v4700
      %v6089 = vpop.f32.mrf.mxu0
      %v6090 = vadd.f32 %v6001, %v6089
      %v6091 = vpop.f32.mrf.mxu0
      %v6092 = vadd.f32 %v6003, %v6091
      %6093 = vmatmul.bf16.gmra.mxu0 %v4702
      %v6094 = vpop.f32.mrf.mxu0
      %v6095 = vadd.f32 %v6006, %v6094
      %v6096 = vpop.f32.mrf.mxu0
      %v6097 = vadd.f32 %v6008, %v6096
      %6098 = vmatmul.bf16.gmra.mxu0 %v4704
      %v6099 = vpop.f32.mrf.mxu0
      %v6100 = vadd.f32 %v6011, %v6099
      %v6101 = vpop.f32.mrf.mxu0
      %v6102 = vadd.f32 %v6013, %v6101
      %6103 = vmatmul.bf16.gmra.mxu0 %v4706
      %v6104 = vpop.f32.mrf.mxu0
      %v6105 = vadd.f32 %v6016, %v6104
      %v6106 = vpop.f32.mrf.mxu0
      %v6107 = vadd.f32 %v6018, %v6106
      %6108 = vmatmul.bf16.gmra.mxu0 %v4708
      %v6109 = vpop.f32.mrf.mxu0
      %v6110 = vadd.f32 %v6021, %v6109
      %v6111 = vpop.f32.mrf.mxu0
      %v6112 = vadd.f32 %v6023, %v6111
      %6113 = vmatmul.bf16.gmra.mxu0 %v4710
      %v6114 = vpop.f32.mrf.mxu0
      %v6115 = vadd.f32 %v6026, %v6114
      %v6116 = vpop.f32.mrf.mxu0
      %v6117 = vadd.f32 %v6028, %v6116
      %6118 = vmatmul.bf16.gmra.mxu0 %v4712
      %v6119 = vpop.f32.mrf.mxu0
      %v6120 = vadd.f32 %v6031, %v6119
      %v6121 = vpop.f32.mrf.mxu0
      %v6122 = vadd.f32 %v6033, %v6121
      %6123 = vmatmul.bf16.gmra.mxu0 %v4714
      %v6124 = vpop.f32.mrf.mxu0
      %v6125 = vadd.f32 %v6036, %v6124
      %v6126 = vpop.f32.mrf.mxu0
      %v6127 = vadd.f32 %v6038, %v6126
      %6128 = vmatmul.bf16.gmra.mxu0 %v4716
      %v6129 = vpop.f32.mrf.mxu0
      %v6130 = vadd.f32 %v6041, %v6129
      %v6131 = vpop.f32.mrf.mxu0
      %v6132 = vadd.f32 %v6043, %v6131
      %6133 = vmatmul.bf16.gmra.mxu0 %v4718
      %v6134 = vpop.f32.mrf.mxu0
      %v6135 = vadd.f32 %v6046, %v6134
      %v6136 = vpop.f32.mrf.mxu0
      %v6137 = vadd.f32 %v6048, %v6136
      %6138 = vmatmul.bf16.gmra.mxu0 %v4720
      %v6139 = vpop.f32.mrf.mxu0
      %v6140 = vadd.f32 %v6051, %v6139
      %v6141 = vpop.f32.mrf.mxu0
      %v6142 = vadd.f32 %v6053, %v6141
      %6143 = vmatmul.bf16.gmra.mxu0 %v4722
      %v6144 = vpop.f32.mrf.mxu0
      %v6145 = vadd.f32 %v6056, %v6144
      %v6146 = vpop.f32.mrf.mxu0
      %v6147 = vadd.f32 %v6058, %v6146
      %6148 = vmatmul.bf16.gmra.mxu0 %v4724
      %v6149 = vpop.f32.mrf.mxu0
      %v6150 = vadd.f32 %v6061, %v6149
      %v6151 = vpop.f32.mrf.mxu0
      %v6152 = vadd.f32 %v6063, %v6151
      %6153 = vmatmul.bf16.gmra.mxu0 %v4726
      %v6154 = vpop.f32.mrf.mxu0
      %v6155 = vadd.f32 %v6066, %v6154
      %v6156 = vpop.f32.mrf.mxu0
      %v6157 = vadd.f32 %v6068, %v6156
      %6158 = vmatmul.bf16.gmra.mxu0 %v4728
      %v6159 = vpop.f32.mrf.mxu0
      %v6160 = vadd.f32 %v6071, %v6159
      %v6161 = vpop.f32.mrf.mxu0
      %v6162 = vadd.f32 %v6073, %v6161
      %6163 = vdwg.mxu0
      %6164 = vmatpush.bf16.msra.mxu0 %v5281
      %6165 = vmatpush.bf16.msra.mxu0 %v5274
      %6166 = vmatpush.bf16.msra.mxu0 %v5267
      %6167 = vmatpush.bf16.msra.mxu0 %v5260
      %6168 = vmatpush.bf16.msra.mxu0 %v5253
      %6169 = vmatpush.bf16.msra.mxu0 %v5246
      %6170 = vmatpush.bf16.msra.mxu0 %v5239
      %6171 = vmatpush.bf16.msra.mxu0 %v5232
      %6172 = vmatmul.bf16.gmra.mxu0 %v4697
      %v6173 = vpop.f32.mrf.mxu0
      %v6174 = vadd.f32 %v4866, %v6173
      %v6175 = vpop.f32.mrf.mxu0
      %v6176 = vadd.f32 %v4866, %v6175
      %6177 = vmatmul.bf16.gmra.mxu0 %v4699
      %v6178 = vpop.f32.mrf.mxu0
      %v6179 = vadd.f32 %v4866, %v6178
      %v6180 = vpop.f32.mrf.mxu0
      %v6181 = vadd.f32 %v4866, %v6180
      %6182 = vmatmul.bf16.gmra.mxu0 %v4701
      %v6183 = vpop.f32.mrf.mxu0
      %v6184 = vadd.f32 %v4866, %v6183
      %v6185 = vpop.f32.mrf.mxu0
      %v6186 = vadd.f32 %v4866, %v6185
      %6187 = vmatmul.bf16.gmra.mxu0 %v4703
      %v6188 = vpop.f32.mrf.mxu0
      %v6189 = vadd.f32 %v4866, %v6188
      %v6190 = vpop.f32.mrf.mxu0
      %v6191 = vadd.f32 %v4866, %v6190
      %6192 = vmatmul.bf16.gmra.mxu0 %v4705
      %v6193 = vpop.f32.mrf.mxu0
      %v6194 = vadd.f32 %v4866, %v6193
      %v6195 = vpop.f32.mrf.mxu0
      %v6196 = vadd.f32 %v4866, %v6195
      %6197 = vmatmul.bf16.gmra.mxu0 %v4707
      %v6198 = vpop.f32.mrf.mxu0
      %v6199 = vadd.f32 %v4866, %v6198
      %v6200 = vpop.f32.mrf.mxu0
      %v6201 = vadd.f32 %v4866, %v6200
      %6202 = vmatmul.bf16.gmra.mxu0 %v4709
      %v6203 = vpop.f32.mrf.mxu0
      %v6204 = vadd.f32 %v4866, %v6203
      %v6205 = vpop.f32.mrf.mxu0
      %v6206 = vadd.f32 %v4866, %v6205
      %6207 = vmatmul.bf16.gmra.mxu0 %v4711
      %v6208 = vpop.f32.mrf.mxu0
      %v6209 = vadd.f32 %v4866, %v6208
      %v6210 = vpop.f32.mrf.mxu0
      %v6211 = vadd.f32 %v4866, %v6210
      %6212 = vmatmul.bf16.gmra.mxu0 %v4713
      %v6213 = vpop.f32.mrf.mxu0
      %v6214 = vadd.f32 %v4866, %v6213
      %v6215 = vpop.f32.mrf.mxu0
      %v6216 = vadd.f32 %v4866, %v6215
      %6217 = vmatmul.bf16.gmra.mxu0 %v4715
      %v6218 = vpop.f32.mrf.mxu0
      %v6219 = vadd.f32 %v4866, %v6218
      %v6220 = vpop.f32.mrf.mxu0
      %v6221 = vadd.f32 %v4866, %v6220
      %6222 = vmatmul.bf16.gmra.mxu0 %v4717
      %v6223 = vpop.f32.mrf.mxu0
      %v6224 = vadd.f32 %v4866, %v6223
      %v6225 = vpop.f32.mrf.mxu0
      %v6226 = vadd.f32 %v4866, %v6225
      %6227 = vmatmul.bf16.gmra.mxu0 %v4719
      %v6228 = vpop.f32.mrf.mxu0
      %v6229 = vadd.f32 %v4866, %v6228
      %v6230 = vpop.f32.mrf.mxu0
      %v6231 = vadd.f32 %v4866, %v6230
      %6232 = vmatmul.bf16.gmra.mxu0 %v4721
      %v6233 = vpop.f32.mrf.mxu0
      %v6234 = vadd.f32 %v4866, %v6233
      %v6235 = vpop.f32.mrf.mxu0
      %v6236 = vadd.f32 %v4866, %v6235
      %6237 = vmatmul.bf16.gmra.mxu0 %v4723
      %v6238 = vpop.f32.mrf.mxu0
      %v6239 = vadd.f32 %v4866, %v6238
      %v6240 = vpop.f32.mrf.mxu0
      %v6241 = vadd.f32 %v4866, %v6240
      %6242 = vmatmul.bf16.gmra.mxu0 %v4725
      %v6243 = vpop.f32.mrf.mxu0
      %v6244 = vadd.f32 %v4866, %v6243
      %v6245 = vpop.f32.mrf.mxu0
      %v6246 = vadd.f32 %v4866, %v6245
      %6247 = vmatmul.bf16.gmra.mxu0 %v4727
      %v6248 = vpop.f32.mrf.mxu0
      %v6249 = vadd.f32 %v4866, %v6248
      %v6250 = vpop.f32.mrf.mxu0
      %v6251 = vadd.f32 %v4866, %v6250
      %6252 = vdwg.mxu0
      %6253 = vmatpush.bf16.msra.mxu0 %v5337
      %6254 = vmatpush.bf16.msra.mxu0 %v5330
      %6255 = vmatpush.bf16.msra.mxu0 %v5323
      %6256 = vmatpush.bf16.msra.mxu0 %v5316
      %6257 = vmatpush.bf16.msra.mxu0 %v5309
      %6258 = vmatpush.bf16.msra.mxu0 %v5302
      %6259 = vmatpush.bf16.msra.mxu0 %v5295
      %6260 = vmatpush.bf16.msra.mxu0 %v5288
      %6261 = vmatmul.bf16.gmra.mxu0 %v4698
      %v6262 = vpop.f32.mrf.mxu0
      %v6263 = vadd.f32 %v6174, %v6262
      %v6264 = vpop.f32.mrf.mxu0
      %v6265 = vadd.f32 %v6176, %v6264
      %6266 = vmatmul.bf16.gmra.mxu0 %v4700
      %v6267 = vpop.f32.mrf.mxu0
      %v6268 = vadd.f32 %v6179, %v6267
      %v6269 = vpop.f32.mrf.mxu0
      %v6270 = vadd.f32 %v6181, %v6269
      %6271 = vmatmul.bf16.gmra.mxu0 %v4702
      %v6272 = vpop.f32.mrf.mxu0
      %v6273 = vadd.f32 %v6184, %v6272
      %v6274 = vpop.f32.mrf.mxu0
      %v6275 = vadd.f32 %v6186, %v6274
      %6276 = vmatmul.bf16.gmra.mxu0 %v4704
      %v6277 = vpop.f32.mrf.mxu0
      %v6278 = vadd.f32 %v6189, %v6277
      %v6279 = vpop.f32.mrf.mxu0
      %v6280 = vadd.f32 %v6191, %v6279
      %6281 = vmatmul.bf16.gmra.mxu0 %v4706
      %v6282 = vpop.f32.mrf.mxu0
      %v6283 = vadd.f32 %v6194, %v6282
      %v6284 = vpop.f32.mrf.mxu0
      %v6285 = vadd.f32 %v6196, %v6284
      %6286 = vmatmul.bf16.gmra.mxu0 %v4708
      %v6287 = vpop.f32.mrf.mxu0
      %v6288 = vadd.f32 %v6199, %v6287
      %v6289 = vpop.f32.mrf.mxu0
      %v6290 = vadd.f32 %v6201, %v6289
      %6291 = vmatmul.bf16.gmra.mxu0 %v4710
      %v6292 = vpop.f32.mrf.mxu0
      %v6293 = vadd.f32 %v6204, %v6292
      %v6294 = vpop.f32.mrf.mxu0
      %v6295 = vadd.f32 %v6206, %v6294
      %6296 = vmatmul.bf16.gmra.mxu0 %v4712
      %v6297 = vpop.f32.mrf.mxu0
      %v6298 = vadd.f32 %v6209, %v6297
      %v6299 = vpop.f32.mrf.mxu0
      %v6300 = vadd.f32 %v6211, %v6299
      %6301 = vmatmul.bf16.gmra.mxu0 %v4714
      %v6302 = vpop.f32.mrf.mxu0
      %v6303 = vadd.f32 %v6214, %v6302
      %v6304 = vpop.f32.mrf.mxu0
      %v6305 = vadd.f32 %v6216, %v6304
      %6306 = vmatmul.bf16.gmra.mxu0 %v4716
      %v6307 = vpop.f32.mrf.mxu0
      %v6308 = vadd.f32 %v6219, %v6307
      %v6309 = vpop.f32.mrf.mxu0
      %v6310 = vadd.f32 %v6221, %v6309
      %6311 = vmatmul.bf16.gmra.mxu0 %v4718
      %v6312 = vpop.f32.mrf.mxu0
      %v6313 = vadd.f32 %v6224, %v6312
      %v6314 = vpop.f32.mrf.mxu0
      %v6315 = vadd.f32 %v6226, %v6314
      %6316 = vmatmul.bf16.gmra.mxu0 %v4720
      %v6317 = vpop.f32.mrf.mxu0
      %v6318 = vadd.f32 %v6229, %v6317
      %v6319 = vpop.f32.mrf.mxu0
      %v6320 = vadd.f32 %v6231, %v6319
      %6321 = vmatmul.bf16.gmra.mxu0 %v4722
      %v6322 = vpop.f32.mrf.mxu0
      %v6323 = vadd.f32 %v6234, %v6322
      %v6324 = vpop.f32.mrf.mxu0
      %v6325 = vadd.f32 %v6236, %v6324
      %6326 = vmatmul.bf16.gmra.mxu0 %v4724
      %v6327 = vpop.f32.mrf.mxu0
      %v6328 = vadd.f32 %v6239, %v6327
      %v6329 = vpop.f32.mrf.mxu0
      %v6330 = vadd.f32 %v6241, %v6329
      %6331 = vmatmul.bf16.gmra.mxu0 %v4726
      %v6332 = vpop.f32.mrf.mxu0
      %v6333 = vadd.f32 %v6244, %v6332
      %v6334 = vpop.f32.mrf.mxu0
      %v6335 = vadd.f32 %v6246, %v6334
      %6336 = vmatmul.bf16.gmra.mxu0 %v4728
      %v6337 = vpop.f32.mrf.mxu0
      %v6338 = vadd.f32 %v6249, %v6337
      %v6339 = vpop.f32.mrf.mxu0
      %v6340 = vadd.f32 %v6251, %v6339
      %6341 = vdwg.mxu0
      %6342 = vmatpush.bf16.msra.mxu0 %v5282
      %6343 = vmatpush.bf16.msra.mxu0 %v5275
      %6344 = vmatpush.bf16.msra.mxu0 %v5268
      %6345 = vmatpush.bf16.msra.mxu0 %v5261
      %6346 = vmatpush.bf16.msra.mxu0 %v5254
      %6347 = vmatpush.bf16.msra.mxu0 %v5247
      %6348 = vmatpush.bf16.msra.mxu0 %v5240
      %6349 = vmatpush.bf16.msra.mxu0 %v5233
      %6350 = vmatmul.bf16.gmra.mxu0 %v4697
      %v6351 = vpop.f32.mrf.mxu0
      %v6352 = vadd.f32 %v4867, %v6351
      %v6353 = vpop.f32.mrf.mxu0
      %v6354 = vadd.f32 %v4867, %v6353
      %6355 = vmatmul.bf16.gmra.mxu0 %v4699
      %v6356 = vpop.f32.mrf.mxu0
      %v6357 = vadd.f32 %v4867, %v6356
      %v6358 = vpop.f32.mrf.mxu0
      %v6359 = vadd.f32 %v4867, %v6358
      %6360 = vmatmul.bf16.gmra.mxu0 %v4701
      %v6361 = vpop.f32.mrf.mxu0
      %v6362 = vadd.f32 %v4867, %v6361
      %v6363 = vpop.f32.mrf.mxu0
      %v6364 = vadd.f32 %v4867, %v6363
      %6365 = vmatmul.bf16.gmra.mxu0 %v4703
      %v6366 = vpop.f32.mrf.mxu0
      %v6367 = vadd.f32 %v4867, %v6366
      %v6368 = vpop.f32.mrf.mxu0
      %v6369 = vadd.f32 %v4867, %v6368
      %6370 = vmatmul.bf16.gmra.mxu0 %v4705
      %v6371 = vpop.f32.mrf.mxu0
      %v6372 = vadd.f32 %v4867, %v6371
      %v6373 = vpop.f32.mrf.mxu0
      %v6374 = vadd.f32 %v4867, %v6373
      %6375 = vmatmul.bf16.gmra.mxu0 %v4707
      %v6376 = vpop.f32.mrf.mxu0
      %v6377 = vadd.f32 %v4867, %v6376
      %v6378 = vpop.f32.mrf.mxu0
      %v6379 = vadd.f32 %v4867, %v6378
      %6380 = vmatmul.bf16.gmra.mxu0 %v4709
      %v6381 = vpop.f32.mrf.mxu0
      %v6382 = vadd.f32 %v4867, %v6381
      %v6383 = vpop.f32.mrf.mxu0
      %v6384 = vadd.f32 %v4867, %v6383
      %6385 = vmatmul.bf16.gmra.mxu0 %v4711
      %v6386 = vpop.f32.mrf.mxu0
      %v6387 = vadd.f32 %v4867, %v6386
      %v6388 = vpop.f32.mrf.mxu0
      %v6389 = vadd.f32 %v4867, %v6388
      %6390 = vmatmul.bf16.gmra.mxu0 %v4713
      %v6391 = vpop.f32.mrf.mxu0
      %v6392 = vadd.f32 %v4867, %v6391
      %v6393 = vpop.f32.mrf.mxu0
      %v6394 = vadd.f32 %v4867, %v6393
      %6395 = vmatmul.bf16.gmra.mxu0 %v4715
      %v6396 = vpop.f32.mrf.mxu0
      %v6397 = vadd.f32 %v4867, %v6396
      %v6398 = vpop.f32.mrf.mxu0
      %v6399 = vadd.f32 %v4867, %v6398
      %6400 = vmatmul.bf16.gmra.mxu0 %v4717
      %v6401 = vpop.f32.mrf.mxu0
      %v6402 = vadd.f32 %v4867, %v6401
      %v6403 = vpop.f32.mrf.mxu0
      %v6404 = vadd.f32 %v4867, %v6403
      %6405 = vmatmul.bf16.gmra.mxu0 %v4719
      %v6406 = vpop.f32.mrf.mxu0
      %v6407 = vadd.f32 %v4867, %v6406
      %v6408 = vpop.f32.mrf.mxu0
      %v6409 = vadd.f32 %v4867, %v6408
      %6410 = vmatmul.bf16.gmra.mxu0 %v4721
      %v6411 = vpop.f32.mrf.mxu0
      %v6412 = vadd.f32 %v4867, %v6411
      %v6413 = vpop.f32.mrf.mxu0
      %v6414 = vadd.f32 %v4867, %v6413
      %6415 = vmatmul.bf16.gmra.mxu0 %v4723
      %v6416 = vpop.f32.mrf.mxu0
      %v6417 = vadd.f32 %v4867, %v6416
      %v6418 = vpop.f32.mrf.mxu0
      %v6419 = vadd.f32 %v4867, %v6418
      %6420 = vmatmul.bf16.gmra.mxu0 %v4725
      %v6421 = vpop.f32.mrf.mxu0
      %v6422 = vadd.f32 %v4867, %v6421
      %v6423 = vpop.f32.mrf.mxu0
      %v6424 = vadd.f32 %v4867, %v6423
      %6425 = vmatmul.bf16.gmra.mxu0 %v4727
      %v6426 = vpop.f32.mrf.mxu0
      %v6427 = vadd.f32 %v4867, %v6426
      %v6428 = vpop.f32.mrf.mxu0
      %v6429 = vadd.f32 %v4867, %v6428
      %6430 = vdwg.mxu0
      %6431 = vmatpush.bf16.msra.mxu0 %v5338
      %6432 = vmatpush.bf16.msra.mxu0 %v5331
      %6433 = vmatpush.bf16.msra.mxu0 %v5324
      %6434 = vmatpush.bf16.msra.mxu0 %v5317
      %6435 = vmatpush.bf16.msra.mxu0 %v5310
      %6436 = vmatpush.bf16.msra.mxu0 %v5303
      %6437 = vmatpush.bf16.msra.mxu0 %v5296
      %6438 = vmatpush.bf16.msra.mxu0 %v5289
      %6439 = vmatmul.bf16.gmra.mxu0 %v4698
      %v6440 = vpop.f32.mrf.mxu0
      %v6441 = vadd.f32 %v6352, %v6440
      %v6442 = vpop.f32.mrf.mxu0
      %v6443 = vadd.f32 %v6354, %v6442
      %6444 = vmatmul.bf16.gmra.mxu0 %v4700
      %v6445 = vpop.f32.mrf.mxu0
      %v6446 = vadd.f32 %v6357, %v6445
      %v6447 = vpop.f32.mrf.mxu0
      %v6448 = vadd.f32 %v6359, %v6447
      %6449 = vmatmul.bf16.gmra.mxu0 %v4702
      %v6450 = vpop.f32.mrf.mxu0
      %v6451 = vadd.f32 %v6362, %v6450
      %v6452 = vpop.f32.mrf.mxu0
      %v6453 = vadd.f32 %v6364, %v6452
      %6454 = vmatmul.bf16.gmra.mxu0 %v4704
      %v6455 = vpop.f32.mrf.mxu0
      %v6456 = vadd.f32 %v6367, %v6455
      %v6457 = vpop.f32.mrf.mxu0
      %v6458 = vadd.f32 %v6369, %v6457
      %6459 = vmatmul.bf16.gmra.mxu0 %v4706
      %v6460 = vpop.f32.mrf.mxu0
      %v6461 = vadd.f32 %v6372, %v6460
      %v6462 = vpop.f32.mrf.mxu0
      %v6463 = vadd.f32 %v6374, %v6462
      %6464 = vmatmul.bf16.gmra.mxu0 %v4708
      %v6465 = vpop.f32.mrf.mxu0
      %v6466 = vadd.f32 %v6377, %v6465
      %v6467 = vpop.f32.mrf.mxu0
      %v6468 = vadd.f32 %v6379, %v6467
      %6469 = vmatmul.bf16.gmra.mxu0 %v4710
      %v6470 = vpop.f32.mrf.mxu0
      %v6471 = vadd.f32 %v6382, %v6470
      %v6472 = vpop.f32.mrf.mxu0
      %v6473 = vadd.f32 %v6384, %v6472
      %6474 = vmatmul.bf16.gmra.mxu0 %v4712
      %v6475 = vpop.f32.mrf.mxu0
      %v6476 = vadd.f32 %v6387, %v6475
      %v6477 = vpop.f32.mrf.mxu0
      %v6478 = vadd.f32 %v6389, %v6477
      %6479 = vmatmul.bf16.gmra.mxu0 %v4714
      %v6480 = vpop.f32.mrf.mxu0
      %v6481 = vadd.f32 %v6392, %v6480
      %v6482 = vpop.f32.mrf.mxu0
      %v6483 = vadd.f32 %v6394, %v6482
      %6484 = vmatmul.bf16.gmra.mxu0 %v4716
      %v6485 = vpop.f32.mrf.mxu0
      %v6486 = vadd.f32 %v6397, %v6485
      %v6487 = vpop.f32.mrf.mxu0
      %v6488 = vadd.f32 %v6399, %v6487
      %6489 = vmatmul.bf16.gmra.mxu0 %v4718
      %v6490 = vpop.f32.mrf.mxu0
      %v6491 = vadd.f32 %v6402, %v6490
      %v6492 = vpop.f32.mrf.mxu0
      %v6493 = vadd.f32 %v6404, %v6492
      %6494 = vmatmul.bf16.gmra.mxu0 %v4720
      %v6495 = vpop.f32.mrf.mxu0
      %v6496 = vadd.f32 %v6407, %v6495
      %v6497 = vpop.f32.mrf.mxu0
      %v6498 = vadd.f32 %v6409, %v6497
      %6499 = vmatmul.bf16.gmra.mxu0 %v4722
      %v6500 = vpop.f32.mrf.mxu0
      %v6501 = vadd.f32 %v6412, %v6500
      %v6502 = vpop.f32.mrf.mxu0
      %v6503 = vadd.f32 %v6414, %v6502
      %6504 = vmatmul.bf16.gmra.mxu0 %v4724
      %v6505 = vpop.f32.mrf.mxu0
      %v6506 = vadd.f32 %v6417, %v6505
      %v6507 = vpop.f32.mrf.mxu0
      %v6508 = vadd.f32 %v6419, %v6507
      %6509 = vmatmul.bf16.gmra.mxu0 %v4726
      %v6510 = vpop.f32.mrf.mxu0
      %v6511 = vadd.f32 %v6422, %v6510
      %v6512 = vpop.f32.mrf.mxu0
      %v6513 = vadd.f32 %v6424, %v6512
      %6514 = vmatmul.bf16.gmra.mxu0 %v4728
      %v6515 = vpop.f32.mrf.mxu0
      %v6516 = vadd.f32 %v6427, %v6515
      %v6517 = vpop.f32.mrf.mxu0
      %v6518 = vadd.f32 %v6429, %v6517
      %6519 = vdwg.mxu0
      %6520 = vmatpush.bf16.msra.mxu0 %v5283
      %6521 = vmatpush.bf16.msra.mxu0 %v5276
      %6522 = vmatpush.bf16.msra.mxu0 %v5269
      %6523 = vmatpush.bf16.msra.mxu0 %v5262
      %6524 = vmatpush.bf16.msra.mxu0 %v5255
      %6525 = vmatpush.bf16.msra.mxu0 %v5248
      %6526 = vmatpush.bf16.msra.mxu0 %v5241
      %6527 = vmatpush.bf16.msra.mxu0 %v5234
      %6528 = vmatmul.bf16.gmra.mxu0 %v4697
      %v6529 = vpop.f32.mrf.mxu0
      %v6530 = vadd.f32 %v4868, %v6529
      %v6531 = vpop.f32.mrf.mxu0
      %v6532 = vadd.f32 %v4868, %v6531
      %6533 = vmatmul.bf16.gmra.mxu0 %v4699
      %v6534 = vpop.f32.mrf.mxu0
      %v6535 = vadd.f32 %v4868, %v6534
      %v6536 = vpop.f32.mrf.mxu0
      %v6537 = vadd.f32 %v4868, %v6536
      %6538 = vmatmul.bf16.gmra.mxu0 %v4701
      %v6539 = vpop.f32.mrf.mxu0
      %v6540 = vadd.f32 %v4868, %v6539
      %v6541 = vpop.f32.mrf.mxu0
      %v6542 = vadd.f32 %v4868, %v6541
      %6543 = vmatmul.bf16.gmra.mxu0 %v4703
      %v6544 = vpop.f32.mrf.mxu0
      %v6545 = vadd.f32 %v4868, %v6544
      %v6546 = vpop.f32.mrf.mxu0
      %v6547 = vadd.f32 %v4868, %v6546
      %6548 = vmatmul.bf16.gmra.mxu0 %v4705
      %v6549 = vpop.f32.mrf.mxu0
      %v6550 = vadd.f32 %v4868, %v6549
      %v6551 = vpop.f32.mrf.mxu0
      %v6552 = vadd.f32 %v4868, %v6551
      %6553 = vmatmul.bf16.gmra.mxu0 %v4707
      %v6554 = vpop.f32.mrf.mxu0
      %v6555 = vadd.f32 %v4868, %v6554
      %v6556 = vpop.f32.mrf.mxu0
      %v6557 = vadd.f32 %v4868, %v6556
      %6558 = vmatmul.bf16.gmra.mxu0 %v4709
      %v6559 = vpop.f32.mrf.mxu0
      %v6560 = vadd.f32 %v4868, %v6559
      %v6561 = vpop.f32.mrf.mxu0
      %v6562 = vadd.f32 %v4868, %v6561
      %6563 = vmatmul.bf16.gmra.mxu0 %v4711
      %v6564 = vpop.f32.mrf.mxu0
      %v6565 = vadd.f32 %v4868, %v6564
      %v6566 = vpop.f32.mrf.mxu0
      %v6567 = vadd.f32 %v4868, %v6566
      %6568 = vmatmul.bf16.gmra.mxu0 %v4713
      %v6569 = vpop.f32.mrf.mxu0
      %v6570 = vadd.f32 %v4868, %v6569
      %v6571 = vpop.f32.mrf.mxu0
      %v6572 = vadd.f32 %v4868, %v6571
      %6573 = vmatmul.bf16.gmra.mxu0 %v4715
      %v6574 = vpop.f32.mrf.mxu0
      %v6575 = vadd.f32 %v4868, %v6574
      %v6576 = vpop.f32.mrf.mxu0
      %v6577 = vadd.f32 %v4868, %v6576
      %6578 = vmatmul.bf16.gmra.mxu0 %v4717
      %v6579 = vpop.f32.mrf.mxu0
      %v6580 = vadd.f32 %v4868, %v6579
      %v6581 = vpop.f32.mrf.mxu0
      %v6582 = vadd.f32 %v4868, %v6581
      %6583 = vmatmul.bf16.gmra.mxu0 %v4719
      %v6584 = vpop.f32.mrf.mxu0
      %v6585 = vadd.f32 %v4868, %v6584
      %v6586 = vpop.f32.mrf.mxu0
      %v6587 = vadd.f32 %v4868, %v6586
      %6588 = vmatmul.bf16.gmra.mxu0 %v4721
      %v6589 = vpop.f32.mrf.mxu0
      %v6590 = vadd.f32 %v4868, %v6589
      %v6591 = vpop.f32.mrf.mxu0
      %v6592 = vadd.f32 %v4868, %v6591
      %6593 = vmatmul.bf16.gmra.mxu0 %v4723
      %v6594 = vpop.f32.mrf.mxu0
      %v6595 = vadd.f32 %v4868, %v6594
      %v6596 = vpop.f32.mrf.mxu0
      %v6597 = vadd.f32 %v4868, %v6596
      %6598 = vmatmul.bf16.gmra.mxu0 %v4725
      %v6599 = vpop.f32.mrf.mxu0
      %v6600 = vadd.f32 %v4868, %v6599
      %v6601 = vpop.f32.mrf.mxu0
      %v6602 = vadd.f32 %v4868, %v6601
      %6603 = vmatmul.bf16.gmra.mxu0 %v4727
      %v6604 = vpop.f32.mrf.mxu0
      %v6605 = vadd.f32 %v4868, %v6604
      %v6606 = vpop.f32.mrf.mxu0
      %v6607 = vadd.f32 %v4868, %v6606
      %6608 = vdwg.mxu0
      %6609 = vmatpush.bf16.msra.mxu0 %v5339
      %6610 = vmatpush.bf16.msra.mxu0 %v5332
      %6611 = vmatpush.bf16.msra.mxu0 %v5325
      %6612 = vmatpush.bf16.msra.mxu0 %v5318
      %6613 = vmatpush.bf16.msra.mxu0 %v5311
      %6614 = vmatpush.bf16.msra.mxu0 %v5304
      %6615 = vmatpush.bf16.msra.mxu0 %v5297
      %6616 = vmatpush.bf16.msra.mxu0 %v5290
      %6617 = vmatmul.bf16.gmra.mxu0 %v4698
      %v6618 = vpop.f32.mrf.mxu0
      %v6619 = vadd.f32 %v6530, %v6618
      %v6620 = vpop.f32.mrf.mxu0
      %v6621 = vadd.f32 %v6532, %v6620
      %6622 = vmatmul.bf16.gmra.mxu0 %v4700
      %v6623 = vpop.f32.mrf.mxu0
      %v6624 = vadd.f32 %v6535, %v6623
      %v6625 = vpop.f32.mrf.mxu0
      %v6626 = vadd.f32 %v6537, %v6625
      %6627 = vmatmul.bf16.gmra.mxu0 %v4702
      %v6628 = vpop.f32.mrf.mxu0
      %v6629 = vadd.f32 %v6540, %v6628
      %v6630 = vpop.f32.mrf.mxu0
      %v6631 = vadd.f32 %v6542, %v6630
      %6632 = vmatmul.bf16.gmra.mxu0 %v4704
      %v6633 = vpop.f32.mrf.mxu0
      %v6634 = vadd.f32 %v6545, %v6633
      %v6635 = vpop.f32.mrf.mxu0
      %v6636 = vadd.f32 %v6547, %v6635
      %6637 = vmatmul.bf16.gmra.mxu0 %v4706
      %v6638 = vpop.f32.mrf.mxu0
      %v6639 = vadd.f32 %v6550, %v6638
      %v6640 = vpop.f32.mrf.mxu0
      %v6641 = vadd.f32 %v6552, %v6640
      %6642 = vmatmul.bf16.gmra.mxu0 %v4708
      %v6643 = vpop.f32.mrf.mxu0
      %v6644 = vadd.f32 %v6555, %v6643
      %v6645 = vpop.f32.mrf.mxu0
      %v6646 = vadd.f32 %v6557, %v6645
      %6647 = vmatmul.bf16.gmra.mxu0 %v4710
      %v6648 = vpop.f32.mrf.mxu0
      %v6649 = vadd.f32 %v6560, %v6648
      %v6650 = vpop.f32.mrf.mxu0
      %v6651 = vadd.f32 %v6562, %v6650
      %6652 = vmatmul.bf16.gmra.mxu0 %v4712
      %v6653 = vpop.f32.mrf.mxu0
      %v6654 = vadd.f32 %v6565, %v6653
      %v6655 = vpop.f32.mrf.mxu0
      %v6656 = vadd.f32 %v6567, %v6655
      %6657 = vmatmul.bf16.gmra.mxu0 %v4714
      %v6658 = vpop.f32.mrf.mxu0
      %v6659 = vadd.f32 %v6570, %v6658
      %v6660 = vpop.f32.mrf.mxu0
      %v6661 = vadd.f32 %v6572, %v6660
      %6662 = vmatmul.bf16.gmra.mxu0 %v4716
      %v6663 = vpop.f32.mrf.mxu0
      %v6664 = vadd.f32 %v6575, %v6663
      %v6665 = vpop.f32.mrf.mxu0
      %v6666 = vadd.f32 %v6577, %v6665
      %6667 = vmatmul.bf16.gmra.mxu0 %v4718
      %v6668 = vpop.f32.mrf.mxu0
      %v6669 = vadd.f32 %v6580, %v6668
      %v6670 = vpop.f32.mrf.mxu0
      %v6671 = vadd.f32 %v6582, %v6670
      %6672 = vmatmul.bf16.gmra.mxu0 %v4720
      %v6673 = vpop.f32.mrf.mxu0
      %v6674 = vadd.f32 %v6585, %v6673
      %v6675 = vpop.f32.mrf.mxu0
      %v6676 = vadd.f32 %v6587, %v6675
      %6677 = vmatmul.bf16.gmra.mxu0 %v4722
      %v6678 = vpop.f32.mrf.mxu0
      %v6679 = vadd.f32 %v6590, %v6678
      %v6680 = vpop.f32.mrf.mxu0
      %v6681 = vadd.f32 %v6592, %v6680
      %6682 = vmatmul.bf16.gmra.mxu0 %v4724
      %v6683 = vpop.f32.mrf.mxu0
      %v6684 = vadd.f32 %v6595, %v6683
      %v6685 = vpop.f32.mrf.mxu0
      %v6686 = vadd.f32 %v6597, %v6685
      %6687 = vmatmul.bf16.gmra.mxu0 %v4726
      %v6688 = vpop.f32.mrf.mxu0
      %v6689 = vadd.f32 %v6600, %v6688
      %v6690 = vpop.f32.mrf.mxu0
      %v6691 = vadd.f32 %v6602, %v6690
      %6692 = vmatmul.bf16.gmra.mxu0 %v4728
      %v6693 = vpop.f32.mrf.mxu0
      %v6694 = vadd.f32 %v6605, %v6693
      %v6695 = vpop.f32.mrf.mxu0
      %v6696 = vadd.f32 %v6607, %v6695
      %6697 = vdwg.mxu0
      %v6698 = vxor.u32 %v5551, 2147483648
      %v6699 = vxor.u32 %v5729, 2147483648
      %v6700 = vxor.u32 %v5907, 2147483648
      %v6701 = vxor.u32 %v6085, 2147483648
      %v6702 = vxor.u32 %v6263, 2147483648
      %v6703 = vxor.u32 %v6441, 2147483648
      %v6704 = vxor.u32 %v6619, 2147483648
      %v6705 = vxor.u32 %v5553, 2147483648
      %v6706 = vxor.u32 %v5731, 2147483648
      %v6707 = vxor.u32 %v5909, 2147483648
      %v6708 = vxor.u32 %v6087, 2147483648
      %v6709 = vxor.u32 %v6265, 2147483648
      %v6710 = vxor.u32 %v6443, 2147483648
      %v6711 = vxor.u32 %v6621, 2147483648
      %v6712 = vxor.u32 %v5556, 2147483648
      %v6713 = vxor.u32 %v5734, 2147483648
      %v6714 = vxor.u32 %v5912, 2147483648
      %v6715 = vxor.u32 %v6090, 2147483648
      %v6716 = vxor.u32 %v6268, 2147483648
      %v6717 = vxor.u32 %v6446, 2147483648
      %v6718 = vxor.u32 %v6624, 2147483648
      %v6719 = vxor.u32 %v5558, 2147483648
      %v6720 = vxor.u32 %v5736, 2147483648
      %v6721 = vxor.u32 %v5914, 2147483648
      %v6722 = vxor.u32 %v6092, 2147483648
      %v6723 = vxor.u32 %v6270, 2147483648
      %v6724 = vxor.u32 %v6448, 2147483648
      %v6725 = vxor.u32 %v6626, 2147483648
      %v6726 = vxor.u32 %v5561, 2147483648
      %v6727 = vxor.u32 %v5739, 2147483648
      %v6728 = vxor.u32 %v5917, 2147483648
      %v6729 = vxor.u32 %v6095, 2147483648
      %v6730 = vxor.u32 %v6273, 2147483648
      %v6731 = vxor.u32 %v6451, 2147483648
      %v6732 = vxor.u32 %v6629, 2147483648
      %v6733 = vxor.u32 %v5563, 2147483648
      %v6734 = vxor.u32 %v5741, 2147483648
      %v6735 = vxor.u32 %v5919, 2147483648
      %v6736 = vxor.u32 %v6097, 2147483648
      %v6737 = vxor.u32 %v6275, 2147483648
      %v6738 = vxor.u32 %v6453, 2147483648
      %v6739 = vxor.u32 %v6631, 2147483648
      %v6740 = vxor.u32 %v5566, 2147483648
      %v6741 = vxor.u32 %v5744, 2147483648
      %v6742 = vxor.u32 %v5922, 2147483648
      %v6743 = vxor.u32 %v6100, 2147483648
      %v6744 = vxor.u32 %v6278, 2147483648
      %v6745 = vxor.u32 %v6456, 2147483648
      %v6746 = vxor.u32 %v6634, 2147483648
      %v6747 = vxor.u32 %v5568, 2147483648
      %v6748 = vxor.u32 %v5746, 2147483648
      %v6749 = vxor.u32 %v5924, 2147483648
      %v6750 = vxor.u32 %v6102, 2147483648
      %v6751 = vxor.u32 %v6280, 2147483648
      %v6752 = vxor.u32 %v6458, 2147483648
      %v6753 = vxor.u32 %v6636, 2147483648
      %v6754 = vxor.u32 %v5571, 2147483648
      %v6755 = vxor.u32 %v5749, 2147483648
      %v6756 = vxor.u32 %v5927, 2147483648
      %v6757 = vxor.u32 %v6105, 2147483648
      %v6758 = vxor.u32 %v6283, 2147483648
      %v6759 = vxor.u32 %v6461, 2147483648
      %v6760 = vxor.u32 %v6639, 2147483648
      %v6761 = vxor.u32 %v5573, 2147483648
      %v6762 = vxor.u32 %v5751, 2147483648
      %v6763 = vxor.u32 %v5929, 2147483648
      %v6764 = vxor.u32 %v6107, 2147483648
      %v6765 = vxor.u32 %v6285, 2147483648
      %v6766 = vxor.u32 %v6463, 2147483648
      %v6767 = vxor.u32 %v6641, 2147483648
      %v6768 = vxor.u32 %v5576, 2147483648
      %v6769 = vxor.u32 %v5754, 2147483648
      %v6770 = vxor.u32 %v5932, 2147483648
      %v6771 = vxor.u32 %v6110, 2147483648
      %v6772 = vxor.u32 %v6288, 2147483648
      %v6773 = vxor.u32 %v6466, 2147483648
      %v6774 = vxor.u32 %v6644, 2147483648
      %v6775 = vxor.u32 %v5578, 2147483648
      %v6776 = vxor.u32 %v5756, 2147483648
      %v6777 = vxor.u32 %v5934, 2147483648
      %v6778 = vxor.u32 %v6112, 2147483648
      %v6779 = vxor.u32 %v6290, 2147483648
      %v6780 = vxor.u32 %v6468, 2147483648
      %v6781 = vxor.u32 %v6646, 2147483648
      %v6782 = vxor.u32 %v5581, 2147483648
      %v6783 = vxor.u32 %v5759, 2147483648
      %v6784 = vxor.u32 %v5937, 2147483648
      %v6785 = vxor.u32 %v6115, 2147483648
      %v6786 = vxor.u32 %v6293, 2147483648
      %v6787 = vxor.u32 %v6471, 2147483648
      %v6788 = vxor.u32 %v6649, 2147483648
      %v6789 = vxor.u32 %v5583, 2147483648
      %v6790 = vxor.u32 %v5761, 2147483648
      %v6791 = vxor.u32 %v5939, 2147483648
      %v6792 = vxor.u32 %v6117, 2147483648
      %v6793 = vxor.u32 %v6295, 2147483648
      %v6794 = vxor.u32 %v6473, 2147483648
      %v6795 = vxor.u32 %v6651, 2147483648
      %v6796 = vxor.u32 %v5586, 2147483648
      %v6797 = vxor.u32 %v5764, 2147483648
      %v6798 = vxor.u32 %v5942, 2147483648
      %v6799 = vxor.u32 %v6120, 2147483648
      %v6800 = vxor.u32 %v6298, 2147483648
      %v6801 = vxor.u32 %v6476, 2147483648
      %v6802 = vxor.u32 %v6654, 2147483648
      %v6803 = vxor.u32 %v5588, 2147483648
      %v6804 = vxor.u32 %v5766, 2147483648
      %v6805 = vxor.u32 %v5944, 2147483648
      %v6806 = vxor.u32 %v6122, 2147483648
      %v6807 = vxor.u32 %v6300, 2147483648
      %v6808 = vxor.u32 %v6478, 2147483648
      %v6809 = vxor.u32 %v6656, 2147483648
      %v6810 = vxor.u32 %v5591, 2147483648
      %v6811 = vxor.u32 %v5769, 2147483648
      %v6812 = vxor.u32 %v5947, 2147483648
      %v6813 = vxor.u32 %v6125, 2147483648
      %v6814 = vxor.u32 %v6303, 2147483648
      %v6815 = vxor.u32 %v6481, 2147483648
      %v6816 = vxor.u32 %v6659, 2147483648
      %v6817 = vxor.u32 %v5593, 2147483648
      %v6818 = vxor.u32 %v5771, 2147483648
      %v6819 = vxor.u32 %v5949, 2147483648
      %v6820 = vxor.u32 %v6127, 2147483648
      %v6821 = vxor.u32 %v6305, 2147483648
      %v6822 = vxor.u32 %v6483, 2147483648
      %v6823 = vxor.u32 %v6661, 2147483648
      %v6824 = vxor.u32 %v5596, 2147483648
      %v6825 = vxor.u32 %v5774, 2147483648
      %v6826 = vxor.u32 %v5952, 2147483648
      %v6827 = vxor.u32 %v6130, 2147483648
      %v6828 = vxor.u32 %v6308, 2147483648
      %v6829 = vxor.u32 %v6486, 2147483648
      %v6830 = vxor.u32 %v6664, 2147483648
      %v6831 = vxor.u32 %v5598, 2147483648
      %v6832 = vxor.u32 %v5776, 2147483648
      %v6833 = vxor.u32 %v5954, 2147483648
      %v6834 = vxor.u32 %v6132, 2147483648
      %v6835 = vxor.u32 %v6310, 2147483648
      %v6836 = vxor.u32 %v6488, 2147483648
      %v6837 = vxor.u32 %v6666, 2147483648
      %v6838 = vxor.u32 %v5601, 2147483648
      %v6839 = vxor.u32 %v5779, 2147483648
      %v6840 = vxor.u32 %v5957, 2147483648
      %v6841 = vxor.u32 %v6135, 2147483648
      %v6842 = vxor.u32 %v6313, 2147483648
      %v6843 = vxor.u32 %v6491, 2147483648
      %v6844 = vxor.u32 %v6669, 2147483648
      %v6845 = vxor.u32 %v5603, 2147483648
      %v6846 = vxor.u32 %v5781, 2147483648
      %v6847 = vxor.u32 %v5959, 2147483648
      %v6848 = vxor.u32 %v6137, 2147483648
      %v6849 = vxor.u32 %v6315, 2147483648
      %v6850 = vxor.u32 %v6493, 2147483648
      %v6851 = vxor.u32 %v6671, 2147483648
      %v6852 = vxor.u32 %v5606, 2147483648
      %v6853 = vxor.u32 %v5784, 2147483648
      %v6854 = vxor.u32 %v5962, 2147483648
      %v6855 = vxor.u32 %v6140, 2147483648
      %v6856 = vxor.u32 %v6318, 2147483648
      %v6857 = vxor.u32 %v6496, 2147483648
      %v6858 = vxor.u32 %v6674, 2147483648
      %v6859 = vxor.u32 %v5608, 2147483648
      %v6860 = vxor.u32 %v5786, 2147483648
      %v6861 = vxor.u32 %v5964, 2147483648
      %v6862 = vxor.u32 %v6142, 2147483648
      %v6863 = vxor.u32 %v6320, 2147483648
      %v6864 = vxor.u32 %v6498, 2147483648
      %v6865 = vxor.u32 %v6676, 2147483648
      %v6866 = vxor.u32 %v5611, 2147483648
      %v6867 = vxor.u32 %v5789, 2147483648
      %v6868 = vxor.u32 %v5967, 2147483648
      %v6869 = vxor.u32 %v6145, 2147483648
      %v6870 = vxor.u32 %v6323, 2147483648
      %v6871 = vxor.u32 %v6501, 2147483648
      %v6872 = vxor.u32 %v6679, 2147483648
      %v6873 = vxor.u32 %v5613, 2147483648
      %v6874 = vxor.u32 %v5791, 2147483648
      %v6875 = vxor.u32 %v5969, 2147483648
      %v6876 = vxor.u32 %v6147, 2147483648
      %v6877 = vxor.u32 %v6325, 2147483648
      %v6878 = vxor.u32 %v6503, 2147483648
      %v6879 = vxor.u32 %v6681, 2147483648
      %v6880 = vxor.u32 %v5616, 2147483648
      %v6881 = vxor.u32 %v5794, 2147483648
      %v6882 = vxor.u32 %v5972, 2147483648
      %v6883 = vxor.u32 %v6150, 2147483648
      %v6884 = vxor.u32 %v6328, 2147483648
      %v6885 = vxor.u32 %v6506, 2147483648
      %v6886 = vxor.u32 %v6684, 2147483648
      %v6887 = vxor.u32 %v5618, 2147483648
      %v6888 = vxor.u32 %v5796, 2147483648
      %v6889 = vxor.u32 %v5974, 2147483648
      %v6890 = vxor.u32 %v6152, 2147483648
      %v6891 = vxor.u32 %v6330, 2147483648
      %v6892 = vxor.u32 %v6508, 2147483648
      %v6893 = vxor.u32 %v6686, 2147483648
      %v6894 = vxor.u32 %v5621, 2147483648
      %v6895 = vxor.u32 %v5799, 2147483648
      %v6896 = vxor.u32 %v5977, 2147483648
      %v6897 = vxor.u32 %v6155, 2147483648
      %v6898 = vxor.u32 %v6333, 2147483648
      %v6899 = vxor.u32 %v6511, 2147483648
      %v6900 = vxor.u32 %v6689, 2147483648
      %v6901 = vxor.u32 %v5623, 2147483648
      %v6902 = vxor.u32 %v5801, 2147483648
      %v6903 = vxor.u32 %v5979, 2147483648
      %v6904 = vxor.u32 %v6157, 2147483648
      %v6905 = vxor.u32 %v6335, 2147483648
      %v6906 = vxor.u32 %v6513, 2147483648
      %v6907 = vxor.u32 %v6691, 2147483648
      %v6908 = vxor.u32 %v5626, 2147483648
      %v6909 = vxor.u32 %v5804, 2147483648
      %v6910 = vxor.u32 %v5982, 2147483648
      %v6911 = vxor.u32 %v6160, 2147483648
      %v6912 = vxor.u32 %v6338, 2147483648
      %v6913 = vxor.u32 %v6516, 2147483648
      %v6914 = vxor.u32 %v6694, 2147483648
      %v6915 = vxor.u32 %v5628, 2147483648
      %v6916 = vxor.u32 %v5806, 2147483648
      %v6917 = vxor.u32 %v5984, 2147483648
      %v6918 = vxor.u32 %v6162, 2147483648
      %v6919 = vxor.u32 %v6340, 2147483648
      %v6920 = vxor.u32 %v6518, 2147483648
      %v6921 = vxor.u32 %v6696, 2147483648
      %v6922 = vmul.f32 %v6698, 1.442695
      %v6923 = vpow.pop %v6922
      %v6924 = vmul.f32 %v6699, 1.442695
      %v6925 = vpow.pop %v6924
      %v6926 = vmul.f32 %v6700, 1.442695
      %v6927 = vpow.pop %v6926
      %v6928 = vmul.f32 %v6701, 1.442695
      %v6929 = vpow.pop %v6928
      %v6930 = vmul.f32 %v6702, 1.442695
      %v6931 = vpow.pop %v6930
      %v6932 = vmul.f32 %v6703, 1.442695
      %v6933 = vpow.pop %v6932
      %v6934 = vmul.f32 %v6704, 1.442695
      %v6935 = vpow.pop %v6934
      %v6936 = vmul.f32 %v6705, 1.442695
      %v6937 = vpow.pop %v6936
      %v6938 = vmul.f32 %v6706, 1.442695
      %v6939 = vpow.pop %v6938
      %v6940 = vmul.f32 %v6707, 1.442695
      %v6941 = vpow.pop %v6940
      %v6942 = vmul.f32 %v6708, 1.442695
      %v6943 = vpow.pop %v6942
      %v6944 = vmul.f32 %v6709, 1.442695
      %v6945 = vpow.pop %v6944
      %v6946 = vmul.f32 %v6710, 1.442695
      %v6947 = vpow.pop %v6946
      %v6948 = vmul.f32 %v6711, 1.442695
      %v6949 = vpow.pop %v6948
      %v6950 = vmul.f32 %v6712, 1.442695
      %v6951 = vpow.pop %v6950
      %v6952 = vmul.f32 %v6713, 1.442695
      %v6953 = vpow.pop %v6952
      %v6954 = vmul.f32 %v6714, 1.442695
      %v6955 = vpow.pop %v6954
      %v6956 = vmul.f32 %v6715, 1.442695
      %v6957 = vpow.pop %v6956
      %v6958 = vmul.f32 %v6716, 1.442695
      %v6959 = vpow.pop %v6958
      %v6960 = vmul.f32 %v6717, 1.442695
      %v6961 = vpow.pop %v6960
      %v6962 = vmul.f32 %v6718, 1.442695
      %v6963 = vpow.pop %v6962
      %v6964 = vmul.f32 %v6719, 1.442695
      %v6965 = vpow.pop %v6964
      %v6966 = vmul.f32 %v6720, 1.442695
      %v6967 = vpow.pop %v6966
      %v6968 = vmul.f32 %v6721, 1.442695
      %v6969 = vpow.pop %v6968
      %v6970 = vmul.f32 %v6722, 1.442695
      %v6971 = vpow.pop %v6970
      %v6972 = vmul.f32 %v6723, 1.442695
      %v6973 = vpow.pop %v6972
      %v6974 = vmul.f32 %v6724, 1.442695
      %v6975 = vpow.pop %v6974
      %v6976 = vmul.f32 %v6725, 1.442695
      %v6977 = vpow.pop %v6976
      %v6978 = vmul.f32 %v6726, 1.442695
      %v6979 = vpow.pop %v6978
      %v6980 = vmul.f32 %v6727, 1.442695
      %v6981 = vpow.pop %v6980
      %v6982 = vmul.f32 %v6728, 1.442695
      %v6983 = vpow.pop %v6982
      %v6984 = vmul.f32 %v6729, 1.442695
      %v6985 = vpow.pop %v6984
      %v6986 = vmul.f32 %v6730, 1.442695
      %v6987 = vpow.pop %v6986
      %v6988 = vmul.f32 %v6731, 1.442695
      %v6989 = vpow.pop %v6988
      %v6990 = vmul.f32 %v6732, 1.442695
      %v6991 = vpow.pop %v6990
      %v6992 = vmul.f32 %v6733, 1.442695
      %v6993 = vpow.pop %v6992
      %v6994 = vmul.f32 %v6734, 1.442695
      %v6995 = vpow.pop %v6994
      %v6996 = vmul.f32 %v6735, 1.442695
      %v6997 = vpow.pop %v6996
      %v6998 = vmul.f32 %v6736, 1.442695
      %v6999 = vpow.pop %v6998
      %v7000 = vmul.f32 %v6737, 1.442695
      %v7001 = vpow.pop %v7000
      %v7002 = vmul.f32 %v6738, 1.442695
      %v7003 = vpow.pop %v7002
      %v7004 = vmul.f32 %v6739, 1.442695
      %v7005 = vpow.pop %v7004
      %v7006 = vmul.f32 %v6740, 1.442695
      %v7007 = vpow.pop %v7006
      %v7008 = vmul.f32 %v6741, 1.442695
      %v7009 = vpow.pop %v7008
      %v7010 = vmul.f32 %v6742, 1.442695
      %v7011 = vpow.pop %v7010
      %v7012 = vmul.f32 %v6743, 1.442695
      %v7013 = vpow.pop %v7012
      %v7014 = vmul.f32 %v6744, 1.442695
      %v7015 = vpow.pop %v7014
      %v7016 = vmul.f32 %v6745, 1.442695
      %v7017 = vpow.pop %v7016
      %v7018 = vmul.f32 %v6746, 1.442695
      %v7019 = vpow.pop %v7018
      %v7020 = vmul.f32 %v6747, 1.442695
      %v7021 = vpow.pop %v7020
      %v7022 = vmul.f32 %v6748, 1.442695
      %v7023 = vpow.pop %v7022
      %v7024 = vmul.f32 %v6749, 1.442695
      %v7025 = vpow.pop %v7024
      %v7026 = vmul.f32 %v6750, 1.442695
      %v7027 = vpow.pop %v7026
      %v7028 = vmul.f32 %v6751, 1.442695
      %v7029 = vpow.pop %v7028
      %v7030 = vmul.f32 %v6752, 1.442695
      %v7031 = vpow.pop %v7030
      %v7032 = vmul.f32 %v6753, 1.442695
      %v7033 = vpow.pop %v7032
      %v7034 = vmul.f32 %v6754, 1.442695
      %v7035 = vpow.pop %v7034
      %v7036 = vmul.f32 %v6755, 1.442695
      %v7037 = vpow.pop %v7036
      %v7038 = vmul.f32 %v6756, 1.442695
      %v7039 = vpow.pop %v7038
      %v7040 = vmul.f32 %v6757, 1.442695
      %v7041 = vpow.pop %v7040
      %v7042 = vmul.f32 %v6758, 1.442695
      %v7043 = vpow.pop %v7042
      %v7044 = vmul.f32 %v6759, 1.442695
      %v7045 = vpow.pop %v7044
      %v7046 = vmul.f32 %v6760, 1.442695
      %v7047 = vpow.pop %v7046
      %v7048 = vmul.f32 %v6761, 1.442695
      %v7049 = vpow.pop %v7048
      %v7050 = vmul.f32 %v6762, 1.442695
      %v7051 = vpow.pop %v7050
      %v7052 = vmul.f32 %v6763, 1.442695
      %v7053 = vpow.pop %v7052
      %v7054 = vmul.f32 %v6764, 1.442695
      %v7055 = vpow.pop %v7054
      %v7056 = vmul.f32 %v6765, 1.442695
      %v7057 = vpow.pop %v7056
      %v7058 = vmul.f32 %v6766, 1.442695
      %v7059 = vpow.pop %v7058
      %v7060 = vmul.f32 %v6767, 1.442695
      %v7061 = vpow.pop %v7060
      %v7062 = vmul.f32 %v6768, 1.442695
      %v7063 = vpow.pop %v7062
      %v7064 = vmul.f32 %v6769, 1.442695
      %v7065 = vpow.pop %v7064
      %v7066 = vmul.f32 %v6770, 1.442695
      %v7067 = vpow.pop %v7066
      %v7068 = vmul.f32 %v6771, 1.442695
      %v7069 = vpow.pop %v7068
      %v7070 = vmul.f32 %v6772, 1.442695
      %v7071 = vpow.pop %v7070
      %v7072 = vmul.f32 %v6773, 1.442695
      %v7073 = vpow.pop %v7072
      %v7074 = vmul.f32 %v6774, 1.442695
      %v7075 = vpow.pop %v7074
      %v7076 = vmul.f32 %v6775, 1.442695
      %v7077 = vpow.pop %v7076
      %v7078 = vmul.f32 %v6776, 1.442695
      %v7079 = vpow.pop %v7078
      %v7080 = vmul.f32 %v6777, 1.442695
      %v7081 = vpow.pop %v7080
      %v7082 = vmul.f32 %v6778, 1.442695
      %v7083 = vpow.pop %v7082
      %v7084 = vmul.f32 %v6779, 1.442695
      %v7085 = vpow.pop %v7084
      %v7086 = vmul.f32 %v6780, 1.442695
      %v7087 = vpow.pop %v7086
      %v7088 = vmul.f32 %v6781, 1.442695
      %v7089 = vpow.pop %v7088
      %v7090 = vmul.f32 %v6782, 1.442695
      %v7091 = vpow.pop %v7090
      %v7092 = vmul.f32 %v6783, 1.442695
      %v7093 = vpow.pop %v7092
      %v7094 = vmul.f32 %v6784, 1.442695
      %v7095 = vpow.pop %v7094
      %v7096 = vmul.f32 %v6785, 1.442695
      %v7097 = vpow.pop %v7096
      %v7098 = vmul.f32 %v6786, 1.442695
      %v7099 = vpow.pop %v7098
      %v7100 = vmul.f32 %v6787, 1.442695
      %v7101 = vpow.pop %v7100
      %v7102 = vmul.f32 %v6788, 1.442695
      %v7103 = vpow.pop %v7102
      %v7104 = vmul.f32 %v6789, 1.442695
      %v7105 = vpow.pop %v7104
      %v7106 = vmul.f32 %v6790, 1.442695
      %v7107 = vpow.pop %v7106
      %v7108 = vmul.f32 %v6791, 1.442695
      %v7109 = vpow.pop %v7108
      %v7110 = vmul.f32 %v6792, 1.442695
      %v7111 = vpow.pop %v7110
      %v7112 = vmul.f32 %v6793, 1.442695
      %v7113 = vpow.pop %v7112
      %v7114 = vmul.f32 %v6794, 1.442695
      %v7115 = vpow.pop %v7114
      %v7116 = vmul.f32 %v6795, 1.442695
      %v7117 = vpow.pop %v7116
      %v7118 = vmul.f32 %v6796, 1.442695
      %v7119 = vpow.pop %v7118
      %v7120 = vmul.f32 %v6797, 1.442695
      %v7121 = vpow.pop %v7120
      %v7122 = vmul.f32 %v6798, 1.442695
      %v7123 = vpow.pop %v7122
      %v7124 = vmul.f32 %v6799, 1.442695
      %v7125 = vpow.pop %v7124
      %v7126 = vmul.f32 %v6800, 1.442695
      %v7127 = vpow.pop %v7126
      %v7128 = vmul.f32 %v6801, 1.442695
      %v7129 = vpow.pop %v7128
      %v7130 = vmul.f32 %v6802, 1.442695
      %v7131 = vpow.pop %v7130
      %v7132 = vmul.f32 %v6803, 1.442695
      %v7133 = vpow.pop %v7132
      %v7134 = vmul.f32 %v6804, 1.442695
      %v7135 = vpow.pop %v7134
      %v7136 = vmul.f32 %v6805, 1.442695
      %v7137 = vpow.pop %v7136
      %v7138 = vmul.f32 %v6806, 1.442695
      %v7139 = vpow.pop %v7138
      %v7140 = vmul.f32 %v6807, 1.442695
      %v7141 = vpow.pop %v7140
      %v7142 = vmul.f32 %v6808, 1.442695
      %v7143 = vpow.pop %v7142
      %v7144 = vmul.f32 %v6809, 1.442695
      %v7145 = vpow.pop %v7144
      %v7146 = vmul.f32 %v6810, 1.442695
      %v7147 = vpow.pop %v7146
      %v7148 = vmul.f32 %v6811, 1.442695
      %v7149 = vpow.pop %v7148
      %v7150 = vmul.f32 %v6812, 1.442695
      %v7151 = vpow.pop %v7150
      %v7152 = vmul.f32 %v6813, 1.442695
      %v7153 = vpow.pop %v7152
      %v7154 = vmul.f32 %v6814, 1.442695
      %v7155 = vpow.pop %v7154
      %v7156 = vmul.f32 %v6815, 1.442695
      %v7157 = vpow.pop %v7156
      %v7158 = vmul.f32 %v6816, 1.442695
      %v7159 = vpow.pop %v7158
      %v7160 = vmul.f32 %v6817, 1.442695
      %v7161 = vpow.pop %v7160
      %v7162 = vmul.f32 %v6818, 1.442695
      %v7163 = vpow.pop %v7162
      %v7164 = vmul.f32 %v6819, 1.442695
      %v7165 = vpow.pop %v7164
      %v7166 = vmul.f32 %v6820, 1.442695
      %v7167 = vpow.pop %v7166
      %v7168 = vmul.f32 %v6821, 1.442695
      %v7169 = vpow.pop %v7168
      %v7170 = vmul.f32 %v6822, 1.442695
      %v7171 = vpow.pop %v7170
      %v7172 = vmul.f32 %v6823, 1.442695
      %v7173 = vpow.pop %v7172
      %v7174 = vmul.f32 %v6824, 1.442695
      %v7175 = vpow.pop %v7174
      %v7176 = vmul.f32 %v6825, 1.442695
      %v7177 = vpow.pop %v7176
      %v7178 = vmul.f32 %v6826, 1.442695
      %v7179 = vpow.pop %v7178
      %v7180 = vmul.f32 %v6827, 1.442695
      %v7181 = vpow.pop %v7180
      %v7182 = vmul.f32 %v6828, 1.442695
      %v7183 = vpow.pop %v7182
      %v7184 = vmul.f32 %v6829, 1.442695
      %v7185 = vpow.pop %v7184
      %v7186 = vmul.f32 %v6830, 1.442695
      %v7187 = vpow.pop %v7186
      %v7188 = vmul.f32 %v6831, 1.442695
      %v7189 = vpow.pop %v7188
      %v7190 = vmul.f32 %v6832, 1.442695
      %v7191 = vpow.pop %v7190
      %v7192 = vmul.f32 %v6833, 1.442695
      %v7193 = vpow.pop %v7192
      %v7194 = vmul.f32 %v6834, 1.442695
      %v7195 = vpow.pop %v7194
      %v7196 = vmul.f32 %v6835, 1.442695
      %v7197 = vpow.pop %v7196
      %v7198 = vmul.f32 %v6836, 1.442695
      %v7199 = vpow.pop %v7198
      %v7200 = vmul.f32 %v6837, 1.442695
      %v7201 = vpow.pop %v7200
      %v7202 = vmul.f32 %v6838, 1.442695
      %v7203 = vpow.pop %v7202
      %v7204 = vmul.f32 %v6839, 1.442695
      %v7205 = vpow.pop %v7204
      %v7206 = vmul.f32 %v6840, 1.442695
      %v7207 = vpow.pop %v7206
      %v7208 = vmul.f32 %v6841, 1.442695
      %v7209 = vpow.pop %v7208
      %v7210 = vmul.f32 %v6842, 1.442695
      %v7211 = vpow.pop %v7210
      %v7212 = vmul.f32 %v6843, 1.442695
      %v7213 = vpow.pop %v7212
      %v7214 = vmul.f32 %v6844, 1.442695
      %v7215 = vpow.pop %v7214
      %v7216 = vmul.f32 %v6845, 1.442695
      %v7217 = vpow.pop %v7216
      %v7218 = vmul.f32 %v6846, 1.442695
      %v7219 = vpow.pop %v7218
      %v7220 = vmul.f32 %v6847, 1.442695
      %v7221 = vpow.pop %v7220
      %v7222 = vmul.f32 %v6848, 1.442695
      %v7223 = vpow.pop %v7222
      %v7224 = vmul.f32 %v6849, 1.442695
      %v7225 = vpow.pop %v7224
      %v7226 = vmul.f32 %v6850, 1.442695
      %v7227 = vpow.pop %v7226
      %v7228 = vmul.f32 %v6851, 1.442695
      %v7229 = vpow.pop %v7228
      %v7230 = vmul.f32 %v6852, 1.442695
      %v7231 = vpow.pop %v7230
      %v7232 = vmul.f32 %v6853, 1.442695
      %v7233 = vpow.pop %v7232
      %v7234 = vmul.f32 %v6854, 1.442695
      %v7235 = vpow.pop %v7234
      %v7236 = vmul.f32 %v6855, 1.442695
      %v7237 = vpow.pop %v7236
      %v7238 = vmul.f32 %v6856, 1.442695
      %v7239 = vpow.pop %v7238
      %v7240 = vmul.f32 %v6857, 1.442695
      %v7241 = vpow.pop %v7240
      %v7242 = vmul.f32 %v6858, 1.442695
      %v7243 = vpow.pop %v7242
      %v7244 = vmul.f32 %v6859, 1.442695
      %v7245 = vpow.pop %v7244
      %v7246 = vmul.f32 %v6860, 1.442695
      %v7247 = vpow.pop %v7246
      %v7248 = vmul.f32 %v6861, 1.442695
      %v7249 = vpow.pop %v7248
      %v7250 = vmul.f32 %v6862, 1.442695
      %v7251 = vpow.pop %v7250
      %v7252 = vmul.f32 %v6863, 1.442695
      %v7253 = vpow.pop %v7252
      %v7254 = vmul.f32 %v6864, 1.442695
      %v7255 = vpow.pop %v7254
      %v7256 = vmul.f32 %v6865, 1.442695
      %v7257 = vpow.pop %v7256
      %v7258 = vmul.f32 %v6866, 1.442695
      %v7259 = vpow.pop %v7258
      %v7260 = vmul.f32 %v6867, 1.442695
      %v7261 = vpow.pop %v7260
      %v7262 = vmul.f32 %v6868, 1.442695
      %v7263 = vpow.pop %v7262
      %v7264 = vmul.f32 %v6869, 1.442695
      %v7265 = vpow.pop %v7264
      %v7266 = vmul.f32 %v6870, 1.442695
      %v7267 = vpow.pop %v7266
      %v7268 = vmul.f32 %v6871, 1.442695
      %v7269 = vpow.pop %v7268
      %v7270 = vmul.f32 %v6872, 1.442695
      %v7271 = vpow.pop %v7270
      %v7272 = vmul.f32 %v6873, 1.442695
      %v7273 = vpow.pop %v7272
      %v7274 = vmul.f32 %v6874, 1.442695
      %v7275 = vpow.pop %v7274
      %v7276 = vmul.f32 %v6875, 1.442695
      %v7277 = vpow.pop %v7276
      %v7278 = vmul.f32 %v6876, 1.442695
      %v7279 = vpow.pop %v7278
      %v7280 = vmul.f32 %v6877, 1.442695
      %v7281 = vpow.pop %v7280
      %v7282 = vmul.f32 %v6878, 1.442695
      %v7283 = vpow.pop %v7282
      %v7284 = vmul.f32 %v6879, 1.442695
      %v7285 = vpow.pop %v7284
      %v7286 = vmul.f32 %v6880, 1.442695
      %v7287 = vpow.pop %v7286
      %v7288 = vmul.f32 %v6881, 1.442695
      %v7289 = vpow.pop %v7288
      %v7290 = vmul.f32 %v6882, 1.442695
      %v7291 = vpow.pop %v7290
      %v7292 = vmul.f32 %v6883, 1.442695
      %v7293 = vpow.pop %v7292
      %v7294 = vmul.f32 %v6884, 1.442695
      %v7295 = vpow.pop %v7294
      %v7296 = vmul.f32 %v6885, 1.442695
      %v7297 = vpow.pop %v7296
      %v7298 = vmul.f32 %v6886, 1.442695
      %v7299 = vpow.pop %v7298
      %v7300 = vmul.f32 %v6887, 1.442695
      %v7301 = vpow.pop %v7300
      %v7302 = vmul.f32 %v6888, 1.442695
      %v7303 = vpow.pop %v7302
      %v7304 = vmul.f32 %v6889, 1.442695
      %v7305 = vpow.pop %v7304
      %v7306 = vmul.f32 %v6890, 1.442695
      %v7307 = vpow.pop %v7306
      %v7308 = vmul.f32 %v6891, 1.442695
      %v7309 = vpow.pop %v7308
      %v7310 = vmul.f32 %v6892, 1.442695
      %v7311 = vpow.pop %v7310
      %v7312 = vmul.f32 %v6893, 1.442695
      %v7313 = vpow.pop %v7312
      %v7314 = vmul.f32 %v6894, 1.442695
      %v7315 = vpow.pop %v7314
      %v7316 = vmul.f32 %v6895, 1.442695
      %v7317 = vpow.pop %v7316
      %v7318 = vmul.f32 %v6896, 1.442695
      %v7319 = vpow.pop %v7318
      %v7320 = vmul.f32 %v6897, 1.442695
      %v7321 = vpow.pop %v7320
      %v7322 = vmul.f32 %v6898, 1.442695
      %v7323 = vpow.pop %v7322
      %v7324 = vmul.f32 %v6899, 1.442695
      %v7325 = vpow.pop %v7324
      %v7326 = vmul.f32 %v6900, 1.442695
      %v7327 = vpow.pop %v7326
      %v7328 = vmul.f32 %v6901, 1.442695
      %v7329 = vpow.pop %v7328
      %v7330 = vmul.f32 %v6902, 1.442695
      %v7331 = vpow.pop %v7330
      %v7332 = vmul.f32 %v6903, 1.442695
      %v7333 = vpow.pop %v7332
      %v7334 = vmul.f32 %v6904, 1.442695
      %v7335 = vpow.pop %v7334
      %v7336 = vmul.f32 %v6905, 1.442695
      %v7337 = vpow.pop %v7336
      %v7338 = vmul.f32 %v6906, 1.442695
      %v7339 = vpow.pop %v7338
      %v7340 = vmul.f32 %v6907, 1.442695
      %v7341 = vpow.pop %v7340
      %v7342 = vmul.f32 %v6908, 1.442695
      %v7343 = vpow.pop %v7342
      %v7344 = vmul.f32 %v6909, 1.442695
      %v7345 = vpow.pop %v7344
      %v7346 = vmul.f32 %v6910, 1.442695
      %v7347 = vpow.pop %v7346
      %v7348 = vmul.f32 %v6911, 1.442695
      %v7349 = vpow.pop %v7348
      %v7350 = vmul.f32 %v6912, 1.442695
      %v7351 = vpow.pop %v7350
      %v7352 = vmul.f32 %v6913, 1.442695
      %v7353 = vpow.pop %v7352
      %v7354 = vmul.f32 %v6914, 1.442695
      %v7355 = vpow.pop %v7354
      %v7356 = vmul.f32 %v6915, 1.442695
      %v7357 = vpow.pop %v7356
      %v7358 = vmul.f32 %v6916, 1.442695
      %v7359 = vpow.pop %v7358
      %v7360 = vmul.f32 %v6917, 1.442695
      %v7361 = vpow.pop %v7360
      %v7362 = vmul.f32 %v6918, 1.442695
      %v7363 = vpow.pop %v7362
      %v7364 = vmul.f32 %v6919, 1.442695
      %v7365 = vpow.pop %v7364
      %v7366 = vmul.f32 %v6920, 1.442695
      %v7367 = vpow.pop %v7366
      %v7368 = vmul.f32 %v6921, 1.442695
      %v7369 = vpow.pop %v7368
      %v7370 = vadd.f32 %v6923, 1.0
      %v7371 = vadd.f32 %v6925, 1.0
      %v7372 = vadd.f32 %v6927, 1.0
      %v7373 = vadd.f32 %v6929, 1.0
      %v7374 = vadd.f32 %v6931, 1.0
      %v7375 = vadd.f32 %v6933, 1.0
      %v7376 = vadd.f32 %v6935, 1.0
      %v7377 = vadd.f32 %v6937, 1.0
      %v7378 = vadd.f32 %v6939, 1.0
      %v7379 = vadd.f32 %v6941, 1.0
      %v7380 = vadd.f32 %v6943, 1.0
      %v7381 = vadd.f32 %v6945, 1.0
      %v7382 = vadd.f32 %v6947, 1.0
      %v7383 = vadd.f32 %v6949, 1.0
      %v7384 = vadd.f32 %v6951, 1.0
      %v7385 = vadd.f32 %v6953, 1.0
      %v7386 = vadd.f32 %v6955, 1.0
      %v7387 = vadd.f32 %v6957, 1.0
      %v7388 = vadd.f32 %v6959, 1.0
      %v7389 = vadd.f32 %v6961, 1.0
      %v7390 = vadd.f32 %v6963, 1.0
      %v7391 = vadd.f32 %v6965, 1.0
      %v7392 = vadd.f32 %v6967, 1.0
      %v7393 = vadd.f32 %v6969, 1.0
      %v7394 = vadd.f32 %v6971, 1.0
      %v7395 = vadd.f32 %v6973, 1.0
      %v7396 = vadd.f32 %v6975, 1.0
      %v7397 = vadd.f32 %v6977, 1.0
      %v7398 = vadd.f32 %v6979, 1.0
      %v7399 = vadd.f32 %v6981, 1.0
      %v7400 = vadd.f32 %v6983, 1.0
      %v7401 = vadd.f32 %v6985, 1.0
      %v7402 = vadd.f32 %v6987, 1.0
      %v7403 = vadd.f32 %v6989, 1.0
      %v7404 = vadd.f32 %v6991, 1.0
      %v7405 = vadd.f32 %v6993, 1.0
      %v7406 = vadd.f32 %v6995, 1.0
      %v7407 = vadd.f32 %v6997, 1.0
      %v7408 = vadd.f32 %v6999, 1.0
      %v7409 = vadd.f32 %v7001, 1.0
      %v7410 = vadd.f32 %v7003, 1.0
      %v7411 = vadd.f32 %v7005, 1.0
      %v7412 = vadd.f32 %v7007, 1.0
      %v7413 = vadd.f32 %v7009, 1.0
      %v7414 = vadd.f32 %v7011, 1.0
      %v7415 = vadd.f32 %v7013, 1.0
      %v7416 = vadd.f32 %v7015, 1.0
      %v7417 = vadd.f32 %v7017, 1.0
      %v7418 = vadd.f32 %v7019, 1.0
      %v7419 = vadd.f32 %v7021, 1.0
      %v7420 = vadd.f32 %v7023, 1.0
      %v7421 = vadd.f32 %v7025, 1.0
      %v7422 = vadd.f32 %v7027, 1.0
      %v7423 = vadd.f32 %v7029, 1.0
      %v7424 = vadd.f32 %v7031, 1.0
      %v7425 = vadd.f32 %v7033, 1.0
      %v7426 = vadd.f32 %v7035, 1.0
      %v7427 = vadd.f32 %v7037, 1.0
      %v7428 = vadd.f32 %v7039, 1.0
      %v7429 = vadd.f32 %v7041, 1.0
      %v7430 = vadd.f32 %v7043, 1.0
      %v7431 = vadd.f32 %v7045, 1.0
      %v7432 = vadd.f32 %v7047, 1.0
      %v7433 = vadd.f32 %v7049, 1.0
      %v7434 = vadd.f32 %v7051, 1.0
      %v7435 = vadd.f32 %v7053, 1.0
      %v7436 = vadd.f32 %v7055, 1.0
      %v7437 = vadd.f32 %v7057, 1.0
      %v7438 = vadd.f32 %v7059, 1.0
      %v7439 = vadd.f32 %v7061, 1.0
      %v7440 = vadd.f32 %v7063, 1.0
      %v7441 = vadd.f32 %v7065, 1.0
      %v7442 = vadd.f32 %v7067, 1.0
      %v7443 = vadd.f32 %v7069, 1.0
      %v7444 = vadd.f32 %v7071, 1.0
      %v7445 = vadd.f32 %v7073, 1.0
      %v7446 = vadd.f32 %v7075, 1.0
      %v7447 = vadd.f32 %v7077, 1.0
      %v7448 = vadd.f32 %v7079, 1.0
      %v7449 = vadd.f32 %v7081, 1.0
      %v7450 = vadd.f32 %v7083, 1.0
      %v7451 = vadd.f32 %v7085, 1.0
      %v7452 = vadd.f32 %v7087, 1.0
      %v7453 = vadd.f32 %v7089, 1.0
      %v7454 = vadd.f32 %v7091, 1.0
      %v7455 = vadd.f32 %v7093, 1.0
      %v7456 = vadd.f32 %v7095, 1.0
      %v7457 = vadd.f32 %v7097, 1.0
      %v7458 = vadd.f32 %v7099, 1.0
      %v7459 = vadd.f32 %v7101, 1.0
      %v7460 = vadd.f32 %v7103, 1.0
      %v7461 = vadd.f32 %v7105, 1.0
      %v7462 = vadd.f32 %v7107, 1.0
      %v7463 = vadd.f32 %v7109, 1.0
      %v7464 = vadd.f32 %v7111, 1.0
      %v7465 = vadd.f32 %v7113, 1.0
      %v7466 = vadd.f32 %v7115, 1.0
      %v7467 = vadd.f32 %v7117, 1.0
      %v7468 = vadd.f32 %v7119, 1.0
      %v7469 = vadd.f32 %v7121, 1.0
      %v7470 = vadd.f32 %v7123, 1.0
      %v7471 = vadd.f32 %v7125, 1.0
      %v7472 = vadd.f32 %v7127, 1.0
      %v7473 = vadd.f32 %v7129, 1.0
      %v7474 = vadd.f32 %v7131, 1.0
      %v7475 = vadd.f32 %v7133, 1.0
      %v7476 = vadd.f32 %v7135, 1.0
      %v7477 = vadd.f32 %v7137, 1.0
      %v7478 = vadd.f32 %v7139, 1.0
      %v7479 = vadd.f32 %v7141, 1.0
      %v7480 = vadd.f32 %v7143, 1.0
      %v7481 = vadd.f32 %v7145, 1.0
      %v7482 = vadd.f32 %v7147, 1.0
      %v7483 = vadd.f32 %v7149, 1.0
      %v7484 = vadd.f32 %v7151, 1.0
      %v7485 = vadd.f32 %v7153, 1.0
      %v7486 = vadd.f32 %v7155, 1.0
      %v7487 = vadd.f32 %v7157, 1.0
      %v7488 = vadd.f32 %v7159, 1.0
      %v7489 = vadd.f32 %v7161, 1.0
      %v7490 = vadd.f32 %v7163, 1.0
      %v7491 = vadd.f32 %v7165, 1.0
      %v7492 = vadd.f32 %v7167, 1.0
      %v7493 = vadd.f32 %v7169, 1.0
      %v7494 = vadd.f32 %v7171, 1.0
      %v7495 = vadd.f32 %v7173, 1.0
      %v7496 = vadd.f32 %v7175, 1.0
      %v7497 = vadd.f32 %v7177, 1.0
      %v7498 = vadd.f32 %v7179, 1.0
      %v7499 = vadd.f32 %v7181, 1.0
      %v7500 = vadd.f32 %v7183, 1.0
      %v7501 = vadd.f32 %v7185, 1.0
      %v7502 = vadd.f32 %v7187, 1.0
      %v7503 = vadd.f32 %v7189, 1.0
      %v7504 = vadd.f32 %v7191, 1.0
      %v7505 = vadd.f32 %v7193, 1.0
      %v7506 = vadd.f32 %v7195, 1.0
      %v7507 = vadd.f32 %v7197, 1.0
      %v7508 = vadd.f32 %v7199, 1.0
      %v7509 = vadd.f32 %v7201, 1.0
      %v7510 = vadd.f32 %v7203, 1.0
      %v7511 = vadd.f32 %v7205, 1.0
      %v7512 = vadd.f32 %v7207, 1.0
      %v7513 = vadd.f32 %v7209, 1.0
      %v7514 = vadd.f32 %v7211, 1.0
      %v7515 = vadd.f32 %v7213, 1.0
      %v7516 = vadd.f32 %v7215, 1.0
      %v7517 = vadd.f32 %v7217, 1.0
      %v7518 = vadd.f32 %v7219, 1.0
      %v7519 = vadd.f32 %v7221, 1.0
      %v7520 = vadd.f32 %v7223, 1.0
      %v7521 = vadd.f32 %v7225, 1.0
      %v7522 = vadd.f32 %v7227, 1.0
      %v7523 = vadd.f32 %v7229, 1.0
      %v7524 = vadd.f32 %v7231, 1.0
      %v7525 = vadd.f32 %v7233, 1.0
      %v7526 = vadd.f32 %v7235, 1.0
      %v7527 = vadd.f32 %v7237, 1.0
      %v7528 = vadd.f32 %v7239, 1.0
      %v7529 = vadd.f32 %v7241, 1.0
      %v7530 = vadd.f32 %v7243, 1.0
      %v7531 = vadd.f32 %v7245, 1.0
      %v7532 = vadd.f32 %v7247, 1.0
      %v7533 = vadd.f32 %v7249, 1.0
      %v7534 = vadd.f32 %v7251, 1.0
      %v7535 = vadd.f32 %v7253, 1.0
      %v7536 = vadd.f32 %v7255, 1.0
      %v7537 = vadd.f32 %v7257, 1.0
      %v7538 = vadd.f32 %v7259, 1.0
      %v7539 = vadd.f32 %v7261, 1.0
      %v7540 = vadd.f32 %v7263, 1.0
      %v7541 = vadd.f32 %v7265, 1.0
      %v7542 = vadd.f32 %v7267, 1.0
      %v7543 = vadd.f32 %v7269, 1.0
      %v7544 = vadd.f32 %v7271, 1.0
      %v7545 = vadd.f32 %v7273, 1.0
      %v7546 = vadd.f32 %v7275, 1.0
      %v7547 = vadd.f32 %v7277, 1.0
      %v7548 = vadd.f32 %v7279, 1.0
      %v7549 = vadd.f32 %v7281, 1.0
      %v7550 = vadd.f32 %v7283, 1.0
      %v7551 = vadd.f32 %v7285, 1.0
      %v7552 = vadd.f32 %v7287, 1.0
      %v7553 = vadd.f32 %v7289, 1.0
      %v7554 = vadd.f32 %v7291, 1.0
      %v7555 = vadd.f32 %v7293, 1.0
      %v7556 = vadd.f32 %v7295, 1.0
      %v7557 = vadd.f32 %v7297, 1.0
      %v7558 = vadd.f32 %v7299, 1.0
      %v7559 = vadd.f32 %v7301, 1.0
      %v7560 = vadd.f32 %v7303, 1.0
      %v7561 = vadd.f32 %v7305, 1.0
      %v7562 = vadd.f32 %v7307, 1.0
      %v7563 = vadd.f32 %v7309, 1.0
      %v7564 = vadd.f32 %v7311, 1.0
      %v7565 = vadd.f32 %v7313, 1.0
      %v7566 = vadd.f32 %v7315, 1.0
      %v7567 = vadd.f32 %v7317, 1.0
      %v7568 = vadd.f32 %v7319, 1.0
      %v7569 = vadd.f32 %v7321, 1.0
      %v7570 = vadd.f32 %v7323, 1.0
      %v7571 = vadd.f32 %v7325, 1.0
      %v7572 = vadd.f32 %v7327, 1.0
      %v7573 = vadd.f32 %v7329, 1.0
      %v7574 = vadd.f32 %v7331, 1.0
      %v7575 = vadd.f32 %v7333, 1.0
      %v7576 = vadd.f32 %v7335, 1.0
      %v7577 = vadd.f32 %v7337, 1.0
      %v7578 = vadd.f32 %v7339, 1.0
      %v7579 = vadd.f32 %v7341, 1.0
      %v7580 = vadd.f32 %v7343, 1.0
      %v7581 = vadd.f32 %v7345, 1.0
      %v7582 = vadd.f32 %v7347, 1.0
      %v7583 = vadd.f32 %v7349, 1.0
      %v7584 = vadd.f32 %v7351, 1.0
      %v7585 = vadd.f32 %v7353, 1.0
      %v7586 = vadd.f32 %v7355, 1.0
      %v7587 = vadd.f32 %v7357, 1.0
      %v7588 = vadd.f32 %v7359, 1.0
      %v7589 = vadd.f32 %v7361, 1.0
      %v7590 = vadd.f32 %v7363, 1.0
      %v7591 = vadd.f32 %v7365, 1.0
      %v7592 = vadd.f32 %v7367, 1.0
      %v7593 = vadd.f32 %v7369, 1.0
      %v7594 = vrcp.pop %v7370
      %v7595 = vmul.f32 %v7370, %v7594
      %v7596 = vsub.f32 1.0, %v7595
      %v7597 = vmul.f32 %v7594, %v7596
      %v7598 = vadd.f32 %v7594, %v7597
      %vm7599 = vweird.f32 %v7370
      %vm7600 = vweird.f32 %v7594
      %vm7601 = vmor %vm7599, %vm7600
      %v7602 = vsel %vm7601, %v7594, %v7598
      %v7603 = vand.u32 2147483647, %v7370
      %vm7604 = vcmp.eq.f32.partialorder %v7603, 8.507059e+37
      %v7605 = vand.u32 %v7370, 2147483648
      %v7606 = vor.u32 1.1754944e-38, %v7605
      %v7607 = vsel %vm7604, %v7606, %v7602
      %v7608 = vmul.f32 1.0, %v7607
      %v7609 = vrcp.pop %v7371
      %v7610 = vmul.f32 %v7371, %v7609
      %v7611 = vsub.f32 1.0, %v7610
      %v7612 = vmul.f32 %v7609, %v7611
      %v7613 = vadd.f32 %v7609, %v7612
      %vm7614 = vweird.f32 %v7371
      %vm7615 = vweird.f32 %v7609
      %vm7616 = vmor %vm7614, %vm7615
      %v7617 = vsel %vm7616, %v7609, %v7613
      %v7618 = vand.u32 2147483647, %v7371
      %vm7619 = vcmp.eq.f32.partialorder %v7618, 8.507059e+37
      %v7620 = vand.u32 %v7371, 2147483648
      %v7621 = vor.u32 1.1754944e-38, %v7620
      %v7622 = vsel %vm7619, %v7621, %v7617
      %v7623 = vmul.f32 1.0, %v7622
      %v7624 = vrcp.pop %v7372
      %v7625 = vmul.f32 %v7372, %v7624
      %v7626 = vsub.f32 1.0, %v7625
      %v7627 = vmul.f32 %v7624, %v7626
      %v7628 = vadd.f32 %v7624, %v7627
      %vm7629 = vweird.f32 %v7372
      %vm7630 = vweird.f32 %v7624
      %vm7631 = vmor %vm7629, %vm7630
      %v7632 = vsel %vm7631, %v7624, %v7628
      %v7633 = vand.u32 2147483647, %v7372
      %vm7634 = vcmp.eq.f32.partialorder %v7633, 8.507059e+37
      %v7635 = vand.u32 %v7372, 2147483648
      %v7636 = vor.u32 1.1754944e-38, %v7635
      %v7637 = vsel %vm7634, %v7636, %v7632
      %v7638 = vmul.f32 1.0, %v7637
      %v7639 = vrcp.pop %v7373
      %v7640 = vmul.f32 %v7373, %v7639
      %v7641 = vsub.f32 1.0, %v7640
      %v7642 = vmul.f32 %v7639, %v7641
      %v7643 = vadd.f32 %v7639, %v7642
      %vm7644 = vweird.f32 %v7373
      %vm7645 = vweird.f32 %v7639
      %vm7646 = vmor %vm7644, %vm7645
      %v7647 = vsel %vm7646, %v7639, %v7643
      %v7648 = vand.u32 2147483647, %v7373
      %vm7649 = vcmp.eq.f32.partialorder %v7648, 8.507059e+37
      %v7650 = vand.u32 %v7373, 2147483648
      %v7651 = vor.u32 1.1754944e-38, %v7650
      %v7652 = vsel %vm7649, %v7651, %v7647
      %v7653 = vmul.f32 1.0, %v7652
      %v7654 = vrcp.pop %v7374
      %v7655 = vmul.f32 %v7374, %v7654
      %v7656 = vsub.f32 1.0, %v7655
      %v7657 = vmul.f32 %v7654, %v7656
      %v7658 = vadd.f32 %v7654, %v7657
      %vm7659 = vweird.f32 %v7374
      %vm7660 = vweird.f32 %v7654
      %vm7661 = vmor %vm7659, %vm7660
      %v7662 = vsel %vm7661, %v7654, %v7658
      %v7663 = vand.u32 2147483647, %v7374
      %vm7664 = vcmp.eq.f32.partialorder %v7663, 8.507059e+37
      %v7665 = vand.u32 %v7374, 2147483648
      %v7666 = vor.u32 1.1754944e-38, %v7665
      %v7667 = vsel %vm7664, %v7666, %v7662
      %v7668 = vmul.f32 1.0, %v7667
      %v7669 = vrcp.pop %v7375
      %v7670 = vmul.f32 %v7375, %v7669
      %v7671 = vsub.f32 1.0, %v7670
      %v7672 = vmul.f32 %v7669, %v7671
      %v7673 = vadd.f32 %v7669, %v7672
      %vm7674 = vweird.f32 %v7375
      %vm7675 = vweird.f32 %v7669
      %vm7676 = vmor %vm7674, %vm7675
      %v7677 = vsel %vm7676, %v7669, %v7673
      %v7678 = vand.u32 2147483647, %v7375
      %vm7679 = vcmp.eq.f32.partialorder %v7678, 8.507059e+37
      %v7680 = vand.u32 %v7375, 2147483648
      %v7681 = vor.u32 1.1754944e-38, %v7680
      %v7682 = vsel %vm7679, %v7681, %v7677
      %v7683 = vmul.f32 1.0, %v7682
      %v7684 = vrcp.pop %v7376
      %v7685 = vmul.f32 %v7376, %v7684
      %v7686 = vsub.f32 1.0, %v7685
      %v7687 = vmul.f32 %v7684, %v7686
      %v7688 = vadd.f32 %v7684, %v7687
      %vm7689 = vweird.f32 %v7376
      %vm7690 = vweird.f32 %v7684
      %vm7691 = vmor %vm7689, %vm7690
      %v7692 = vsel %vm7691, %v7684, %v7688
      %v7693 = vand.u32 2147483647, %v7376
      %vm7694 = vcmp.eq.f32.partialorder %v7693, 8.507059e+37
      %v7695 = vand.u32 %v7376, 2147483648
      %v7696 = vor.u32 1.1754944e-38, %v7695
      %v7697 = vsel %vm7694, %v7696, %v7692
      %v7698 = vmul.f32 1.0, %v7697
      %v7699 = vrcp.pop %v7377
      %v7700 = vmul.f32 %v7377, %v7699
      %v7701 = vsub.f32 1.0, %v7700
      %v7702 = vmul.f32 %v7699, %v7701
      %v7703 = vadd.f32 %v7699, %v7702
      %vm7704 = vweird.f32 %v7377
      %vm7705 = vweird.f32 %v7699
      %vm7706 = vmor %vm7704, %vm7705
      %v7707 = vsel %vm7706, %v7699, %v7703
      %v7708 = vand.u32 2147483647, %v7377
      %vm7709 = vcmp.eq.f32.partialorder %v7708, 8.507059e+37
      %v7710 = vand.u32 %v7377, 2147483648
      %v7711 = vor.u32 1.1754944e-38, %v7710
      %v7712 = vsel %vm7709, %v7711, %v7707
      %v7713 = vmul.f32 1.0, %v7712
      %v7714 = vrcp.pop %v7378
      %v7715 = vmul.f32 %v7378, %v7714
      %v7716 = vsub.f32 1.0, %v7715
      %v7717 = vmul.f32 %v7714, %v7716
      %v7718 = vadd.f32 %v7714, %v7717
      %vm7719 = vweird.f32 %v7378
      %vm7720 = vweird.f32 %v7714
      %vm7721 = vmor %vm7719, %vm7720
      %v7722 = vsel %vm7721, %v7714, %v7718
      %v7723 = vand.u32 2147483647, %v7378
      %vm7724 = vcmp.eq.f32.partialorder %v7723, 8.507059e+37
      %v7725 = vand.u32 %v7378, 2147483648
      %v7726 = vor.u32 1.1754944e-38, %v7725
      %v7727 = vsel %vm7724, %v7726, %v7722
      %v7728 = vmul.f32 1.0, %v7727
      %v7729 = vrcp.pop %v7379
      %v7730 = vmul.f32 %v7379, %v7729
      %v7731 = vsub.f32 1.0, %v7730
      %v7732 = vmul.f32 %v7729, %v7731
      %v7733 = vadd.f32 %v7729, %v7732
      %vm7734 = vweird.f32 %v7379
      %vm7735 = vweird.f32 %v7729
      %vm7736 = vmor %vm7734, %vm7735
      %v7737 = vsel %vm7736, %v7729, %v7733
      %v7738 = vand.u32 2147483647, %v7379
      %vm7739 = vcmp.eq.f32.partialorder %v7738, 8.507059e+37
      %v7740 = vand.u32 %v7379, 2147483648
      %v7741 = vor.u32 1.1754944e-38, %v7740
      %v7742 = vsel %vm7739, %v7741, %v7737
      %v7743 = vmul.f32 1.0, %v7742
      %v7744 = vrcp.pop %v7380
      %v7745 = vmul.f32 %v7380, %v7744
      %v7746 = vsub.f32 1.0, %v7745
      %v7747 = vmul.f32 %v7744, %v7746
      %v7748 = vadd.f32 %v7744, %v7747
      %vm7749 = vweird.f32 %v7380
      %vm7750 = vweird.f32 %v7744
      %vm7751 = vmor %vm7749, %vm7750
      %v7752 = vsel %vm7751, %v7744, %v7748
      %v7753 = vand.u32 2147483647, %v7380
      %vm7754 = vcmp.eq.f32.partialorder %v7753, 8.507059e+37
      %v7755 = vand.u32 %v7380, 2147483648
      %v7756 = vor.u32 1.1754944e-38, %v7755
      %v7757 = vsel %vm7754, %v7756, %v7752
      %v7758 = vmul.f32 1.0, %v7757
      %v7759 = vrcp.pop %v7381
      %v7760 = vmul.f32 %v7381, %v7759
      %v7761 = vsub.f32 1.0, %v7760
      %v7762 = vmul.f32 %v7759, %v7761
      %v7763 = vadd.f32 %v7759, %v7762
      %vm7764 = vweird.f32 %v7381
      %vm7765 = vweird.f32 %v7759
      %vm7766 = vmor %vm7764, %vm7765
      %v7767 = vsel %vm7766, %v7759, %v7763
      %v7768 = vand.u32 2147483647, %v7381
      %vm7769 = vcmp.eq.f32.partialorder %v7768, 8.507059e+37
      %v7770 = vand.u32 %v7381, 2147483648
      %v7771 = vor.u32 1.1754944e-38, %v7770
      %v7772 = vsel %vm7769, %v7771, %v7767
      %v7773 = vmul.f32 1.0, %v7772
      %v7774 = vrcp.pop %v7382
      %v7775 = vmul.f32 %v7382, %v7774
      %v7776 = vsub.f32 1.0, %v7775
      %v7777 = vmul.f32 %v7774, %v7776
      %v7778 = vadd.f32 %v7774, %v7777
      %vm7779 = vweird.f32 %v7382
      %vm7780 = vweird.f32 %v7774
      %vm7781 = vmor %vm7779, %vm7780
      %v7782 = vsel %vm7781, %v7774, %v7778
      %v7783 = vand.u32 2147483647, %v7382
      %vm7784 = vcmp.eq.f32.partialorder %v7783, 8.507059e+37
      %v7785 = vand.u32 %v7382, 2147483648
      %v7786 = vor.u32 1.1754944e-38, %v7785
      %v7787 = vsel %vm7784, %v7786, %v7782
      %v7788 = vmul.f32 1.0, %v7787
      %v7789 = vrcp.pop %v7383
      %v7790 = vmul.f32 %v7383, %v7789
      %v7791 = vsub.f32 1.0, %v7790
      %v7792 = vmul.f32 %v7789, %v7791
      %v7793 = vadd.f32 %v7789, %v7792
      %vm7794 = vweird.f32 %v7383
      %vm7795 = vweird.f32 %v7789
      %vm7796 = vmor %vm7794, %vm7795
      %v7797 = vsel %vm7796, %v7789, %v7793
      %v7798 = vand.u32 2147483647, %v7383
      %vm7799 = vcmp.eq.f32.partialorder %v7798, 8.507059e+37
      %v7800 = vand.u32 %v7383, 2147483648
      %v7801 = vor.u32 1.1754944e-38, %v7800
      %v7802 = vsel %vm7799, %v7801, %v7797
      %v7803 = vmul.f32 1.0, %v7802
      %v7804 = vrcp.pop %v7384
      %v7805 = vmul.f32 %v7384, %v7804
      %v7806 = vsub.f32 1.0, %v7805
      %v7807 = vmul.f32 %v7804, %v7806
      %v7808 = vadd.f32 %v7804, %v7807
      %vm7809 = vweird.f32 %v7384
      %vm7810 = vweird.f32 %v7804
      %vm7811 = vmor %vm7809, %vm7810
      %v7812 = vsel %vm7811, %v7804, %v7808
      %v7813 = vand.u32 2147483647, %v7384
      %vm7814 = vcmp.eq.f32.partialorder %v7813, 8.507059e+37
      %v7815 = vand.u32 %v7384, 2147483648
      %v7816 = vor.u32 1.1754944e-38, %v7815
      %v7817 = vsel %vm7814, %v7816, %v7812
      %v7818 = vmul.f32 1.0, %v7817
      %v7819 = vrcp.pop %v7385
      %v7820 = vmul.f32 %v7385, %v7819
      %v7821 = vsub.f32 1.0, %v7820
      %v7822 = vmul.f32 %v7819, %v7821
      %v7823 = vadd.f32 %v7819, %v7822
      %vm7824 = vweird.f32 %v7385
      %vm7825 = vweird.f32 %v7819
      %vm7826 = vmor %vm7824, %vm7825
      %v7827 = vsel %vm7826, %v7819, %v7823
      %v7828 = vand.u32 2147483647, %v7385
      %vm7829 = vcmp.eq.f32.partialorder %v7828, 8.507059e+37
      %v7830 = vand.u32 %v7385, 2147483648
      %v7831 = vor.u32 1.1754944e-38, %v7830
      %v7832 = vsel %vm7829, %v7831, %v7827
      %v7833 = vmul.f32 1.0, %v7832
      %v7834 = vrcp.pop %v7386
      %v7835 = vmul.f32 %v7386, %v7834
      %v7836 = vsub.f32 1.0, %v7835
      %v7837 = vmul.f32 %v7834, %v7836
      %v7838 = vadd.f32 %v7834, %v7837
      %vm7839 = vweird.f32 %v7386
      %vm7840 = vweird.f32 %v7834
      %vm7841 = vmor %vm7839, %vm7840
      %v7842 = vsel %vm7841, %v7834, %v7838
      %v7843 = vand.u32 2147483647, %v7386
      %vm7844 = vcmp.eq.f32.partialorder %v7843, 8.507059e+37
      %v7845 = vand.u32 %v7386, 2147483648
      %v7846 = vor.u32 1.1754944e-38, %v7845
      %v7847 = vsel %vm7844, %v7846, %v7842
      %v7848 = vmul.f32 1.0, %v7847
      %v7849 = vrcp.pop %v7387
      %v7850 = vmul.f32 %v7387, %v7849
      %v7851 = vsub.f32 1.0, %v7850
      %v7852 = vmul.f32 %v7849, %v7851
      %v7853 = vadd.f32 %v7849, %v7852
      %vm7854 = vweird.f32 %v7387
      %vm7855 = vweird.f32 %v7849
      %vm7856 = vmor %vm7854, %vm7855
      %v7857 = vsel %vm7856, %v7849, %v7853
      %v7858 = vand.u32 2147483647, %v7387
      %vm7859 = vcmp.eq.f32.partialorder %v7858, 8.507059e+37
      %v7860 = vand.u32 %v7387, 2147483648
      %v7861 = vor.u32 1.1754944e-38, %v7860
      %v7862 = vsel %vm7859, %v7861, %v7857
      %v7863 = vmul.f32 1.0, %v7862
      %v7864 = vrcp.pop %v7388
      %v7865 = vmul.f32 %v7388, %v7864
      %v7866 = vsub.f32 1.0, %v7865
      %v7867 = vmul.f32 %v7864, %v7866
      %v7868 = vadd.f32 %v7864, %v7867
      %vm7869 = vweird.f32 %v7388
      %vm7870 = vweird.f32 %v7864
      %vm7871 = vmor %vm7869, %vm7870
      %v7872 = vsel %vm7871, %v7864, %v7868
      %v7873 = vand.u32 2147483647, %v7388
      %vm7874 = vcmp.eq.f32.partialorder %v7873, 8.507059e+37
      %v7875 = vand.u32 %v7388, 2147483648
      %v7876 = vor.u32 1.1754944e-38, %v7875
      %v7877 = vsel %vm7874, %v7876, %v7872
      %v7878 = vmul.f32 1.0, %v7877
      %v7879 = vrcp.pop %v7389
      %v7880 = vmul.f32 %v7389, %v7879
      %v7881 = vsub.f32 1.0, %v7880
      %v7882 = vmul.f32 %v7879, %v7881
      %v7883 = vadd.f32 %v7879, %v7882
      %vm7884 = vweird.f32 %v7389
      %vm7885 = vweird.f32 %v7879
      %vm7886 = vmor %vm7884, %vm7885
      %v7887 = vsel %vm7886, %v7879, %v7883
      %v7888 = vand.u32 2147483647, %v7389
      %vm7889 = vcmp.eq.f32.partialorder %v7888, 8.507059e+37
      %v7890 = vand.u32 %v7389, 2147483648
      %v7891 = vor.u32 1.1754944e-38, %v7890
      %v7892 = vsel %vm7889, %v7891, %v7887
      %v7893 = vmul.f32 1.0, %v7892
      %v7894 = vrcp.pop %v7390
      %v7895 = vmul.f32 %v7390, %v7894
      %v7896 = vsub.f32 1.0, %v7895
      %v7897 = vmul.f32 %v7894, %v7896
      %v7898 = vadd.f32 %v7894, %v7897
      %vm7899 = vweird.f32 %v7390
      %vm7900 = vweird.f32 %v7894
      %vm7901 = vmor %vm7899, %vm7900
      %v7902 = vsel %vm7901, %v7894, %v7898
      %v7903 = vand.u32 2147483647, %v7390
      %vm7904 = vcmp.eq.f32.partialorder %v7903, 8.507059e+37
      %v7905 = vand.u32 %v7390, 2147483648
      %v7906 = vor.u32 1.1754944e-38, %v7905
      %v7907 = vsel %vm7904, %v7906, %v7902
      %v7908 = vmul.f32 1.0, %v7907
      %v7909 = vrcp.pop %v7391
      %v7910 = vmul.f32 %v7391, %v7909
      %v7911 = vsub.f32 1.0, %v7910
      %v7912 = vmul.f32 %v7909, %v7911
      %v7913 = vadd.f32 %v7909, %v7912
      %vm7914 = vweird.f32 %v7391
      %vm7915 = vweird.f32 %v7909
      %vm7916 = vmor %vm7914, %vm7915
      %v7917 = vsel %vm7916, %v7909, %v7913
      %v7918 = vand.u32 2147483647, %v7391
      %vm7919 = vcmp.eq.f32.partialorder %v7918, 8.507059e+37
      %v7920 = vand.u32 %v7391, 2147483648
      %v7921 = vor.u32 1.1754944e-38, %v7920
      %v7922 = vsel %vm7919, %v7921, %v7917
      %v7923 = vmul.f32 1.0, %v7922
      %v7924 = vrcp.pop %v7392
      %v7925 = vmul.f32 %v7392, %v7924
      %v7926 = vsub.f32 1.0, %v7925
      %v7927 = vmul.f32 %v7924, %v7926
      %v7928 = vadd.f32 %v7924, %v7927
      %vm7929 = vweird.f32 %v7392
      %vm7930 = vweird.f32 %v7924
      %vm7931 = vmor %vm7929, %vm7930
      %v7932 = vsel %vm7931, %v7924, %v7928
      %v7933 = vand.u32 2147483647, %v7392
      %vm7934 = vcmp.eq.f32.partialorder %v7933, 8.507059e+37
      %v7935 = vand.u32 %v7392, 2147483648
      %v7936 = vor.u32 1.1754944e-38, %v7935
      %v7937 = vsel %vm7934, %v7936, %v7932
      %v7938 = vmul.f32 1.0, %v7937
      %v7939 = vrcp.pop %v7393
      %v7940 = vmul.f32 %v7393, %v7939
      %v7941 = vsub.f32 1.0, %v7940
      %v7942 = vmul.f32 %v7939, %v7941
      %v7943 = vadd.f32 %v7939, %v7942
      %vm7944 = vweird.f32 %v7393
      %vm7945 = vweird.f32 %v7939
      %vm7946 = vmor %vm7944, %vm7945
      %v7947 = vsel %vm7946, %v7939, %v7943
      %v7948 = vand.u32 2147483647, %v7393
      %vm7949 = vcmp.eq.f32.partialorder %v7948, 8.507059e+37
      %v7950 = vand.u32 %v7393, 2147483648
      %v7951 = vor.u32 1.1754944e-38, %v7950
      %v7952 = vsel %vm7949, %v7951, %v7947
      %v7953 = vmul.f32 1.0, %v7952
      %v7954 = vrcp.pop %v7394
      %v7955 = vmul.f32 %v7394, %v7954
      %v7956 = vsub.f32 1.0, %v7955
      %v7957 = vmul.f32 %v7954, %v7956
      %v7958 = vadd.f32 %v7954, %v7957
      %vm7959 = vweird.f32 %v7394
      %vm7960 = vweird.f32 %v7954
      %vm7961 = vmor %vm7959, %vm7960
      %v7962 = vsel %vm7961, %v7954, %v7958
      %v7963 = vand.u32 2147483647, %v7394
      %vm7964 = vcmp.eq.f32.partialorder %v7963, 8.507059e+37
      %v7965 = vand.u32 %v7394, 2147483648
      %v7966 = vor.u32 1.1754944e-38, %v7965
      %v7967 = vsel %vm7964, %v7966, %v7962
      %v7968 = vmul.f32 1.0, %v7967
      %v7969 = vrcp.pop %v7395
      %v7970 = vmul.f32 %v7395, %v7969
      %v7971 = vsub.f32 1.0, %v7970
      %v7972 = vmul.f32 %v7969, %v7971
      %v7973 = vadd.f32 %v7969, %v7972
      %vm7974 = vweird.f32 %v7395
      %vm7975 = vweird.f32 %v7969
      %vm7976 = vmor %vm7974, %vm7975
      %v7977 = vsel %vm7976, %v7969, %v7973
      %v7978 = vand.u32 2147483647, %v7395
      %vm7979 = vcmp.eq.f32.partialorder %v7978, 8.507059e+37
      %v7980 = vand.u32 %v7395, 2147483648
      %v7981 = vor.u32 1.1754944e-38, %v7980
      %v7982 = vsel %vm7979, %v7981, %v7977
      %v7983 = vmul.f32 1.0, %v7982
      %v7984 = vrcp.pop %v7396
      %v7985 = vmul.f32 %v7396, %v7984
      %v7986 = vsub.f32 1.0, %v7985
      %v7987 = vmul.f32 %v7984, %v7986
      %v7988 = vadd.f32 %v7984, %v7987
      %vm7989 = vweird.f32 %v7396
      %vm7990 = vweird.f32 %v7984
      %vm7991 = vmor %vm7989, %vm7990
      %v7992 = vsel %vm7991, %v7984, %v7988
      %v7993 = vand.u32 2147483647, %v7396
      %vm7994 = vcmp.eq.f32.partialorder %v7993, 8.507059e+37
      %v7995 = vand.u32 %v7396, 2147483648
      %v7996 = vor.u32 1.1754944e-38, %v7995
      %v7997 = vsel %vm7994, %v7996, %v7992
      %v7998 = vmul.f32 1.0, %v7997
      %v7999 = vrcp.pop %v7397
      %v8000 = vmul.f32 %v7397, %v7999
      %v8001 = vsub.f32 1.0, %v8000
      %v8002 = vmul.f32 %v7999, %v8001
      %v8003 = vadd.f32 %v7999, %v8002
      %vm8004 = vweird.f32 %v7397
      %vm8005 = vweird.f32 %v7999
      %vm8006 = vmor %vm8004, %vm8005
      %v8007 = vsel %vm8006, %v7999, %v8003
      %v8008 = vand.u32 2147483647, %v7397
      %vm8009 = vcmp.eq.f32.partialorder %v8008, 8.507059e+37
      %v8010 = vand.u32 %v7397, 2147483648
      %v8011 = vor.u32 1.1754944e-38, %v8010
      %v8012 = vsel %vm8009, %v8011, %v8007
      %v8013 = vmul.f32 1.0, %v8012
      %v8014 = vrcp.pop %v7398
      %v8015 = vmul.f32 %v7398, %v8014
      %v8016 = vsub.f32 1.0, %v8015
      %v8017 = vmul.f32 %v8014, %v8016
      %v8018 = vadd.f32 %v8014, %v8017
      %vm8019 = vweird.f32 %v7398
      %vm8020 = vweird.f32 %v8014
      %vm8021 = vmor %vm8019, %vm8020
      %v8022 = vsel %vm8021, %v8014, %v8018
      %v8023 = vand.u32 2147483647, %v7398
      %vm8024 = vcmp.eq.f32.partialorder %v8023, 8.507059e+37
      %v8025 = vand.u32 %v7398, 2147483648
      %v8026 = vor.u32 1.1754944e-38, %v8025
      %v8027 = vsel %vm8024, %v8026, %v8022
      %v8028 = vmul.f32 1.0, %v8027
      %v8029 = vrcp.pop %v7399
      %v8030 = vmul.f32 %v7399, %v8029
      %v8031 = vsub.f32 1.0, %v8030
      %v8032 = vmul.f32 %v8029, %v8031
      %v8033 = vadd.f32 %v8029, %v8032
      %vm8034 = vweird.f32 %v7399
      %vm8035 = vweird.f32 %v8029
      %vm8036 = vmor %vm8034, %vm8035
      %v8037 = vsel %vm8036, %v8029, %v8033
      %v8038 = vand.u32 2147483647, %v7399
      %vm8039 = vcmp.eq.f32.partialorder %v8038, 8.507059e+37
      %v8040 = vand.u32 %v7399, 2147483648
      %v8041 = vor.u32 1.1754944e-38, %v8040
      %v8042 = vsel %vm8039, %v8041, %v8037
      %v8043 = vmul.f32 1.0, %v8042
      %v8044 = vrcp.pop %v7400
      %v8045 = vmul.f32 %v7400, %v8044
      %v8046 = vsub.f32 1.0, %v8045
      %v8047 = vmul.f32 %v8044, %v8046
      %v8048 = vadd.f32 %v8044, %v8047
      %vm8049 = vweird.f32 %v7400
      %vm8050 = vweird.f32 %v8044
      %vm8051 = vmor %vm8049, %vm8050
      %v8052 = vsel %vm8051, %v8044, %v8048
      %v8053 = vand.u32 2147483647, %v7400
      %vm8054 = vcmp.eq.f32.partialorder %v8053, 8.507059e+37
      %v8055 = vand.u32 %v7400, 2147483648
      %v8056 = vor.u32 1.1754944e-38, %v8055
      %v8057 = vsel %vm8054, %v8056, %v8052
      %v8058 = vmul.f32 1.0, %v8057
      %v8059 = vrcp.pop %v7401
      %v8060 = vmul.f32 %v7401, %v8059
      %v8061 = vsub.f32 1.0, %v8060
      %v8062 = vmul.f32 %v8059, %v8061
      %v8063 = vadd.f32 %v8059, %v8062
      %vm8064 = vweird.f32 %v7401
      %vm8065 = vweird.f32 %v8059
      %vm8066 = vmor %vm8064, %vm8065
      %v8067 = vsel %vm8066, %v8059, %v8063
      %v8068 = vand.u32 2147483647, %v7401
      %vm8069 = vcmp.eq.f32.partialorder %v8068, 8.507059e+37
      %v8070 = vand.u32 %v7401, 2147483648
      %v8071 = vor.u32 1.1754944e-38, %v8070
      %v8072 = vsel %vm8069, %v8071, %v8067
      %v8073 = vmul.f32 1.0, %v8072
      %v8074 = vrcp.pop %v7402
      %v8075 = vmul.f32 %v7402, %v8074
      %v8076 = vsub.f32 1.0, %v8075
      %v8077 = vmul.f32 %v8074, %v8076
      %v8078 = vadd.f32 %v8074, %v8077
      %vm8079 = vweird.f32 %v7402
      %vm8080 = vweird.f32 %v8074
      %vm8081 = vmor %vm8079, %vm8080
      %v8082 = vsel %vm8081, %v8074, %v8078
      %v8083 = vand.u32 2147483647, %v7402
      %vm8084 = vcmp.eq.f32.partialorder %v8083, 8.507059e+37
      %v8085 = vand.u32 %v7402, 2147483648
      %v8086 = vor.u32 1.1754944e-38, %v8085
      %v8087 = vsel %vm8084, %v8086, %v8082
      %v8088 = vmul.f32 1.0, %v8087
      %v8089 = vrcp.pop %v7403
      %v8090 = vmul.f32 %v7403, %v8089
      %v8091 = vsub.f32 1.0, %v8090
      %v8092 = vmul.f32 %v8089, %v8091
      %v8093 = vadd.f32 %v8089, %v8092
      %vm8094 = vweird.f32 %v7403
      %vm8095 = vweird.f32 %v8089
      %vm8096 = vmor %vm8094, %vm8095
      %v8097 = vsel %vm8096, %v8089, %v8093
      %v8098 = vand.u32 2147483647, %v7403
      %vm8099 = vcmp.eq.f32.partialorder %v8098, 8.507059e+37
      %v8100 = vand.u32 %v7403, 2147483648
      %v8101 = vor.u32 1.1754944e-38, %v8100
      %v8102 = vsel %vm8099, %v8101, %v8097
      %v8103 = vmul.f32 1.0, %v8102
      %v8104 = vrcp.pop %v7404
      %v8105 = vmul.f32 %v7404, %v8104
      %v8106 = vsub.f32 1.0, %v8105
      %v8107 = vmul.f32 %v8104, %v8106
      %v8108 = vadd.f32 %v8104, %v8107
      %vm8109 = vweird.f32 %v7404
      %vm8110 = vweird.f32 %v8104
      %vm8111 = vmor %vm8109, %vm8110
      %v8112 = vsel %vm8111, %v8104, %v8108
      %v8113 = vand.u32 2147483647, %v7404
      %vm8114 = vcmp.eq.f32.partialorder %v8113, 8.507059e+37
      %v8115 = vand.u32 %v7404, 2147483648
      %v8116 = vor.u32 1.1754944e-38, %v8115
      %v8117 = vsel %vm8114, %v8116, %v8112
      %v8118 = vmul.f32 1.0, %v8117
      %v8119 = vrcp.pop %v7405
      %v8120 = vmul.f32 %v7405, %v8119
      %v8121 = vsub.f32 1.0, %v8120
      %v8122 = vmul.f32 %v8119, %v8121
      %v8123 = vadd.f32 %v8119, %v8122
      %vm8124 = vweird.f32 %v7405
      %vm8125 = vweird.f32 %v8119
      %vm8126 = vmor %vm8124, %vm8125
      %v8127 = vsel %vm8126, %v8119, %v8123
      %v8128 = vand.u32 2147483647, %v7405
      %vm8129 = vcmp.eq.f32.partialorder %v8128, 8.507059e+37
      %v8130 = vand.u32 %v7405, 2147483648
      %v8131 = vor.u32 1.1754944e-38, %v8130
      %v8132 = vsel %vm8129, %v8131, %v8127
      %v8133 = vmul.f32 1.0, %v8132
      %v8134 = vrcp.pop %v7406
      %v8135 = vmul.f32 %v7406, %v8134
      %v8136 = vsub.f32 1.0, %v8135
      %v8137 = vmul.f32 %v8134, %v8136
      %v8138 = vadd.f32 %v8134, %v8137
      %vm8139 = vweird.f32 %v7406
      %vm8140 = vweird.f32 %v8134
      %vm8141 = vmor %vm8139, %vm8140
      %v8142 = vsel %vm8141, %v8134, %v8138
      %v8143 = vand.u32 2147483647, %v7406
      %vm8144 = vcmp.eq.f32.partialorder %v8143, 8.507059e+37
      %v8145 = vand.u32 %v7406, 2147483648
      %v8146 = vor.u32 1.1754944e-38, %v8145
      %v8147 = vsel %vm8144, %v8146, %v8142
      %v8148 = vmul.f32 1.0, %v8147
      %v8149 = vrcp.pop %v7407
      %v8150 = vmul.f32 %v7407, %v8149
      %v8151 = vsub.f32 1.0, %v8150
      %v8152 = vmul.f32 %v8149, %v8151
      %v8153 = vadd.f32 %v8149, %v8152
      %vm8154 = vweird.f32 %v7407
      %vm8155 = vweird.f32 %v8149
      %vm8156 = vmor %vm8154, %vm8155
      %v8157 = vsel %vm8156, %v8149, %v8153
      %v8158 = vand.u32 2147483647, %v7407
      %vm8159 = vcmp.eq.f32.partialorder %v8158, 8.507059e+37
      %v8160 = vand.u32 %v7407, 2147483648
      %v8161 = vor.u32 1.1754944e-38, %v8160
      %v8162 = vsel %vm8159, %v8161, %v8157
      %v8163 = vmul.f32 1.0, %v8162
      %v8164 = vrcp.pop %v7408
      %v8165 = vmul.f32 %v7408, %v8164
      %v8166 = vsub.f32 1.0, %v8165
      %v8167 = vmul.f32 %v8164, %v8166
      %v8168 = vadd.f32 %v8164, %v8167
      %vm8169 = vweird.f32 %v7408
      %vm8170 = vweird.f32 %v8164
      %vm8171 = vmor %vm8169, %vm8170
      %v8172 = vsel %vm8171, %v8164, %v8168
      %v8173 = vand.u32 2147483647, %v7408
      %vm8174 = vcmp.eq.f32.partialorder %v8173, 8.507059e+37
      %v8175 = vand.u32 %v7408, 2147483648
      %v8176 = vor.u32 1.1754944e-38, %v8175
      %v8177 = vsel %vm8174, %v8176, %v8172
      %v8178 = vmul.f32 1.0, %v8177
      %v8179 = vrcp.pop %v7409
      %v8180 = vmul.f32 %v7409, %v8179
      %v8181 = vsub.f32 1.0, %v8180
      %v8182 = vmul.f32 %v8179, %v8181
      %v8183 = vadd.f32 %v8179, %v8182
      %vm8184 = vweird.f32 %v7409
      %vm8185 = vweird.f32 %v8179
      %vm8186 = vmor %vm8184, %vm8185
      %v8187 = vsel %vm8186, %v8179, %v8183
      %v8188 = vand.u32 2147483647, %v7409
      %vm8189 = vcmp.eq.f32.partialorder %v8188, 8.507059e+37
      %v8190 = vand.u32 %v7409, 2147483648
      %v8191 = vor.u32 1.1754944e-38, %v8190
      %v8192 = vsel %vm8189, %v8191, %v8187
      %v8193 = vmul.f32 1.0, %v8192
      %v8194 = vrcp.pop %v7410
      %v8195 = vmul.f32 %v7410, %v8194
      %v8196 = vsub.f32 1.0, %v8195
      %v8197 = vmul.f32 %v8194, %v8196
      %v8198 = vadd.f32 %v8194, %v8197
      %vm8199 = vweird.f32 %v7410
      %vm8200 = vweird.f32 %v8194
      %vm8201 = vmor %vm8199, %vm8200
      %v8202 = vsel %vm8201, %v8194, %v8198
      %v8203 = vand.u32 2147483647, %v7410
      %vm8204 = vcmp.eq.f32.partialorder %v8203, 8.507059e+37
      %v8205 = vand.u32 %v7410, 2147483648
      %v8206 = vor.u32 1.1754944e-38, %v8205
      %v8207 = vsel %vm8204, %v8206, %v8202
      %v8208 = vmul.f32 1.0, %v8207
      %v8209 = vrcp.pop %v7411
      %v8210 = vmul.f32 %v7411, %v8209
      %v8211 = vsub.f32 1.0, %v8210
      %v8212 = vmul.f32 %v8209, %v8211
      %v8213 = vadd.f32 %v8209, %v8212
      %vm8214 = vweird.f32 %v7411
      %vm8215 = vweird.f32 %v8209
      %vm8216 = vmor %vm8214, %vm8215
      %v8217 = vsel %vm8216, %v8209, %v8213
      %v8218 = vand.u32 2147483647, %v7411
      %vm8219 = vcmp.eq.f32.partialorder %v8218, 8.507059e+37
      %v8220 = vand.u32 %v7411, 2147483648
      %v8221 = vor.u32 1.1754944e-38, %v8220
      %v8222 = vsel %vm8219, %v8221, %v8217
      %v8223 = vmul.f32 1.0, %v8222
      %v8224 = vrcp.pop %v7412
      %v8225 = vmul.f32 %v7412, %v8224
      %v8226 = vsub.f32 1.0, %v8225
      %v8227 = vmul.f32 %v8224, %v8226
      %v8228 = vadd.f32 %v8224, %v8227
      %vm8229 = vweird.f32 %v7412
      %vm8230 = vweird.f32 %v8224
      %vm8231 = vmor %vm8229, %vm8230
      %v8232 = vsel %vm8231, %v8224, %v8228
      %v8233 = vand.u32 2147483647, %v7412
      %vm8234 = vcmp.eq.f32.partialorder %v8233, 8.507059e+37
      %v8235 = vand.u32 %v7412, 2147483648
      %v8236 = vor.u32 1.1754944e-38, %v8235
      %v8237 = vsel %vm8234, %v8236, %v8232
      %v8238 = vmul.f32 1.0, %v8237
      %v8239 = vrcp.pop %v7413
      %v8240 = vmul.f32 %v7413, %v8239
      %v8241 = vsub.f32 1.0, %v8240
      %v8242 = vmul.f32 %v8239, %v8241
      %v8243 = vadd.f32 %v8239, %v8242
      %vm8244 = vweird.f32 %v7413
      %vm8245 = vweird.f32 %v8239
      %vm8246 = vmor %vm8244, %vm8245
      %v8247 = vsel %vm8246, %v8239, %v8243
      %v8248 = vand.u32 2147483647, %v7413
      %vm8249 = vcmp.eq.f32.partialorder %v8248, 8.507059e+37
      %v8250 = vand.u32 %v7413, 2147483648
      %v8251 = vor.u32 1.1754944e-38, %v8250
      %v8252 = vsel %vm8249, %v8251, %v8247
      %v8253 = vmul.f32 1.0, %v8252
      %v8254 = vrcp.pop %v7414
      %v8255 = vmul.f32 %v7414, %v8254
      %v8256 = vsub.f32 1.0, %v8255
      %v8257 = vmul.f32 %v8254, %v8256
      %v8258 = vadd.f32 %v8254, %v8257
      %vm8259 = vweird.f32 %v7414
      %vm8260 = vweird.f32 %v8254
      %vm8261 = vmor %vm8259, %vm8260
      %v8262 = vsel %vm8261, %v8254, %v8258
      %v8263 = vand.u32 2147483647, %v7414
      %vm8264 = vcmp.eq.f32.partialorder %v8263, 8.507059e+37
      %v8265 = vand.u32 %v7414, 2147483648
      %v8266 = vor.u32 1.1754944e-38, %v8265
      %v8267 = vsel %vm8264, %v8266, %v8262
      %v8268 = vmul.f32 1.0, %v8267
      %v8269 = vrcp.pop %v7415
      %v8270 = vmul.f32 %v7415, %v8269
      %v8271 = vsub.f32 1.0, %v8270
      %v8272 = vmul.f32 %v8269, %v8271
      %v8273 = vadd.f32 %v8269, %v8272
      %vm8274 = vweird.f32 %v7415
      %vm8275 = vweird.f32 %v8269
      %vm8276 = vmor %vm8274, %vm8275
      %v8277 = vsel %vm8276, %v8269, %v8273
      %v8278 = vand.u32 2147483647, %v7415
      %vm8279 = vcmp.eq.f32.partialorder %v8278, 8.507059e+37
      %v8280 = vand.u32 %v7415, 2147483648
      %v8281 = vor.u32 1.1754944e-38, %v8280
      %v8282 = vsel %vm8279, %v8281, %v8277
      %v8283 = vmul.f32 1.0, %v8282
      %v8284 = vrcp.pop %v7416
      %v8285 = vmul.f32 %v7416, %v8284
      %v8286 = vsub.f32 1.0, %v8285
      %v8287 = vmul.f32 %v8284, %v8286
      %v8288 = vadd.f32 %v8284, %v8287
      %vm8289 = vweird.f32 %v7416
      %vm8290 = vweird.f32 %v8284
      %vm8291 = vmor %vm8289, %vm8290
      %v8292 = vsel %vm8291, %v8284, %v8288
      %v8293 = vand.u32 2147483647, %v7416
      %vm8294 = vcmp.eq.f32.partialorder %v8293, 8.507059e+37
      %v8295 = vand.u32 %v7416, 2147483648
      %v8296 = vor.u32 1.1754944e-38, %v8295
      %v8297 = vsel %vm8294, %v8296, %v8292
      %v8298 = vmul.f32 1.0, %v8297
      %v8299 = vrcp.pop %v7417
      %v8300 = vmul.f32 %v7417, %v8299
      %v8301 = vsub.f32 1.0, %v8300
      %v8302 = vmul.f32 %v8299, %v8301
      %v8303 = vadd.f32 %v8299, %v8302
      %vm8304 = vweird.f32 %v7417
      %vm8305 = vweird.f32 %v8299
      %vm8306 = vmor %vm8304, %vm8305
      %v8307 = vsel %vm8306, %v8299, %v8303
      %v8308 = vand.u32 2147483647, %v7417
      %vm8309 = vcmp.eq.f32.partialorder %v8308, 8.507059e+37
      %v8310 = vand.u32 %v7417, 2147483648
      %v8311 = vor.u32 1.1754944e-38, %v8310
      %v8312 = vsel %vm8309, %v8311, %v8307
      %v8313 = vmul.f32 1.0, %v8312
      %v8314 = vrcp.pop %v7418
      %v8315 = vmul.f32 %v7418, %v8314
      %v8316 = vsub.f32 1.0, %v8315
      %v8317 = vmul.f32 %v8314, %v8316
      %v8318 = vadd.f32 %v8314, %v8317
      %vm8319 = vweird.f32 %v7418
      %vm8320 = vweird.f32 %v8314
      %vm8321 = vmor %vm8319, %vm8320
      %v8322 = vsel %vm8321, %v8314, %v8318
      %v8323 = vand.u32 2147483647, %v7418
      %vm8324 = vcmp.eq.f32.partialorder %v8323, 8.507059e+37
      %v8325 = vand.u32 %v7418, 2147483648
      %v8326 = vor.u32 1.1754944e-38, %v8325
      %v8327 = vsel %vm8324, %v8326, %v8322
      %v8328 = vmul.f32 1.0, %v8327
      %v8329 = vrcp.pop %v7419
      %v8330 = vmul.f32 %v7419, %v8329
      %v8331 = vsub.f32 1.0, %v8330
      %v8332 = vmul.f32 %v8329, %v8331
      %v8333 = vadd.f32 %v8329, %v8332
      %vm8334 = vweird.f32 %v7419
      %vm8335 = vweird.f32 %v8329
      %vm8336 = vmor %vm8334, %vm8335
      %v8337 = vsel %vm8336, %v8329, %v8333
      %v8338 = vand.u32 2147483647, %v7419
      %vm8339 = vcmp.eq.f32.partialorder %v8338, 8.507059e+37
      %v8340 = vand.u32 %v7419, 2147483648
      %v8341 = vor.u32 1.1754944e-38, %v8340
      %v8342 = vsel %vm8339, %v8341, %v8337
      %v8343 = vmul.f32 1.0, %v8342
      %v8344 = vrcp.pop %v7420
      %v8345 = vmul.f32 %v7420, %v8344
      %v8346 = vsub.f32 1.0, %v8345
      %v8347 = vmul.f32 %v8344, %v8346
      %v8348 = vadd.f32 %v8344, %v8347
      %vm8349 = vweird.f32 %v7420
      %vm8350 = vweird.f32 %v8344
      %vm8351 = vmor %vm8349, %vm8350
      %v8352 = vsel %vm8351, %v8344, %v8348
      %v8353 = vand.u32 2147483647, %v7420
      %vm8354 = vcmp.eq.f32.partialorder %v8353, 8.507059e+37
      %v8355 = vand.u32 %v7420, 2147483648
      %v8356 = vor.u32 1.1754944e-38, %v8355
      %v8357 = vsel %vm8354, %v8356, %v8352
      %v8358 = vmul.f32 1.0, %v8357
      %v8359 = vrcp.pop %v7421
      %v8360 = vmul.f32 %v7421, %v8359
      %v8361 = vsub.f32 1.0, %v8360
      %v8362 = vmul.f32 %v8359, %v8361
      %v8363 = vadd.f32 %v8359, %v8362
      %vm8364 = vweird.f32 %v7421
      %vm8365 = vweird.f32 %v8359
      %vm8366 = vmor %vm8364, %vm8365
      %v8367 = vsel %vm8366, %v8359, %v8363
      %v8368 = vand.u32 2147483647, %v7421
      %vm8369 = vcmp.eq.f32.partialorder %v8368, 8.507059e+37
      %v8370 = vand.u32 %v7421, 2147483648
      %v8371 = vor.u32 1.1754944e-38, %v8370
      %v8372 = vsel %vm8369, %v8371, %v8367
      %v8373 = vmul.f32 1.0, %v8372
      %v8374 = vrcp.pop %v7422
      %v8375 = vmul.f32 %v7422, %v8374
      %v8376 = vsub.f32 1.0, %v8375
      %v8377 = vmul.f32 %v8374, %v8376
      %v8378 = vadd.f32 %v8374, %v8377
      %vm8379 = vweird.f32 %v7422
      %vm8380 = vweird.f32 %v8374
      %vm8381 = vmor %vm8379, %vm8380
      %v8382 = vsel %vm8381, %v8374, %v8378
      %v8383 = vand.u32 2147483647, %v7422
      %vm8384 = vcmp.eq.f32.partialorder %v8383, 8.507059e+37
      %v8385 = vand.u32 %v7422, 2147483648
      %v8386 = vor.u32 1.1754944e-38, %v8385
      %v8387 = vsel %vm8384, %v8386, %v8382
      %v8388 = vmul.f32 1.0, %v8387
      %v8389 = vrcp.pop %v7423
      %v8390 = vmul.f32 %v7423, %v8389
      %v8391 = vsub.f32 1.0, %v8390
      %v8392 = vmul.f32 %v8389, %v8391
      %v8393 = vadd.f32 %v8389, %v8392
      %vm8394 = vweird.f32 %v7423
      %vm8395 = vweird.f32 %v8389
      %vm8396 = vmor %vm8394, %vm8395
      %v8397 = vsel %vm8396, %v8389, %v8393
      %v8398 = vand.u32 2147483647, %v7423
      %vm8399 = vcmp.eq.f32.partialorder %v8398, 8.507059e+37
      %v8400 = vand.u32 %v7423, 2147483648
      %v8401 = vor.u32 1.1754944e-38, %v8400
      %v8402 = vsel %vm8399, %v8401, %v8397
      %v8403 = vmul.f32 1.0, %v8402
      %v8404 = vrcp.pop %v7424
      %v8405 = vmul.f32 %v7424, %v8404
      %v8406 = vsub.f32 1.0, %v8405
      %v8407 = vmul.f32 %v8404, %v8406
      %v8408 = vadd.f32 %v8404, %v8407
      %vm8409 = vweird.f32 %v7424
      %vm8410 = vweird.f32 %v8404
      %vm8411 = vmor %vm8409, %vm8410
      %v8412 = vsel %vm8411, %v8404, %v8408
      %v8413 = vand.u32 2147483647, %v7424
      %vm8414 = vcmp.eq.f32.partialorder %v8413, 8.507059e+37
      %v8415 = vand.u32 %v7424, 2147483648
      %v8416 = vor.u32 1.1754944e-38, %v8415
      %v8417 = vsel %vm8414, %v8416, %v8412
      %v8418 = vmul.f32 1.0, %v8417
      %v8419 = vrcp.pop %v7425
      %v8420 = vmul.f32 %v7425, %v8419
      %v8421 = vsub.f32 1.0, %v8420
      %v8422 = vmul.f32 %v8419, %v8421
      %v8423 = vadd.f32 %v8419, %v8422
      %vm8424 = vweird.f32 %v7425
      %vm8425 = vweird.f32 %v8419
      %vm8426 = vmor %vm8424, %vm8425
      %v8427 = vsel %vm8426, %v8419, %v8423
      %v8428 = vand.u32 2147483647, %v7425
      %vm8429 = vcmp.eq.f32.partialorder %v8428, 8.507059e+37
      %v8430 = vand.u32 %v7425, 2147483648
      %v8431 = vor.u32 1.1754944e-38, %v8430
      %v8432 = vsel %vm8429, %v8431, %v8427
      %v8433 = vmul.f32 1.0, %v8432
      %v8434 = vrcp.pop %v7426
      %v8435 = vmul.f32 %v7426, %v8434
      %v8436 = vsub.f32 1.0, %v8435
      %v8437 = vmul.f32 %v8434, %v8436
      %v8438 = vadd.f32 %v8434, %v8437
      %vm8439 = vweird.f32 %v7426
      %vm8440 = vweird.f32 %v8434
      %vm8441 = vmor %vm8439, %vm8440
      %v8442 = vsel %vm8441, %v8434, %v8438
      %v8443 = vand.u32 2147483647, %v7426
      %vm8444 = vcmp.eq.f32.partialorder %v8443, 8.507059e+37
      %v8445 = vand.u32 %v7426, 2147483648
      %v8446 = vor.u32 1.1754944e-38, %v8445
      %v8447 = vsel %vm8444, %v8446, %v8442
      %v8448 = vmul.f32 1.0, %v8447
      %v8449 = vrcp.pop %v7427
      %v8450 = vmul.f32 %v7427, %v8449
      %v8451 = vsub.f32 1.0, %v8450
      %v8452 = vmul.f32 %v8449, %v8451
      %v8453 = vadd.f32 %v8449, %v8452
      %vm8454 = vweird.f32 %v7427
      %vm8455 = vweird.f32 %v8449
      %vm8456 = vmor %vm8454, %vm8455
      %v8457 = vsel %vm8456, %v8449, %v8453
      %v8458 = vand.u32 2147483647, %v7427
      %vm8459 = vcmp.eq.f32.partialorder %v8458, 8.507059e+37
      %v8460 = vand.u32 %v7427, 2147483648
      %v8461 = vor.u32 1.1754944e-38, %v8460
      %v8462 = vsel %vm8459, %v8461, %v8457
      %v8463 = vmul.f32 1.0, %v8462
      %v8464 = vrcp.pop %v7428
      %v8465 = vmul.f32 %v7428, %v8464
      %v8466 = vsub.f32 1.0, %v8465
      %v8467 = vmul.f32 %v8464, %v8466
      %v8468 = vadd.f32 %v8464, %v8467
      %vm8469 = vweird.f32 %v7428
      %vm8470 = vweird.f32 %v8464
      %vm8471 = vmor %vm8469, %vm8470
      %v8472 = vsel %vm8471, %v8464, %v8468
      %v8473 = vand.u32 2147483647, %v7428
      %vm8474 = vcmp.eq.f32.partialorder %v8473, 8.507059e+37
      %v8475 = vand.u32 %v7428, 2147483648
      %v8476 = vor.u32 1.1754944e-38, %v8475
      %v8477 = vsel %vm8474, %v8476, %v8472
      %v8478 = vmul.f32 1.0, %v8477
      %v8479 = vrcp.pop %v7429
      %v8480 = vmul.f32 %v7429, %v8479
      %v8481 = vsub.f32 1.0, %v8480
      %v8482 = vmul.f32 %v8479, %v8481
      %v8483 = vadd.f32 %v8479, %v8482
      %vm8484 = vweird.f32 %v7429
      %vm8485 = vweird.f32 %v8479
      %vm8486 = vmor %vm8484, %vm8485
      %v8487 = vsel %vm8486, %v8479, %v8483
      %v8488 = vand.u32 2147483647, %v7429
      %vm8489 = vcmp.eq.f32.partialorder %v8488, 8.507059e+37
      %v8490 = vand.u32 %v7429, 2147483648
      %v8491 = vor.u32 1.1754944e-38, %v8490
      %v8492 = vsel %vm8489, %v8491, %v8487
      %v8493 = vmul.f32 1.0, %v8492
      %v8494 = vrcp.pop %v7430
      %v8495 = vmul.f32 %v7430, %v8494
      %v8496 = vsub.f32 1.0, %v8495
      %v8497 = vmul.f32 %v8494, %v8496
      %v8498 = vadd.f32 %v8494, %v8497
      %vm8499 = vweird.f32 %v7430
      %vm8500 = vweird.f32 %v8494
      %vm8501 = vmor %vm8499, %vm8500
      %v8502 = vsel %vm8501, %v8494, %v8498
      %v8503 = vand.u32 2147483647, %v7430
      %vm8504 = vcmp.eq.f32.partialorder %v8503, 8.507059e+37
      %v8505 = vand.u32 %v7430, 2147483648
      %v8506 = vor.u32 1.1754944e-38, %v8505
      %v8507 = vsel %vm8504, %v8506, %v8502
      %v8508 = vmul.f32 1.0, %v8507
      %v8509 = vrcp.pop %v7431
      %v8510 = vmul.f32 %v7431, %v8509
      %v8511 = vsub.f32 1.0, %v8510
      %v8512 = vmul.f32 %v8509, %v8511
      %v8513 = vadd.f32 %v8509, %v8512
      %vm8514 = vweird.f32 %v7431
      %vm8515 = vweird.f32 %v8509
      %vm8516 = vmor %vm8514, %vm8515
      %v8517 = vsel %vm8516, %v8509, %v8513
      %v8518 = vand.u32 2147483647, %v7431
      %vm8519 = vcmp.eq.f32.partialorder %v8518, 8.507059e+37
      %v8520 = vand.u32 %v7431, 2147483648
      %v8521 = vor.u32 1.1754944e-38, %v8520
      %v8522 = vsel %vm8519, %v8521, %v8517
      %v8523 = vmul.f32 1.0, %v8522
      %v8524 = vrcp.pop %v7432
      %v8525 = vmul.f32 %v7432, %v8524
      %v8526 = vsub.f32 1.0, %v8525
      %v8527 = vmul.f32 %v8524, %v8526
      %v8528 = vadd.f32 %v8524, %v8527
      %vm8529 = vweird.f32 %v7432
      %vm8530 = vweird.f32 %v8524
      %vm8531 = vmor %vm8529, %vm8530
      %v8532 = vsel %vm8531, %v8524, %v8528
      %v8533 = vand.u32 2147483647, %v7432
      %vm8534 = vcmp.eq.f32.partialorder %v8533, 8.507059e+37
      %v8535 = vand.u32 %v7432, 2147483648
      %v8536 = vor.u32 1.1754944e-38, %v8535
      %v8537 = vsel %vm8534, %v8536, %v8532
      %v8538 = vmul.f32 1.0, %v8537
      %v8539 = vrcp.pop %v7433
      %v8540 = vmul.f32 %v7433, %v8539
      %v8541 = vsub.f32 1.0, %v8540
      %v8542 = vmul.f32 %v8539, %v8541
      %v8543 = vadd.f32 %v8539, %v8542
      %vm8544 = vweird.f32 %v7433
      %vm8545 = vweird.f32 %v8539
      %vm8546 = vmor %vm8544, %vm8545
      %v8547 = vsel %vm8546, %v8539, %v8543
      %v8548 = vand.u32 2147483647, %v7433
      %vm8549 = vcmp.eq.f32.partialorder %v8548, 8.507059e+37
      %v8550 = vand.u32 %v7433, 2147483648
      %v8551 = vor.u32 1.1754944e-38, %v8550
      %v8552 = vsel %vm8549, %v8551, %v8547
      %v8553 = vmul.f32 1.0, %v8552
      %v8554 = vrcp.pop %v7434
      %v8555 = vmul.f32 %v7434, %v8554
      %v8556 = vsub.f32 1.0, %v8555
      %v8557 = vmul.f32 %v8554, %v8556
      %v8558 = vadd.f32 %v8554, %v8557
      %vm8559 = vweird.f32 %v7434
      %vm8560 = vweird.f32 %v8554
      %vm8561 = vmor %vm8559, %vm8560
      %v8562 = vsel %vm8561, %v8554, %v8558
      %v8563 = vand.u32 2147483647, %v7434
      %vm8564 = vcmp.eq.f32.partialorder %v8563, 8.507059e+37
      %v8565 = vand.u32 %v7434, 2147483648
      %v8566 = vor.u32 1.1754944e-38, %v8565
      %v8567 = vsel %vm8564, %v8566, %v8562
      %v8568 = vmul.f32 1.0, %v8567
      %v8569 = vrcp.pop %v7435
      %v8570 = vmul.f32 %v7435, %v8569
      %v8571 = vsub.f32 1.0, %v8570
      %v8572 = vmul.f32 %v8569, %v8571
      %v8573 = vadd.f32 %v8569, %v8572
      %vm8574 = vweird.f32 %v7435
      %vm8575 = vweird.f32 %v8569
      %vm8576 = vmor %vm8574, %vm8575
      %v8577 = vsel %vm8576, %v8569, %v8573
      %v8578 = vand.u32 2147483647, %v7435
      %vm8579 = vcmp.eq.f32.partialorder %v8578, 8.507059e+37
      %v8580 = vand.u32 %v7435, 2147483648
      %v8581 = vor.u32 1.1754944e-38, %v8580
      %v8582 = vsel %vm8579, %v8581, %v8577
      %v8583 = vmul.f32 1.0, %v8582
      %v8584 = vrcp.pop %v7436
      %v8585 = vmul.f32 %v7436, %v8584
      %v8586 = vsub.f32 1.0, %v8585
      %v8587 = vmul.f32 %v8584, %v8586
      %v8588 = vadd.f32 %v8584, %v8587
      %vm8589 = vweird.f32 %v7436
      %vm8590 = vweird.f32 %v8584
      %vm8591 = vmor %vm8589, %vm8590
      %v8592 = vsel %vm8591, %v8584, %v8588
      %v8593 = vand.u32 2147483647, %v7436
      %vm8594 = vcmp.eq.f32.partialorder %v8593, 8.507059e+37
      %v8595 = vand.u32 %v7436, 2147483648
      %v8596 = vor.u32 1.1754944e-38, %v8595
      %v8597 = vsel %vm8594, %v8596, %v8592
      %v8598 = vmul.f32 1.0, %v8597
      %v8599 = vrcp.pop %v7437
      %v8600 = vmul.f32 %v7437, %v8599
      %v8601 = vsub.f32 1.0, %v8600
      %v8602 = vmul.f32 %v8599, %v8601
      %v8603 = vadd.f32 %v8599, %v8602
      %vm8604 = vweird.f32 %v7437
      %vm8605 = vweird.f32 %v8599
      %vm8606 = vmor %vm8604, %vm8605
      %v8607 = vsel %vm8606, %v8599, %v8603
      %v8608 = vand.u32 2147483647, %v7437
      %vm8609 = vcmp.eq.f32.partialorder %v8608, 8.507059e+37
      %v8610 = vand.u32 %v7437, 2147483648
      %v8611 = vor.u32 1.1754944e-38, %v8610
      %v8612 = vsel %vm8609, %v8611, %v8607
      %v8613 = vmul.f32 1.0, %v8612
      %v8614 = vrcp.pop %v7438
      %v8615 = vmul.f32 %v7438, %v8614
      %v8616 = vsub.f32 1.0, %v8615
      %v8617 = vmul.f32 %v8614, %v8616
      %v8618 = vadd.f32 %v8614, %v8617
      %vm8619 = vweird.f32 %v7438
      %vm8620 = vweird.f32 %v8614
      %vm8621 = vmor %vm8619, %vm8620
      %v8622 = vsel %vm8621, %v8614, %v8618
      %v8623 = vand.u32 2147483647, %v7438
      %vm8624 = vcmp.eq.f32.partialorder %v8623, 8.507059e+37
      %v8625 = vand.u32 %v7438, 2147483648
      %v8626 = vor.u32 1.1754944e-38, %v8625
      %v8627 = vsel %vm8624, %v8626, %v8622
      %v8628 = vmul.f32 1.0, %v8627
      %v8629 = vrcp.pop %v7439
      %v8630 = vmul.f32 %v7439, %v8629
      %v8631 = vsub.f32 1.0, %v8630
      %v8632 = vmul.f32 %v8629, %v8631
      %v8633 = vadd.f32 %v8629, %v8632
      %vm8634 = vweird.f32 %v7439
      %vm8635 = vweird.f32 %v8629
      %vm8636 = vmor %vm8634, %vm8635
      %v8637 = vsel %vm8636, %v8629, %v8633
      %v8638 = vand.u32 2147483647, %v7439
      %vm8639 = vcmp.eq.f32.partialorder %v8638, 8.507059e+37
      %v8640 = vand.u32 %v7439, 2147483648
      %v8641 = vor.u32 1.1754944e-38, %v8640
      %v8642 = vsel %vm8639, %v8641, %v8637
      %v8643 = vmul.f32 1.0, %v8642
      %v8644 = vrcp.pop %v7440
      %v8645 = vmul.f32 %v7440, %v8644
      %v8646 = vsub.f32 1.0, %v8645
      %v8647 = vmul.f32 %v8644, %v8646
      %v8648 = vadd.f32 %v8644, %v8647
      %vm8649 = vweird.f32 %v7440
      %vm8650 = vweird.f32 %v8644
      %vm8651 = vmor %vm8649, %vm8650
      %v8652 = vsel %vm8651, %v8644, %v8648
      %v8653 = vand.u32 2147483647, %v7440
      %vm8654 = vcmp.eq.f32.partialorder %v8653, 8.507059e+37
      %v8655 = vand.u32 %v7440, 2147483648
      %v8656 = vor.u32 1.1754944e-38, %v8655
      %v8657 = vsel %vm8654, %v8656, %v8652
      %v8658 = vmul.f32 1.0, %v8657
      %v8659 = vrcp.pop %v7441
      %v8660 = vmul.f32 %v7441, %v8659
      %v8661 = vsub.f32 1.0, %v8660
      %v8662 = vmul.f32 %v8659, %v8661
      %v8663 = vadd.f32 %v8659, %v8662
      %vm8664 = vweird.f32 %v7441
      %vm8665 = vweird.f32 %v8659
      %vm8666 = vmor %vm8664, %vm8665
      %v8667 = vsel %vm8666, %v8659, %v8663
      %v8668 = vand.u32 2147483647, %v7441
      %vm8669 = vcmp.eq.f32.partialorder %v8668, 8.507059e+37
      %v8670 = vand.u32 %v7441, 2147483648
      %v8671 = vor.u32 1.1754944e-38, %v8670
      %v8672 = vsel %vm8669, %v8671, %v8667
      %v8673 = vmul.f32 1.0, %v8672
      %v8674 = vrcp.pop %v7442
      %v8675 = vmul.f32 %v7442, %v8674
      %v8676 = vsub.f32 1.0, %v8675
      %v8677 = vmul.f32 %v8674, %v8676
      %v8678 = vadd.f32 %v8674, %v8677
      %vm8679 = vweird.f32 %v7442
      %vm8680 = vweird.f32 %v8674
      %vm8681 = vmor %vm8679, %vm8680
      %v8682 = vsel %vm8681, %v8674, %v8678
      %v8683 = vand.u32 2147483647, %v7442
      %vm8684 = vcmp.eq.f32.partialorder %v8683, 8.507059e+37
      %v8685 = vand.u32 %v7442, 2147483648
      %v8686 = vor.u32 1.1754944e-38, %v8685
      %v8687 = vsel %vm8684, %v8686, %v8682
      %v8688 = vmul.f32 1.0, %v8687
      %v8689 = vrcp.pop %v7443
      %v8690 = vmul.f32 %v7443, %v8689
      %v8691 = vsub.f32 1.0, %v8690
      %v8692 = vmul.f32 %v8689, %v8691
      %v8693 = vadd.f32 %v8689, %v8692
      %vm8694 = vweird.f32 %v7443
      %vm8695 = vweird.f32 %v8689
      %vm8696 = vmor %vm8694, %vm8695
      %v8697 = vsel %vm8696, %v8689, %v8693
      %v8698 = vand.u32 2147483647, %v7443
      %vm8699 = vcmp.eq.f32.partialorder %v8698, 8.507059e+37
      %v8700 = vand.u32 %v7443, 2147483648
      %v8701 = vor.u32 1.1754944e-38, %v8700
      %v8702 = vsel %vm8699, %v8701, %v8697
      %v8703 = vmul.f32 1.0, %v8702
      %v8704 = vrcp.pop %v7444
      %v8705 = vmul.f32 %v7444, %v8704
      %v8706 = vsub.f32 1.0, %v8705
      %v8707 = vmul.f32 %v8704, %v8706
      %v8708 = vadd.f32 %v8704, %v8707
      %vm8709 = vweird.f32 %v7444
      %vm8710 = vweird.f32 %v8704
      %vm8711 = vmor %vm8709, %vm8710
      %v8712 = vsel %vm8711, %v8704, %v8708
      %v8713 = vand.u32 2147483647, %v7444
      %vm8714 = vcmp.eq.f32.partialorder %v8713, 8.507059e+37
      %v8715 = vand.u32 %v7444, 2147483648
      %v8716 = vor.u32 1.1754944e-38, %v8715
      %v8717 = vsel %vm8714, %v8716, %v8712
      %v8718 = vmul.f32 1.0, %v8717
      %v8719 = vrcp.pop %v7445
      %v8720 = vmul.f32 %v7445, %v8719
      %v8721 = vsub.f32 1.0, %v8720
      %v8722 = vmul.f32 %v8719, %v8721
      %v8723 = vadd.f32 %v8719, %v8722
      %vm8724 = vweird.f32 %v7445
      %vm8725 = vweird.f32 %v8719
      %vm8726 = vmor %vm8724, %vm8725
      %v8727 = vsel %vm8726, %v8719, %v8723
      %v8728 = vand.u32 2147483647, %v7445
      %vm8729 = vcmp.eq.f32.partialorder %v8728, 8.507059e+37
      %v8730 = vand.u32 %v7445, 2147483648
      %v8731 = vor.u32 1.1754944e-38, %v8730
      %v8732 = vsel %vm8729, %v8731, %v8727
      %v8733 = vmul.f32 1.0, %v8732
      %v8734 = vrcp.pop %v7446
      %v8735 = vmul.f32 %v7446, %v8734
      %v8736 = vsub.f32 1.0, %v8735
      %v8737 = vmul.f32 %v8734, %v8736
      %v8738 = vadd.f32 %v8734, %v8737
      %vm8739 = vweird.f32 %v7446
      %vm8740 = vweird.f32 %v8734
      %vm8741 = vmor %vm8739, %vm8740
      %v8742 = vsel %vm8741, %v8734, %v8738
      %v8743 = vand.u32 2147483647, %v7446
      %vm8744 = vcmp.eq.f32.partialorder %v8743, 8.507059e+37
      %v8745 = vand.u32 %v7446, 2147483648
      %v8746 = vor.u32 1.1754944e-38, %v8745
      %v8747 = vsel %vm8744, %v8746, %v8742
      %v8748 = vmul.f32 1.0, %v8747
      %v8749 = vrcp.pop %v7447
      %v8750 = vmul.f32 %v7447, %v8749
      %v8751 = vsub.f32 1.0, %v8750
      %v8752 = vmul.f32 %v8749, %v8751
      %v8753 = vadd.f32 %v8749, %v8752
      %vm8754 = vweird.f32 %v7447
      %vm8755 = vweird.f32 %v8749
      %vm8756 = vmor %vm8754, %vm8755
      %v8757 = vsel %vm8756, %v8749, %v8753
      %v8758 = vand.u32 2147483647, %v7447
      %vm8759 = vcmp.eq.f32.partialorder %v8758, 8.507059e+37
      %v8760 = vand.u32 %v7447, 2147483648
      %v8761 = vor.u32 1.1754944e-38, %v8760
      %v8762 = vsel %vm8759, %v8761, %v8757
      %v8763 = vmul.f32 1.0, %v8762
      %v8764 = vrcp.pop %v7448
      %v8765 = vmul.f32 %v7448, %v8764
      %v8766 = vsub.f32 1.0, %v8765
      %v8767 = vmul.f32 %v8764, %v8766
      %v8768 = vadd.f32 %v8764, %v8767
      %vm8769 = vweird.f32 %v7448
      %vm8770 = vweird.f32 %v8764
      %vm8771 = vmor %vm8769, %vm8770
      %v8772 = vsel %vm8771, %v8764, %v8768
      %v8773 = vand.u32 2147483647, %v7448
      %vm8774 = vcmp.eq.f32.partialorder %v8773, 8.507059e+37
      %v8775 = vand.u32 %v7448, 2147483648
      %v8776 = vor.u32 1.1754944e-38, %v8775
      %v8777 = vsel %vm8774, %v8776, %v8772
      %v8778 = vmul.f32 1.0, %v8777
      %v8779 = vrcp.pop %v7449
      %v8780 = vmul.f32 %v7449, %v8779
      %v8781 = vsub.f32 1.0, %v8780
      %v8782 = vmul.f32 %v8779, %v8781
      %v8783 = vadd.f32 %v8779, %v8782
      %vm8784 = vweird.f32 %v7449
      %vm8785 = vweird.f32 %v8779
      %vm8786 = vmor %vm8784, %vm8785
      %v8787 = vsel %vm8786, %v8779, %v8783
      %v8788 = vand.u32 2147483647, %v7449
      %vm8789 = vcmp.eq.f32.partialorder %v8788, 8.507059e+37
      %v8790 = vand.u32 %v7449, 2147483648
      %v8791 = vor.u32 1.1754944e-38, %v8790
      %v8792 = vsel %vm8789, %v8791, %v8787
      %v8793 = vmul.f32 1.0, %v8792
      %v8794 = vrcp.pop %v7450
      %v8795 = vmul.f32 %v7450, %v8794
      %v8796 = vsub.f32 1.0, %v8795
      %v8797 = vmul.f32 %v8794, %v8796
      %v8798 = vadd.f32 %v8794, %v8797
      %vm8799 = vweird.f32 %v7450
      %vm8800 = vweird.f32 %v8794
      %vm8801 = vmor %vm8799, %vm8800
      %v8802 = vsel %vm8801, %v8794, %v8798
      %v8803 = vand.u32 2147483647, %v7450
      %vm8804 = vcmp.eq.f32.partialorder %v8803, 8.507059e+37
      %v8805 = vand.u32 %v7450, 2147483648
      %v8806 = vor.u32 1.1754944e-38, %v8805
      %v8807 = vsel %vm8804, %v8806, %v8802
      %v8808 = vmul.f32 1.0, %v8807
      %v8809 = vrcp.pop %v7451
      %v8810 = vmul.f32 %v7451, %v8809
      %v8811 = vsub.f32 1.0, %v8810
      %v8812 = vmul.f32 %v8809, %v8811
      %v8813 = vadd.f32 %v8809, %v8812
      %vm8814 = vweird.f32 %v7451
      %vm8815 = vweird.f32 %v8809
      %vm8816 = vmor %vm8814, %vm8815
      %v8817 = vsel %vm8816, %v8809, %v8813
      %v8818 = vand.u32 2147483647, %v7451
      %vm8819 = vcmp.eq.f32.partialorder %v8818, 8.507059e+37
      %v8820 = vand.u32 %v7451, 2147483648
      %v8821 = vor.u32 1.1754944e-38, %v8820
      %v8822 = vsel %vm8819, %v8821, %v8817
      %v8823 = vmul.f32 1.0, %v8822
      %v8824 = vrcp.pop %v7452
      %v8825 = vmul.f32 %v7452, %v8824
      %v8826 = vsub.f32 1.0, %v8825
      %v8827 = vmul.f32 %v8824, %v8826
      %v8828 = vadd.f32 %v8824, %v8827
      %vm8829 = vweird.f32 %v7452
      %vm8830 = vweird.f32 %v8824
      %vm8831 = vmor %vm8829, %vm8830
      %v8832 = vsel %vm8831, %v8824, %v8828
      %v8833 = vand.u32 2147483647, %v7452
      %vm8834 = vcmp.eq.f32.partialorder %v8833, 8.507059e+37
      %v8835 = vand.u32 %v7452, 2147483648
      %v8836 = vor.u32 1.1754944e-38, %v8835
      %v8837 = vsel %vm8834, %v8836, %v8832
      %v8838 = vmul.f32 1.0, %v8837
      %v8839 = vrcp.pop %v7453
      %v8840 = vmul.f32 %v7453, %v8839
      %v8841 = vsub.f32 1.0, %v8840
      %v8842 = vmul.f32 %v8839, %v8841
      %v8843 = vadd.f32 %v8839, %v8842
      %vm8844 = vweird.f32 %v7453
      %vm8845 = vweird.f32 %v8839
      %vm8846 = vmor %vm8844, %vm8845
      %v8847 = vsel %vm8846, %v8839, %v8843
      %v8848 = vand.u32 2147483647, %v7453
      %vm8849 = vcmp.eq.f32.partialorder %v8848, 8.507059e+37
      %v8850 = vand.u32 %v7453, 2147483648
      %v8851 = vor.u32 1.1754944e-38, %v8850
      %v8852 = vsel %vm8849, %v8851, %v8847
      %v8853 = vmul.f32 1.0, %v8852
      %v8854 = vrcp.pop %v7454
      %v8855 = vmul.f32 %v7454, %v8854
      %v8856 = vsub.f32 1.0, %v8855
      %v8857 = vmul.f32 %v8854, %v8856
      %v8858 = vadd.f32 %v8854, %v8857
      %vm8859 = vweird.f32 %v7454
      %vm8860 = vweird.f32 %v8854
      %vm8861 = vmor %vm8859, %vm8860
      %v8862 = vsel %vm8861, %v8854, %v8858
      %v8863 = vand.u32 2147483647, %v7454
      %vm8864 = vcmp.eq.f32.partialorder %v8863, 8.507059e+37
      %v8865 = vand.u32 %v7454, 2147483648
      %v8866 = vor.u32 1.1754944e-38, %v8865
      %v8867 = vsel %vm8864, %v8866, %v8862
      %v8868 = vmul.f32 1.0, %v8867
      %v8869 = vrcp.pop %v7455
      %v8870 = vmul.f32 %v7455, %v8869
      %v8871 = vsub.f32 1.0, %v8870
      %v8872 = vmul.f32 %v8869, %v8871
      %v8873 = vadd.f32 %v8869, %v8872
      %vm8874 = vweird.f32 %v7455
      %vm8875 = vweird.f32 %v8869
      %vm8876 = vmor %vm8874, %vm8875
      %v8877 = vsel %vm8876, %v8869, %v8873
      %v8878 = vand.u32 2147483647, %v7455
      %vm8879 = vcmp.eq.f32.partialorder %v8878, 8.507059e+37
      %v8880 = vand.u32 %v7455, 2147483648
      %v8881 = vor.u32 1.1754944e-38, %v8880
      %v8882 = vsel %vm8879, %v8881, %v8877
      %v8883 = vmul.f32 1.0, %v8882
      %v8884 = vrcp.pop %v7456
      %v8885 = vmul.f32 %v7456, %v8884
      %v8886 = vsub.f32 1.0, %v8885
      %v8887 = vmul.f32 %v8884, %v8886
      %v8888 = vadd.f32 %v8884, %v8887
      %vm8889 = vweird.f32 %v7456
      %vm8890 = vweird.f32 %v8884
      %vm8891 = vmor %vm8889, %vm8890
      %v8892 = vsel %vm8891, %v8884, %v8888
      %v8893 = vand.u32 2147483647, %v7456
      %vm8894 = vcmp.eq.f32.partialorder %v8893, 8.507059e+37
      %v8895 = vand.u32 %v7456, 2147483648
      %v8896 = vor.u32 1.1754944e-38, %v8895
      %v8897 = vsel %vm8894, %v8896, %v8892
      %v8898 = vmul.f32 1.0, %v8897
      %v8899 = vrcp.pop %v7457
      %v8900 = vmul.f32 %v7457, %v8899
      %v8901 = vsub.f32 1.0, %v8900
      %v8902 = vmul.f32 %v8899, %v8901
      %v8903 = vadd.f32 %v8899, %v8902
      %vm8904 = vweird.f32 %v7457
      %vm8905 = vweird.f32 %v8899
      %vm8906 = vmor %vm8904, %vm8905
      %v8907 = vsel %vm8906, %v8899, %v8903
      %v8908 = vand.u32 2147483647, %v7457
      %vm8909 = vcmp.eq.f32.partialorder %v8908, 8.507059e+37
      %v8910 = vand.u32 %v7457, 2147483648
      %v8911 = vor.u32 1.1754944e-38, %v8910
      %v8912 = vsel %vm8909, %v8911, %v8907
      %v8913 = vmul.f32 1.0, %v8912
      %v8914 = vrcp.pop %v7458
      %v8915 = vmul.f32 %v7458, %v8914
      %v8916 = vsub.f32 1.0, %v8915
      %v8917 = vmul.f32 %v8914, %v8916
      %v8918 = vadd.f32 %v8914, %v8917
      %vm8919 = vweird.f32 %v7458
      %vm8920 = vweird.f32 %v8914
      %vm8921 = vmor %vm8919, %vm8920
      %v8922 = vsel %vm8921, %v8914, %v8918
      %v8923 = vand.u32 2147483647, %v7458
      %vm8924 = vcmp.eq.f32.partialorder %v8923, 8.507059e+37
      %v8925 = vand.u32 %v7458, 2147483648
      %v8926 = vor.u32 1.1754944e-38, %v8925
      %v8927 = vsel %vm8924, %v8926, %v8922
      %v8928 = vmul.f32 1.0, %v8927
      %v8929 = vrcp.pop %v7459
      %v8930 = vmul.f32 %v7459, %v8929
      %v8931 = vsub.f32 1.0, %v8930
      %v8932 = vmul.f32 %v8929, %v8931
      %v8933 = vadd.f32 %v8929, %v8932
      %vm8934 = vweird.f32 %v7459
      %vm8935 = vweird.f32 %v8929
      %vm8936 = vmor %vm8934, %vm8935
      %v8937 = vsel %vm8936, %v8929, %v8933
      %v8938 = vand.u32 2147483647, %v7459
      %vm8939 = vcmp.eq.f32.partialorder %v8938, 8.507059e+37
      %v8940 = vand.u32 %v7459, 2147483648
      %v8941 = vor.u32 1.1754944e-38, %v8940
      %v8942 = vsel %vm8939, %v8941, %v8937
      %v8943 = vmul.f32 1.0, %v8942
      %v8944 = vrcp.pop %v7460
      %v8945 = vmul.f32 %v7460, %v8944
      %v8946 = vsub.f32 1.0, %v8945
      %v8947 = vmul.f32 %v8944, %v8946
      %v8948 = vadd.f32 %v8944, %v8947
      %vm8949 = vweird.f32 %v7460
      %vm8950 = vweird.f32 %v8944
      %vm8951 = vmor %vm8949, %vm8950
      %v8952 = vsel %vm8951, %v8944, %v8948
      %v8953 = vand.u32 2147483647, %v7460
      %vm8954 = vcmp.eq.f32.partialorder %v8953, 8.507059e+37
      %v8955 = vand.u32 %v7460, 2147483648
      %v8956 = vor.u32 1.1754944e-38, %v8955
      %v8957 = vsel %vm8954, %v8956, %v8952
      %v8958 = vmul.f32 1.0, %v8957
      %v8959 = vrcp.pop %v7461
      %v8960 = vmul.f32 %v7461, %v8959
      %v8961 = vsub.f32 1.0, %v8960
      %v8962 = vmul.f32 %v8959, %v8961
      %v8963 = vadd.f32 %v8959, %v8962
      %vm8964 = vweird.f32 %v7461
      %vm8965 = vweird.f32 %v8959
      %vm8966 = vmor %vm8964, %vm8965
      %v8967 = vsel %vm8966, %v8959, %v8963
      %v8968 = vand.u32 2147483647, %v7461
      %vm8969 = vcmp.eq.f32.partialorder %v8968, 8.507059e+37
      %v8970 = vand.u32 %v7461, 2147483648
      %v8971 = vor.u32 1.1754944e-38, %v8970
      %v8972 = vsel %vm8969, %v8971, %v8967
      %v8973 = vmul.f32 1.0, %v8972
      %v8974 = vrcp.pop %v7462
      %v8975 = vmul.f32 %v7462, %v8974
      %v8976 = vsub.f32 1.0, %v8975
      %v8977 = vmul.f32 %v8974, %v8976
      %v8978 = vadd.f32 %v8974, %v8977
      %vm8979 = vweird.f32 %v7462
      %vm8980 = vweird.f32 %v8974
      %vm8981 = vmor %vm8979, %vm8980
      %v8982 = vsel %vm8981, %v8974, %v8978
      %v8983 = vand.u32 2147483647, %v7462
      %vm8984 = vcmp.eq.f32.partialorder %v8983, 8.507059e+37
      %v8985 = vand.u32 %v7462, 2147483648
      %v8986 = vor.u32 1.1754944e-38, %v8985
      %v8987 = vsel %vm8984, %v8986, %v8982
      %v8988 = vmul.f32 1.0, %v8987
      %v8989 = vrcp.pop %v7463
      %v8990 = vmul.f32 %v7463, %v8989
      %v8991 = vsub.f32 1.0, %v8990
      %v8992 = vmul.f32 %v8989, %v8991
      %v8993 = vadd.f32 %v8989, %v8992
      %vm8994 = vweird.f32 %v7463
      %vm8995 = vweird.f32 %v8989
      %vm8996 = vmor %vm8994, %vm8995
      %v8997 = vsel %vm8996, %v8989, %v8993
      %v8998 = vand.u32 2147483647, %v7463
      %vm8999 = vcmp.eq.f32.partialorder %v8998, 8.507059e+37
      %v9000 = vand.u32 %v7463, 2147483648
      %v9001 = vor.u32 1.1754944e-38, %v9000
      %v9002 = vsel %vm8999, %v9001, %v8997
      %v9003 = vmul.f32 1.0, %v9002
      %v9004 = vrcp.pop %v7464
      %v9005 = vmul.f32 %v7464, %v9004
      %v9006 = vsub.f32 1.0, %v9005
      %v9007 = vmul.f32 %v9004, %v9006
      %v9008 = vadd.f32 %v9004, %v9007
      %vm9009 = vweird.f32 %v7464
      %vm9010 = vweird.f32 %v9004
      %vm9011 = vmor %vm9009, %vm9010
      %v9012 = vsel %vm9011, %v9004, %v9008
      %v9013 = vand.u32 2147483647, %v7464
      %vm9014 = vcmp.eq.f32.partialorder %v9013, 8.507059e+37
      %v9015 = vand.u32 %v7464, 2147483648
      %v9016 = vor.u32 1.1754944e-38, %v9015
      %v9017 = vsel %vm9014, %v9016, %v9012
      %v9018 = vmul.f32 1.0, %v9017
      %v9019 = vrcp.pop %v7465
      %v9020 = vmul.f32 %v7465, %v9019
      %v9021 = vsub.f32 1.0, %v9020
      %v9022 = vmul.f32 %v9019, %v9021
      %v9023 = vadd.f32 %v9019, %v9022
      %vm9024 = vweird.f32 %v7465
      %vm9025 = vweird.f32 %v9019
      %vm9026 = vmor %vm9024, %vm9025
      %v9027 = vsel %vm9026, %v9019, %v9023
      %v9028 = vand.u32 2147483647, %v7465
      %vm9029 = vcmp.eq.f32.partialorder %v9028, 8.507059e+37
      %v9030 = vand.u32 %v7465, 2147483648
      %v9031 = vor.u32 1.1754944e-38, %v9030
      %v9032 = vsel %vm9029, %v9031, %v9027
      %v9033 = vmul.f32 1.0, %v9032
      %v9034 = vrcp.pop %v7466
      %v9035 = vmul.f32 %v7466, %v9034
      %v9036 = vsub.f32 1.0, %v9035
      %v9037 = vmul.f32 %v9034, %v9036
      %v9038 = vadd.f32 %v9034, %v9037
      %vm9039 = vweird.f32 %v7466
      %vm9040 = vweird.f32 %v9034
      %vm9041 = vmor %vm9039, %vm9040
      %v9042 = vsel %vm9041, %v9034, %v9038
      %v9043 = vand.u32 2147483647, %v7466
      %vm9044 = vcmp.eq.f32.partialorder %v9043, 8.507059e+37
      %v9045 = vand.u32 %v7466, 2147483648
      %v9046 = vor.u32 1.1754944e-38, %v9045
      %v9047 = vsel %vm9044, %v9046, %v9042
      %v9048 = vmul.f32 1.0, %v9047
      %v9049 = vrcp.pop %v7467
      %v9050 = vmul.f32 %v7467, %v9049
      %v9051 = vsub.f32 1.0, %v9050
      %v9052 = vmul.f32 %v9049, %v9051
      %v9053 = vadd.f32 %v9049, %v9052
      %vm9054 = vweird.f32 %v7467
      %vm9055 = vweird.f32 %v9049
      %vm9056 = vmor %vm9054, %vm9055
      %v9057 = vsel %vm9056, %v9049, %v9053
      %v9058 = vand.u32 2147483647, %v7467
      %vm9059 = vcmp.eq.f32.partialorder %v9058, 8.507059e+37
      %v9060 = vand.u32 %v7467, 2147483648
      %v9061 = vor.u32 1.1754944e-38, %v9060
      %v9062 = vsel %vm9059, %v9061, %v9057
      %v9063 = vmul.f32 1.0, %v9062
      %v9064 = vrcp.pop %v7468
      %v9065 = vmul.f32 %v7468, %v9064
      %v9066 = vsub.f32 1.0, %v9065
      %v9067 = vmul.f32 %v9064, %v9066
      %v9068 = vadd.f32 %v9064, %v9067
      %vm9069 = vweird.f32 %v7468
      %vm9070 = vweird.f32 %v9064
      %vm9071 = vmor %vm9069, %vm9070
      %v9072 = vsel %vm9071, %v9064, %v9068
      %v9073 = vand.u32 2147483647, %v7468
      %vm9074 = vcmp.eq.f32.partialorder %v9073, 8.507059e+37
      %v9075 = vand.u32 %v7468, 2147483648
      %v9076 = vor.u32 1.1754944e-38, %v9075
      %v9077 = vsel %vm9074, %v9076, %v9072
      %v9078 = vmul.f32 1.0, %v9077
      %v9079 = vrcp.pop %v7469
      %v9080 = vmul.f32 %v7469, %v9079
      %v9081 = vsub.f32 1.0, %v9080
      %v9082 = vmul.f32 %v9079, %v9081
      %v9083 = vadd.f32 %v9079, %v9082
      %vm9084 = vweird.f32 %v7469
      %vm9085 = vweird.f32 %v9079
      %vm9086 = vmor %vm9084, %vm9085
      %v9087 = vsel %vm9086, %v9079, %v9083
      %v9088 = vand.u32 2147483647, %v7469
      %vm9089 = vcmp.eq.f32.partialorder %v9088, 8.507059e+37
      %v9090 = vand.u32 %v7469, 2147483648
      %v9091 = vor.u32 1.1754944e-38, %v9090
      %v9092 = vsel %vm9089, %v9091, %v9087
      %v9093 = vmul.f32 1.0, %v9092
      %v9094 = vrcp.pop %v7470
      %v9095 = vmul.f32 %v7470, %v9094
      %v9096 = vsub.f32 1.0, %v9095
      %v9097 = vmul.f32 %v9094, %v9096
      %v9098 = vadd.f32 %v9094, %v9097
      %vm9099 = vweird.f32 %v7470
      %vm9100 = vweird.f32 %v9094
      %vm9101 = vmor %vm9099, %vm9100
      %v9102 = vsel %vm9101, %v9094, %v9098
      %v9103 = vand.u32 2147483647, %v7470
      %vm9104 = vcmp.eq.f32.partialorder %v9103, 8.507059e+37
      %v9105 = vand.u32 %v7470, 2147483648
      %v9106 = vor.u32 1.1754944e-38, %v9105
      %v9107 = vsel %vm9104, %v9106, %v9102
      %v9108 = vmul.f32 1.0, %v9107
      %v9109 = vrcp.pop %v7471
      %v9110 = vmul.f32 %v7471, %v9109
      %v9111 = vsub.f32 1.0, %v9110
      %v9112 = vmul.f32 %v9109, %v9111
      %v9113 = vadd.f32 %v9109, %v9112
      %vm9114 = vweird.f32 %v7471
      %vm9115 = vweird.f32 %v9109
      %vm9116 = vmor %vm9114, %vm9115
      %v9117 = vsel %vm9116, %v9109, %v9113
      %v9118 = vand.u32 2147483647, %v7471
      %vm9119 = vcmp.eq.f32.partialorder %v9118, 8.507059e+37
      %v9120 = vand.u32 %v7471, 2147483648
      %v9121 = vor.u32 1.1754944e-38, %v9120
      %v9122 = vsel %vm9119, %v9121, %v9117
      %v9123 = vmul.f32 1.0, %v9122
      %v9124 = vrcp.pop %v7472
      %v9125 = vmul.f32 %v7472, %v9124
      %v9126 = vsub.f32 1.0, %v9125
      %v9127 = vmul.f32 %v9124, %v9126
      %v9128 = vadd.f32 %v9124, %v9127
      %vm9129 = vweird.f32 %v7472
      %vm9130 = vweird.f32 %v9124
      %vm9131 = vmor %vm9129, %vm9130
      %v9132 = vsel %vm9131, %v9124, %v9128
      %v9133 = vand.u32 2147483647, %v7472
      %vm9134 = vcmp.eq.f32.partialorder %v9133, 8.507059e+37
      %v9135 = vand.u32 %v7472, 2147483648
      %v9136 = vor.u32 1.1754944e-38, %v9135
      %v9137 = vsel %vm9134, %v9136, %v9132
      %v9138 = vmul.f32 1.0, %v9137
      %v9139 = vrcp.pop %v7473
      %v9140 = vmul.f32 %v7473, %v9139
      %v9141 = vsub.f32 1.0, %v9140
      %v9142 = vmul.f32 %v9139, %v9141
      %v9143 = vadd.f32 %v9139, %v9142
      %vm9144 = vweird.f32 %v7473
      %vm9145 = vweird.f32 %v9139
      %vm9146 = vmor %vm9144, %vm9145
      %v9147 = vsel %vm9146, %v9139, %v9143
      %v9148 = vand.u32 2147483647, %v7473
      %vm9149 = vcmp.eq.f32.partialorder %v9148, 8.507059e+37
      %v9150 = vand.u32 %v7473, 2147483648
      %v9151 = vor.u32 1.1754944e-38, %v9150
      %v9152 = vsel %vm9149, %v9151, %v9147
      %v9153 = vmul.f32 1.0, %v9152
      %v9154 = vrcp.pop %v7474
      %v9155 = vmul.f32 %v7474, %v9154
      %v9156 = vsub.f32 1.0, %v9155
      %v9157 = vmul.f32 %v9154, %v9156
      %v9158 = vadd.f32 %v9154, %v9157
      %vm9159 = vweird.f32 %v7474
      %vm9160 = vweird.f32 %v9154
      %vm9161 = vmor %vm9159, %vm9160
      %v9162 = vsel %vm9161, %v9154, %v9158
      %v9163 = vand.u32 2147483647, %v7474
      %vm9164 = vcmp.eq.f32.partialorder %v9163, 8.507059e+37
      %v9165 = vand.u32 %v7474, 2147483648
      %v9166 = vor.u32 1.1754944e-38, %v9165
      %v9167 = vsel %vm9164, %v9166, %v9162
      %v9168 = vmul.f32 1.0, %v9167
      %v9169 = vrcp.pop %v7475
      %v9170 = vmul.f32 %v7475, %v9169
      %v9171 = vsub.f32 1.0, %v9170
      %v9172 = vmul.f32 %v9169, %v9171
      %v9173 = vadd.f32 %v9169, %v9172
      %vm9174 = vweird.f32 %v7475
      %vm9175 = vweird.f32 %v9169
      %vm9176 = vmor %vm9174, %vm9175
      %v9177 = vsel %vm9176, %v9169, %v9173
      %v9178 = vand.u32 2147483647, %v7475
      %vm9179 = vcmp.eq.f32.partialorder %v9178, 8.507059e+37
      %v9180 = vand.u32 %v7475, 2147483648
      %v9181 = vor.u32 1.1754944e-38, %v9180
      %v9182 = vsel %vm9179, %v9181, %v9177
      %v9183 = vmul.f32 1.0, %v9182
      %v9184 = vrcp.pop %v7476
      %v9185 = vmul.f32 %v7476, %v9184
      %v9186 = vsub.f32 1.0, %v9185
      %v9187 = vmul.f32 %v9184, %v9186
      %v9188 = vadd.f32 %v9184, %v9187
      %vm9189 = vweird.f32 %v7476
      %vm9190 = vweird.f32 %v9184
      %vm9191 = vmor %vm9189, %vm9190
      %v9192 = vsel %vm9191, %v9184, %v9188
      %v9193 = vand.u32 2147483647, %v7476
      %vm9194 = vcmp.eq.f32.partialorder %v9193, 8.507059e+37
      %v9195 = vand.u32 %v7476, 2147483648
      %v9196 = vor.u32 1.1754944e-38, %v9195
      %v9197 = vsel %vm9194, %v9196, %v9192
      %v9198 = vmul.f32 1.0, %v9197
      %v9199 = vrcp.pop %v7477
      %v9200 = vmul.f32 %v7477, %v9199
      %v9201 = vsub.f32 1.0, %v9200
      %v9202 = vmul.f32 %v9199, %v9201
      %v9203 = vadd.f32 %v9199, %v9202
      %vm9204 = vweird.f32 %v7477
      %vm9205 = vweird.f32 %v9199
      %vm9206 = vmor %vm9204, %vm9205
      %v9207 = vsel %vm9206, %v9199, %v9203
      %v9208 = vand.u32 2147483647, %v7477
      %vm9209 = vcmp.eq.f32.partialorder %v9208, 8.507059e+37
      %v9210 = vand.u32 %v7477, 2147483648
      %v9211 = vor.u32 1.1754944e-38, %v9210
      %v9212 = vsel %vm9209, %v9211, %v9207
      %v9213 = vmul.f32 1.0, %v9212
      %v9214 = vrcp.pop %v7478
      %v9215 = vmul.f32 %v7478, %v9214
      %v9216 = vsub.f32 1.0, %v9215
      %v9217 = vmul.f32 %v9214, %v9216
      %v9218 = vadd.f32 %v9214, %v9217
      %vm9219 = vweird.f32 %v7478
      %vm9220 = vweird.f32 %v9214
      %vm9221 = vmor %vm9219, %vm9220
      %v9222 = vsel %vm9221, %v9214, %v9218
      %v9223 = vand.u32 2147483647, %v7478
      %vm9224 = vcmp.eq.f32.partialorder %v9223, 8.507059e+37
      %v9225 = vand.u32 %v7478, 2147483648
      %v9226 = vor.u32 1.1754944e-38, %v9225
      %v9227 = vsel %vm9224, %v9226, %v9222
      %v9228 = vmul.f32 1.0, %v9227
      %v9229 = vrcp.pop %v7479
      %v9230 = vmul.f32 %v7479, %v9229
      %v9231 = vsub.f32 1.0, %v9230
      %v9232 = vmul.f32 %v9229, %v9231
      %v9233 = vadd.f32 %v9229, %v9232
      %vm9234 = vweird.f32 %v7479
      %vm9235 = vweird.f32 %v9229
      %vm9236 = vmor %vm9234, %vm9235
      %v9237 = vsel %vm9236, %v9229, %v9233
      %v9238 = vand.u32 2147483647, %v7479
      %vm9239 = vcmp.eq.f32.partialorder %v9238, 8.507059e+37
      %v9240 = vand.u32 %v7479, 2147483648
      %v9241 = vor.u32 1.1754944e-38, %v9240
      %v9242 = vsel %vm9239, %v9241, %v9237
      %v9243 = vmul.f32 1.0, %v9242
      %v9244 = vrcp.pop %v7480
      %v9245 = vmul.f32 %v7480, %v9244
      %v9246 = vsub.f32 1.0, %v9245
      %v9247 = vmul.f32 %v9244, %v9246
      %v9248 = vadd.f32 %v9244, %v9247
      %vm9249 = vweird.f32 %v7480
      %vm9250 = vweird.f32 %v9244
      %vm9251 = vmor %vm9249, %vm9250
      %v9252 = vsel %vm9251, %v9244, %v9248
      %v9253 = vand.u32 2147483647, %v7480
      %vm9254 = vcmp.eq.f32.partialorder %v9253, 8.507059e+37
      %v9255 = vand.u32 %v7480, 2147483648
      %v9256 = vor.u32 1.1754944e-38, %v9255
      %v9257 = vsel %vm9254, %v9256, %v9252
      %v9258 = vmul.f32 1.0, %v9257
      %v9259 = vrcp.pop %v7481
      %v9260 = vmul.f32 %v7481, %v9259
      %v9261 = vsub.f32 1.0, %v9260
      %v9262 = vmul.f32 %v9259, %v9261
      %v9263 = vadd.f32 %v9259, %v9262
      %vm9264 = vweird.f32 %v7481
      %vm9265 = vweird.f32 %v9259
      %vm9266 = vmor %vm9264, %vm9265
      %v9267 = vsel %vm9266, %v9259, %v9263
      %v9268 = vand.u32 2147483647, %v7481
      %vm9269 = vcmp.eq.f32.partialorder %v9268, 8.507059e+37
      %v9270 = vand.u32 %v7481, 2147483648
      %v9271 = vor.u32 1.1754944e-38, %v9270
      %v9272 = vsel %vm9269, %v9271, %v9267
      %v9273 = vmul.f32 1.0, %v9272
      %v9274 = vrcp.pop %v7482
      %v9275 = vmul.f32 %v7482, %v9274
      %v9276 = vsub.f32 1.0, %v9275
      %v9277 = vmul.f32 %v9274, %v9276
      %v9278 = vadd.f32 %v9274, %v9277
      %vm9279 = vweird.f32 %v7482
      %vm9280 = vweird.f32 %v9274
      %vm9281 = vmor %vm9279, %vm9280
      %v9282 = vsel %vm9281, %v9274, %v9278
      %v9283 = vand.u32 2147483647, %v7482
      %vm9284 = vcmp.eq.f32.partialorder %v9283, 8.507059e+37
      %v9285 = vand.u32 %v7482, 2147483648
      %v9286 = vor.u32 1.1754944e-38, %v9285
      %v9287 = vsel %vm9284, %v9286, %v9282
      %v9288 = vmul.f32 1.0, %v9287
      %v9289 = vrcp.pop %v7483
      %v9290 = vmul.f32 %v7483, %v9289
      %v9291 = vsub.f32 1.0, %v9290
      %v9292 = vmul.f32 %v9289, %v9291
      %v9293 = vadd.f32 %v9289, %v9292
      %vm9294 = vweird.f32 %v7483
      %vm9295 = vweird.f32 %v9289
      %vm9296 = vmor %vm9294, %vm9295
      %v9297 = vsel %vm9296, %v9289, %v9293
      %v9298 = vand.u32 2147483647, %v7483
      %vm9299 = vcmp.eq.f32.partialorder %v9298, 8.507059e+37
      %v9300 = vand.u32 %v7483, 2147483648
      %v9301 = vor.u32 1.1754944e-38, %v9300
      %v9302 = vsel %vm9299, %v9301, %v9297
      %v9303 = vmul.f32 1.0, %v9302
      %v9304 = vrcp.pop %v7484
      %v9305 = vmul.f32 %v7484, %v9304
      %v9306 = vsub.f32 1.0, %v9305
      %v9307 = vmul.f32 %v9304, %v9306
      %v9308 = vadd.f32 %v9304, %v9307
      %vm9309 = vweird.f32 %v7484
      %vm9310 = vweird.f32 %v9304
      %vm9311 = vmor %vm9309, %vm9310
      %v9312 = vsel %vm9311, %v9304, %v9308
      %v9313 = vand.u32 2147483647, %v7484
      %vm9314 = vcmp.eq.f32.partialorder %v9313, 8.507059e+37
      %v9315 = vand.u32 %v7484, 2147483648
      %v9316 = vor.u32 1.1754944e-38, %v9315
      %v9317 = vsel %vm9314, %v9316, %v9312
      %v9318 = vmul.f32 1.0, %v9317
      %v9319 = vrcp.pop %v7485
      %v9320 = vmul.f32 %v7485, %v9319
      %v9321 = vsub.f32 1.0, %v9320
      %v9322 = vmul.f32 %v9319, %v9321
      %v9323 = vadd.f32 %v9319, %v9322
      %vm9324 = vweird.f32 %v7485
      %vm9325 = vweird.f32 %v9319
      %vm9326 = vmor %vm9324, %vm9325
      %v9327 = vsel %vm9326, %v9319, %v9323
      %v9328 = vand.u32 2147483647, %v7485
      %vm9329 = vcmp.eq.f32.partialorder %v9328, 8.507059e+37
      %v9330 = vand.u32 %v7485, 2147483648
      %v9331 = vor.u32 1.1754944e-38, %v9330
      %v9332 = vsel %vm9329, %v9331, %v9327
      %v9333 = vmul.f32 1.0, %v9332
      %v9334 = vrcp.pop %v7486
      %v9335 = vmul.f32 %v7486, %v9334
      %v9336 = vsub.f32 1.0, %v9335
      %v9337 = vmul.f32 %v9334, %v9336
      %v9338 = vadd.f32 %v9334, %v9337
      %vm9339 = vweird.f32 %v7486
      %vm9340 = vweird.f32 %v9334
      %vm9341 = vmor %vm9339, %vm9340
      %v9342 = vsel %vm9341, %v9334, %v9338
      %v9343 = vand.u32 2147483647, %v7486
      %vm9344 = vcmp.eq.f32.partialorder %v9343, 8.507059e+37
      %v9345 = vand.u32 %v7486, 2147483648
      %v9346 = vor.u32 1.1754944e-38, %v9345
      %v9347 = vsel %vm9344, %v9346, %v9342
      %v9348 = vmul.f32 1.0, %v9347
      %v9349 = vrcp.pop %v7487
      %v9350 = vmul.f32 %v7487, %v9349
      %v9351 = vsub.f32 1.0, %v9350
      %v9352 = vmul.f32 %v9349, %v9351
      %v9353 = vadd.f32 %v9349, %v9352
      %vm9354 = vweird.f32 %v7487
      %vm9355 = vweird.f32 %v9349
      %vm9356 = vmor %vm9354, %vm9355
      %v9357 = vsel %vm9356, %v9349, %v9353
      %v9358 = vand.u32 2147483647, %v7487
      %vm9359 = vcmp.eq.f32.partialorder %v9358, 8.507059e+37
      %v9360 = vand.u32 %v7487, 2147483648
      %v9361 = vor.u32 1.1754944e-38, %v9360
      %v9362 = vsel %vm9359, %v9361, %v9357
      %v9363 = vmul.f32 1.0, %v9362
      %v9364 = vrcp.pop %v7488
      %v9365 = vmul.f32 %v7488, %v9364
      %v9366 = vsub.f32 1.0, %v9365
      %v9367 = vmul.f32 %v9364, %v9366
      %v9368 = vadd.f32 %v9364, %v9367
      %vm9369 = vweird.f32 %v7488
      %vm9370 = vweird.f32 %v9364
      %vm9371 = vmor %vm9369, %vm9370
      %v9372 = vsel %vm9371, %v9364, %v9368
      %v9373 = vand.u32 2147483647, %v7488
      %vm9374 = vcmp.eq.f32.partialorder %v9373, 8.507059e+37
      %v9375 = vand.u32 %v7488, 2147483648
      %v9376 = vor.u32 1.1754944e-38, %v9375
      %v9377 = vsel %vm9374, %v9376, %v9372
      %v9378 = vmul.f32 1.0, %v9377
      %v9379 = vrcp.pop %v7489
      %v9380 = vmul.f32 %v7489, %v9379
      %v9381 = vsub.f32 1.0, %v9380
      %v9382 = vmul.f32 %v9379, %v9381
      %v9383 = vadd.f32 %v9379, %v9382
      %vm9384 = vweird.f32 %v7489
      %vm9385 = vweird.f32 %v9379
      %vm9386 = vmor %vm9384, %vm9385
      %v9387 = vsel %vm9386, %v9379, %v9383
      %v9388 = vand.u32 2147483647, %v7489
      %vm9389 = vcmp.eq.f32.partialorder %v9388, 8.507059e+37
      %v9390 = vand.u32 %v7489, 2147483648
      %v9391 = vor.u32 1.1754944e-38, %v9390
      %v9392 = vsel %vm9389, %v9391, %v9387
      %v9393 = vmul.f32 1.0, %v9392
      %v9394 = vrcp.pop %v7490
      %v9395 = vmul.f32 %v7490, %v9394
      %v9396 = vsub.f32 1.0, %v9395
      %v9397 = vmul.f32 %v9394, %v9396
      %v9398 = vadd.f32 %v9394, %v9397
      %vm9399 = vweird.f32 %v7490
      %vm9400 = vweird.f32 %v9394
      %vm9401 = vmor %vm9399, %vm9400
      %v9402 = vsel %vm9401, %v9394, %v9398
      %v9403 = vand.u32 2147483647, %v7490
      %vm9404 = vcmp.eq.f32.partialorder %v9403, 8.507059e+37
      %v9405 = vand.u32 %v7490, 2147483648
      %v9406 = vor.u32 1.1754944e-38, %v9405
      %v9407 = vsel %vm9404, %v9406, %v9402
      %v9408 = vmul.f32 1.0, %v9407
      %v9409 = vrcp.pop %v7491
      %v9410 = vmul.f32 %v7491, %v9409
      %v9411 = vsub.f32 1.0, %v9410
      %v9412 = vmul.f32 %v9409, %v9411
      %v9413 = vadd.f32 %v9409, %v9412
      %vm9414 = vweird.f32 %v7491
      %vm9415 = vweird.f32 %v9409
      %vm9416 = vmor %vm9414, %vm9415
      %v9417 = vsel %vm9416, %v9409, %v9413
      %v9418 = vand.u32 2147483647, %v7491
      %vm9419 = vcmp.eq.f32.partialorder %v9418, 8.507059e+37
      %v9420 = vand.u32 %v7491, 2147483648
      %v9421 = vor.u32 1.1754944e-38, %v9420
      %v9422 = vsel %vm9419, %v9421, %v9417
      %v9423 = vmul.f32 1.0, %v9422
      %v9424 = vrcp.pop %v7492
      %v9425 = vmul.f32 %v7492, %v9424
      %v9426 = vsub.f32 1.0, %v9425
      %v9427 = vmul.f32 %v9424, %v9426
      %v9428 = vadd.f32 %v9424, %v9427
      %vm9429 = vweird.f32 %v7492
      %vm9430 = vweird.f32 %v9424
      %vm9431 = vmor %vm9429, %vm9430
      %v9432 = vsel %vm9431, %v9424, %v9428
      %v9433 = vand.u32 2147483647, %v7492
      %vm9434 = vcmp.eq.f32.partialorder %v9433, 8.507059e+37
      %v9435 = vand.u32 %v7492, 2147483648
      %v9436 = vor.u32 1.1754944e-38, %v9435
      %v9437 = vsel %vm9434, %v9436, %v9432
      %v9438 = vmul.f32 1.0, %v9437
      %v9439 = vrcp.pop %v7493
      %v9440 = vmul.f32 %v7493, %v9439
      %v9441 = vsub.f32 1.0, %v9440
      %v9442 = vmul.f32 %v9439, %v9441
      %v9443 = vadd.f32 %v9439, %v9442
      %vm9444 = vweird.f32 %v7493
      %vm9445 = vweird.f32 %v9439
      %vm9446 = vmor %vm9444, %vm9445
      %v9447 = vsel %vm9446, %v9439, %v9443
      %v9448 = vand.u32 2147483647, %v7493
      %vm9449 = vcmp.eq.f32.partialorder %v9448, 8.507059e+37
      %v9450 = vand.u32 %v7493, 2147483648
      %v9451 = vor.u32 1.1754944e-38, %v9450
      %v9452 = vsel %vm9449, %v9451, %v9447
      %v9453 = vmul.f32 1.0, %v9452
      %v9454 = vrcp.pop %v7494
      %v9455 = vmul.f32 %v7494, %v9454
      %v9456 = vsub.f32 1.0, %v9455
      %v9457 = vmul.f32 %v9454, %v9456
      %v9458 = vadd.f32 %v9454, %v9457
      %vm9459 = vweird.f32 %v7494
      %vm9460 = vweird.f32 %v9454
      %vm9461 = vmor %vm9459, %vm9460
      %v9462 = vsel %vm9461, %v9454, %v9458
      %v9463 = vand.u32 2147483647, %v7494
      %vm9464 = vcmp.eq.f32.partialorder %v9463, 8.507059e+37
      %v9465 = vand.u32 %v7494, 2147483648
      %v9466 = vor.u32 1.1754944e-38, %v9465
      %v9467 = vsel %vm9464, %v9466, %v9462
      %v9468 = vmul.f32 1.0, %v9467
      %v9469 = vrcp.pop %v7495
      %v9470 = vmul.f32 %v7495, %v9469
      %v9471 = vsub.f32 1.0, %v9470
      %v9472 = vmul.f32 %v9469, %v9471
      %v9473 = vadd.f32 %v9469, %v9472
      %vm9474 = vweird.f32 %v7495
      %vm9475 = vweird.f32 %v9469
      %vm9476 = vmor %vm9474, %vm9475
      %v9477 = vsel %vm9476, %v9469, %v9473
      %v9478 = vand.u32 2147483647, %v7495
      %vm9479 = vcmp.eq.f32.partialorder %v9478, 8.507059e+37
      %v9480 = vand.u32 %v7495, 2147483648
      %v9481 = vor.u32 1.1754944e-38, %v9480
      %v9482 = vsel %vm9479, %v9481, %v9477
      %v9483 = vmul.f32 1.0, %v9482
      %v9484 = vrcp.pop %v7496
      %v9485 = vmul.f32 %v7496, %v9484
      %v9486 = vsub.f32 1.0, %v9485
      %v9487 = vmul.f32 %v9484, %v9486
      %v9488 = vadd.f32 %v9484, %v9487
      %vm9489 = vweird.f32 %v7496
      %vm9490 = vweird.f32 %v9484
      %vm9491 = vmor %vm9489, %vm9490
      %v9492 = vsel %vm9491, %v9484, %v9488
      %v9493 = vand.u32 2147483647, %v7496
      %vm9494 = vcmp.eq.f32.partialorder %v9493, 8.507059e+37
      %v9495 = vand.u32 %v7496, 2147483648
      %v9496 = vor.u32 1.1754944e-38, %v9495
      %v9497 = vsel %vm9494, %v9496, %v9492
      %v9498 = vmul.f32 1.0, %v9497
      %v9499 = vrcp.pop %v7497
      %v9500 = vmul.f32 %v7497, %v9499
      %v9501 = vsub.f32 1.0, %v9500
      %v9502 = vmul.f32 %v9499, %v9501
      %v9503 = vadd.f32 %v9499, %v9502
      %vm9504 = vweird.f32 %v7497
      %vm9505 = vweird.f32 %v9499
      %vm9506 = vmor %vm9504, %vm9505
      %v9507 = vsel %vm9506, %v9499, %v9503
      %v9508 = vand.u32 2147483647, %v7497
      %vm9509 = vcmp.eq.f32.partialorder %v9508, 8.507059e+37
      %v9510 = vand.u32 %v7497, 2147483648
      %v9511 = vor.u32 1.1754944e-38, %v9510
      %v9512 = vsel %vm9509, %v9511, %v9507
      %v9513 = vmul.f32 1.0, %v9512
      %v9514 = vrcp.pop %v7498
      %v9515 = vmul.f32 %v7498, %v9514
      %v9516 = vsub.f32 1.0, %v9515
      %v9517 = vmul.f32 %v9514, %v9516
      %v9518 = vadd.f32 %v9514, %v9517
      %vm9519 = vweird.f32 %v7498
      %vm9520 = vweird.f32 %v9514
      %vm9521 = vmor %vm9519, %vm9520
      %v9522 = vsel %vm9521, %v9514, %v9518
      %v9523 = vand.u32 2147483647, %v7498
      %vm9524 = vcmp.eq.f32.partialorder %v9523, 8.507059e+37
      %v9525 = vand.u32 %v7498, 2147483648
      %v9526 = vor.u32 1.1754944e-38, %v9525
      %v9527 = vsel %vm9524, %v9526, %v9522
      %v9528 = vmul.f32 1.0, %v9527
      %v9529 = vrcp.pop %v7499
      %v9530 = vmul.f32 %v7499, %v9529
      %v9531 = vsub.f32 1.0, %v9530
      %v9532 = vmul.f32 %v9529, %v9531
      %v9533 = vadd.f32 %v9529, %v9532
      %vm9534 = vweird.f32 %v7499
      %vm9535 = vweird.f32 %v9529
      %vm9536 = vmor %vm9534, %vm9535
      %v9537 = vsel %vm9536, %v9529, %v9533
      %v9538 = vand.u32 2147483647, %v7499
      %vm9539 = vcmp.eq.f32.partialorder %v9538, 8.507059e+37
      %v9540 = vand.u32 %v7499, 2147483648
      %v9541 = vor.u32 1.1754944e-38, %v9540
      %v9542 = vsel %vm9539, %v9541, %v9537
      %v9543 = vmul.f32 1.0, %v9542
      %v9544 = vrcp.pop %v7500
      %v9545 = vmul.f32 %v7500, %v9544
      %v9546 = vsub.f32 1.0, %v9545
      %v9547 = vmul.f32 %v9544, %v9546
      %v9548 = vadd.f32 %v9544, %v9547
      %vm9549 = vweird.f32 %v7500
      %vm9550 = vweird.f32 %v9544
      %vm9551 = vmor %vm9549, %vm9550
      %v9552 = vsel %vm9551, %v9544, %v9548
      %v9553 = vand.u32 2147483647, %v7500
      %vm9554 = vcmp.eq.f32.partialorder %v9553, 8.507059e+37
      %v9555 = vand.u32 %v7500, 2147483648
      %v9556 = vor.u32 1.1754944e-38, %v9555
      %v9557 = vsel %vm9554, %v9556, %v9552
      %v9558 = vmul.f32 1.0, %v9557
      %v9559 = vrcp.pop %v7501
      %v9560 = vmul.f32 %v7501, %v9559
      %v9561 = vsub.f32 1.0, %v9560
      %v9562 = vmul.f32 %v9559, %v9561
      %v9563 = vadd.f32 %v9559, %v9562
      %vm9564 = vweird.f32 %v7501
      %vm9565 = vweird.f32 %v9559
      %vm9566 = vmor %vm9564, %vm9565
      %v9567 = vsel %vm9566, %v9559, %v9563
      %v9568 = vand.u32 2147483647, %v7501
      %vm9569 = vcmp.eq.f32.partialorder %v9568, 8.507059e+37
      %v9570 = vand.u32 %v7501, 2147483648
      %v9571 = vor.u32 1.1754944e-38, %v9570
      %v9572 = vsel %vm9569, %v9571, %v9567
      %v9573 = vmul.f32 1.0, %v9572
      %v9574 = vrcp.pop %v7502
      %v9575 = vmul.f32 %v7502, %v9574
      %v9576 = vsub.f32 1.0, %v9575
      %v9577 = vmul.f32 %v9574, %v9576
      %v9578 = vadd.f32 %v9574, %v9577
      %vm9579 = vweird.f32 %v7502
      %vm9580 = vweird.f32 %v9574
      %vm9581 = vmor %vm9579, %vm9580
      %v9582 = vsel %vm9581, %v9574, %v9578
      %v9583 = vand.u32 2147483647, %v7502
      %vm9584 = vcmp.eq.f32.partialorder %v9583, 8.507059e+37
      %v9585 = vand.u32 %v7502, 2147483648
      %v9586 = vor.u32 1.1754944e-38, %v9585
      %v9587 = vsel %vm9584, %v9586, %v9582
      %v9588 = vmul.f32 1.0, %v9587
      %v9589 = vrcp.pop %v7503
      %v9590 = vmul.f32 %v7503, %v9589
      %v9591 = vsub.f32 1.0, %v9590
      %v9592 = vmul.f32 %v9589, %v9591
      %v9593 = vadd.f32 %v9589, %v9592
      %vm9594 = vweird.f32 %v7503
      %vm9595 = vweird.f32 %v9589
      %vm9596 = vmor %vm9594, %vm9595
      %v9597 = vsel %vm9596, %v9589, %v9593
      %v9598 = vand.u32 2147483647, %v7503
      %vm9599 = vcmp.eq.f32.partialorder %v9598, 8.507059e+37
      %v9600 = vand.u32 %v7503, 2147483648
      %v9601 = vor.u32 1.1754944e-38, %v9600
      %v9602 = vsel %vm9599, %v9601, %v9597
      %v9603 = vmul.f32 1.0, %v9602
      %v9604 = vrcp.pop %v7504
      %v9605 = vmul.f32 %v7504, %v9604
      %v9606 = vsub.f32 1.0, %v9605
      %v9607 = vmul.f32 %v9604, %v9606
      %v9608 = vadd.f32 %v9604, %v9607
      %vm9609 = vweird.f32 %v7504
      %vm9610 = vweird.f32 %v9604
      %vm9611 = vmor %vm9609, %vm9610
      %v9612 = vsel %vm9611, %v9604, %v9608
      %v9613 = vand.u32 2147483647, %v7504
      %vm9614 = vcmp.eq.f32.partialorder %v9613, 8.507059e+37
      %v9615 = vand.u32 %v7504, 2147483648
      %v9616 = vor.u32 1.1754944e-38, %v9615
      %v9617 = vsel %vm9614, %v9616, %v9612
      %v9618 = vmul.f32 1.0, %v9617
      %v9619 = vrcp.pop %v7505
      %v9620 = vmul.f32 %v7505, %v9619
      %v9621 = vsub.f32 1.0, %v9620
      %v9622 = vmul.f32 %v9619, %v9621
      %v9623 = vadd.f32 %v9619, %v9622
      %vm9624 = vweird.f32 %v7505
      %vm9625 = vweird.f32 %v9619
      %vm9626 = vmor %vm9624, %vm9625
      %v9627 = vsel %vm9626, %v9619, %v9623
      %v9628 = vand.u32 2147483647, %v7505
      %vm9629 = vcmp.eq.f32.partialorder %v9628, 8.507059e+37
      %v9630 = vand.u32 %v7505, 2147483648
      %v9631 = vor.u32 1.1754944e-38, %v9630
      %v9632 = vsel %vm9629, %v9631, %v9627
      %v9633 = vmul.f32 1.0, %v9632
      %v9634 = vrcp.pop %v7506
      %v9635 = vmul.f32 %v7506, %v9634
      %v9636 = vsub.f32 1.0, %v9635
      %v9637 = vmul.f32 %v9634, %v9636
      %v9638 = vadd.f32 %v9634, %v9637
      %vm9639 = vweird.f32 %v7506
      %vm9640 = vweird.f32 %v9634
      %vm9641 = vmor %vm9639, %vm9640
      %v9642 = vsel %vm9641, %v9634, %v9638
      %v9643 = vand.u32 2147483647, %v7506
      %vm9644 = vcmp.eq.f32.partialorder %v9643, 8.507059e+37
      %v9645 = vand.u32 %v7506, 2147483648
      %v9646 = vor.u32 1.1754944e-38, %v9645
      %v9647 = vsel %vm9644, %v9646, %v9642
      %v9648 = vmul.f32 1.0, %v9647
      %v9649 = vrcp.pop %v7507
      %v9650 = vmul.f32 %v7507, %v9649
      %v9651 = vsub.f32 1.0, %v9650
      %v9652 = vmul.f32 %v9649, %v9651
      %v9653 = vadd.f32 %v9649, %v9652
      %vm9654 = vweird.f32 %v7507
      %vm9655 = vweird.f32 %v9649
      %vm9656 = vmor %vm9654, %vm9655
      %v9657 = vsel %vm9656, %v9649, %v9653
      %v9658 = vand.u32 2147483647, %v7507
      %vm9659 = vcmp.eq.f32.partialorder %v9658, 8.507059e+37
      %v9660 = vand.u32 %v7507, 2147483648
      %v9661 = vor.u32 1.1754944e-38, %v9660
      %v9662 = vsel %vm9659, %v9661, %v9657
      %v9663 = vmul.f32 1.0, %v9662
      %v9664 = vrcp.pop %v7508
      %v9665 = vmul.f32 %v7508, %v9664
      %v9666 = vsub.f32 1.0, %v9665
      %v9667 = vmul.f32 %v9664, %v9666
      %v9668 = vadd.f32 %v9664, %v9667
      %vm9669 = vweird.f32 %v7508
      %vm9670 = vweird.f32 %v9664
      %vm9671 = vmor %vm9669, %vm9670
      %v9672 = vsel %vm9671, %v9664, %v9668
      %v9673 = vand.u32 2147483647, %v7508
      %vm9674 = vcmp.eq.f32.partialorder %v9673, 8.507059e+37
      %v9675 = vand.u32 %v7508, 2147483648
      %v9676 = vor.u32 1.1754944e-38, %v9675
      %v9677 = vsel %vm9674, %v9676, %v9672
      %v9678 = vmul.f32 1.0, %v9677
      %v9679 = vrcp.pop %v7509
      %v9680 = vmul.f32 %v7509, %v9679
      %v9681 = vsub.f32 1.0, %v9680
      %v9682 = vmul.f32 %v9679, %v9681
      %v9683 = vadd.f32 %v9679, %v9682
      %vm9684 = vweird.f32 %v7509
      %vm9685 = vweird.f32 %v9679
      %vm9686 = vmor %vm9684, %vm9685
      %v9687 = vsel %vm9686, %v9679, %v9683
      %v9688 = vand.u32 2147483647, %v7509
      %vm9689 = vcmp.eq.f32.partialorder %v9688, 8.507059e+37
      %v9690 = vand.u32 %v7509, 2147483648
      %v9691 = vor.u32 1.1754944e-38, %v9690
      %v9692 = vsel %vm9689, %v9691, %v9687
      %v9693 = vmul.f32 1.0, %v9692
      %v9694 = vrcp.pop %v7510
      %v9695 = vmul.f32 %v7510, %v9694
      %v9696 = vsub.f32 1.0, %v9695
      %v9697 = vmul.f32 %v9694, %v9696
      %v9698 = vadd.f32 %v9694, %v9697
      %vm9699 = vweird.f32 %v7510
      %vm9700 = vweird.f32 %v9694
      %vm9701 = vmor %vm9699, %vm9700
      %v9702 = vsel %vm9701, %v9694, %v9698
      %v9703 = vand.u32 2147483647, %v7510
      %vm9704 = vcmp.eq.f32.partialorder %v9703, 8.507059e+37
      %v9705 = vand.u32 %v7510, 2147483648
      %v9706 = vor.u32 1.1754944e-38, %v9705
      %v9707 = vsel %vm9704, %v9706, %v9702
      %v9708 = vmul.f32 1.0, %v9707
      %v9709 = vrcp.pop %v7511
      %v9710 = vmul.f32 %v7511, %v9709
      %v9711 = vsub.f32 1.0, %v9710
      %v9712 = vmul.f32 %v9709, %v9711
      %v9713 = vadd.f32 %v9709, %v9712
      %vm9714 = vweird.f32 %v7511
      %vm9715 = vweird.f32 %v9709
      %vm9716 = vmor %vm9714, %vm9715
      %v9717 = vsel %vm9716, %v9709, %v9713
      %v9718 = vand.u32 2147483647, %v7511
      %vm9719 = vcmp.eq.f32.partialorder %v9718, 8.507059e+37
      %v9720 = vand.u32 %v7511, 2147483648
      %v9721 = vor.u32 1.1754944e-38, %v9720
      %v9722 = vsel %vm9719, %v9721, %v9717
      %v9723 = vmul.f32 1.0, %v9722
      %v9724 = vrcp.pop %v7512
      %v9725 = vmul.f32 %v7512, %v9724
      %v9726 = vsub.f32 1.0, %v9725
      %v9727 = vmul.f32 %v9724, %v9726
      %v9728 = vadd.f32 %v9724, %v9727
      %vm9729 = vweird.f32 %v7512
      %vm9730 = vweird.f32 %v9724
      %vm9731 = vmor %vm9729, %vm9730
      %v9732 = vsel %vm9731, %v9724, %v9728
      %v9733 = vand.u32 2147483647, %v7512
      %vm9734 = vcmp.eq.f32.partialorder %v9733, 8.507059e+37
      %v9735 = vand.u32 %v7512, 2147483648
      %v9736 = vor.u32 1.1754944e-38, %v9735
      %v9737 = vsel %vm9734, %v9736, %v9732
      %v9738 = vmul.f32 1.0, %v9737
      %v9739 = vrcp.pop %v7513
      %v9740 = vmul.f32 %v7513, %v9739
      %v9741 = vsub.f32 1.0, %v9740
      %v9742 = vmul.f32 %v9739, %v9741
      %v9743 = vadd.f32 %v9739, %v9742
      %vm9744 = vweird.f32 %v7513
      %vm9745 = vweird.f32 %v9739
      %vm9746 = vmor %vm9744, %vm9745
      %v9747 = vsel %vm9746, %v9739, %v9743
      %v9748 = vand.u32 2147483647, %v7513
      %vm9749 = vcmp.eq.f32.partialorder %v9748, 8.507059e+37
      %v9750 = vand.u32 %v7513, 2147483648
      %v9751 = vor.u32 1.1754944e-38, %v9750
      %v9752 = vsel %vm9749, %v9751, %v9747
      %v9753 = vmul.f32 1.0, %v9752
      %v9754 = vrcp.pop %v7514
      %v9755 = vmul.f32 %v7514, %v9754
      %v9756 = vsub.f32 1.0, %v9755
      %v9757 = vmul.f32 %v9754, %v9756
      %v9758 = vadd.f32 %v9754, %v9757
      %vm9759 = vweird.f32 %v7514
      %vm9760 = vweird.f32 %v9754
      %vm9761 = vmor %vm9759, %vm9760
      %v9762 = vsel %vm9761, %v9754, %v9758
      %v9763 = vand.u32 2147483647, %v7514
      %vm9764 = vcmp.eq.f32.partialorder %v9763, 8.507059e+37
      %v9765 = vand.u32 %v7514, 2147483648
      %v9766 = vor.u32 1.1754944e-38, %v9765
      %v9767 = vsel %vm9764, %v9766, %v9762
      %v9768 = vmul.f32 1.0, %v9767
      %v9769 = vrcp.pop %v7515
      %v9770 = vmul.f32 %v7515, %v9769
      %v9771 = vsub.f32 1.0, %v9770
      %v9772 = vmul.f32 %v9769, %v9771
      %v9773 = vadd.f32 %v9769, %v9772
      %vm9774 = vweird.f32 %v7515
      %vm9775 = vweird.f32 %v9769
      %vm9776 = vmor %vm9774, %vm9775
      %v9777 = vsel %vm9776, %v9769, %v9773
      %v9778 = vand.u32 2147483647, %v7515
      %vm9779 = vcmp.eq.f32.partialorder %v9778, 8.507059e+37
      %v9780 = vand.u32 %v7515, 2147483648
      %v9781 = vor.u32 1.1754944e-38, %v9780
      %v9782 = vsel %vm9779, %v9781, %v9777
      %v9783 = vmul.f32 1.0, %v9782
      %v9784 = vrcp.pop %v7516
      %v9785 = vmul.f32 %v7516, %v9784
      %v9786 = vsub.f32 1.0, %v9785
      %v9787 = vmul.f32 %v9784, %v9786
      %v9788 = vadd.f32 %v9784, %v9787
      %vm9789 = vweird.f32 %v7516
      %vm9790 = vweird.f32 %v9784
      %vm9791 = vmor %vm9789, %vm9790
      %v9792 = vsel %vm9791, %v9784, %v9788
      %v9793 = vand.u32 2147483647, %v7516
      %vm9794 = vcmp.eq.f32.partialorder %v9793, 8.507059e+37
      %v9795 = vand.u32 %v7516, 2147483648
      %v9796 = vor.u32 1.1754944e-38, %v9795
      %v9797 = vsel %vm9794, %v9796, %v9792
      %v9798 = vmul.f32 1.0, %v9797
      %v9799 = vrcp.pop %v7517
      %v9800 = vmul.f32 %v7517, %v9799
      %v9801 = vsub.f32 1.0, %v9800
      %v9802 = vmul.f32 %v9799, %v9801
      %v9803 = vadd.f32 %v9799, %v9802
      %vm9804 = vweird.f32 %v7517
      %vm9805 = vweird.f32 %v9799
      %vm9806 = vmor %vm9804, %vm9805
      %v9807 = vsel %vm9806, %v9799, %v9803
      %v9808 = vand.u32 2147483647, %v7517
      %vm9809 = vcmp.eq.f32.partialorder %v9808, 8.507059e+37
      %v9810 = vand.u32 %v7517, 2147483648
      %v9811 = vor.u32 1.1754944e-38, %v9810
      %v9812 = vsel %vm9809, %v9811, %v9807
      %v9813 = vmul.f32 1.0, %v9812
      %v9814 = vrcp.pop %v7518
      %v9815 = vmul.f32 %v7518, %v9814
      %v9816 = vsub.f32 1.0, %v9815
      %v9817 = vmul.f32 %v9814, %v9816
      %v9818 = vadd.f32 %v9814, %v9817
      %vm9819 = vweird.f32 %v7518
      %vm9820 = vweird.f32 %v9814
      %vm9821 = vmor %vm9819, %vm9820
      %v9822 = vsel %vm9821, %v9814, %v9818
      %v9823 = vand.u32 2147483647, %v7518
      %vm9824 = vcmp.eq.f32.partialorder %v9823, 8.507059e+37
      %v9825 = vand.u32 %v7518, 2147483648
      %v9826 = vor.u32 1.1754944e-38, %v9825
      %v9827 = vsel %vm9824, %v9826, %v9822
      %v9828 = vmul.f32 1.0, %v9827
      %v9829 = vrcp.pop %v7519
      %v9830 = vmul.f32 %v7519, %v9829
      %v9831 = vsub.f32 1.0, %v9830
      %v9832 = vmul.f32 %v9829, %v9831
      %v9833 = vadd.f32 %v9829, %v9832
      %vm9834 = vweird.f32 %v7519
      %vm9835 = vweird.f32 %v9829
      %vm9836 = vmor %vm9834, %vm9835
      %v9837 = vsel %vm9836, %v9829, %v9833
      %v9838 = vand.u32 2147483647, %v7519
      %vm9839 = vcmp.eq.f32.partialorder %v9838, 8.507059e+37
      %v9840 = vand.u32 %v7519, 2147483648
      %v9841 = vor.u32 1.1754944e-38, %v9840
      %v9842 = vsel %vm9839, %v9841, %v9837
      %v9843 = vmul.f32 1.0, %v9842
      %v9844 = vrcp.pop %v7520
      %v9845 = vmul.f32 %v7520, %v9844
      %v9846 = vsub.f32 1.0, %v9845
      %v9847 = vmul.f32 %v9844, %v9846
      %v9848 = vadd.f32 %v9844, %v9847
      %vm9849 = vweird.f32 %v7520
      %vm9850 = vweird.f32 %v9844
      %vm9851 = vmor %vm9849, %vm9850
      %v9852 = vsel %vm9851, %v9844, %v9848
      %v9853 = vand.u32 2147483647, %v7520
      %vm9854 = vcmp.eq.f32.partialorder %v9853, 8.507059e+37
      %v9855 = vand.u32 %v7520, 2147483648
      %v9856 = vor.u32 1.1754944e-38, %v9855
      %v9857 = vsel %vm9854, %v9856, %v9852
      %v9858 = vmul.f32 1.0, %v9857
      %v9859 = vrcp.pop %v7521
      %v9860 = vmul.f32 %v7521, %v9859
      %v9861 = vsub.f32 1.0, %v9860
      %v9862 = vmul.f32 %v9859, %v9861
      %v9863 = vadd.f32 %v9859, %v9862
      %vm9864 = vweird.f32 %v7521
      %vm9865 = vweird.f32 %v9859
      %vm9866 = vmor %vm9864, %vm9865
      %v9867 = vsel %vm9866, %v9859, %v9863
      %v9868 = vand.u32 2147483647, %v7521
      %vm9869 = vcmp.eq.f32.partialorder %v9868, 8.507059e+37
      %v9870 = vand.u32 %v7521, 2147483648
      %v9871 = vor.u32 1.1754944e-38, %v9870
      %v9872 = vsel %vm9869, %v9871, %v9867
      %v9873 = vmul.f32 1.0, %v9872
      %v9874 = vrcp.pop %v7522
      %v9875 = vmul.f32 %v7522, %v9874
      %v9876 = vsub.f32 1.0, %v9875
      %v9877 = vmul.f32 %v9874, %v9876
      %v9878 = vadd.f32 %v9874, %v9877
      %vm9879 = vweird.f32 %v7522
      %vm9880 = vweird.f32 %v9874
      %vm9881 = vmor %vm9879, %vm9880
      %v9882 = vsel %vm9881, %v9874, %v9878
      %v9883 = vand.u32 2147483647, %v7522
      %vm9884 = vcmp.eq.f32.partialorder %v9883, 8.507059e+37
      %v9885 = vand.u32 %v7522, 2147483648
      %v9886 = vor.u32 1.1754944e-38, %v9885
      %v9887 = vsel %vm9884, %v9886, %v9882
      %v9888 = vmul.f32 1.0, %v9887
      %v9889 = vrcp.pop %v7523
      %v9890 = vmul.f32 %v7523, %v9889
      %v9891 = vsub.f32 1.0, %v9890
      %v9892 = vmul.f32 %v9889, %v9891
      %v9893 = vadd.f32 %v9889, %v9892
      %vm9894 = vweird.f32 %v7523
      %vm9895 = vweird.f32 %v9889
      %vm9896 = vmor %vm9894, %vm9895
      %v9897 = vsel %vm9896, %v9889, %v9893
      %v9898 = vand.u32 2147483647, %v7523
      %vm9899 = vcmp.eq.f32.partialorder %v9898, 8.507059e+37
      %v9900 = vand.u32 %v7523, 2147483648
      %v9901 = vor.u32 1.1754944e-38, %v9900
      %v9902 = vsel %vm9899, %v9901, %v9897
      %v9903 = vmul.f32 1.0, %v9902
      %v9904 = vrcp.pop %v7524
      %v9905 = vmul.f32 %v7524, %v9904
      %v9906 = vsub.f32 1.0, %v9905
      %v9907 = vmul.f32 %v9904, %v9906
      %v9908 = vadd.f32 %v9904, %v9907
      %vm9909 = vweird.f32 %v7524
      %vm9910 = vweird.f32 %v9904
      %vm9911 = vmor %vm9909, %vm9910
      %v9912 = vsel %vm9911, %v9904, %v9908
      %v9913 = vand.u32 2147483647, %v7524
      %vm9914 = vcmp.eq.f32.partialorder %v9913, 8.507059e+37
      %v9915 = vand.u32 %v7524, 2147483648
      %v9916 = vor.u32 1.1754944e-38, %v9915
      %v9917 = vsel %vm9914, %v9916, %v9912
      %v9918 = vmul.f32 1.0, %v9917
      %v9919 = vrcp.pop %v7525
      %v9920 = vmul.f32 %v7525, %v9919
      %v9921 = vsub.f32 1.0, %v9920
      %v9922 = vmul.f32 %v9919, %v9921
      %v9923 = vadd.f32 %v9919, %v9922
      %vm9924 = vweird.f32 %v7525
      %vm9925 = vweird.f32 %v9919
      %vm9926 = vmor %vm9924, %vm9925
      %v9927 = vsel %vm9926, %v9919, %v9923
      %v9928 = vand.u32 2147483647, %v7525
      %vm9929 = vcmp.eq.f32.partialorder %v9928, 8.507059e+37
      %v9930 = vand.u32 %v7525, 2147483648
      %v9931 = vor.u32 1.1754944e-38, %v9930
      %v9932 = vsel %vm9929, %v9931, %v9927
      %v9933 = vmul.f32 1.0, %v9932
      %v9934 = vrcp.pop %v7526
      %v9935 = vmul.f32 %v7526, %v9934
      %v9936 = vsub.f32 1.0, %v9935
      %v9937 = vmul.f32 %v9934, %v9936
      %v9938 = vadd.f32 %v9934, %v9937
      %vm9939 = vweird.f32 %v7526
      %vm9940 = vweird.f32 %v9934
      %vm9941 = vmor %vm9939, %vm9940
      %v9942 = vsel %vm9941, %v9934, %v9938
      %v9943 = vand.u32 2147483647, %v7526
      %vm9944 = vcmp.eq.f32.partialorder %v9943, 8.507059e+37
      %v9945 = vand.u32 %v7526, 2147483648
      %v9946 = vor.u32 1.1754944e-38, %v9945
      %v9947 = vsel %vm9944, %v9946, %v9942
      %v9948 = vmul.f32 1.0, %v9947
      %v9949 = vrcp.pop %v7527
      %v9950 = vmul.f32 %v7527, %v9949
      %v9951 = vsub.f32 1.0, %v9950
      %v9952 = vmul.f32 %v9949, %v9951
      %v9953 = vadd.f32 %v9949, %v9952
      %vm9954 = vweird.f32 %v7527
      %vm9955 = vweird.f32 %v9949
      %vm9956 = vmor %vm9954, %vm9955
      %v9957 = vsel %vm9956, %v9949, %v9953
      %v9958 = vand.u32 2147483647, %v7527
      %vm9959 = vcmp.eq.f32.partialorder %v9958, 8.507059e+37
      %v9960 = vand.u32 %v7527, 2147483648
      %v9961 = vor.u32 1.1754944e-38, %v9960
      %v9962 = vsel %vm9959, %v9961, %v9957
      %v9963 = vmul.f32 1.0, %v9962
      %v9964 = vrcp.pop %v7528
      %v9965 = vmul.f32 %v7528, %v9964
      %v9966 = vsub.f32 1.0, %v9965
      %v9967 = vmul.f32 %v9964, %v9966
      %v9968 = vadd.f32 %v9964, %v9967
      %vm9969 = vweird.f32 %v7528
      %vm9970 = vweird.f32 %v9964
      %vm9971 = vmor %vm9969, %vm9970
      %v9972 = vsel %vm9971, %v9964, %v9968
      %v9973 = vand.u32 2147483647, %v7528
      %vm9974 = vcmp.eq.f32.partialorder %v9973, 8.507059e+37
      %v9975 = vand.u32 %v7528, 2147483648
      %v9976 = vor.u32 1.1754944e-38, %v9975
      %v9977 = vsel %vm9974, %v9976, %v9972
      %v9978 = vmul.f32 1.0, %v9977
      %v9979 = vrcp.pop %v7529
      %v9980 = vmul.f32 %v7529, %v9979
      %v9981 = vsub.f32 1.0, %v9980
      %v9982 = vmul.f32 %v9979, %v9981
      %v9983 = vadd.f32 %v9979, %v9982
      %vm9984 = vweird.f32 %v7529
      %vm9985 = vweird.f32 %v9979
      %vm9986 = vmor %vm9984, %vm9985
      %v9987 = vsel %vm9986, %v9979, %v9983
      %v9988 = vand.u32 2147483647, %v7529
      %vm9989 = vcmp.eq.f32.partialorder %v9988, 8.507059e+37
      %v9990 = vand.u32 %v7529, 2147483648
      %v9991 = vor.u32 1.1754944e-38, %v9990
      %v9992 = vsel %vm9989, %v9991, %v9987
      %v9993 = vmul.f32 1.0, %v9992
      %v9994 = vrcp.pop %v7530
      %v9995 = vmul.f32 %v7530, %v9994
      %v9996 = vsub.f32 1.0, %v9995
      %v9997 = vmul.f32 %v9994, %v9996
      %v9998 = vadd.f32 %v9994, %v9997
      %vm9999 = vweird.f32 %v7530
      %vm10000 = vweird.f32 %v9994
      %vm10001 = vmor %vm9999, %vm10000
      %v10002 = vsel %vm10001, %v9994, %v9998
      %v10003 = vand.u32 2147483647, %v7530
      %vm10004 = vcmp.eq.f32.partialorder %v10003, 8.507059e+37
      %v10005 = vand.u32 %v7530, 2147483648
      %v10006 = vor.u32 1.1754944e-38, %v10005
      %v10007 = vsel %vm10004, %v10006, %v10002
      %v10008 = vmul.f32 1.0, %v10007
      %v10009 = vrcp.pop %v7531
      %v10010 = vmul.f32 %v7531, %v10009
      %v10011 = vsub.f32 1.0, %v10010
      %v10012 = vmul.f32 %v10009, %v10011
      %v10013 = vadd.f32 %v10009, %v10012
      %vm10014 = vweird.f32 %v7531
      %vm10015 = vweird.f32 %v10009
      %vm10016 = vmor %vm10014, %vm10015
      %v10017 = vsel %vm10016, %v10009, %v10013
      %v10018 = vand.u32 2147483647, %v7531
      %vm10019 = vcmp.eq.f32.partialorder %v10018, 8.507059e+37
      %v10020 = vand.u32 %v7531, 2147483648
      %v10021 = vor.u32 1.1754944e-38, %v10020
      %v10022 = vsel %vm10019, %v10021, %v10017
      %v10023 = vmul.f32 1.0, %v10022
      %v10024 = vrcp.pop %v7532
      %v10025 = vmul.f32 %v7532, %v10024
      %v10026 = vsub.f32 1.0, %v10025
      %v10027 = vmul.f32 %v10024, %v10026
      %v10028 = vadd.f32 %v10024, %v10027
      %vm10029 = vweird.f32 %v7532
      %vm10030 = vweird.f32 %v10024
      %vm10031 = vmor %vm10029, %vm10030
      %v10032 = vsel %vm10031, %v10024, %v10028
      %v10033 = vand.u32 2147483647, %v7532
      %vm10034 = vcmp.eq.f32.partialorder %v10033, 8.507059e+37
      %v10035 = vand.u32 %v7532, 2147483648
      %v10036 = vor.u32 1.1754944e-38, %v10035
      %v10037 = vsel %vm10034, %v10036, %v10032
      %v10038 = vmul.f32 1.0, %v10037
      %v10039 = vrcp.pop %v7533
      %v10040 = vmul.f32 %v7533, %v10039
      %v10041 = vsub.f32 1.0, %v10040
      %v10042 = vmul.f32 %v10039, %v10041
      %v10043 = vadd.f32 %v10039, %v10042
      %vm10044 = vweird.f32 %v7533
      %vm10045 = vweird.f32 %v10039
      %vm10046 = vmor %vm10044, %vm10045
      %v10047 = vsel %vm10046, %v10039, %v10043
      %v10048 = vand.u32 2147483647, %v7533
      %vm10049 = vcmp.eq.f32.partialorder %v10048, 8.507059e+37
      %v10050 = vand.u32 %v7533, 2147483648
      %v10051 = vor.u32 1.1754944e-38, %v10050
      %v10052 = vsel %vm10049, %v10051, %v10047
      %v10053 = vmul.f32 1.0, %v10052
      %v10054 = vrcp.pop %v7534
      %v10055 = vmul.f32 %v7534, %v10054
      %v10056 = vsub.f32 1.0, %v10055
      %v10057 = vmul.f32 %v10054, %v10056
      %v10058 = vadd.f32 %v10054, %v10057
      %vm10059 = vweird.f32 %v7534
      %vm10060 = vweird.f32 %v10054
      %vm10061 = vmor %vm10059, %vm10060
      %v10062 = vsel %vm10061, %v10054, %v10058
      %v10063 = vand.u32 2147483647, %v7534
      %vm10064 = vcmp.eq.f32.partialorder %v10063, 8.507059e+37
      %v10065 = vand.u32 %v7534, 2147483648
      %v10066 = vor.u32 1.1754944e-38, %v10065
      %v10067 = vsel %vm10064, %v10066, %v10062
      %v10068 = vmul.f32 1.0, %v10067
      %v10069 = vrcp.pop %v7535
      %v10070 = vmul.f32 %v7535, %v10069
      %v10071 = vsub.f32 1.0, %v10070
      %v10072 = vmul.f32 %v10069, %v10071
      %v10073 = vadd.f32 %v10069, %v10072
      %vm10074 = vweird.f32 %v7535
      %vm10075 = vweird.f32 %v10069
      %vm10076 = vmor %vm10074, %vm10075
      %v10077 = vsel %vm10076, %v10069, %v10073
      %v10078 = vand.u32 2147483647, %v7535
      %vm10079 = vcmp.eq.f32.partialorder %v10078, 8.507059e+37
      %v10080 = vand.u32 %v7535, 2147483648
      %v10081 = vor.u32 1.1754944e-38, %v10080
      %v10082 = vsel %vm10079, %v10081, %v10077
      %v10083 = vmul.f32 1.0, %v10082
      %v10084 = vrcp.pop %v7536
      %v10085 = vmul.f32 %v7536, %v10084
      %v10086 = vsub.f32 1.0, %v10085
      %v10087 = vmul.f32 %v10084, %v10086
      %v10088 = vadd.f32 %v10084, %v10087
      %vm10089 = vweird.f32 %v7536
      %vm10090 = vweird.f32 %v10084
      %vm10091 = vmor %vm10089, %vm10090
      %v10092 = vsel %vm10091, %v10084, %v10088
      %v10093 = vand.u32 2147483647, %v7536
      %vm10094 = vcmp.eq.f32.partialorder %v10093, 8.507059e+37
      %v10095 = vand.u32 %v7536, 2147483648
      %v10096 = vor.u32 1.1754944e-38, %v10095
      %v10097 = vsel %vm10094, %v10096, %v10092
      %v10098 = vmul.f32 1.0, %v10097
      %v10099 = vrcp.pop %v7537
      %v10100 = vmul.f32 %v7537, %v10099
      %v10101 = vsub.f32 1.0, %v10100
      %v10102 = vmul.f32 %v10099, %v10101
      %v10103 = vadd.f32 %v10099, %v10102
      %vm10104 = vweird.f32 %v7537
      %vm10105 = vweird.f32 %v10099
      %vm10106 = vmor %vm10104, %vm10105
      %v10107 = vsel %vm10106, %v10099, %v10103
      %v10108 = vand.u32 2147483647, %v7537
      %vm10109 = vcmp.eq.f32.partialorder %v10108, 8.507059e+37
      %v10110 = vand.u32 %v7537, 2147483648
      %v10111 = vor.u32 1.1754944e-38, %v10110
      %v10112 = vsel %vm10109, %v10111, %v10107
      %v10113 = vmul.f32 1.0, %v10112
      %v10114 = vrcp.pop %v7538
      %v10115 = vmul.f32 %v7538, %v10114
      %v10116 = vsub.f32 1.0, %v10115
      %v10117 = vmul.f32 %v10114, %v10116
      %v10118 = vadd.f32 %v10114, %v10117
      %vm10119 = vweird.f32 %v7538
      %vm10120 = vweird.f32 %v10114
      %vm10121 = vmor %vm10119, %vm10120
      %v10122 = vsel %vm10121, %v10114, %v10118
      %v10123 = vand.u32 2147483647, %v7538
      %vm10124 = vcmp.eq.f32.partialorder %v10123, 8.507059e+37
      %v10125 = vand.u32 %v7538, 2147483648
      %v10126 = vor.u32 1.1754944e-38, %v10125
      %v10127 = vsel %vm10124, %v10126, %v10122
      %v10128 = vmul.f32 1.0, %v10127
      %v10129 = vrcp.pop %v7539
      %v10130 = vmul.f32 %v7539, %v10129
      %v10131 = vsub.f32 1.0, %v10130
      %v10132 = vmul.f32 %v10129, %v10131
      %v10133 = vadd.f32 %v10129, %v10132
      %vm10134 = vweird.f32 %v7539
      %vm10135 = vweird.f32 %v10129
      %vm10136 = vmor %vm10134, %vm10135
      %v10137 = vsel %vm10136, %v10129, %v10133
      %v10138 = vand.u32 2147483647, %v7539
      %vm10139 = vcmp.eq.f32.partialorder %v10138, 8.507059e+37
      %v10140 = vand.u32 %v7539, 2147483648
      %v10141 = vor.u32 1.1754944e-38, %v10140
      %v10142 = vsel %vm10139, %v10141, %v10137
      %v10143 = vmul.f32 1.0, %v10142
      %v10144 = vrcp.pop %v7540
      %v10145 = vmul.f32 %v7540, %v10144
      %v10146 = vsub.f32 1.0, %v10145
      %v10147 = vmul.f32 %v10144, %v10146
      %v10148 = vadd.f32 %v10144, %v10147
      %vm10149 = vweird.f32 %v7540
      %vm10150 = vweird.f32 %v10144
      %vm10151 = vmor %vm10149, %vm10150
      %v10152 = vsel %vm10151, %v10144, %v10148
      %v10153 = vand.u32 2147483647, %v7540
      %vm10154 = vcmp.eq.f32.partialorder %v10153, 8.507059e+37
      %v10155 = vand.u32 %v7540, 2147483648
      %v10156 = vor.u32 1.1754944e-38, %v10155
      %v10157 = vsel %vm10154, %v10156, %v10152
      %v10158 = vmul.f32 1.0, %v10157
      %v10159 = vrcp.pop %v7541
      %v10160 = vmul.f32 %v7541, %v10159
      %v10161 = vsub.f32 1.0, %v10160
      %v10162 = vmul.f32 %v10159, %v10161
      %v10163 = vadd.f32 %v10159, %v10162
      %vm10164 = vweird.f32 %v7541
      %vm10165 = vweird.f32 %v10159
      %vm10166 = vmor %vm10164, %vm10165
      %v10167 = vsel %vm10166, %v10159, %v10163
      %v10168 = vand.u32 2147483647, %v7541
      %vm10169 = vcmp.eq.f32.partialorder %v10168, 8.507059e+37
      %v10170 = vand.u32 %v7541, 2147483648
      %v10171 = vor.u32 1.1754944e-38, %v10170
      %v10172 = vsel %vm10169, %v10171, %v10167
      %v10173 = vmul.f32 1.0, %v10172
      %v10174 = vrcp.pop %v7542
      %v10175 = vmul.f32 %v7542, %v10174
      %v10176 = vsub.f32 1.0, %v10175
      %v10177 = vmul.f32 %v10174, %v10176
      %v10178 = vadd.f32 %v10174, %v10177
      %vm10179 = vweird.f32 %v7542
      %vm10180 = vweird.f32 %v10174
      %vm10181 = vmor %vm10179, %vm10180
      %v10182 = vsel %vm10181, %v10174, %v10178
      %v10183 = vand.u32 2147483647, %v7542
      %vm10184 = vcmp.eq.f32.partialorder %v10183, 8.507059e+37
      %v10185 = vand.u32 %v7542, 2147483648
      %v10186 = vor.u32 1.1754944e-38, %v10185
      %v10187 = vsel %vm10184, %v10186, %v10182
      %v10188 = vmul.f32 1.0, %v10187
      %v10189 = vrcp.pop %v7543
      %v10190 = vmul.f32 %v7543, %v10189
      %v10191 = vsub.f32 1.0, %v10190
      %v10192 = vmul.f32 %v10189, %v10191
      %v10193 = vadd.f32 %v10189, %v10192
      %vm10194 = vweird.f32 %v7543
      %vm10195 = vweird.f32 %v10189
      %vm10196 = vmor %vm10194, %vm10195
      %v10197 = vsel %vm10196, %v10189, %v10193
      %v10198 = vand.u32 2147483647, %v7543
      %vm10199 = vcmp.eq.f32.partialorder %v10198, 8.507059e+37
      %v10200 = vand.u32 %v7543, 2147483648
      %v10201 = vor.u32 1.1754944e-38, %v10200
      %v10202 = vsel %vm10199, %v10201, %v10197
      %v10203 = vmul.f32 1.0, %v10202
      %v10204 = vrcp.pop %v7544
      %v10205 = vmul.f32 %v7544, %v10204
      %v10206 = vsub.f32 1.0, %v10205
      %v10207 = vmul.f32 %v10204, %v10206
      %v10208 = vadd.f32 %v10204, %v10207
      %vm10209 = vweird.f32 %v7544
      %vm10210 = vweird.f32 %v10204
      %vm10211 = vmor %vm10209, %vm10210
      %v10212 = vsel %vm10211, %v10204, %v10208
      %v10213 = vand.u32 2147483647, %v7544
      %vm10214 = vcmp.eq.f32.partialorder %v10213, 8.507059e+37
      %v10215 = vand.u32 %v7544, 2147483648
      %v10216 = vor.u32 1.1754944e-38, %v10215
      %v10217 = vsel %vm10214, %v10216, %v10212
      %v10218 = vmul.f32 1.0, %v10217
      %v10219 = vrcp.pop %v7545
      %v10220 = vmul.f32 %v7545, %v10219
      %v10221 = vsub.f32 1.0, %v10220
      %v10222 = vmul.f32 %v10219, %v10221
      %v10223 = vadd.f32 %v10219, %v10222
      %vm10224 = vweird.f32 %v7545
      %vm10225 = vweird.f32 %v10219
      %vm10226 = vmor %vm10224, %vm10225
      %v10227 = vsel %vm10226, %v10219, %v10223
      %v10228 = vand.u32 2147483647, %v7545
      %vm10229 = vcmp.eq.f32.partialorder %v10228, 8.507059e+37
      %v10230 = vand.u32 %v7545, 2147483648
      %v10231 = vor.u32 1.1754944e-38, %v10230
      %v10232 = vsel %vm10229, %v10231, %v10227
      %v10233 = vmul.f32 1.0, %v10232
      %v10234 = vrcp.pop %v7546
      %v10235 = vmul.f32 %v7546, %v10234
      %v10236 = vsub.f32 1.0, %v10235
      %v10237 = vmul.f32 %v10234, %v10236
      %v10238 = vadd.f32 %v10234, %v10237
      %vm10239 = vweird.f32 %v7546
      %vm10240 = vweird.f32 %v10234
      %vm10241 = vmor %vm10239, %vm10240
      %v10242 = vsel %vm10241, %v10234, %v10238
      %v10243 = vand.u32 2147483647, %v7546
      %vm10244 = vcmp.eq.f32.partialorder %v10243, 8.507059e+37
      %v10245 = vand.u32 %v7546, 2147483648
      %v10246 = vor.u32 1.1754944e-38, %v10245
      %v10247 = vsel %vm10244, %v10246, %v10242
      %v10248 = vmul.f32 1.0, %v10247
      %v10249 = vrcp.pop %v7547
      %v10250 = vmul.f32 %v7547, %v10249
      %v10251 = vsub.f32 1.0, %v10250
      %v10252 = vmul.f32 %v10249, %v10251
      %v10253 = vadd.f32 %v10249, %v10252
      %vm10254 = vweird.f32 %v7547
      %vm10255 = vweird.f32 %v10249
      %vm10256 = vmor %vm10254, %vm10255
      %v10257 = vsel %vm10256, %v10249, %v10253
      %v10258 = vand.u32 2147483647, %v7547
      %vm10259 = vcmp.eq.f32.partialorder %v10258, 8.507059e+37
      %v10260 = vand.u32 %v7547, 2147483648
      %v10261 = vor.u32 1.1754944e-38, %v10260
      %v10262 = vsel %vm10259, %v10261, %v10257
      %v10263 = vmul.f32 1.0, %v10262
      %v10264 = vrcp.pop %v7548
      %v10265 = vmul.f32 %v7548, %v10264
      %v10266 = vsub.f32 1.0, %v10265
      %v10267 = vmul.f32 %v10264, %v10266
      %v10268 = vadd.f32 %v10264, %v10267
      %vm10269 = vweird.f32 %v7548
      %vm10270 = vweird.f32 %v10264
      %vm10271 = vmor %vm10269, %vm10270
      %v10272 = vsel %vm10271, %v10264, %v10268
      %v10273 = vand.u32 2147483647, %v7548
      %vm10274 = vcmp.eq.f32.partialorder %v10273, 8.507059e+37
      %v10275 = vand.u32 %v7548, 2147483648
      %v10276 = vor.u32 1.1754944e-38, %v10275
      %v10277 = vsel %vm10274, %v10276, %v10272
      %v10278 = vmul.f32 1.0, %v10277
      %v10279 = vrcp.pop %v7549
      %v10280 = vmul.f32 %v7549, %v10279
      %v10281 = vsub.f32 1.0, %v10280
      %v10282 = vmul.f32 %v10279, %v10281
      %v10283 = vadd.f32 %v10279, %v10282
      %vm10284 = vweird.f32 %v7549
      %vm10285 = vweird.f32 %v10279
      %vm10286 = vmor %vm10284, %vm10285
      %v10287 = vsel %vm10286, %v10279, %v10283
      %v10288 = vand.u32 2147483647, %v7549
      %vm10289 = vcmp.eq.f32.partialorder %v10288, 8.507059e+37
      %v10290 = vand.u32 %v7549, 2147483648
      %v10291 = vor.u32 1.1754944e-38, %v10290
      %v10292 = vsel %vm10289, %v10291, %v10287
      %v10293 = vmul.f32 1.0, %v10292
      %v10294 = vrcp.pop %v7550
      %v10295 = vmul.f32 %v7550, %v10294
      %v10296 = vsub.f32 1.0, %v10295
      %v10297 = vmul.f32 %v10294, %v10296
      %v10298 = vadd.f32 %v10294, %v10297
      %vm10299 = vweird.f32 %v7550
      %vm10300 = vweird.f32 %v10294
      %vm10301 = vmor %vm10299, %vm10300
      %v10302 = vsel %vm10301, %v10294, %v10298
      %v10303 = vand.u32 2147483647, %v7550
      %vm10304 = vcmp.eq.f32.partialorder %v10303, 8.507059e+37
      %v10305 = vand.u32 %v7550, 2147483648
      %v10306 = vor.u32 1.1754944e-38, %v10305
      %v10307 = vsel %vm10304, %v10306, %v10302
      %v10308 = vmul.f32 1.0, %v10307
      %v10309 = vrcp.pop %v7551
      %v10310 = vmul.f32 %v7551, %v10309
      %v10311 = vsub.f32 1.0, %v10310
      %v10312 = vmul.f32 %v10309, %v10311
      %v10313 = vadd.f32 %v10309, %v10312
      %vm10314 = vweird.f32 %v7551
      %vm10315 = vweird.f32 %v10309
      %vm10316 = vmor %vm10314, %vm10315
      %v10317 = vsel %vm10316, %v10309, %v10313
      %v10318 = vand.u32 2147483647, %v7551
      %vm10319 = vcmp.eq.f32.partialorder %v10318, 8.507059e+37
      %v10320 = vand.u32 %v7551, 2147483648
      %v10321 = vor.u32 1.1754944e-38, %v10320
      %v10322 = vsel %vm10319, %v10321, %v10317
      %v10323 = vmul.f32 1.0, %v10322
      %v10324 = vrcp.pop %v7552
      %v10325 = vmul.f32 %v7552, %v10324
      %v10326 = vsub.f32 1.0, %v10325
      %v10327 = vmul.f32 %v10324, %v10326
      %v10328 = vadd.f32 %v10324, %v10327
      %vm10329 = vweird.f32 %v7552
      %vm10330 = vweird.f32 %v10324
      %vm10331 = vmor %vm10329, %vm10330
      %v10332 = vsel %vm10331, %v10324, %v10328
      %v10333 = vand.u32 2147483647, %v7552
      %vm10334 = vcmp.eq.f32.partialorder %v10333, 8.507059e+37
      %v10335 = vand.u32 %v7552, 2147483648
      %v10336 = vor.u32 1.1754944e-38, %v10335
      %v10337 = vsel %vm10334, %v10336, %v10332
      %v10338 = vmul.f32 1.0, %v10337
      %v10339 = vrcp.pop %v7553
      %v10340 = vmul.f32 %v7553, %v10339
      %v10341 = vsub.f32 1.0, %v10340
      %v10342 = vmul.f32 %v10339, %v10341
      %v10343 = vadd.f32 %v10339, %v10342
      %vm10344 = vweird.f32 %v7553
      %vm10345 = vweird.f32 %v10339
      %vm10346 = vmor %vm10344, %vm10345
      %v10347 = vsel %vm10346, %v10339, %v10343
      %v10348 = vand.u32 2147483647, %v7553
      %vm10349 = vcmp.eq.f32.partialorder %v10348, 8.507059e+37
      %v10350 = vand.u32 %v7553, 2147483648
      %v10351 = vor.u32 1.1754944e-38, %v10350
      %v10352 = vsel %vm10349, %v10351, %v10347
      %v10353 = vmul.f32 1.0, %v10352
      %v10354 = vrcp.pop %v7554
      %v10355 = vmul.f32 %v7554, %v10354
      %v10356 = vsub.f32 1.0, %v10355
      %v10357 = vmul.f32 %v10354, %v10356
      %v10358 = vadd.f32 %v10354, %v10357
      %vm10359 = vweird.f32 %v7554
      %vm10360 = vweird.f32 %v10354
      %vm10361 = vmor %vm10359, %vm10360
      %v10362 = vsel %vm10361, %v10354, %v10358
      %v10363 = vand.u32 2147483647, %v7554
      %vm10364 = vcmp.eq.f32.partialorder %v10363, 8.507059e+37
      %v10365 = vand.u32 %v7554, 2147483648
      %v10366 = vor.u32 1.1754944e-38, %v10365
      %v10367 = vsel %vm10364, %v10366, %v10362
      %v10368 = vmul.f32 1.0, %v10367
      %v10369 = vrcp.pop %v7555
      %v10370 = vmul.f32 %v7555, %v10369
      %v10371 = vsub.f32 1.0, %v10370
      %v10372 = vmul.f32 %v10369, %v10371
      %v10373 = vadd.f32 %v10369, %v10372
      %vm10374 = vweird.f32 %v7555
      %vm10375 = vweird.f32 %v10369
      %vm10376 = vmor %vm10374, %vm10375
      %v10377 = vsel %vm10376, %v10369, %v10373
      %v10378 = vand.u32 2147483647, %v7555
      %vm10379 = vcmp.eq.f32.partialorder %v10378, 8.507059e+37
      %v10380 = vand.u32 %v7555, 2147483648
      %v10381 = vor.u32 1.1754944e-38, %v10380
      %v10382 = vsel %vm10379, %v10381, %v10377
      %v10383 = vmul.f32 1.0, %v10382
      %v10384 = vrcp.pop %v7556
      %v10385 = vmul.f32 %v7556, %v10384
      %v10386 = vsub.f32 1.0, %v10385
      %v10387 = vmul.f32 %v10384, %v10386
      %v10388 = vadd.f32 %v10384, %v10387
      %vm10389 = vweird.f32 %v7556
      %vm10390 = vweird.f32 %v10384
      %vm10391 = vmor %vm10389, %vm10390
      %v10392 = vsel %vm10391, %v10384, %v10388
      %v10393 = vand.u32 2147483647, %v7556
      %vm10394 = vcmp.eq.f32.partialorder %v10393, 8.507059e+37
      %v10395 = vand.u32 %v7556, 2147483648
      %v10396 = vor.u32 1.1754944e-38, %v10395
      %v10397 = vsel %vm10394, %v10396, %v10392
      %v10398 = vmul.f32 1.0, %v10397
      %v10399 = vrcp.pop %v7557
      %v10400 = vmul.f32 %v7557, %v10399
      %v10401 = vsub.f32 1.0, %v10400
      %v10402 = vmul.f32 %v10399, %v10401
      %v10403 = vadd.f32 %v10399, %v10402
      %vm10404 = vweird.f32 %v7557
      %vm10405 = vweird.f32 %v10399
      %vm10406 = vmor %vm10404, %vm10405
      %v10407 = vsel %vm10406, %v10399, %v10403
      %v10408 = vand.u32 2147483647, %v7557
      %vm10409 = vcmp.eq.f32.partialorder %v10408, 8.507059e+37
      %v10410 = vand.u32 %v7557, 2147483648
      %v10411 = vor.u32 1.1754944e-38, %v10410
      %v10412 = vsel %vm10409, %v10411, %v10407
      %v10413 = vmul.f32 1.0, %v10412
      %v10414 = vrcp.pop %v7558
      %v10415 = vmul.f32 %v7558, %v10414
      %v10416 = vsub.f32 1.0, %v10415
      %v10417 = vmul.f32 %v10414, %v10416
      %v10418 = vadd.f32 %v10414, %v10417
      %vm10419 = vweird.f32 %v7558
      %vm10420 = vweird.f32 %v10414
      %vm10421 = vmor %vm10419, %vm10420
      %v10422 = vsel %vm10421, %v10414, %v10418
      %v10423 = vand.u32 2147483647, %v7558
      %vm10424 = vcmp.eq.f32.partialorder %v10423, 8.507059e+37
      %v10425 = vand.u32 %v7558, 2147483648
      %v10426 = vor.u32 1.1754944e-38, %v10425
      %v10427 = vsel %vm10424, %v10426, %v10422
      %v10428 = vmul.f32 1.0, %v10427
      %v10429 = vrcp.pop %v7559
      %v10430 = vmul.f32 %v7559, %v10429
      %v10431 = vsub.f32 1.0, %v10430
      %v10432 = vmul.f32 %v10429, %v10431
      %v10433 = vadd.f32 %v10429, %v10432
      %vm10434 = vweird.f32 %v7559
      %vm10435 = vweird.f32 %v10429
      %vm10436 = vmor %vm10434, %vm10435
      %v10437 = vsel %vm10436, %v10429, %v10433
      %v10438 = vand.u32 2147483647, %v7559
      %vm10439 = vcmp.eq.f32.partialorder %v10438, 8.507059e+37
      %v10440 = vand.u32 %v7559, 2147483648
      %v10441 = vor.u32 1.1754944e-38, %v10440
      %v10442 = vsel %vm10439, %v10441, %v10437
      %v10443 = vmul.f32 1.0, %v10442
      %v10444 = vrcp.pop %v7560
      %v10445 = vmul.f32 %v7560, %v10444
      %v10446 = vsub.f32 1.0, %v10445
      %v10447 = vmul.f32 %v10444, %v10446
      %v10448 = vadd.f32 %v10444, %v10447
      %vm10449 = vweird.f32 %v7560
      %vm10450 = vweird.f32 %v10444
      %vm10451 = vmor %vm10449, %vm10450
      %v10452 = vsel %vm10451, %v10444, %v10448
      %v10453 = vand.u32 2147483647, %v7560
      %vm10454 = vcmp.eq.f32.partialorder %v10453, 8.507059e+37
      %v10455 = vand.u32 %v7560, 2147483648
      %v10456 = vor.u32 1.1754944e-38, %v10455
      %v10457 = vsel %vm10454, %v10456, %v10452
      %v10458 = vmul.f32 1.0, %v10457
      %v10459 = vrcp.pop %v7561
      %v10460 = vmul.f32 %v7561, %v10459
      %v10461 = vsub.f32 1.0, %v10460
      %v10462 = vmul.f32 %v10459, %v10461
      %v10463 = vadd.f32 %v10459, %v10462
      %vm10464 = vweird.f32 %v7561
      %vm10465 = vweird.f32 %v10459
      %vm10466 = vmor %vm10464, %vm10465
      %v10467 = vsel %vm10466, %v10459, %v10463
      %v10468 = vand.u32 2147483647, %v7561
      %vm10469 = vcmp.eq.f32.partialorder %v10468, 8.507059e+37
      %v10470 = vand.u32 %v7561, 2147483648
      %v10471 = vor.u32 1.1754944e-38, %v10470
      %v10472 = vsel %vm10469, %v10471, %v10467
      %v10473 = vmul.f32 1.0, %v10472
      %v10474 = vrcp.pop %v7562
      %v10475 = vmul.f32 %v7562, %v10474
      %v10476 = vsub.f32 1.0, %v10475
      %v10477 = vmul.f32 %v10474, %v10476
      %v10478 = vadd.f32 %v10474, %v10477
      %vm10479 = vweird.f32 %v7562
      %vm10480 = vweird.f32 %v10474
      %vm10481 = vmor %vm10479, %vm10480
      %v10482 = vsel %vm10481, %v10474, %v10478
      %v10483 = vand.u32 2147483647, %v7562
      %vm10484 = vcmp.eq.f32.partialorder %v10483, 8.507059e+37
      %v10485 = vand.u32 %v7562, 2147483648
      %v10486 = vor.u32 1.1754944e-38, %v10485
      %v10487 = vsel %vm10484, %v10486, %v10482
      %v10488 = vmul.f32 1.0, %v10487
      %v10489 = vrcp.pop %v7563
      %v10490 = vmul.f32 %v7563, %v10489
      %v10491 = vsub.f32 1.0, %v10490
      %v10492 = vmul.f32 %v10489, %v10491
      %v10493 = vadd.f32 %v10489, %v10492
      %vm10494 = vweird.f32 %v7563
      %vm10495 = vweird.f32 %v10489
      %vm10496 = vmor %vm10494, %vm10495
      %v10497 = vsel %vm10496, %v10489, %v10493
      %v10498 = vand.u32 2147483647, %v7563
      %vm10499 = vcmp.eq.f32.partialorder %v10498, 8.507059e+37
      %v10500 = vand.u32 %v7563, 2147483648
      %v10501 = vor.u32 1.1754944e-38, %v10500
      %v10502 = vsel %vm10499, %v10501, %v10497
      %v10503 = vmul.f32 1.0, %v10502
      %v10504 = vrcp.pop %v7564
      %v10505 = vmul.f32 %v7564, %v10504
      %v10506 = vsub.f32 1.0, %v10505
      %v10507 = vmul.f32 %v10504, %v10506
      %v10508 = vadd.f32 %v10504, %v10507
      %vm10509 = vweird.f32 %v7564
      %vm10510 = vweird.f32 %v10504
      %vm10511 = vmor %vm10509, %vm10510
      %v10512 = vsel %vm10511, %v10504, %v10508
      %v10513 = vand.u32 2147483647, %v7564
      %vm10514 = vcmp.eq.f32.partialorder %v10513, 8.507059e+37
      %v10515 = vand.u32 %v7564, 2147483648
      %v10516 = vor.u32 1.1754944e-38, %v10515
      %v10517 = vsel %vm10514, %v10516, %v10512
      %v10518 = vmul.f32 1.0, %v10517
      %v10519 = vrcp.pop %v7565
      %v10520 = vmul.f32 %v7565, %v10519
      %v10521 = vsub.f32 1.0, %v10520
      %v10522 = vmul.f32 %v10519, %v10521
      %v10523 = vadd.f32 %v10519, %v10522
      %vm10524 = vweird.f32 %v7565
      %vm10525 = vweird.f32 %v10519
      %vm10526 = vmor %vm10524, %vm10525
      %v10527 = vsel %vm10526, %v10519, %v10523
      %v10528 = vand.u32 2147483647, %v7565
      %vm10529 = vcmp.eq.f32.partialorder %v10528, 8.507059e+37
      %v10530 = vand.u32 %v7565, 2147483648
      %v10531 = vor.u32 1.1754944e-38, %v10530
      %v10532 = vsel %vm10529, %v10531, %v10527
      %v10533 = vmul.f32 1.0, %v10532
      %v10534 = vrcp.pop %v7566
      %v10535 = vmul.f32 %v7566, %v10534
      %v10536 = vsub.f32 1.0, %v10535
      %v10537 = vmul.f32 %v10534, %v10536
      %v10538 = vadd.f32 %v10534, %v10537
      %vm10539 = vweird.f32 %v7566
      %vm10540 = vweird.f32 %v10534
      %vm10541 = vmor %vm10539, %vm10540
      %v10542 = vsel %vm10541, %v10534, %v10538
      %v10543 = vand.u32 2147483647, %v7566
      %vm10544 = vcmp.eq.f32.partialorder %v10543, 8.507059e+37
      %v10545 = vand.u32 %v7566, 2147483648
      %v10546 = vor.u32 1.1754944e-38, %v10545
      %v10547 = vsel %vm10544, %v10546, %v10542
      %v10548 = vmul.f32 1.0, %v10547
      %v10549 = vrcp.pop %v7567
      %v10550 = vmul.f32 %v7567, %v10549
      %v10551 = vsub.f32 1.0, %v10550
      %v10552 = vmul.f32 %v10549, %v10551
      %v10553 = vadd.f32 %v10549, %v10552
      %vm10554 = vweird.f32 %v7567
      %vm10555 = vweird.f32 %v10549
      %vm10556 = vmor %vm10554, %vm10555
      %v10557 = vsel %vm10556, %v10549, %v10553
      %v10558 = vand.u32 2147483647, %v7567
      %vm10559 = vcmp.eq.f32.partialorder %v10558, 8.507059e+37
      %v10560 = vand.u32 %v7567, 2147483648
      %v10561 = vor.u32 1.1754944e-38, %v10560
      %v10562 = vsel %vm10559, %v10561, %v10557
      %v10563 = vmul.f32 1.0, %v10562
      %v10564 = vrcp.pop %v7568
      %v10565 = vmul.f32 %v7568, %v10564
      %v10566 = vsub.f32 1.0, %v10565
      %v10567 = vmul.f32 %v10564, %v10566
      %v10568 = vadd.f32 %v10564, %v10567
      %vm10569 = vweird.f32 %v7568
      %vm10570 = vweird.f32 %v10564
      %vm10571 = vmor %vm10569, %vm10570
      %v10572 = vsel %vm10571, %v10564, %v10568
      %v10573 = vand.u32 2147483647, %v7568
      %vm10574 = vcmp.eq.f32.partialorder %v10573, 8.507059e+37
      %v10575 = vand.u32 %v7568, 2147483648
      %v10576 = vor.u32 1.1754944e-38, %v10575
      %v10577 = vsel %vm10574, %v10576, %v10572
      %v10578 = vmul.f32 1.0, %v10577
      %v10579 = vrcp.pop %v7569
      %v10580 = vmul.f32 %v7569, %v10579
      %v10581 = vsub.f32 1.0, %v10580
      %v10582 = vmul.f32 %v10579, %v10581
      %v10583 = vadd.f32 %v10579, %v10582
      %vm10584 = vweird.f32 %v7569
      %vm10585 = vweird.f32 %v10579
      %vm10586 = vmor %vm10584, %vm10585
      %v10587 = vsel %vm10586, %v10579, %v10583
      %v10588 = vand.u32 2147483647, %v7569
      %vm10589 = vcmp.eq.f32.partialorder %v10588, 8.507059e+37
      %v10590 = vand.u32 %v7569, 2147483648
      %v10591 = vor.u32 1.1754944e-38, %v10590
      %v10592 = vsel %vm10589, %v10591, %v10587
      %v10593 = vmul.f32 1.0, %v10592
      %v10594 = vrcp.pop %v7570
      %v10595 = vmul.f32 %v7570, %v10594
      %v10596 = vsub.f32 1.0, %v10595
      %v10597 = vmul.f32 %v10594, %v10596
      %v10598 = vadd.f32 %v10594, %v10597
      %vm10599 = vweird.f32 %v7570
      %vm10600 = vweird.f32 %v10594
      %vm10601 = vmor %vm10599, %vm10600
      %v10602 = vsel %vm10601, %v10594, %v10598
      %v10603 = vand.u32 2147483647, %v7570
      %vm10604 = vcmp.eq.f32.partialorder %v10603, 8.507059e+37
      %v10605 = vand.u32 %v7570, 2147483648
      %v10606 = vor.u32 1.1754944e-38, %v10605
      %v10607 = vsel %vm10604, %v10606, %v10602
      %v10608 = vmul.f32 1.0, %v10607
      %v10609 = vrcp.pop %v7571
      %v10610 = vmul.f32 %v7571, %v10609
      %v10611 = vsub.f32 1.0, %v10610
      %v10612 = vmul.f32 %v10609, %v10611
      %v10613 = vadd.f32 %v10609, %v10612
      %vm10614 = vweird.f32 %v7571
      %vm10615 = vweird.f32 %v10609
      %vm10616 = vmor %vm10614, %vm10615
      %v10617 = vsel %vm10616, %v10609, %v10613
      %v10618 = vand.u32 2147483647, %v7571
      %vm10619 = vcmp.eq.f32.partialorder %v10618, 8.507059e+37
      %v10620 = vand.u32 %v7571, 2147483648
      %v10621 = vor.u32 1.1754944e-38, %v10620
      %v10622 = vsel %vm10619, %v10621, %v10617
      %v10623 = vmul.f32 1.0, %v10622
      %v10624 = vrcp.pop %v7572
      %v10625 = vmul.f32 %v7572, %v10624
      %v10626 = vsub.f32 1.0, %v10625
      %v10627 = vmul.f32 %v10624, %v10626
      %v10628 = vadd.f32 %v10624, %v10627
      %vm10629 = vweird.f32 %v7572
      %vm10630 = vweird.f32 %v10624
      %vm10631 = vmor %vm10629, %vm10630
      %v10632 = vsel %vm10631, %v10624, %v10628
      %v10633 = vand.u32 2147483647, %v7572
      %vm10634 = vcmp.eq.f32.partialorder %v10633, 8.507059e+37
      %v10635 = vand.u32 %v7572, 2147483648
      %v10636 = vor.u32 1.1754944e-38, %v10635
      %v10637 = vsel %vm10634, %v10636, %v10632
      %v10638 = vmul.f32 1.0, %v10637
      %v10639 = vrcp.pop %v7573
      %v10640 = vmul.f32 %v7573, %v10639
      %v10641 = vsub.f32 1.0, %v10640
      %v10642 = vmul.f32 %v10639, %v10641
      %v10643 = vadd.f32 %v10639, %v10642
      %vm10644 = vweird.f32 %v7573
      %vm10645 = vweird.f32 %v10639
      %vm10646 = vmor %vm10644, %vm10645
      %v10647 = vsel %vm10646, %v10639, %v10643
      %v10648 = vand.u32 2147483647, %v7573
      %vm10649 = vcmp.eq.f32.partialorder %v10648, 8.507059e+37
      %v10650 = vand.u32 %v7573, 2147483648
      %v10651 = vor.u32 1.1754944e-38, %v10650
      %v10652 = vsel %vm10649, %v10651, %v10647
      %v10653 = vmul.f32 1.0, %v10652
      %v10654 = vrcp.pop %v7574
      %v10655 = vmul.f32 %v7574, %v10654
      %v10656 = vsub.f32 1.0, %v10655
      %v10657 = vmul.f32 %v10654, %v10656
      %v10658 = vadd.f32 %v10654, %v10657
      %vm10659 = vweird.f32 %v7574
      %vm10660 = vweird.f32 %v10654
      %vm10661 = vmor %vm10659, %vm10660
      %v10662 = vsel %vm10661, %v10654, %v10658
      %v10663 = vand.u32 2147483647, %v7574
      %vm10664 = vcmp.eq.f32.partialorder %v10663, 8.507059e+37
      %v10665 = vand.u32 %v7574, 2147483648
      %v10666 = vor.u32 1.1754944e-38, %v10665
      %v10667 = vsel %vm10664, %v10666, %v10662
      %v10668 = vmul.f32 1.0, %v10667
      %v10669 = vrcp.pop %v7575
      %v10670 = vmul.f32 %v7575, %v10669
      %v10671 = vsub.f32 1.0, %v10670
      %v10672 = vmul.f32 %v10669, %v10671
      %v10673 = vadd.f32 %v10669, %v10672
      %vm10674 = vweird.f32 %v7575
      %vm10675 = vweird.f32 %v10669
      %vm10676 = vmor %vm10674, %vm10675
      %v10677 = vsel %vm10676, %v10669, %v10673
      %v10678 = vand.u32 2147483647, %v7575
      %vm10679 = vcmp.eq.f32.partialorder %v10678, 8.507059e+37
      %v10680 = vand.u32 %v7575, 2147483648
      %v10681 = vor.u32 1.1754944e-38, %v10680
      %v10682 = vsel %vm10679, %v10681, %v10677
      %v10683 = vmul.f32 1.0, %v10682
      %v10684 = vrcp.pop %v7576
      %v10685 = vmul.f32 %v7576, %v10684
      %v10686 = vsub.f32 1.0, %v10685
      %v10687 = vmul.f32 %v10684, %v10686
      %v10688 = vadd.f32 %v10684, %v10687
      %vm10689 = vweird.f32 %v7576
      %vm10690 = vweird.f32 %v10684
      %vm10691 = vmor %vm10689, %vm10690
      %v10692 = vsel %vm10691, %v10684, %v10688
      %v10693 = vand.u32 2147483647, %v7576
      %vm10694 = vcmp.eq.f32.partialorder %v10693, 8.507059e+37
      %v10695 = vand.u32 %v7576, 2147483648
      %v10696 = vor.u32 1.1754944e-38, %v10695
      %v10697 = vsel %vm10694, %v10696, %v10692
      %v10698 = vmul.f32 1.0, %v10697
      %v10699 = vrcp.pop %v7577
      %v10700 = vmul.f32 %v7577, %v10699
      %v10701 = vsub.f32 1.0, %v10700
      %v10702 = vmul.f32 %v10699, %v10701
      %v10703 = vadd.f32 %v10699, %v10702
      %vm10704 = vweird.f32 %v7577
      %vm10705 = vweird.f32 %v10699
      %vm10706 = vmor %vm10704, %vm10705
      %v10707 = vsel %vm10706, %v10699, %v10703
      %v10708 = vand.u32 2147483647, %v7577
      %vm10709 = vcmp.eq.f32.partialorder %v10708, 8.507059e+37
      %v10710 = vand.u32 %v7577, 2147483648
      %v10711 = vor.u32 1.1754944e-38, %v10710
      %v10712 = vsel %vm10709, %v10711, %v10707
      %v10713 = vmul.f32 1.0, %v10712
      %v10714 = vrcp.pop %v7578
      %v10715 = vmul.f32 %v7578, %v10714
      %v10716 = vsub.f32 1.0, %v10715
      %v10717 = vmul.f32 %v10714, %v10716
      %v10718 = vadd.f32 %v10714, %v10717
      %vm10719 = vweird.f32 %v7578
      %vm10720 = vweird.f32 %v10714
      %vm10721 = vmor %vm10719, %vm10720
      %v10722 = vsel %vm10721, %v10714, %v10718
      %v10723 = vand.u32 2147483647, %v7578
      %vm10724 = vcmp.eq.f32.partialorder %v10723, 8.507059e+37
      %v10725 = vand.u32 %v7578, 2147483648
      %v10726 = vor.u32 1.1754944e-38, %v10725
      %v10727 = vsel %vm10724, %v10726, %v10722
      %v10728 = vmul.f32 1.0, %v10727
      %v10729 = vrcp.pop %v7579
      %v10730 = vmul.f32 %v7579, %v10729
      %v10731 = vsub.f32 1.0, %v10730
      %v10732 = vmul.f32 %v10729, %v10731
      %v10733 = vadd.f32 %v10729, %v10732
      %vm10734 = vweird.f32 %v7579
      %vm10735 = vweird.f32 %v10729
      %vm10736 = vmor %vm10734, %vm10735
      %v10737 = vsel %vm10736, %v10729, %v10733
      %v10738 = vand.u32 2147483647, %v7579
      %vm10739 = vcmp.eq.f32.partialorder %v10738, 8.507059e+37
      %v10740 = vand.u32 %v7579, 2147483648
      %v10741 = vor.u32 1.1754944e-38, %v10740
      %v10742 = vsel %vm10739, %v10741, %v10737
      %v10743 = vmul.f32 1.0, %v10742
      %v10744 = vrcp.pop %v7580
      %v10745 = vmul.f32 %v7580, %v10744
      %v10746 = vsub.f32 1.0, %v10745
      %v10747 = vmul.f32 %v10744, %v10746
      %v10748 = vadd.f32 %v10744, %v10747
      %vm10749 = vweird.f32 %v7580
      %vm10750 = vweird.f32 %v10744
      %vm10751 = vmor %vm10749, %vm10750
      %v10752 = vsel %vm10751, %v10744, %v10748
      %v10753 = vand.u32 2147483647, %v7580
      %vm10754 = vcmp.eq.f32.partialorder %v10753, 8.507059e+37
      %v10755 = vand.u32 %v7580, 2147483648
      %v10756 = vor.u32 1.1754944e-38, %v10755
      %v10757 = vsel %vm10754, %v10756, %v10752
      %v10758 = vmul.f32 1.0, %v10757
      %v10759 = vrcp.pop %v7581
      %v10760 = vmul.f32 %v7581, %v10759
      %v10761 = vsub.f32 1.0, %v10760
      %v10762 = vmul.f32 %v10759, %v10761
      %v10763 = vadd.f32 %v10759, %v10762
      %vm10764 = vweird.f32 %v7581
      %vm10765 = vweird.f32 %v10759
      %vm10766 = vmor %vm10764, %vm10765
      %v10767 = vsel %vm10766, %v10759, %v10763
      %v10768 = vand.u32 2147483647, %v7581
      %vm10769 = vcmp.eq.f32.partialorder %v10768, 8.507059e+37
      %v10770 = vand.u32 %v7581, 2147483648
      %v10771 = vor.u32 1.1754944e-38, %v10770
      %v10772 = vsel %vm10769, %v10771, %v10767
      %v10773 = vmul.f32 1.0, %v10772
      %v10774 = vrcp.pop %v7582
      %v10775 = vmul.f32 %v7582, %v10774
      %v10776 = vsub.f32 1.0, %v10775
      %v10777 = vmul.f32 %v10774, %v10776
      %v10778 = vadd.f32 %v10774, %v10777
      %vm10779 = vweird.f32 %v7582
      %vm10780 = vweird.f32 %v10774
      %vm10781 = vmor %vm10779, %vm10780
      %v10782 = vsel %vm10781, %v10774, %v10778
      %v10783 = vand.u32 2147483647, %v7582
      %vm10784 = vcmp.eq.f32.partialorder %v10783, 8.507059e+37
      %v10785 = vand.u32 %v7582, 2147483648
      %v10786 = vor.u32 1.1754944e-38, %v10785
      %v10787 = vsel %vm10784, %v10786, %v10782
      %v10788 = vmul.f32 1.0, %v10787
      %v10789 = vrcp.pop %v7583
      %v10790 = vmul.f32 %v7583, %v10789
      %v10791 = vsub.f32 1.0, %v10790
      %v10792 = vmul.f32 %v10789, %v10791
      %v10793 = vadd.f32 %v10789, %v10792
      %vm10794 = vweird.f32 %v7583
      %vm10795 = vweird.f32 %v10789
      %vm10796 = vmor %vm10794, %vm10795
      %v10797 = vsel %vm10796, %v10789, %v10793
      %v10798 = vand.u32 2147483647, %v7583
      %vm10799 = vcmp.eq.f32.partialorder %v10798, 8.507059e+37
      %v10800 = vand.u32 %v7583, 2147483648
      %v10801 = vor.u32 1.1754944e-38, %v10800
      %v10802 = vsel %vm10799, %v10801, %v10797
      %v10803 = vmul.f32 1.0, %v10802
      %v10804 = vrcp.pop %v7584
      %v10805 = vmul.f32 %v7584, %v10804
      %v10806 = vsub.f32 1.0, %v10805
      %v10807 = vmul.f32 %v10804, %v10806
      %v10808 = vadd.f32 %v10804, %v10807
      %vm10809 = vweird.f32 %v7584
      %vm10810 = vweird.f32 %v10804
      %vm10811 = vmor %vm10809, %vm10810
      %v10812 = vsel %vm10811, %v10804, %v10808
      %v10813 = vand.u32 2147483647, %v7584
      %vm10814 = vcmp.eq.f32.partialorder %v10813, 8.507059e+37
      %v10815 = vand.u32 %v7584, 2147483648
      %v10816 = vor.u32 1.1754944e-38, %v10815
      %v10817 = vsel %vm10814, %v10816, %v10812
      %v10818 = vmul.f32 1.0, %v10817
      %v10819 = vrcp.pop %v7585
      %v10820 = vmul.f32 %v7585, %v10819
      %v10821 = vsub.f32 1.0, %v10820
      %v10822 = vmul.f32 %v10819, %v10821
      %v10823 = vadd.f32 %v10819, %v10822
      %vm10824 = vweird.f32 %v7585
      %vm10825 = vweird.f32 %v10819
      %vm10826 = vmor %vm10824, %vm10825
      %v10827 = vsel %vm10826, %v10819, %v10823
      %v10828 = vand.u32 2147483647, %v7585
      %vm10829 = vcmp.eq.f32.partialorder %v10828, 8.507059e+37
      %v10830 = vand.u32 %v7585, 2147483648
      %v10831 = vor.u32 1.1754944e-38, %v10830
      %v10832 = vsel %vm10829, %v10831, %v10827
      %v10833 = vmul.f32 1.0, %v10832
      %v10834 = vrcp.pop %v7586
      %v10835 = vmul.f32 %v7586, %v10834
      %v10836 = vsub.f32 1.0, %v10835
      %v10837 = vmul.f32 %v10834, %v10836
      %v10838 = vadd.f32 %v10834, %v10837
      %vm10839 = vweird.f32 %v7586
      %vm10840 = vweird.f32 %v10834
      %vm10841 = vmor %vm10839, %vm10840
      %v10842 = vsel %vm10841, %v10834, %v10838
      %v10843 = vand.u32 2147483647, %v7586
      %vm10844 = vcmp.eq.f32.partialorder %v10843, 8.507059e+37
      %v10845 = vand.u32 %v7586, 2147483648
      %v10846 = vor.u32 1.1754944e-38, %v10845
      %v10847 = vsel %vm10844, %v10846, %v10842
      %v10848 = vmul.f32 1.0, %v10847
      %v10849 = vrcp.pop %v7587
      %v10850 = vmul.f32 %v7587, %v10849
      %v10851 = vsub.f32 1.0, %v10850
      %v10852 = vmul.f32 %v10849, %v10851
      %v10853 = vadd.f32 %v10849, %v10852
      %vm10854 = vweird.f32 %v7587
      %vm10855 = vweird.f32 %v10849
      %vm10856 = vmor %vm10854, %vm10855
      %v10857 = vsel %vm10856, %v10849, %v10853
      %v10858 = vand.u32 2147483647, %v7587
      %vm10859 = vcmp.eq.f32.partialorder %v10858, 8.507059e+37
      %v10860 = vand.u32 %v7587, 2147483648
      %v10861 = vor.u32 1.1754944e-38, %v10860
      %v10862 = vsel %vm10859, %v10861, %v10857
      %v10863 = vmul.f32 1.0, %v10862
      %v10864 = vrcp.pop %v7588
      %v10865 = vmul.f32 %v7588, %v10864
      %v10866 = vsub.f32 1.0, %v10865
      %v10867 = vmul.f32 %v10864, %v10866
      %v10868 = vadd.f32 %v10864, %v10867
      %vm10869 = vweird.f32 %v7588
      %vm10870 = vweird.f32 %v10864
      %vm10871 = vmor %vm10869, %vm10870
      %v10872 = vsel %vm10871, %v10864, %v10868
      %v10873 = vand.u32 2147483647, %v7588
      %vm10874 = vcmp.eq.f32.partialorder %v10873, 8.507059e+37
      %v10875 = vand.u32 %v7588, 2147483648
      %v10876 = vor.u32 1.1754944e-38, %v10875
      %v10877 = vsel %vm10874, %v10876, %v10872
      %v10878 = vmul.f32 1.0, %v10877
      %v10879 = vrcp.pop %v7589
      %v10880 = vmul.f32 %v7589, %v10879
      %v10881 = vsub.f32 1.0, %v10880
      %v10882 = vmul.f32 %v10879, %v10881
      %v10883 = vadd.f32 %v10879, %v10882
      %vm10884 = vweird.f32 %v7589
      %vm10885 = vweird.f32 %v10879
      %vm10886 = vmor %vm10884, %vm10885
      %v10887 = vsel %vm10886, %v10879, %v10883
      %v10888 = vand.u32 2147483647, %v7589
      %vm10889 = vcmp.eq.f32.partialorder %v10888, 8.507059e+37
      %v10890 = vand.u32 %v7589, 2147483648
      %v10891 = vor.u32 1.1754944e-38, %v10890
      %v10892 = vsel %vm10889, %v10891, %v10887
      %v10893 = vmul.f32 1.0, %v10892
      %v10894 = vrcp.pop %v7590
      %v10895 = vmul.f32 %v7590, %v10894
      %v10896 = vsub.f32 1.0, %v10895
      %v10897 = vmul.f32 %v10894, %v10896
      %v10898 = vadd.f32 %v10894, %v10897
      %vm10899 = vweird.f32 %v7590
      %vm10900 = vweird.f32 %v10894
      %vm10901 = vmor %vm10899, %vm10900
      %v10902 = vsel %vm10901, %v10894, %v10898
      %v10903 = vand.u32 2147483647, %v7590
      %vm10904 = vcmp.eq.f32.partialorder %v10903, 8.507059e+37
      %v10905 = vand.u32 %v7590, 2147483648
      %v10906 = vor.u32 1.1754944e-38, %v10905
      %v10907 = vsel %vm10904, %v10906, %v10902
      %v10908 = vmul.f32 1.0, %v10907
      %v10909 = vrcp.pop %v7591
      %v10910 = vmul.f32 %v7591, %v10909
      %v10911 = vsub.f32 1.0, %v10910
      %v10912 = vmul.f32 %v10909, %v10911
      %v10913 = vadd.f32 %v10909, %v10912
      %vm10914 = vweird.f32 %v7591
      %vm10915 = vweird.f32 %v10909
      %vm10916 = vmor %vm10914, %vm10915
      %v10917 = vsel %vm10916, %v10909, %v10913
      %v10918 = vand.u32 2147483647, %v7591
      %vm10919 = vcmp.eq.f32.partialorder %v10918, 8.507059e+37
      %v10920 = vand.u32 %v7591, 2147483648
      %v10921 = vor.u32 1.1754944e-38, %v10920
      %v10922 = vsel %vm10919, %v10921, %v10917
      %v10923 = vmul.f32 1.0, %v10922
      %v10924 = vrcp.pop %v7592
      %v10925 = vmul.f32 %v7592, %v10924
      %v10926 = vsub.f32 1.0, %v10925
      %v10927 = vmul.f32 %v10924, %v10926
      %v10928 = vadd.f32 %v10924, %v10927
      %vm10929 = vweird.f32 %v7592
      %vm10930 = vweird.f32 %v10924
      %vm10931 = vmor %vm10929, %vm10930
      %v10932 = vsel %vm10931, %v10924, %v10928
      %v10933 = vand.u32 2147483647, %v7592
      %vm10934 = vcmp.eq.f32.partialorder %v10933, 8.507059e+37
      %v10935 = vand.u32 %v7592, 2147483648
      %v10936 = vor.u32 1.1754944e-38, %v10935
      %v10937 = vsel %vm10934, %v10936, %v10932
      %v10938 = vmul.f32 1.0, %v10937
      %v10939 = vrcp.pop %v7593
      %v10940 = vmul.f32 %v7593, %v10939
      %v10941 = vsub.f32 1.0, %v10940
      %v10942 = vmul.f32 %v10939, %v10941
      %v10943 = vadd.f32 %v10939, %v10942
      %vm10944 = vweird.f32 %v7593
      %vm10945 = vweird.f32 %v10939
      %vm10946 = vmor %vm10944, %vm10945
      %v10947 = vsel %vm10946, %v10939, %v10943
      %v10948 = vand.u32 2147483647, %v7593
      %vm10949 = vcmp.eq.f32.partialorder %v10948, 8.507059e+37
      %v10950 = vand.u32 %v7593, 2147483648
      %v10951 = vor.u32 1.1754944e-38, %v10950
      %v10952 = vsel %vm10949, %v10951, %v10947
      %v10953 = vmul.f32 1.0, %v10952
      %10954 = vst [vmem:[%s285] sm:$0xff] %v7608
      %10955 = vst [vmem:[%s285 + $0x8] sm:$0xff] %v7623
      %10956 = vst [vmem:[%s285 + $0x10] sm:$0xff] %v7638
      %10957 = vst [vmem:[%s285 + $0x18] sm:$0xff] %v7653
      %10958 = vst [vmem:[%s285 + $0x20] sm:$0xff] %v7668
      %10959 = vst [vmem:[%s285 + $0x28] sm:$0xff] %v7683
      %10960 = vst.msk [vmem:[%s285 + $0x30] sm:$0xff] %vm1218, %v7698
      %10961 = vst [vmem:[%s285 + $0x38] sm:$0xff] %v7713
      %10962 = vst [vmem:[%s285 + $0x40] sm:$0xff] %v7728
      %10963 = vst [vmem:[%s285 + $0x48] sm:$0xff] %v7743
      %10964 = vst [vmem:[%s285 + $0x50] sm:$0xff] %v7758
      %10965 = vst [vmem:[%s285 + $0x58] sm:$0xff] %v7773
      %10966 = vst [vmem:[%s285 + $0x60] sm:$0xff] %v7788
      %10967 = vst.msk [vmem:[%s285 + $0x68] sm:$0xff] %vm1218, %v7803
      %10968 = vst [vmem:[%s285 + $0x70] sm:$0xff] %v7818
      %10969 = vst [vmem:[%s285 + $0x78] sm:$0xff] %v7833
      %10970 = vst [vmem:[%s285 + $0x80] sm:$0xff] %v7848
      %10971 = vst [vmem:[%s285 + $0x88] sm:$0xff] %v7863
      %10972 = vst [vmem:[%s285 + $0x90] sm:$0xff] %v7878
      %10973 = vst [vmem:[%s285 + $0x98] sm:$0xff] %v7893
      %10974 = vst.msk [vmem:[%s285 + $0xa0] sm:$0xff] %vm1218, %v7908
      %10975 = vst [vmem:[%s285 + $0xa8] sm:$0xff] %v7923
      %10976 = vst [vmem:[%s285 + $0xb0] sm:$0xff] %v7938
      %10977 = vst [vmem:[%s285 + $0xb8] sm:$0xff] %v7953
      %10978 = vst [vmem:[%s285 + $0xc0] sm:$0xff] %v7968
      %10979 = vst [vmem:[%s285 + $0xc8] sm:$0xff] %v7983
      %10980 = vst [vmem:[%s285 + $0xd0] sm:$0xff] %v7998
      %10981 = vst.msk [vmem:[%s285 + $0xd8] sm:$0xff] %vm1218, %v8013
      %10982 = vst [vmem:[%s285 + $0xe0] sm:$0xff] %v8028
      %10983 = vst [vmem:[%s285 + $0xe8] sm:$0xff] %v8043
      %10984 = vst [vmem:[%s285 + $0xf0] sm:$0xff] %v8058
      %10985 = vst [vmem:[%s285 + $0xf8] sm:$0xff] %v8073
      %10986 = vst [vmem:[%s285 + $0x100] sm:$0xff] %v8088
      %10987 = vst [vmem:[%s285 + $0x108] sm:$0xff] %v8103
      %10988 = vst.msk [vmem:[%s285 + $0x110] sm:$0xff] %vm1218, %v8118
      %10989 = vst [vmem:[%s285 + $0x118] sm:$0xff] %v8133
      %10990 = vst [vmem:[%s285 + $0x120] sm:$0xff] %v8148
      %10991 = vst [vmem:[%s285 + $0x128] sm:$0xff] %v8163
      %10992 = vst [vmem:[%s285 + $0x130] sm:$0xff] %v8178
      %10993 = vst [vmem:[%s285 + $0x138] sm:$0xff] %v8193
      %10994 = vst [vmem:[%s285 + $0x140] sm:$0xff] %v8208
      %10995 = vst.msk [vmem:[%s285 + $0x148] sm:$0xff] %vm1218, %v8223
      %10996 = vst [vmem:[%s285 + $0x150] sm:$0xff] %v8238
      %10997 = vst [vmem:[%s285 + $0x158] sm:$0xff] %v8253
      %10998 = vst [vmem:[%s285 + $0x160] sm:$0xff] %v8268
      %10999 = vst [vmem:[%s285 + $0x168] sm:$0xff] %v8283
      %11000 = vst [vmem:[%s285 + $0x170] sm:$0xff] %v8298
      %11001 = vst [vmem:[%s285 + $0x178] sm:$0xff] %v8313
      %11002 = vst.msk [vmem:[%s285 + $0x180] sm:$0xff] %vm1218, %v8328
      %11003 = vst [vmem:[%s285 + $0x188] sm:$0xff] %v8343
      %11004 = vst [vmem:[%s285 + $0x190] sm:$0xff] %v8358
      %11005 = vst [vmem:[%s285 + $0x198] sm:$0xff] %v8373
      %11006 = vst [vmem:[%s285 + $0x1a0] sm:$0xff] %v8388
      %11007 = vst [vmem:[%s285 + $0x1a8] sm:$0xff] %v8403
      %11008 = vst [vmem:[%s285 + $0x1b0] sm:$0xff] %v8418
      %11009 = vst.msk [vmem:[%s285 + $0x1b8] sm:$0xff] %vm1218, %v8433
      %11010 = vst [vmem:[%s285 + $0x1c0] sm:$0xff] %v8448
      %11011 = vst [vmem:[%s285 + $0x1c8] sm:$0xff] %v8463
      %11012 = vst [vmem:[%s285 + $0x1d0] sm:$0xff] %v8478
      %11013 = vst [vmem:[%s285 + $0x1d8] sm:$0xff] %v8493
      %11014 = vst [vmem:[%s285 + $0x1e0] sm:$0xff] %v8508
      %11015 = vst [vmem:[%s285 + $0x1e8] sm:$0xff] %v8523
      %11016 = vst.msk [vmem:[%s285 + $0x1f0] sm:$0xff] %vm1218, %v8538
      %11017 = vst [vmem:[%s285 + $0x1f8] sm:$0xff] %v8553
      %11018 = vst [vmem:[%s285 + $0x200] sm:$0xff] %v8568
      %11019 = vst [vmem:[%s285 + $0x208] sm:$0xff] %v8583
      %11020 = vst [vmem:[%s285 + $0x210] sm:$0xff] %v8598
      %11021 = vst [vmem:[%s285 + $0x218] sm:$0xff] %v8613
      %11022 = vst [vmem:[%s285 + $0x220] sm:$0xff] %v8628
      %11023 = vst.msk [vmem:[%s285 + $0x228] sm:$0xff] %vm1218, %v8643
      %11024 = vst [vmem:[%s285 + $0x230] sm:$0xff] %v8658
      %11025 = vst [vmem:[%s285 + $0x238] sm:$0xff] %v8673
      %11026 = vst [vmem:[%s285 + $0x240] sm:$0xff] %v8688
      %11027 = vst [vmem:[%s285 + $0x248] sm:$0xff] %v8703
      %11028 = vst [vmem:[%s285 + $0x250] sm:$0xff] %v8718
      %11029 = vst [vmem:[%s285 + $0x258] sm:$0xff] %v8733
      %11030 = vst.msk [vmem:[%s285 + $0x260] sm:$0xff] %vm1218, %v8748
      %11031 = vst [vmem:[%s285 + $0x268] sm:$0xff] %v8763
      %11032 = vst [vmem:[%s285 + $0x270] sm:$0xff] %v8778
      %11033 = vst [vmem:[%s285 + $0x278] sm:$0xff] %v8793
      %11034 = vst [vmem:[%s285 + $0x280] sm:$0xff] %v8808
      %11035 = vst [vmem:[%s285 + $0x288] sm:$0xff] %v8823
      %11036 = vst [vmem:[%s285 + $0x290] sm:$0xff] %v8838
      %11037 = vst.msk [vmem:[%s285 + $0x298] sm:$0xff] %vm1218, %v8853
      %11038 = vst [vmem:[%s285 + $0x2a0] sm:$0xff] %v8868
      %11039 = vst [vmem:[%s285 + $0x2a8] sm:$0xff] %v8883
      %11040 = vst [vmem:[%s285 + $0x2b0] sm:$0xff] %v8898
      %11041 = vst [vmem:[%s285 + $0x2b8] sm:$0xff] %v8913
      %11042 = vst [vmem:[%s285 + $0x2c0] sm:$0xff] %v8928
      %11043 = vst [vmem:[%s285 + $0x2c8] sm:$0xff] %v8943
      %11044 = vst.msk [vmem:[%s285 + $0x2d0] sm:$0xff] %vm1218, %v8958
      %11045 = vst [vmem:[%s285 + $0x2d8] sm:$0xff] %v8973
      %11046 = vst [vmem:[%s285 + $0x2e0] sm:$0xff] %v8988
      %11047 = vst [vmem:[%s285 + $0x2e8] sm:$0xff] %v9003
      %11048 = vst [vmem:[%s285 + $0x2f0] sm:$0xff] %v9018
      %11049 = vst [vmem:[%s285 + $0x2f8] sm:$0xff] %v9033
      %11050 = vst [vmem:[%s285 + $0x300] sm:$0xff] %v9048
      %11051 = vst.msk [vmem:[%s285 + $0x308] sm:$0xff] %vm1218, %v9063
      %11052 = vst [vmem:[%s285 + $0x310] sm:$0xff] %v9078
      %11053 = vst [vmem:[%s285 + $0x318] sm:$0xff] %v9093
      %11054 = vst [vmem:[%s285 + $0x320] sm:$0xff] %v9108
      %11055 = vst [vmem:[%s285 + $0x328] sm:$0xff] %v9123
      %11056 = vst [vmem:[%s285 + $0x330] sm:$0xff] %v9138
      %11057 = vst [vmem:[%s285 + $0x338] sm:$0xff] %v9153
      %11058 = vst.msk [vmem:[%s285 + $0x340] sm:$0xff] %vm1218, %v9168
      %11059 = vst [vmem:[%s285 + $0x348] sm:$0xff] %v9183
      %11060 = vst [vmem:[%s285 + $0x350] sm:$0xff] %v9198
      %11061 = vst [vmem:[%s285 + $0x358] sm:$0xff] %v9213
      %11062 = vst [vmem:[%s285 + $0x360] sm:$0xff] %v9228
      %11063 = vst [vmem:[%s285 + $0x368] sm:$0xff] %v9243
      %11064 = vst [vmem:[%s285 + $0x370] sm:$0xff] %v9258
      %11065 = vst.msk [vmem:[%s285 + $0x378] sm:$0xff] %vm1218, %v9273
      %11066 = vst [vmem:[%s285 + $0x380] sm:$0xff] %v9288
      %11067 = vst [vmem:[%s285 + $0x388] sm:$0xff] %v9303
      %11068 = vst [vmem:[%s285 + $0x390] sm:$0xff] %v9318
      %11069 = vst [vmem:[%s285 + $0x398] sm:$0xff] %v9333
      %11070 = vst [vmem:[%s285 + $0x3a0] sm:$0xff] %v9348
      %11071 = vst [vmem:[%s285 + $0x3a8] sm:$0xff] %v9363
      %11072 = vst.msk [vmem:[%s285 + $0x3b0] sm:$0xff] %vm1218, %v9378
      %11073 = vst [vmem:[%s285 + $0x3b8] sm:$0xff] %v9393
      %11074 = vst [vmem:[%s285 + $0x3c0] sm:$0xff] %v9408
      %11075 = vst [vmem:[%s285 + $0x3c8] sm:$0xff] %v9423
      %11076 = vst [vmem:[%s285 + $0x3d0] sm:$0xff] %v9438
      %11077 = vst [vmem:[%s285 + $0x3d8] sm:$0xff] %v9453
      %11078 = vst [vmem:[%s285 + $0x3e0] sm:$0xff] %v9468
      %11079 = vst.msk [vmem:[%s285 + $0x3e8] sm:$0xff] %vm1218, %v9483
      %11080 = vst [vmem:[%s285 + $0x3f0] sm:$0xff] %v9498
      %11081 = vst [vmem:[%s285 + $0x3f8] sm:$0xff] %v9513
      %11082 = vst [vmem:[%s285 + $0x400] sm:$0xff] %v9528
      %11083 = vst [vmem:[%s285 + $0x408] sm:$0xff] %v9543
      %11084 = vst [vmem:[%s285 + $0x410] sm:$0xff] %v9558
      %11085 = vst [vmem:[%s285 + $0x418] sm:$0xff] %v9573
      %11086 = vst.msk [vmem:[%s285 + $0x420] sm:$0xff] %vm1218, %v9588
      %11087 = vst [vmem:[%s285 + $0x428] sm:$0xff] %v9603
      %11088 = vst [vmem:[%s285 + $0x430] sm:$0xff] %v9618
      %11089 = vst [vmem:[%s285 + $0x438] sm:$0xff] %v9633
      %11090 = vst [vmem:[%s285 + $0x440] sm:$0xff] %v9648
      %11091 = vst [vmem:[%s285 + $0x448] sm:$0xff] %v9663
      %11092 = vst [vmem:[%s285 + $0x450] sm:$0xff] %v9678
      %11093 = vst.msk [vmem:[%s285 + $0x458] sm:$0xff] %vm1218, %v9693
      %11094 = vst [vmem:[%s285 + $0x460] sm:$0xff] %v9708
      %11095 = vst [vmem:[%s285 + $0x468] sm:$0xff] %v9723
      %11096 = vst [vmem:[%s285 + $0x470] sm:$0xff] %v9738
      %11097 = vst [vmem:[%s285 + $0x478] sm:$0xff] %v9753
      %11098 = vst [vmem:[%s285 + $0x480] sm:$0xff] %v9768
      %11099 = vst [vmem:[%s285 + $0x488] sm:$0xff] %v9783
      %11100 = vst.msk [vmem:[%s285 + $0x490] sm:$0xff] %vm1218, %v9798
      %11101 = vst [vmem:[%s285 + $0x498] sm:$0xff] %v9813
      %11102 = vst [vmem:[%s285 + $0x4a0] sm:$0xff] %v9828
      %11103 = vst [vmem:[%s285 + $0x4a8] sm:$0xff] %v9843
      %11104 = vst [vmem:[%s285 + $0x4b0] sm:$0xff] %v9858
      %11105 = vst [vmem:[%s285 + $0x4b8] sm:$0xff] %v9873
      %11106 = vst [vmem:[%s285 + $0x4c0] sm:$0xff] %v9888
      %11107 = vst.msk [vmem:[%s285 + $0x4c8] sm:$0xff] %vm1218, %v9903
      %11108 = vst [vmem:[%s285 + $0x4d0] sm:$0xff] %v9918
      %11109 = vst [vmem:[%s285 + $0x4d8] sm:$0xff] %v9933
      %11110 = vst [vmem:[%s285 + $0x4e0] sm:$0xff] %v9948
      %11111 = vst [vmem:[%s285 + $0x4e8] sm:$0xff] %v9963
      %11112 = vst [vmem:[%s285 + $0x4f0] sm:$0xff] %v9978
      %11113 = vst [vmem:[%s285 + $0x4f8] sm:$0xff] %v9993
      %11114 = vst.msk [vmem:[%s285 + $0x500] sm:$0xff] %vm1218, %v10008
      %11115 = vst [vmem:[%s285 + $0x508] sm:$0xff] %v10023
      %11116 = vst [vmem:[%s285 + $0x510] sm:$0xff] %v10038
      %11117 = vst [vmem:[%s285 + $0x518] sm:$0xff] %v10053
      %11118 = vst [vmem:[%s285 + $0x520] sm:$0xff] %v10068
      %11119 = vst [vmem:[%s285 + $0x528] sm:$0xff] %v10083
      %11120 = vst [vmem:[%s285 + $0x530] sm:$0xff] %v10098
      %11121 = vst.msk [vmem:[%s285 + $0x538] sm:$0xff] %vm1218, %v10113
      %11122 = vst [vmem:[%s285 + $0x540] sm:$0xff] %v10128
      %11123 = vst [vmem:[%s285 + $0x548] sm:$0xff] %v10143
      %11124 = vst [vmem:[%s285 + $0x550] sm:$0xff] %v10158
      %11125 = vst [vmem:[%s285 + $0x558] sm:$0xff] %v10173
      %11126 = vst [vmem:[%s285 + $0x560] sm:$0xff] %v10188
      %11127 = vst [vmem:[%s285 + $0x568] sm:$0xff] %v10203
      %11128 = vst.msk [vmem:[%s285 + $0x570] sm:$0xff] %vm1218, %v10218
      %11129 = vst [vmem:[%s285 + $0x578] sm:$0xff] %v10233
      %11130 = vst [vmem:[%s285 + $0x580] sm:$0xff] %v10248
      %11131 = vst [vmem:[%s285 + $0x588] sm:$0xff] %v10263
      %11132 = vst [vmem:[%s285 + $0x590] sm:$0xff] %v10278
      %11133 = vst [vmem:[%s285 + $0x598] sm:$0xff] %v10293
      %11134 = vst [vmem:[%s285 + $0x5a0] sm:$0xff] %v10308
      %11135 = vst.msk [vmem:[%s285 + $0x5a8] sm:$0xff] %vm1218, %v10323
      %11136 = vst [vmem:[%s285 + $0x5b0] sm:$0xff] %v10338
      %11137 = vst [vmem:[%s285 + $0x5b8] sm:$0xff] %v10353
      %11138 = vst [vmem:[%s285 + $0x5c0] sm:$0xff] %v10368
      %11139 = vst [vmem:[%s285 + $0x5c8] sm:$0xff] %v10383
      %11140 = vst [vmem:[%s285 + $0x5d0] sm:$0xff] %v10398
      %11141 = vst [vmem:[%s285 + $0x5d8] sm:$0xff] %v10413
      %11142 = vst.msk [vmem:[%s285 + $0x5e0] sm:$0xff] %vm1218, %v10428
      %11143 = vst [vmem:[%s285 + $0x5e8] sm:$0xff] %v10443
      %11144 = vst [vmem:[%s285 + $0x5f0] sm:$0xff] %v10458
      %11145 = vst [vmem:[%s285 + $0x5f8] sm:$0xff] %v10473
      %11146 = vst [vmem:[%s285 + $0x600] sm:$0xff] %v10488
      %11147 = vst [vmem:[%s285 + $0x608] sm:$0xff] %v10503
      %11148 = vst [vmem:[%s285 + $0x610] sm:$0xff] %v10518
      %11149 = vst.msk [vmem:[%s285 + $0x618] sm:$0xff] %vm1218, %v10533
      %11150 = vst [vmem:[%s285 + $0x620] sm:$0xff] %v10548
      %11151 = vst [vmem:[%s285 + $0x628] sm:$0xff] %v10563
      %11152 = vst [vmem:[%s285 + $0x630] sm:$0xff] %v10578
      %11153 = vst [vmem:[%s285 + $0x638] sm:$0xff] %v10593
      %11154 = vst [vmem:[%s285 + $0x640] sm:$0xff] %v10608
      %11155 = vst [vmem:[%s285 + $0x648] sm:$0xff] %v10623
      %11156 = vst.msk [vmem:[%s285 + $0x650] sm:$0xff] %vm1218, %v10638
      %11157 = vst [vmem:[%s285 + $0x658] sm:$0xff] %v10653
      %11158 = vst [vmem:[%s285 + $0x660] sm:$0xff] %v10668
      %11159 = vst [vmem:[%s285 + $0x668] sm:$0xff] %v10683
      %11160 = vst [vmem:[%s285 + $0x670] sm:$0xff] %v10698
      %11161 = vst [vmem:[%s285 + $0x678] sm:$0xff] %v10713
      %11162 = vst [vmem:[%s285 + $0x680] sm:$0xff] %v10728
      %11163 = vst.msk [vmem:[%s285 + $0x688] sm:$0xff] %vm1218, %v10743
      %11164 = vst [vmem:[%s285 + $0x690] sm:$0xff] %v10758
      %11165 = vst [vmem:[%s285 + $0x698] sm:$0xff] %v10773
      %11166 = vst [vmem:[%s285 + $0x6a0] sm:$0xff] %v10788
      %11167 = vst [vmem:[%s285 + $0x6a8] sm:$0xff] %v10803
      %11168 = vst [vmem:[%s285 + $0x6b0] sm:$0xff] %v10818
      %11169 = vst [vmem:[%s285 + $0x6b8] sm:$0xff] %v10833
      %11170 = vst.msk [vmem:[%s285 + $0x6c0] sm:$0xff] %vm1218, %v10848
      %11171 = vst [vmem:[%s285 + $0x6c8] sm:$0xff] %v10863
      %11172 = vst [vmem:[%s285 + $0x6d0] sm:$0xff] %v10878
      %11173 = vst [vmem:[%s285 + $0x6d8] sm:$0xff] %v10893
      %11174 = vst [vmem:[%s285 + $0x6e0] sm:$0xff] %v10908
      %11175 = vst [vmem:[%s285 + $0x6e8] sm:$0xff] %v10923
      %11176 = vst [vmem:[%s285 + $0x6f0] sm:$0xff] %v10938
      %11177 = vst.msk [vmem:[%s285 + $0x6f8] sm:$0xff] %vm1218, %v10953
      %s11178 = smul.u32 32, %s18
      %p11179 = scmp.lt.s32.totalorder %s11178, 63
      %s11180 = scalar_select %p11179, %s11178, 63
      %s11181 = smul.addr %s11180, 7
      %s11182 = smul.addr %s11181, 8
      %s11183 = scalar_lea.vmem %s7, %s11182
      // Predicated region
      $region49: #{tpu_custom_call.1} parent=47 // pred_check
        %p11184 = pneg %p188
      $region50: #{tpu_custom_call.1} parent=47 // pred_check_branch
        %11186 = sbr.rel (%p11184) target = $region52
      $region51: #{tpu_custom_call.1} parent=47 // pred_region
        %s11187 = smul.u32 32, %s18
      $region52: #{tpu_custom_call.1} parent=47 // pred_fallthru
        _
    $region48: #{tpu_custom_call.1} parent=5 // pred_fallthru
      _
    %p11188 = scmp.le.s32.totalorder 2, %s13
    // Predicated region
    $region53: #{tpu_custom_call.1} parent=5 // pred_check
      %p11189 = pneg %p11188
    $region54: #{tpu_custom_call.1} parent=5 // pred_check_branch
      %11191 = sbr.rel (%p11189) target = $region56
    $region55: #{tpu_custom_call.1} parent=5 // pred_region
      %s11192 = ssub.s32 %s13, 2
      // Predicated region
      $region57: #{tpu_custom_call.1} parent=55 // pred_check
        %p11193 = pneg %p194
      $region58: #{tpu_custom_call.1} parent=55 // pred_check_branch
        %11195 = sbr.rel (%p11193) target = $region60
      $region59: #{tpu_custom_call.1} parent=55 // pred_region
        %s11196 = smul.u32 32, %s19
        %p11197 = scmp.lt.s32.totalorder %s11196, 63
        %s11198 = scalar_select %p11197, %s11196, 63
        %s11199 = smul.addr %s11198, 7
        %s11200 = smul.addr %s11199, 8
        %s11201 = scalar_lea.vmem %s7, %s11200
      $region60: #{tpu_custom_call.1} parent=55 // pred_fallthru
        _
    $region56: #{tpu_custom_call.1} parent=5 // pred_fallthru
      _
  $region6: #{tpu_custom_call.1} parent=0 // loop_footer
    %s17 = sadd.s32 1, %s13
  $region7: #{tpu_custom_call.1} parent=0 // loop_footer_branch
    %12 = sbr.rel target = $region3
  $region8: #{tpu_custom_call.1} parent=0 // loop_exit
    _

</llo_original>
